<compile_context>
chip_gen: v5e
topology: v5e:2x2
jax: 0.10.0
libtpu: 0.0.40
codegen_flags: <defaults>
</compile_context>

<pallas_src>
import functools
import math

import jax
import jax.numpy as jnp
from jax import lax
from jax.experimental import pallas as pl
from jax.experimental.pallas import tpu as pltpu


# ----------------------------- small helpers -----------------------------------

def _round8(n):
    return ((n + 7) // 8) * 8


def _sigmoid(x):
    # numerically stable logistic: exp(-|x|) <= 1, never overflows
    e = jnp.exp(-jnp.abs(x))
    return jnp.where(x >= 0, 1.0 / (1.0 + e), e / (1.0 + e))


def _silu(x):
    return x * _sigmoid(x)


def _softplus(x):
    # numerically stable softplus
    return jnp.maximum(x, 0.0) + jnp.log1p(jnp.exp(-jnp.abs(x)))


def _mm(a, b):
    # (M, K) @ (K, N) -> (M, N) on the MXU, f32 accumulate
    return lax.dot_general(a, b, (((1,), (0,)), ((), ())),
                           preferred_element_type=jnp.float32)


def _mm_nt(a, b):
    # (M, K) @ (N, K)^T -> (M, N) on the MXU, f32 accumulate
    return lax.dot_general(a, b, (((1,), (1,)), ((), ())),
                           preferred_element_type=jnp.float32)


# ----------------------------- packed weight layout ------------------------------

def make_packed_layout(d_model, d_inner, d_state, dt_rank, d_conv):
    """Row offsets inside the two packed slabs.  Every block starts 8-aligned."""
    r8 = _round8(dt_rank)
    off = {}
    # --- slab with lane width d_inner ("w64") ---
    r = 0
    off["dtlow"] = r;   r += r8                   # x_proj rows for dt (zero padded)
    off["wB"] = r;      r += _round8(d_state)     # x_proj rows for B
    off["wC"] = r;      r += _round8(d_state)     # x_proj rows for C
    off["dtproj"] = r;  r += r8                   # dt_proj weight^T (zero padded)
    off["outw"] = r;    r += _round8(d_model)     # out_proj weight
    off["alogT"] = r;   r += _round8(d_state)     # A_log^T
    off["conv"] = r;    r += _round8(d_conv)      # conv taps: row k = conv_w[:, k]
    off["bx"] = r;      r += 8                    # in_proj bias (x half)
    off["bz"] = r;      r += 8                    # in_proj bias (z half)
    off["dtb"] = r;     r += 8                    # dt_proj bias
    off["dskip"] = r;   r += 8                    # D skip parameter
    off["w64_rows"] = r
    # --- slab with lane width d_model ("w32") ---
    r = 0
    off["wxz"] = r;     r += 2 * d_inner          # in_proj weight [W_x ; W_z]
    off["rms"] = r;     r += 8                    # RMSNorm weight
    off["outb"] = r;    r += 8                    # out_proj bias
    off["w32_rows"] = r
    off["dt_pad"] = r8
    return off


def _pack_w64(p, off, d_inner, d_state, dt_rank, d_conv, d_model):
    f32 = jnp.float32
    slab = jnp.zeros((off["w64_rows"], d_inner), f32)
    xproj = p["xproj_w"].astype(f32)
    slab = slab.at[off["dtlow"]:off["dtlow"] + dt_rank, :].set(xproj[:dt_rank])
    slab = slab.at[off["wB"]:off["wB"] + d_state, :].set(
        xproj[dt_rank:dt_rank + d_state])
    slab = slab.at[off["wC"]:off["wC"] + d_state, :].set(
        xproj[dt_rank + d_state:dt_rank + 2 * d_state])
    slab = slab.at[off["dtproj"]:off["dtproj"] + dt_rank, :].set(p["dtproj_w"].T)
    slab = slab.at[off["outw"]:off["outw"] + d_model, :].set(p["out_w"])
    slab = slab.at[off["alogT"]:off["alogT"] + d_state, :].set(p["a_log"].T)
    slab = slab.at[off["conv"]:off["conv"] + d_conv, :].set(p["conv_w"].T)
    slab = slab.at[off["bx"], :].set(p["in_b"][:d_inner])
    slab = slab.at[off["bz"], :].set(p["in_b"][d_inner:])
    slab = slab.at[off["dtb"], :].set(p["dtproj_b"])
    slab = slab.at[off["dskip"], :].set(p["d_param"])
    return slab


def _pack_w32(p, off, d_inner, d_model):
    f32 = jnp.float32
    slab = jnp.zeros((off["w32_rows"], d_model), f32)
    slab = slab.at[off["wxz"]:off["wxz"] + 2 * d_inner, :].set(p["in_w"])
    slab = slab.at[off["rms"], :].set(p["rms_w"])
    slab = slab.at[off["outb"], :].set(p["out_b"])
    return slab


# ----------------------------- fused kernel --------------------------------------

def fused_mamba_kernel(x_ref, w64_ref, w32_ref, o_ref, hs_ref, *,
                       n_dir, n_layers, batch, seq_len, d_model, d_inner,
                       d_state, d_conv, eps, off):
    B, L, D, di, S, K = batch, seq_len, d_model, d_inner, d_state, d_conv
    F = B * L
    R8 = off["dt_pad"]

    # Both directions in one invocation: the two recurrences are independent
    # chains inside a single basic block (scheduler can interleave them).
    for d in range(n_dir):
        resid = x_ref[d].reshape(F, D).astype(jnp.float32)          # (F, D)

        for layer in range(n_layers):
            # ---- unpack this layer's weights (all slices 8-row aligned) ----
            wxz = w32_ref[d, layer, off["wxz"]:off["wxz"] + 2 * di, :]     # (2di, D)
            rms_w = w32_ref[d, layer, off["rms"]:off["rms"] + 1, :]        # (1, D)
            out_b = w32_ref[d, layer, off["outb"]:off["outb"] + 1, :]      # (1, D)

            w_dt = w64_ref[d, layer, off["dtlow"]:off["dtlow"] + R8, :]    # (R8, di)
            w_B = w64_ref[d, layer, off["wB"]:off["wB"] + S, :]            # (S, di)
            w_C = w64_ref[d, layer, off["wC"]:off["wC"] + S, :]            # (S, di)
            dtproj = w64_ref[d, layer, off["dtproj"]:off["dtproj"] + R8, :]
            out_w = w64_ref[d, layer, off["outw"]:off["outw"] + D, :]      # (D, di)
            a_logT = w64_ref[d, layer, off["alogT"]:off["alogT"] + S, :]   # (S, di)
            conv_taps = w64_ref[d, layer, off["conv"]:off["conv"] + K, :]  # (K, di)
            bx = w64_ref[d, layer, off["bx"]:off["bx"] + 1, :]             # (1, di)
            bz = w64_ref[d, layer, off["bz"]:off["bz"] + 1, :]             # (1, di)
            dt_b = w64_ref[d, layer, off["dtb"]:off["dtb"] + 1, :]         # (1, di)
            d_skip = w64_ref[d, layer, off["dskip"]:off["dskip"] + 1, :]   # (1, di)

            # ---- RMSNorm ----
            var = jnp.mean(resid * resid, axis=-1, keepdims=True)          # (F, 1)
            xn = resid * lax.rsqrt(var + eps) * rms_w                      # (F, D)

            # ---- in_proj: one fused matmul, split the result at lane d_inner ----
            xz = _mm_nt(xn, wxz)                                           # (F, 2di)
            x_in = xz[:, :di] + bx                                         # (F, di)
            z = xz[:, di:2 * di] + bz                                      # (F, di)

            # ---- causal depthwise conv1d on the (B, L, di) view: per-example
            #      zero-pad + shift (no (F,F) matrices, no boundary masks) ----
            x3 = x_in.reshape(B, L, di)
            xc3 = x3 * conv_taps[K - 1:K, :]                               # shift-0 tap
            for k in range(K - 1):
                s = K - 1 - k                                              # shift amount
                shifted = jnp.concatenate(
                    [jnp.zeros((B, s, di), jnp.float32), x3[:, :L - s, :]], axis=1)
                xc3 = xc3 + shifted * conv_taps[k:k + 1, :]
            xc3 = _silu(xc3)
            xc = xc3.reshape(F, di)                                        # (F, di)

            # ---- x_proj / dt_proj ----
            dt_low = _mm_nt(xc, w_dt)                                      # (F, R8)
            b_mat = _mm_nt(xc, w_B)                                        # (F, S)
            c_mat = _mm_nt(xc, w_C)                                        # (F, S)
            dt = _softplus(_mm(dt_low, dtproj) + dt_b)                     # (F, di)

            a_t = -jnp.exp(a_logT)                                         # (S, di)

            # ---- selective scan, vectorized over batch: only L serial steps.
            #      dA/dBx are computed per step (never materialized over F), and
            #      per-step h is staged into VMEM; the C-contraction happens once,
            #      batched, after the loop. ----
            dt3 = dt.reshape(B, L, di)
            dtx3 = (dt * xc).reshape(B, L, di)
            b3 = b_mat.reshape(B, L, S)
            h = jnp.zeros((B, S, di), jnp.float32)
            for t in range(L):
                dA_t = jnp.exp(dt3[:, t, :][:, None, :] * a_t[None, :, :])     # (B,S,di)
                dBx_t = dtx3[:, t, :][:, None, :] * b3[:, t, :][:, :, None]    # (B,S,di)
                h = h * dA_t + dBx_t
                hs_ref[d, :, t, :, :] = h          # off the serial chain (VMEM stage)

            hs = hs_ref[d]                                                 # (B,L,S,di)
            c4 = c_mat[:, :, None].reshape(B, L, S, 1)                     # (B,L,S,1)
            ys = jnp.sum(hs * c4, axis=2).reshape(F, di)                   # (F, di)

            # ---- skip (D), gate with SiLU(z), out_proj, residual ----
            y = (ys + xc * d_skip) * _silu(z)                              # (F, di)
            resid = resid + _mm_nt(y, out_w) + out_b                       # (F, D)

        o_ref[d] = resid.reshape(B, L, D).astype(o_ref.dtype)


# ----------------------------- full model forward --------------------------------

def mamba_original_forward(x, fwd_params, bwd_params, *, bidirectional,
                           d_state, d_conv, dt_rank, eps=1e-5):
    B, L, D = x.shape
    n_layers = len(fwd_params)
    d_inner = fwd_params[0]["in_w"].shape[0] // 2
    n_dir = 2 if bidirectional else 1

    off = make_packed_layout(D, d_inner, d_state, dt_rank, d_conv)

    dir_params = [fwd_params] + ([bwd_params] if bidirectional else [])
    w64 = jnp.stack([
        jnp.stack([_pack_w64(p, off, d_inner, d_state, dt_rank, d_conv, D)
                   for p in ps]) for ps in dir_params])        # (n_dir, nl, R64, di)
    w32 = jnp.stack([
        jnp.stack([_pack_w32(p, off, d_inner, D) for p in ps])
        for ps in dir_params])                                 # (n_dir, nl, R32, D)

    # Time reversal for the backward direction is done here (cheap XLA flip on a
    # tiny tensor) instead of with (F,F) reversal matmuls inside the kernel.
    if bidirectional:
        x_stack = jnp.stack([x, jnp.flip(x, axis=1)], axis=0)  # (2, B, L, D)
    else:
        x_stack = x[None]

    kernel = functools.partial(
        fused_mamba_kernel, n_dir=n_dir, n_layers=n_layers, batch=B, seq_len=L,
        d_model=D, d_inner=d_inner, d_state=d_state, d_conv=d_conv, eps=eps,
        off=off)

    out = pl.pallas_call(
        kernel,
        out_shape=jax.ShapeDtypeStruct((n_dir, B, L, D), x.dtype),
        in_specs=[
            pl.BlockSpec(memory_space=pltpu.MemorySpace.VMEM),   # x (both dirs)
            pl.BlockSpec(memory_space=pltpu.MemorySpace.VMEM),   # w64 slabs
            pl.BlockSpec(memory_space=pltpu.MemorySpace.VMEM),   # w32 slabs
        ],
        out_specs=pl.BlockSpec(memory_space=pltpu.MemorySpace.VMEM),
        scratch_shapes=[
            pltpu.VMEM((n_dir, B, L, d_state, d_inner), jnp.float32),  # hs stage
        ],
    )(x_stack, w64, w32)

    if bidirectional:
        # direction 1 ran on flipped time; flip its output back, then average
        return (out[0] + jnp.flip(out[1], axis=1)) * 0.5
    return out[0]


# ----------------------------- parameter construction ----------------------------

def make_layer_params(key, d_model, d_inner, d_state, d_conv, dt_rank,
                      dt_min=0.0001, dt_max=0.1, dt_init_floor=0.0001):
    ks = jax.random.split(key, 6)
    f32 = jnp.float32
    rms_w = jnp.ones((d_model,), f32)
    in_w = 0.05 * jax.random.normal(ks[0], (2 * d_inner, d_model), f32)
    in_b = jnp.zeros((2 * d_inner,), f32)                              # bias=True
    conv_w = 0.2 * jax.random.normal(ks[1], (d_inner, d_conv), f32)    # conv_bias=False
    xproj_w = 0.05 * jax.random.normal(ks[2], (dt_rank + 2 * d_state, d_inner), f32)
    dtproj_w = 0.1 * jax.random.normal(ks[3], (d_inner, dt_rank), f32)

    # dt bias init as in mamba: softplus(bias) ~ LogUniform(dt_min, dt_max)
    u = jax.random.uniform(ks[4], (d_inner,), f32)
    dt = jnp.exp(u * (math.log(dt_max) - math.log(dt_min)) + math.log(dt_min))
    dt = jnp.clip(dt, dt_init_floor)
    dtproj_b = dt + jnp.log(-jnp.expm1(-dt))                           # inverse softplus

    a_log = jnp.log(jnp.broadcast_to(
        jnp.arange(1, d_state + 1, dtype=f32)[None, :], (d_inner, d_state)))
    d_param = jnp.ones((d_inner,), f32)
    out_w = 0.05 * jax.random.normal(ks[5], (d_model, d_inner), f32)
    out_b = jnp.zeros((d_model,), f32)                                 # bias=True
    return dict(rms_w=rms_w, in_w=in_w, in_b=in_b, conv_w=conv_w,
                xproj_w=xproj_w, dtproj_w=dtproj_w, dtproj_b=dtproj_b,
                a_log=a_log, d_param=d_param, out_w=out_w, out_b=out_b)


# ----------------------------------- main -----------------------------------------

if __name__ == "__main__":
    batch, L = 2, 8
    d_model, d_state, d_conv, expand = 32, 16, 4, 2
    d_inner = expand * d_model
    dt_rank = math.ceil(d_model / 16)
    n_layers = 2
    bidirectional = True

    key = jax.random.PRNGKey(0)
    k_x, k_f, k_b = jax.random.split(key, 3)
    x = jax.random.normal(k_x, (batch, L, d_model), jnp.float32)

    fwd_params = [make_layer_params(k, d_model, d_inner, d_state, d_conv, dt_rank)
                  for k in jax.random.split(k_f, n_layers)]
    bwd_params = [make_layer_params(k, d_model, d_inner, d_state, d_conv, dt_rank)
                  for k in jax.random.split(k_b, n_layers)]

    fwd = jax.jit(functools.partial(
        mamba_original_forward, bidirectional=bidirectional,
        d_state=d_state, d_conv=d_conv, dt_rank=dt_rank))

    out = jax.block_until_ready(fwd(x, fwd_params, bwd_params))
    assert out.shape == (batch, L, d_model)
    assert bool(jnp.all(jnp.isfinite(out)))
    print("KERNEL_OK")
</pallas_src>

<mosaic_0001>
module attributes {stable_mosaic.version = 11 : i64} {
  func.func @fused_mamba_kernel(%arg0: memref<2x2x8x32xf32, #tpu.memory_space<vmem>>, %arg1: memref<2x2x136x64xf32, #tpu.memory_space<vmem>>, %arg2: memref<2x2x144x32xf32, #tpu.memory_space<vmem>>, %arg3: memref<2x2x8x32xf32, #tpu.memory_space<vmem>>, %arg4: memref<2x2x8x16x64xf32, #tpu.memory_space<vmem>>) attributes {dimension_semantics = [], scalar_prefetch = 0 : i64, scratch_operands = 1 : i64, tpu.core_type = #tpu.core_type<tc>} {
    %c0 = arith.constant 0 : index
    %c0_0 = arith.constant 0 : index
    %c0_1 = arith.constant 0 : index
    %c0_2 = arith.constant 0 : index
    %0 = vector.load %arg0[%c0, %c0_0, %c0_1, %c0_2] : memref<2x2x8x32xf32, #tpu.memory_space<vmem>>, vector<1x2x8x32xf32>
    %1 = vector.shape_cast %0 : vector<1x2x8x32xf32> to vector<2x8x32xf32>
    %2 = vector.shape_cast %1 : vector<2x8x32xf32> to vector<16x32xf32>
    %c0_3 = arith.constant 0 : index
    %c0_4 = arith.constant 0 : index
    %c0_5 = arith.constant 0 : index
    %c0_6 = arith.constant 0 : index
    %3 = vector.load %arg2[%c0_3, %c0_4, %c0_5, %c0_6] : memref<2x2x144x32xf32, #tpu.memory_space<vmem>>, vector<1x1x128x32xf32>
    %4 = vector.shape_cast %3 : vector<1x1x128x32xf32> to vector<128x32xf32>
    %c0_7 = arith.constant 0 : index
    %c0_8 = arith.constant 0 : index
    %c128 = arith.constant 128 : index
    %c0_9 = arith.constant 0 : index
    %5 = vector.load %arg2[%c0_7, %c0_8, %c128, %c0_9] : memref<2x2x144x32xf32, #tpu.memory_space<vmem>>, vector<1x1x1x32xf32>
    %6 = vector.shape_cast %5 : vector<1x1x1x32xf32> to vector<1x32xf32>
    %c0_10 = arith.constant 0 : index
    %c0_11 = arith.constant 0 : index
    %c136 = arith.constant 136 : index
    %c0_12 = arith.constant 0 : index
    %7 = vector.load %arg2[%c0_10, %c0_11, %c136, %c0_12] : memref<2x2x144x32xf32, #tpu.memory_space<vmem>>, vector<1x1x1x32xf32>
    %8 = vector.shape_cast %7 : vector<1x1x1x32xf32> to vector<1x32xf32>
    %c0_13 = arith.constant 0 : index
    %c0_14 = arith.constant 0 : index
    %c0_15 = arith.constant 0 : index
    %c0_16 = arith.constant 0 : index
    %9 = vector.load %arg1[%c0_13, %c0_14, %c0_15, %c0_16] : memref<2x2x136x64xf32, #tpu.memory_space<vmem>>, vector<1x1x8x64xf32>
    %10 = vector.shape_cast %9 : vector<1x1x8x64xf32> to vector<8x64xf32>
    %c0_17 = arith.constant 0 : index
    %c0_18 = arith.constant 0 : index
    %c8 = arith.constant 8 : index
    %c0_19 = arith.constant 0 : index
    %11 = vector.load %arg1[%c0_17, %c0_18, %c8, %c0_19] : memref<2x2x136x64xf32, #tpu.memory_space<vmem>>, vector<1x1x16x64xf32>
    %12 = vector.shape_cast %11 : vector<1x1x16x64xf32> to vector<16x64xf32>
    %c0_20 = arith.constant 0 : index
    %c0_21 = arith.constant 0 : index
    %c24 = arith.constant 24 : index
    %c0_22 = arith.constant 0 : index
    %13 = vector.load %arg1[%c0_20, %c0_21, %c24, %c0_22] : memref<2x2x136x64xf32, #tpu.memory_space<vmem>>, vector<1x1x16x64xf32>
    %14 = vector.shape_cast %13 : vector<1x1x16x64xf32> to vector<16x64xf32>
    %c0_23 = arith.constant 0 : index
    %c0_24 = arith.constant 0 : index
    %c40 = arith.constant 40 : index
    %c0_25 = arith.constant 0 : index
    %15 = vector.load %arg1[%c0_23, %c0_24, %c40, %c0_25] : memref<2x2x136x64xf32, #tpu.memory_space<vmem>>, vector<1x1x8x64xf32>
    %16 = vector.shape_cast %15 : vector<1x1x8x64xf32> to vector<8x64xf32>
    %c0_26 = arith.constant 0 : index
    %c0_27 = arith.constant 0 : index
    %c48 = arith.constant 48 : index
    %c0_28 = arith.constant 0 : index
    %17 = vector.load %arg1[%c0_26, %c0_27, %c48, %c0_28] : memref<2x2x136x64xf32, #tpu.memory_space<vmem>>, vector<1x1x32x64xf32>
    %18 = vector.shape_cast %17 : vector<1x1x32x64xf32> to vector<32x64xf32>
    %c0_29 = arith.constant 0 : index
    %c0_30 = arith.constant 0 : index
    %c80 = arith.constant 80 : index
    %c0_31 = arith.constant 0 : index
    %19 = vector.load %arg1[%c0_29, %c0_30, %c80, %c0_31] : memref<2x2x136x64xf32, #tpu.memory_space<vmem>>, vector<1x1x16x64xf32>
    %20 = vector.shape_cast %19 : vector<1x1x16x64xf32> to vector<16x64xf32>
    %c0_32 = arith.constant 0 : index
    %c0_33 = arith.constant 0 : index
    %c96 = arith.constant 96 : index
    %c0_34 = arith.constant 0 : index
    %21 = vector.load %arg1[%c0_32, %c0_33, %c96, %c0_34] : memref<2x2x136x64xf32, #tpu.memory_space<vmem>>, vector<1x1x4x64xf32>
    %22 = vector.shape_cast %21 : vector<1x1x4x64xf32> to vector<4x64xf32>
    %c0_35 = arith.constant 0 : index
    %c0_36 = arith.constant 0 : index
    %c104 = arith.constant 104 : index
    %c0_37 = arith.constant 0 : index
    %23 = vector.load %arg1[%c0_35, %c0_36, %c104, %c0_37] : memref<2x2x136x64xf32, #tpu.memory_space<vmem>>, vector<1x1x1x64xf32>
    %24 = vector.shape_cast %23 : vector<1x1x1x64xf32> to vector<1x64xf32>
    %c0_38 = arith.constant 0 : index
    %c0_39 = arith.constant 0 : index
    %c112 = arith.constant 112 : index
    %c0_40 = arith.constant 0 : index
    %25 = vector.load %arg1[%c0_38, %c0_39, %c112, %c0_40] : memref<2x2x136x64xf32, #tpu.memory_space<vmem>>, vector<1x1x1x64xf32>
    %26 = vector.shape_cast %25 : vector<1x1x1x64xf32> to vector<1x64xf32>
    %c0_41 = arith.constant 0 : index
    %c0_42 = arith.constant 0 : index
    %c120 = arith.constant 120 : index
    %c0_43 = arith.constant 0 : index
    %27 = vector.load %arg1[%c0_41, %c0_42, %c120, %c0_43] : memref<2x2x136x64xf32, #tpu.memory_space<vmem>>, vector<1x1x1x64xf32>
    %28 = vector.shape_cast %27 : vector<1x1x1x64xf32> to vector<1x64xf32>
    %c0_44 = arith.constant 0 : index
    %c0_45 = arith.constant 0 : index
    %c128_46 = arith.constant 128 : index
    %c0_47 = arith.constant 0 : index
    %29 = vector.load %arg1[%c0_44, %c0_45, %c128_46, %c0_47] : memref<2x2x136x64xf32, #tpu.memory_space<vmem>>, vector<1x1x1x64xf32>
    %30 = vector.shape_cast %29 : vector<1x1x1x64xf32> to vector<1x64xf32>
    %31 = arith.mulf %2, %2 : vector<16x32xf32>
    %cst = arith.constant dense<0.000000e+00> : vector<16xf32>
    %32 = vector.multi_reduction <add>, %31, %cst [1] : vector<16x32xf32> to vector<16xf32>
    %33 = vector.shape_cast %32 : vector<16xf32> to vector<16x1xf32>
    %cst_48 = arith.constant 3.200000e+01 : f32
    %34 = vector.broadcast %cst_48 : f32 to vector<16x1xf32>
    %35 = arith.divf %33, %34 : vector<16x1xf32>
    %cst_49 = arith.constant 9.99999974E-6 : f32
    %36 = vector.broadcast %cst_49 : f32 to vector<16x1xf32>
    %37 = arith.addf %35, %36 : vector<16x1xf32>
    %38 = math.rsqrt %37 : vector<16x1xf32>
    %39 = vector.broadcast %38 : vector<16x1xf32> to vector<16x32xf32>
    %40 = arith.mulf %2, %39 : vector<16x32xf32>
    %41 = vector.broadcast %6 : vector<1x32xf32> to vector<16x32xf32>
    %42 = arith.mulf %40, %41 : vector<16x32xf32>
    %cst_50 = arith.constant dense<0.000000e+00> : vector<16x128xf32>
    %43 = tpu.matmul %42, %4, %cst_50 {dimension_numbers = #tpu.dot_dimension_numbers<[1], [1], [0], [0], [0, 0, 1, 0], [], []>} : vector<16x32xf32>, vector<128x32xf32>, vector<16x128xf32> -> vector<16x128xf32>
    %44 = vector.extract_strided_slice %43 {offsets = [0, 0], sizes = [16, 64], strides = [1, 1]} : vector<16x128xf32> to vector<16x64xf32>
    %45 = vector.broadcast %24 : vector<1x64xf32> to vector<16x64xf32>
    %46 = arith.addf %44, %45 : vector<16x64xf32>
    %47 = vector.extract_strided_slice %43 {offsets = [0, 64], sizes = [16, 64], strides = [1, 1]} : vector<16x128xf32> to vector<16x64xf32>
    %48 = vector.broadcast %26 : vector<1x64xf32> to vector<16x64xf32>
    %49 = arith.addf %47, %48 : vector<16x64xf32>
    %50 = vector.shape_cast %46 : vector<16x64xf32> to vector<2x8x64xf32>
    %51 = vector.extract_strided_slice %22 {offsets = [3, 0], sizes = [1, 64], strides = [1, 1]} : vector<4x64xf32> to vector<1x64xf32>
    %52 = vector.shape_cast %51 : vector<1x64xf32> to vector<1x1x64xf32>
    %53 = vector.broadcast %52 : vector<1x1x64xf32> to vector<2x8x64xf32>
    %54 = arith.mulf %50, %53 : vector<2x8x64xf32>
    %cst_51 = arith.constant 0.000000e+00 : f32
    %55 = vector.broadcast %cst_51 : f32 to vector<2x3x64xf32>
    %56 = vector.extract_strided_slice %50 {offsets = [0, 0, 0], sizes = [2, 5, 64], strides = [1, 1, 1]} : vector<2x8x64xf32> to vector<2x5x64xf32>
    %57 = tpu.concatenate %55, %56 in 1 : vector<2x3x64xf32>, vector<2x5x64xf32> -> vector<2x8x64xf32>
    %58 = vector.extract_strided_slice %22 {offsets = [0, 0], sizes = [1, 64], strides = [1, 1]} : vector<4x64xf32> to vector<1x64xf32>
    %59 = vector.shape_cast %58 : vector<1x64xf32> to vector<1x1x64xf32>
    %60 = vector.broadcast %59 : vector<1x1x64xf32> to vector<2x8x64xf32>
    %61 = arith.mulf %57, %60 : vector<2x8x64xf32>
    %62 = arith.addf %54, %61 : vector<2x8x64xf32>
    %cst_52 = arith.constant 0.000000e+00 : f32
    %63 = vector.broadcast %cst_52 : f32 to vector<2x2x64xf32>
    %64 = vector.extract_strided_slice %50 {offsets = [0, 0, 0], sizes = [2, 6, 64], strides = [1, 1, 1]} : vector<2x8x64xf32> to vector<2x6x64xf32>
    %65 = tpu.concatenate %63, %64 in 1 : vector<2x2x64xf32>, vector<2x6x64xf32> -> vector<2x8x64xf32>
    %66 = vector.extract_strided_slice %22 {offsets = [1, 0], sizes = [1, 64], strides = [1, 1]} : vector<4x64xf32> to vector<1x64xf32>
    %67 = vector.shape_cast %66 : vector<1x64xf32> to vector<1x1x64xf32>
    %68 = vector.broadcast %67 : vector<1x1x64xf32> to vector<2x8x64xf32>
    %69 = arith.mulf %65, %68 : vector<2x8x64xf32>
    %70 = arith.addf %62, %69 : vector<2x8x64xf32>
    %cst_53 = arith.constant 0.000000e+00 : f32
    %71 = vector.broadcast %cst_53 : f32 to vector<2x1x64xf32>
    %72 = vector.extract_strided_slice %50 {offsets = [0, 0, 0], sizes = [2, 7, 64], strides = [1, 1, 1]} : vector<2x8x64xf32> to vector<2x7x64xf32>
    %73 = tpu.concatenate %71, %72 in 1 : vector<2x1x64xf32>, vector<2x7x64xf32> -> vector<2x8x64xf32>
    %74 = vector.extract_strided_slice %22 {offsets = [2, 0], sizes = [1, 64], strides = [1, 1]} : vector<4x64xf32> to vector<1x64xf32>
    %75 = vector.shape_cast %74 : vector<1x64xf32> to vector<1x1x64xf32>
    %76 = vector.broadcast %75 : vector<1x1x64xf32> to vector<2x8x64xf32>
    %77 = arith.mulf %73, %76 : vector<2x8x64xf32>
    %78 = arith.addf %70, %77 : vector<2x8x64xf32>
    %79 = math.absf %78 : vector<2x8x64xf32>
    %cst_54 = arith.constant 0.000000e+00 : f32
    %80 = vector.broadcast %cst_54 : f32 to vector<2x8x64xf32>
    %81 = arith.subf %80, %79 : vector<2x8x64xf32>
    %82 = math.exp %81 : vector<2x8x64xf32>
    %cst_55 = arith.constant 0.000000e+00 : f32
    %83 = vector.broadcast %cst_55 : f32 to vector<2x8x64xf32>
    %84 = arith.cmpf oge, %78, %83 : vector<2x8x64xf32>
    %cst_56 = arith.constant 1.000000e+00 : f32
    %85 = vector.broadcast %cst_56 : f32 to vector<2x8x64xf32>
    %86 = arith.addf %85, %82 : vector<2x8x64xf32>
    %cst_57 = arith.constant 1.000000e+00 : f32
    %87 = vector.broadcast %cst_57 : f32 to vector<2x8x64xf32>
    %88 = arith.divf %87, %86 : vector<2x8x64xf32>
    %cst_58 = arith.constant 1.000000e+00 : f32
    %89 = vector.broadcast %cst_58 : f32 to vector<2x8x64xf32>
    %90 = arith.addf %89, %82 : vector<2x8x64xf32>
    %91 = arith.divf %82, %90 : vector<2x8x64xf32>
    %92 = arith.select %84, %88, %91 : vector<2x8x64xi1>, vector<2x8x64xf32>
    %93 = arith.mulf %78, %92 : vector<2x8x64xf32>
    %94 = vector.shape_cast %93 : vector<2x8x64xf32> to vector<16x64xf32>
    %cst_59 = arith.constant dense<0.000000e+00> : vector<16x8xf32>
    %95 = tpu.matmul %94, %10, %cst_59 {dimension_numbers = #tpu.dot_dimension_numbers<[1], [1], [0], [0], [0, 0, 1, 0], [], []>} : vector<16x64xf32>, vector<8x64xf32>, vector<16x8xf32> -> vector<16x8xf32>
    %cst_60 = arith.constant dense<0.000000e+00> : vector<16x16xf32>
    %96 = tpu.matmul %94, %12, %cst_60 {dimension_numbers = #tpu.dot_dimension_numbers<[1], [1], [0], [0], [0, 0, 1, 0], [], []>} : vector<16x64xf32>, vector<16x64xf32>, vector<16x16xf32> -> vector<16x16xf32>
    %cst_61 = arith.constant dense<0.000000e+00> : vector<16x16xf32>
    %97 = tpu.matmul %94, %14, %cst_61 {dimension_numbers = #tpu.dot_dimension_numbers<[1], [1], [0], [0], [0, 0, 1, 0], [], []>} : vector<16x64xf32>, vector<16x64xf32>, vector<16x16xf32> -> vector<16x16xf32>
    %cst_62 = arith.constant dense<0.000000e+00> : vector<16x64xf32>
    %98 = tpu.matmul %95, %16, %cst_62 {dimension_numbers = #tpu.dot_dimension_numbers<[1], [0], [0], [1], [0, 0, 1, 1], [], []>} : vector<16x8xf32>, vector<8x64xf32>, vector<16x64xf32> -> vector<16x64xf32>
    %99 = vector.broadcast %28 : vector<1x64xf32> to vector<16x64xf32>
    %100 = arith.addf %98, %99 : vector<16x64xf32>
    %cst_63 = arith.constant 0.000000e+00 : f32
    %101 = vector.broadcast %cst_63 : f32 to vector<16x64xf32>
    %102 = arith.maximumf %100, %101 : vector<16x64xf32>
    %103 = math.absf %100 : vector<16x64xf32>
    %cst_64 = arith.constant 0.000000e+00 : f32
    %104 = vector.broadcast %cst_64 : f32 to vector<16x64xf32>
    %105 = arith.subf %104, %103 : vector<16x64xf32>
    %106 = math.exp %105 : vector<16x64xf32>
    %107 = math.log1p %106 : vector<16x64xf32>
    %108 = arith.addf %102, %107 : vector<16x64xf32>
    %109 = math.exp %20 : vector<16x64xf32>
    %cst_65 = arith.constant 0.000000e+00 : f32
    %110 = vector.broadcast %cst_65 : f32 to vector<16x64xf32>
    %111 = arith.subf %110, %109 : vector<16x64xf32>
    %112 = vector.shape_cast %108 : vector<16x64xf32> to vector<2x8x64xf32>
    %113 = arith.mulf %108, %94 : vector<16x64xf32>
    %114 = vector.shape_cast %113 : vector<16x64xf32> to vector<2x8x64xf32>
    %115 = vector.shape_cast %96 : vector<16x16xf32> to vector<2x8x16xf32>
    %cst_66 = arith.constant 0.000000e+00 : f32
    %116 = vector.broadcast %cst_66 : f32 to vector<2x16x64xf32>
    %117 = vector.extract_strided_slice %112 {offsets = [0, 0, 0], sizes = [2, 1, 64], strides = [1, 1, 1]} : vector<2x8x64xf32> to vector<2x1x64xf32>
    %118 = vector.shape_cast %117 : vector<2x1x64xf32> to vector<2x64xf32>
    %119 = vector.shape_cast %118 : vector<2x64xf32> to vector<2x1x64xf32>
    %120 = vector.shape_cast %111 : vector<16x64xf32> to vector<1x16x64xf32>
    %121 = vector.broadcast %119 : vector<2x1x64xf32> to vector<2x16x64xf32>
    %122 = vector.broadcast %120 : vector<1x16x64xf32> to vector<2x16x64xf32>
    %123 = arith.mulf %121, %122 : vector<2x16x64xf32>
    %124 = math.exp %123 : vector<2x16x64xf32>
    %125 = vector.extract_strided_slice %114 {offsets = [0, 0, 0], sizes = [2, 1, 64], strides = [1, 1, 1]} : vector<2x8x64xf32> to vector<2x1x64xf32>
    %126 = vector.shape_cast %125 : vector<2x1x64xf32> to vector<2x64xf32>
    %127 = vector.shape_cast %126 : vector<2x64xf32> to vector<2x1x64xf32>
    %128 = vector.extract_strided_slice %115 {offsets = [0, 0, 0], sizes = [2, 1, 16], strides = [1, 1, 1]} : vector<2x8x16xf32> to vector<2x1x16xf32>
    %129 = vector.shape_cast %128 : vector<2x1x16xf32> to vector<2x16xf32>
    %130 = vector.shape_cast %129 : vector<2x16xf32> to vector<2x16x1xf32>
    %131 = vector.broadcast %127 : vector<2x1x64xf32> to vector<2x16x64xf32>
    %132 = vector.broadcast %130 : vector<2x16x1xf32> to vector<2x16x64xf32>
    %133 = arith.mulf %131, %132 : vector<2x16x64xf32>
    %134 = arith.mulf %116, %124 : vector<2x16x64xf32>
    %135 = arith.addf %134, %133 : vector<2x16x64xf32>
    %c0_67 = arith.constant 0 : index
    %c0_68 = arith.constant 0 : index
    %c0_69 = arith.constant 0 : index
    %c0_70 = arith.constant 0 : index
    %c0_71 = arith.constant 0 : index
    %136 = vector.load %arg4[%c0_67, %c0_68, %c0_69, %c0_70, %c0_71] : memref<2x2x8x16x64xf32, #tpu.memory_space<vmem>>, vector<1x2x1x16x64xf32>
    %137 = vector.shape_cast %136 : vector<1x2x1x16x64xf32> to vector<2x16x64xf32>
    %138 = vector.shape_cast %135 : vector<2x16x64xf32> to vector<1x2x1x16x64xf32>
    tpu.vector_store %arg4[%c0_67, %c0_68, %c0_69, %c0_70, %c0_71], %138 {strides = array<i32>} : memref<2x2x8x16x64xf32, #tpu.memory_space<vmem>>, vector<1x2x1x16x64xf32>,
    %139 = vector.extract_strided_slice %112 {offsets = [0, 1, 0], sizes = [2, 1, 64], strides = [1, 1, 1]} : vector<2x8x64xf32> to vector<2x1x64xf32>
    %140 = vector.shape_cast %139 : vector<2x1x64xf32> to vector<2x64xf32>
    %141 = vector.shape_cast %140 : vector<2x64xf32> to vector<2x1x64xf32>
    %142 = vector.shape_cast %111 : vector<16x64xf32> to vector<1x16x64xf32>
    %143 = vector.broadcast %141 : vector<2x1x64xf32> to vector<2x16x64xf32>
    %144 = vector.broadcast %142 : vector<1x16x64xf32> to vector<2x16x64xf32>
    %145 = arith.mulf %143, %144 : vector<2x16x64xf32>
    %146 = math.exp %145 : vector<2x16x64xf32>
    %147 = vector.extract_strided_slice %114 {offsets = [0, 1, 0], sizes = [2, 1, 64], strides = [1, 1, 1]} : vector<2x8x64xf32> to vector<2x1x64xf32>
    %148 = vector.shape_cast %147 : vector<2x1x64xf32> to vector<2x64xf32>
    %149 = vector.shape_cast %148 : vector<2x64xf32> to vector<2x1x64xf32>
    %150 = vector.extract_strided_slice %115 {offsets = [0, 1, 0], sizes = [2, 1, 16], strides = [1, 1, 1]} : vector<2x8x16xf32> to vector<2x1x16xf32>
    %151 = vector.shape_cast %150 : vector<2x1x16xf32> to vector<2x16xf32>
    %152 = vector.shape_cast %151 : vector<2x16xf32> to vector<2x16x1xf32>
    %153 = vector.broadcast %149 : vector<2x1x64xf32> to vector<2x16x64xf32>
    %154 = vector.broadcast %152 : vector<2x16x1xf32> to vector<2x16x64xf32>
    %155 = arith.mulf %153, %154 : vector<2x16x64xf32>
    %156 = arith.mulf %135, %146 : vector<2x16x64xf32>
    %157 = arith.addf %156, %155 : vector<2x16x64xf32>
    %c0_72 = arith.constant 0 : index
    %c0_73 = arith.constant 0 : index
    %c1 = arith.constant 1 : index
    %c0_74 = arith.constant 0 : index
    %c0_75 = arith.constant 0 : index
    %158 = vector.load %arg4[%c0_72, %c0_73, %c1, %c0_74, %c0_75] : memref<2x2x8x16x64xf32, #tpu.memory_space<vmem>>, vector<1x2x1x16x64xf32>
    %159 = vector.shape_cast %158 : vector<1x2x1x16x64xf32> to vector<2x16x64xf32>
    %160 = vector.shape_cast %157 : vector<2x16x64xf32> to vector<1x2x1x16x64xf32>
    tpu.vector_store %arg4[%c0_72, %c0_73, %c1, %c0_74, %c0_75], %160 {strides = array<i32>} : memref<2x2x8x16x64xf32, #tpu.memory_space<vmem>>, vector<1x2x1x16x64xf32>,
    %161 = vector.extract_strided_slice %112 {offsets = [0, 2, 0], sizes = [2, 1, 64], strides = [1, 1, 1]} : vector<2x8x64xf32> to vector<2x1x64xf32>
    %162 = vector.shape_cast %161 : vector<2x1x64xf32> to vector<2x64xf32>
    %163 = vector.shape_cast %162 : vector<2x64xf32> to vector<2x1x64xf32>
    %164 = vector.shape_cast %111 : vector<16x64xf32> to vector<1x16x64xf32>
    %165 = vector.broadcast %163 : vector<2x1x64xf32> to vector<2x16x64xf32>
    %166 = vector.broadcast %164 : vector<1x16x64xf32> to vector<2x16x64xf32>
    %167 = arith.mulf %165, %166 : vector<2x16x64xf32>
    %168 = math.exp %167 : vector<2x16x64xf32>
    %169 = vector.extract_strided_slice %114 {offsets = [0, 2, 0], sizes = [2, 1, 64], strides = [1, 1, 1]} : vector<2x8x64xf32> to vector<2x1x64xf32>
    %170 = vector.shape_cast %169 : vector<2x1x64xf32> to vector<2x64xf32>
    %171 = vector.shape_cast %170 : vector<2x64xf32> to vector<2x1x64xf32>
    %172 = vector.extract_strided_slice %115 {offsets = [0, 2, 0], sizes = [2, 1, 16], strides = [1, 1, 1]} : vector<2x8x16xf32> to vector<2x1x16xf32>
    %173 = vector.shape_cast %172 : vector<2x1x16xf32> to vector<2x16xf32>
    %174 = vector.shape_cast %173 : vector<2x16xf32> to vector<2x16x1xf32>
    %175 = vector.broadcast %171 : vector<2x1x64xf32> to vector<2x16x64xf32>
    %176 = vector.broadcast %174 : vector<2x16x1xf32> to vector<2x16x64xf32>
    %177 = arith.mulf %175, %176 : vector<2x16x64xf32>
    %178 = arith.mulf %157, %168 : vector<2x16x64xf32>
    %179 = arith.addf %178, %177 : vector<2x16x64xf32>
    %c0_76 = arith.constant 0 : index
    %c0_77 = arith.constant 0 : index
    %c2 = arith.constant 2 : index
    %c0_78 = arith.constant 0 : index
    %c0_79 = arith.constant 0 : index
    %180 = vector.load %arg4[%c0_76, %c0_77, %c2, %c0_78, %c0_79] : memref<2x2x8x16x64xf32, #tpu.memory_space<vmem>>, vector<1x2x1x16x64xf32>
    %181 = vector.shape_cast %180 : vector<1x2x1x16x64xf32> to vector<2x16x64xf32>
    %182 = vector.shape_cast %179 : vector<2x16x64xf32> to vector<1x2x1x16x64xf32>
    tpu.vector_store %arg4[%c0_76, %c0_77, %c2, %c0_78, %c0_79], %182 {strides = array<i32>} : memref<2x2x8x16x64xf32, #tpu.memory_space<vmem>>, vector<1x2x1x16x64xf32>,
    %183 = vector.extract_strided_slice %112 {offsets = [0, 3, 0], sizes = [2, 1, 64], strides = [1, 1, 1]} : vector<2x8x64xf32> to vector<2x1x64xf32>
    %184 = vector.shape_cast %183 : vector<2x1x64xf32> to vector<2x64xf32>
    %185 = vector.shape_cast %184 : vector<2x64xf32> to vector<2x1x64xf32>
    %186 = vector.shape_cast %111 : vector<16x64xf32> to vector<1x16x64xf32>
    %187 = vector.broadcast %185 : vector<2x1x64xf32> to vector<2x16x64xf32>
    %188 = vector.broadcast %186 : vector<1x16x64xf32> to vector<2x16x64xf32>
    %189 = arith.mulf %187, %188 : vector<2x16x64xf32>
    %190 = math.exp %189 : vector<2x16x64xf32>
    %191 = vector.extract_strided_slice %114 {offsets = [0, 3, 0], sizes = [2, 1, 64], strides = [1, 1, 1]} : vector<2x8x64xf32> to vector<2x1x64xf32>
    %192 = vector.shape_cast %191 : vector<2x1x64xf32> to vector<2x64xf32>
    %193 = vector.shape_cast %192 : vector<2x64xf32> to vector<2x1x64xf32>
    %194 = vector.extract_strided_slice %115 {offsets = [0, 3, 0], sizes = [2, 1, 16], strides = [1, 1, 1]} : vector<2x8x16xf32> to vector<2x1x16xf32>
    %195 = vector.shape_cast %194 : vector<2x1x16xf32> to vector<2x16xf32>
    %196 = vector.shape_cast %195 : vector<2x16xf32> to vector<2x16x1xf32>
    %197 = vector.broadcast %193 : vector<2x1x64xf32> to vector<2x16x64xf32>
    %198 = vector.broadcast %196 : vector<2x16x1xf32> to vector<2x16x64xf32>
    %199 = arith.mulf %197, %198 : vector<2x16x64xf32>
    %200 = arith.mulf %179, %190 : vector<2x16x64xf32>
    %201 = arith.addf %200, %199 : vector<2x16x64xf32>
    %c0_80 = arith.constant 0 : index
    %c0_81 = arith.constant 0 : index
    %c3 = arith.constant 3 : index
    %c0_82 = arith.constant 0 : index
    %c0_83 = arith.constant 0 : index
    %202 = vector.load %arg4[%c0_80, %c0_81, %c3, %c0_82, %c0_83] : memref<2x2x8x16x64xf32, #tpu.memory_space<vmem>>, vector<1x2x1x16x64xf32>
    %203 = vector.shape_cast %202 : vector<1x2x1x16x64xf32> to vector<2x16x64xf32>
    %204 = vector.shape_cast %201 : vector<2x16x64xf32> to vector<1x2x1x16x64xf32>
    tpu.vector_store %arg4[%c0_80, %c0_81, %c3, %c0_82, %c0_83], %204 {strides = array<i32>} : memref<2x2x8x16x64xf32, #tpu.memory_space<vmem>>, vector<1x2x1x16x64xf32>,
    %205 = vector.extract_strided_slice %112 {offsets = [0, 4, 0], sizes = [2, 1, 64], strides = [1, 1, 1]} : vector<2x8x64xf32> to vector<2x1x64xf32>
    %206 = vector.shape_cast %205 : vector<2x1x64xf32> to vector<2x64xf32>
    %207 = vector.shape_cast %206 : vector<2x64xf32> to vector<2x1x64xf32>
    %208 = vector.shape_cast %111 : vector<16x64xf32> to vector<1x16x64xf32>
    %209 = vector.broadcast %207 : vector<2x1x64xf32> to vector<2x16x64xf32>
    %210 = vector.broadcast %208 : vector<1x16x64xf32> to vector<2x16x64xf32>
    %211 = arith.mulf %209, %210 : vector<2x16x64xf32>
    %212 = math.exp %211 : vector<2x16x64xf32>
    %213 = vector.extract_strided_slice %114 {offsets = [0, 4, 0], sizes = [2, 1, 64], strides = [1, 1, 1]} : vector<2x8x64xf32> to vector<2x1x64xf32>
    %214 = vector.shape_cast %213 : vector<2x1x64xf32> to vector<2x64xf32>
    %215 = vector.shape_cast %214 : vector<2x64xf32> to vector<2x1x64xf32>
    %216 = vector.extract_strided_slice %115 {offsets = [0, 4, 0], sizes = [2, 1, 16], strides = [1, 1, 1]} : vector<2x8x16xf32> to vector<2x1x16xf32>
    %217 = vector.shape_cast %216 : vector<2x1x16xf32> to vector<2x16xf32>
    %218 = vector.shape_cast %217 : vector<2x16xf32> to vector<2x16x1xf32>
    %219 = vector.broadcast %215 : vector<2x1x64xf32> to vector<2x16x64xf32>
    %220 = vector.broadcast %218 : vector<2x16x1xf32> to vector<2x16x64xf32>
    %221 = arith.mulf %219, %220 : vector<2x16x64xf32>
    %222 = arith.mulf %201, %212 : vector<2x16x64xf32>
    %223 = arith.addf %222, %221 : vector<2x16x64xf32>
    %c0_84 = arith.constant 0 : index
    %c0_85 = arith.constant 0 : index
    %c4 = arith.constant 4 : index
    %c0_86 = arith.constant 0 : index
    %c0_87 = arith.constant 0 : index
    %224 = vector.load %arg4[%c0_84, %c0_85, %c4, %c0_86, %c0_87] : memref<2x2x8x16x64xf32, #tpu.memory_space<vmem>>, vector<1x2x1x16x64xf32>
    %225 = vector.shape_cast %224 : vector<1x2x1x16x64xf32> to vector<2x16x64xf32>
    %226 = vector.shape_cast %223 : vector<2x16x64xf32> to vector<1x2x1x16x64xf32>
    tpu.vector_store %arg4[%c0_84, %c0_85, %c4, %c0_86, %c0_87], %226 {strides = array<i32>} : memref<2x2x8x16x64xf32, #tpu.memory_space<vmem>>, vector<1x2x1x16x64xf32>,
    %227 = vector.extract_strided_slice %112 {offsets = [0, 5, 0], sizes = [2, 1, 64], strides = [1, 1, 1]} : vector<2x8x64xf32> to vector<2x1x64xf32>
    %228 = vector.shape_cast %227 : vector<2x1x64xf32> to vector<2x64xf32>
    %229 = vector.shape_cast %228 : vector<2x64xf32> to vector<2x1x64xf32>
    %230 = vector.shape_cast %111 : vector<16x64xf32> to vector<1x16x64xf32>
    %231 = vector.broadcast %229 : vector<2x1x64xf32> to vector<2x16x64xf32>
    %232 = vector.broadcast %230 : vector<1x16x64xf32> to vector<2x16x64xf32>
    %233 = arith.mulf %231, %232 : vector<2x16x64xf32>
    %234 = math.exp %233 : vector<2x16x64xf32>
    %235 = vector.extract_strided_slice %114 {offsets = [0, 5, 0], sizes = [2, 1, 64], strides = [1, 1, 1]} : vector<2x8x64xf32> to vector<2x1x64xf32>
    %236 = vector.shape_cast %235 : vector<2x1x64xf32> to vector<2x64xf32>
    %237 = vector.shape_cast %236 : vector<2x64xf32> to vector<2x1x64xf32>
    %238 = vector.extract_strided_slice %115 {offsets = [0, 5, 0], sizes = [2, 1, 16], strides = [1, 1, 1]} : vector<2x8x16xf32> to vector<2x1x16xf32>
    %239 = vector.shape_cast %238 : vector<2x1x16xf32> to vector<2x16xf32>
    %240 = vector.shape_cast %239 : vector<2x16xf32> to vector<2x16x1xf32>
    %241 = vector.broadcast %237 : vector<2x1x64xf32> to vector<2x16x64xf32>
    %242 = vector.broadcast %240 : vector<2x16x1xf32> to vector<2x16x64xf32>
    %243 = arith.mulf %241, %242 : vector<2x16x64xf32>
    %244 = arith.mulf %223, %234 : vector<2x16x64xf32>
    %245 = arith.addf %244, %243 : vector<2x16x64xf32>
    %c0_88 = arith.constant 0 : index
    %c0_89 = arith.constant 0 : index
    %c5 = arith.constant 5 : index
    %c0_90 = arith.constant 0 : index
    %c0_91 = arith.constant 0 : index
    %246 = vector.load %arg4[%c0_88, %c0_89, %c5, %c0_90, %c0_91] : memref<2x2x8x16x64xf32, #tpu.memory_space<vmem>>, vector<1x2x1x16x64xf32>
    %247 = vector.shape_cast %246 : vector<1x2x1x16x64xf32> to vector<2x16x64xf32>
    %248 = vector.shape_cast %245 : vector<2x16x64xf32> to vector<1x2x1x16x64xf32>
    tpu.vector_store %arg4[%c0_88, %c0_89, %c5, %c0_90, %c0_91], %248 {strides = array<i32>} : memref<2x2x8x16x64xf32, #tpu.memory_space<vmem>>, vector<1x2x1x16x64xf32>,
    %249 = vector.extract_strided_slice %112 {offsets = [0, 6, 0], sizes = [2, 1, 64], strides = [1, 1, 1]} : vector<2x8x64xf32> to vector<2x1x64xf32>
    %250 = vector.shape_cast %249 : vector<2x1x64xf32> to vector<2x64xf32>
    %251 = vector.shape_cast %250 : vector<2x64xf32> to vector<2x1x64xf32>
    %252 = vector.shape_cast %111 : vector<16x64xf32> to vector<1x16x64xf32>
    %253 = vector.broadcast %251 : vector<2x1x64xf32> to vector<2x16x64xf32>
    %254 = vector.broadcast %252 : vector<1x16x64xf32> to vector<2x16x64xf32>
    %255 = arith.mulf %253, %254 : vector<2x16x64xf32>
    %256 = math.exp %255 : vector<2x16x64xf32>
    %257 = vector.extract_strided_slice %114 {offsets = [0, 6, 0], sizes = [2, 1, 64], strides = [1, 1, 1]} : vector<2x8x64xf32> to vector<2x1x64xf32>
    %258 = vector.shape_cast %257 : vector<2x1x64xf32> to vector<2x64xf32>
    %259 = vector.shape_cast %258 : vector<2x64xf32> to vector<2x1x64xf32>
    %260 = vector.extract_strided_slice %115 {offsets = [0, 6, 0], sizes = [2, 1, 16], strides = [1, 1, 1]} : vector<2x8x16xf32> to vector<2x1x16xf32>
    %261 = vector.shape_cast %260 : vector<2x1x16xf32> to vector<2x16xf32>
    %262 = vector.shape_cast %261 : vector<2x16xf32> to vector<2x16x1xf32>
    %263 = vector.broadcast %259 : vector<2x1x64xf32> to vector<2x16x64xf32>
    %264 = vector.broadcast %262 : vector<2x16x1xf32> to vector<2x16x64xf32>
    %265 = arith.mulf %263, %264 : vector<2x16x64xf32>
    %266 = arith.mulf %245, %256 : vector<2x16x64xf32>
    %267 = arith.addf %266, %265 : vector<2x16x64xf32>
    %c0_92 = arith.constant 0 : index
    %c0_93 = arith.constant 0 : index
    %c6 = arith.constant 6 : index
    %c0_94 = arith.constant 0 : index
    %c0_95 = arith.constant 0 : index
    %268 = vector.load %arg4[%c0_92, %c0_93, %c6, %c0_94, %c0_95] : memref<2x2x8x16x64xf32, #tpu.memory_space<vmem>>, vector<1x2x1x16x64xf32>
    %269 = vector.shape_cast %268 : vector<1x2x1x16x64xf32> to vector<2x16x64xf32>
    %270 = vector.shape_cast %267 : vector<2x16x64xf32> to vector<1x2x1x16x64xf32>
    tpu.vector_store %arg4[%c0_92, %c0_93, %c6, %c0_94, %c0_95], %270 {strides = array<i32>} : memref<2x2x8x16x64xf32, #tpu.memory_space<vmem>>, vector<1x2x1x16x64xf32>,
    %271 = vector.extract_strided_slice %112 {offsets = [0, 7, 0], sizes = [2, 1, 64], strides = [1, 1, 1]} : vector<2x8x64xf32> to vector<2x1x64xf32>
    %272 = vector.shape_cast %271 : vector<2x1x64xf32> to vector<2x64xf32>
    %273 = vector.shape_cast %272 : vector<2x64xf32> to vector<2x1x64xf32>
    %274 = vector.shape_cast %111 : vector<16x64xf32> to vector<1x16x64xf32>
    %275 = vector.broadcast %273 : vector<2x1x64xf32> to vector<2x16x64xf32>
    %276 = vector.broadcast %274 : vector<1x16x64xf32> to vector<2x16x64xf32>
    %277 = arith.mulf %275, %276 : vector<2x16x64xf32>
    %278 = math.exp %277 : vector<2x16x64xf32>
    %279 = vector.extract_strided_slice %114 {offsets = [0, 7, 0], sizes = [2, 1, 64], strides = [1, 1, 1]} : vector<2x8x64xf32> to vector<2x1x64xf32>
    %280 = vector.shape_cast %279 : vector<2x1x64xf32> to vector<2x64xf32>
    %281 = vector.shape_cast %280 : vector<2x64xf32> to vector<2x1x64xf32>
    %282 = vector.extract_strided_slice %115 {offsets = [0, 7, 0], sizes = [2, 1, 16], strides = [1, 1, 1]} : vector<2x8x16xf32> to vector<2x1x16xf32>
    %283 = vector.shape_cast %282 : vector<2x1x16xf32> to vector<2x16xf32>
    %284 = vector.shape_cast %283 : vector<2x16xf32> to vector<2x16x1xf32>
    %285 = vector.broadcast %281 : vector<2x1x64xf32> to vector<2x16x64xf32>
    %286 = vector.broadcast %284 : vector<2x16x1xf32> to vector<2x16x64xf32>
    %287 = arith.mulf %285, %286 : vector<2x16x64xf32>
    %288 = arith.mulf %267, %278 : vector<2x16x64xf32>
    %289 = arith.addf %288, %287 : vector<2x16x64xf32>
    %c0_96 = arith.constant 0 : index
    %c0_97 = arith.constant 0 : index
    %c7 = arith.constant 7 : index
    %c0_98 = arith.constant 0 : index
    %c0_99 = arith.constant 0 : index
    %290 = vector.load %arg4[%c0_96, %c0_97, %c7, %c0_98, %c0_99] : memref<2x2x8x16x64xf32, #tpu.memory_space<vmem>>, vector<1x2x1x16x64xf32>
    %291 = vector.shape_cast %290 : vector<1x2x1x16x64xf32> to vector<2x16x64xf32>
    %292 = vector.shape_cast %289 : vector<2x16x64xf32> to vector<1x2x1x16x64xf32>
    tpu.vector_store %arg4[%c0_96, %c0_97, %c7, %c0_98, %c0_99], %292 {strides = array<i32>} : memref<2x2x8x16x64xf32, #tpu.memory_space<vmem>>, vector<1x2x1x16x64xf32>,
    %c0_100 = arith.constant 0 : index
    %c0_101 = arith.constant 0 : index
    %c0_102 = arith.constant 0 : index
    %c0_103 = arith.constant 0 : index
    %c0_104 = arith.constant 0 : index
    %293 = vector.load %arg4[%c0_100, %c0_101, %c0_102, %c0_103, %c0_104] : memref<2x2x8x16x64xf32, #tpu.memory_space<vmem>>, vector<1x2x8x16x64xf32>
    %294 = vector.shape_cast %293 : vector<1x2x8x16x64xf32> to vector<2x8x16x64xf32>
    %295 = vector.shape_cast %97 : vector<16x16xf32> to vector<16x16x1xf32>
    %296 = vector.shape_cast %295 : vector<16x16x1xf32> to vector<2x8x16x1xf32>
    %297 = vector.broadcast %296 : vector<2x8x16x1xf32> to vector<2x8x16x64xf32>
    %298 = arith.mulf %294, %297 : vector<2x8x16x64xf32>
    %cst_105 = arith.constant dense<0.000000e+00> : vector<2x8x64xf32>
    %299 = vector.multi_reduction <add>, %298, %cst_105 [2] : vector<2x8x16x64xf32> to vector<2x8x64xf32>
    %300 = vector.shape_cast %299 : vector<2x8x64xf32> to vector<16x64xf32>
    %301 = vector.broadcast %30 : vector<1x64xf32> to vector<16x64xf32>
    %302 = arith.mulf %94, %301 : vector<16x64xf32>
    %303 = arith.addf %300, %302 : vector<16x64xf32>
    %304 = math.absf %49 : vector<16x64xf32>
    %cst_106 = arith.constant 0.000000e+00 : f32
    %305 = vector.broadcast %cst_106 : f32 to vector<16x64xf32>
    %306 = arith.subf %305, %304 : vector<16x64xf32>
    %307 = math.exp %306 : vector<16x64xf32>
    %cst_107 = arith.constant 0.000000e+00 : f32
    %308 = vector.broadcast %cst_107 : f32 to vector<16x64xf32>
    %309 = arith.cmpf oge, %49, %308 : vector<16x64xf32>
    %cst_108 = arith.constant 1.000000e+00 : f32
    %310 = vector.broadcast %cst_108 : f32 to vector<16x64xf32>
    %311 = arith.addf %310, %307 : vector<16x64xf32>
    %cst_109 = arith.constant 1.000000e+00 : f32
    %312 = vector.broadcast %cst_109 : f32 to vector<16x64xf32>
    %313 = arith.divf %312, %311 : vector<16x64xf32>
    %cst_110 = arith.constant 1.000000e+00 : f32
    %314 = vector.broadcast %cst_110 : f32 to vector<16x64xf32>
    %315 = arith.addf %314, %307 : vector<16x64xf32>
    %316 = arith.divf %307, %315 : vector<16x64xf32>
    %317 = arith.select %309, %313, %316 : vector<16x64xi1>, vector<16x64xf32>
    %318 = arith.mulf %49, %317 : vector<16x64xf32>
    %319 = arith.mulf %303, %318 : vector<16x64xf32>
    %cst_111 = arith.constant dense<0.000000e+00> : vector<16x32xf32>
    %320 = tpu.matmul %319, %18, %cst_111 {dimension_numbers = #tpu.dot_dimension_numbers<[1], [1], [0], [0], [0, 0, 1, 0], [], []>} : vector<16x64xf32>, vector<32x64xf32>, vector<16x32xf32> -> vector<16x32xf32>
    %321 = arith.addf %2, %320 : vector<16x32xf32>
    %322 = vector.broadcast %8 : vector<1x32xf32> to vector<16x32xf32>
    %323 = arith.addf %321, %322 : vector<16x32xf32>
    %c0_112 = arith.constant 0 : index
    %c1_113 = arith.constant 1 : index
    %c0_114 = arith.constant 0 : index
    %c0_115 = arith.constant 0 : index
    %324 = vector.load %arg2[%c0_112, %c1_113, %c0_114, %c0_115] : memref<2x2x144x32xf32, #tpu.memory_space<vmem>>, vector<1x1x128x32xf32>
    %325 = vector.shape_cast %324 : vector<1x1x128x32xf32> to vector<128x32xf32>
    %c0_116 = arith.constant 0 : index
    %c1_117 = arith.constant 1 : index
    %c128_118 = arith.constant 128 : index
    %c0_119 = arith.constant 0 : index
    %326 = vector.load %arg2[%c0_116, %c1_117, %c128_118, %c0_119] : memref<2x2x144x32xf32, #tpu.memory_space<vmem>>, vector<1x1x1x32xf32>
    %327 = vector.shape_cast %326 : vector<1x1x1x32xf32> to vector<1x32xf32>
    %c0_120 = arith.constant 0 : index
    %c1_121 = arith.constant 1 : index
    %c136_122 = arith.constant 136 : index
    %c0_123 = arith.constant 0 : index
    %328 = vector.load %arg2[%c0_120, %c1_121, %c136_122, %c0_123] : memref<2x2x144x32xf32, #tpu.memory_space<vmem>>, vector<1x1x1x32xf32>
    %329 = vector.shape_cast %328 : vector<1x1x1x32xf32> to vector<1x32xf32>
    %c0_124 = arith.constant 0 : index
    %c1_125 = arith.constant 1 : index
    %c0_126 = arith.constant 0 : index
    %c0_127 = arith.constant 0 : index
    %330 = vector.load %arg1[%c0_124, %c1_125, %c0_126, %c0_127] : memref<2x2x136x64xf32, #tpu.memory_space<vmem>>, vector<1x1x8x64xf32>
    %331 = vector.shape_cast %330 : vector<1x1x8x64xf32> to vector<8x64xf32>
    %c0_128 = arith.constant 0 : index
    %c1_129 = arith.constant 1 : index
    %c8_130 = arith.constant 8 : index
    %c0_131 = arith.constant 0 : index
    %332 = vector.load %arg1[%c0_128, %c1_129, %c8_130, %c0_131] : memref<2x2x136x64xf32, #tpu.memory_space<vmem>>, vector<1x1x16x64xf32>
    %333 = vector.shape_cast %332 : vector<1x1x16x64xf32> to vector<16x64xf32>
    %c0_132 = arith.constant 0 : index
    %c1_133 = arith.constant 1 : index
    %c24_134 = arith.constant 24 : index
    %c0_135 = arith.constant 0 : index
    %334 = vector.load %arg1[%c0_132, %c1_133, %c24_134, %c0_135] : memref<2x2x136x64xf32, #tpu.memory_space<vmem>>, vector<1x1x16x64xf32>
    %335 = vector.shape_cast %334 : vector<1x1x16x64xf32> to vector<16x64xf32>
    %c0_136 = arith.constant 0 : index
    %c1_137 = arith.constant 1 : index
    %c40_138 = arith.constant 40 : index
    %c0_139 = arith.constant 0 : index
    %336 = vector.load %arg1[%c0_136, %c1_137, %c40_138, %c0_139] : memref<2x2x136x64xf32, #tpu.memory_space<vmem>>, vector<1x1x8x64xf32>
    %337 = vector.shape_cast %336 : vector<1x1x8x64xf32> to vector<8x64xf32>
    %c0_140 = arith.constant 0 : index
    %c1_141 = arith.constant 1 : index
    %c48_142 = arith.constant 48 : index
    %c0_143 = arith.constant 0 : index
    %338 = vector.load %arg1[%c0_140, %c1_141, %c48_142, %c0_143] : memref<2x2x136x64xf32, #tpu.memory_space<vmem>>, vector<1x1x32x64xf32>
    %339 = vector.shape_cast %338 : vector<1x1x32x64xf32> to vector<32x64xf32>
    %c0_144 = arith.constant 0 : index
    %c1_145 = arith.constant 1 : index
    %c80_146 = arith.constant 80 : index
    %c0_147 = arith.constant 0 : index
    %340 = vector.load %arg1[%c0_144, %c1_145, %c80_146, %c0_147] : memref<2x2x136x64xf32, #tpu.memory_space<vmem>>, vector<1x1x16x64xf32>
    %341 = vector.shape_cast %340 : vector<1x1x16x64xf32> to vector<16x64xf32>
    %c0_148 = arith.constant 0 : index
    %c1_149 = arith.constant 1 : index
    %c96_150 = arith.constant 96 : index
    %c0_151 = arith.constant 0 : index
    %342 = vector.load %arg1[%c0_148, %c1_149, %c96_150, %c0_151] : memref<2x2x136x64xf32, #tpu.memory_space<vmem>>, vector<1x1x4x64xf32>
    %343 = vector.shape_cast %342 : vector<1x1x4x64xf32> to vector<4x64xf32>
    %c0_152 = arith.constant 0 : index
    %c1_153 = arith.constant 1 : index
    %c104_154 = arith.constant 104 : index
    %c0_155 = arith.constant 0 : index
    %344 = vector.load %arg1[%c0_152, %c1_153, %c104_154, %c0_155] : memref<2x2x136x64xf32, #tpu.memory_space<vmem>>, vector<1x1x1x64xf32>
    %345 = vector.shape_cast %344 : vector<1x1x1x64xf32> to vector<1x64xf32>
    %c0_156 = arith.constant 0 : index
    %c1_157 = arith.constant 1 : index
    %c112_158 = arith.constant 112 : index
    %c0_159 = arith.constant 0 : index
    %346 = vector.load %arg1[%c0_156, %c1_157, %c112_158, %c0_159] : memref<2x2x136x64xf32, #tpu.memory_space<vmem>>, vector<1x1x1x64xf32>
    %347 = vector.shape_cast %346 : vector<1x1x1x64xf32> to vector<1x64xf32>
    %c0_160 = arith.constant 0 : index
    %c1_161 = arith.constant 1 : index
    %c120_162 = arith.constant 120 : index
    %c0_163 = arith.constant 0 : index
    %348 = vector.load %arg1[%c0_160, %c1_161, %c120_162, %c0_163] : memref<2x2x136x64xf32, #tpu.memory_space<vmem>>, vector<1x1x1x64xf32>
    %349 = vector.shape_cast %348 : vector<1x1x1x64xf32> to vector<1x64xf32>
    %c0_164 = arith.constant 0 : index
    %c1_165 = arith.constant 1 : index
    %c128_166 = arith.constant 128 : index
    %c0_167 = arith.constant 0 : index
    %350 = vector.load %arg1[%c0_164, %c1_165, %c128_166, %c0_167] : memref<2x2x136x64xf32, #tpu.memory_space<vmem>>, vector<1x1x1x64xf32>
    %351 = vector.shape_cast %350 : vector<1x1x1x64xf32> to vector<1x64xf32>
    %352 = arith.mulf %323, %323 : vector<16x32xf32>
    %cst_168 = arith.constant dense<0.000000e+00> : vector<16xf32>
    %353 = vector.multi_reduction <add>, %352, %cst_168 [1] : vector<16x32xf32> to vector<16xf32>
    %354 = vector.shape_cast %353 : vector<16xf32> to vector<16x1xf32>
    %cst_169 = arith.constant 3.200000e+01 : f32
    %355 = vector.broadcast %cst_169 : f32 to vector<16x1xf32>
    %356 = arith.divf %354, %355 : vector<16x1xf32>
    %cst_170 = arith.constant 9.99999974E-6 : f32
    %357 = vector.broadcast %cst_170 : f32 to vector<16x1xf32>
    %358 = arith.addf %356, %357 : vector<16x1xf32>
    %359 = math.rsqrt %358 : vector<16x1xf32>
    %360 = vector.broadcast %359 : vector<16x1xf32> to vector<16x32xf32>
    %361 = arith.mulf %323, %360 : vector<16x32xf32>
    %362 = vector.broadcast %327 : vector<1x32xf32> to vector<16x32xf32>
    %363 = arith.mulf %361, %362 : vector<16x32xf32>
    %cst_171 = arith.constant dense<0.000000e+00> : vector<16x128xf32>
    %364 = tpu.matmul %363, %325, %cst_171 {dimension_numbers = #tpu.dot_dimension_numbers<[1], [1], [0], [0], [0, 0, 1, 0], [], []>} : vector<16x32xf32>, vector<128x32xf32>, vector<16x128xf32> -> vector<16x128xf32>
    %365 = vector.extract_strided_slice %364 {offsets = [0, 0], sizes = [16, 64], strides = [1, 1]} : vector<16x128xf32> to vector<16x64xf32>
    %366 = vector.broadcast %345 : vector<1x64xf32> to vector<16x64xf32>
    %367 = arith.addf %365, %366 : vector<16x64xf32>
    %368 = vector.extract_strided_slice %364 {offsets = [0, 64], sizes = [16, 64], strides = [1, 1]} : vector<16x128xf32> to vector<16x64xf32>
    %369 = vector.broadcast %347 : vector<1x64xf32> to vector<16x64xf32>
    %370 = arith.addf %368, %369 : vector<16x64xf32>
    %371 = vector.shape_cast %367 : vector<16x64xf32> to vector<2x8x64xf32>
    %372 = vector.extract_strided_slice %343 {offsets = [3, 0], sizes = [1, 64], strides = [1, 1]} : vector<4x64xf32> to vector<1x64xf32>
    %373 = vector.shape_cast %372 : vector<1x64xf32> to vector<1x1x64xf32>
    %374 = vector.broadcast %373 : vector<1x1x64xf32> to vector<2x8x64xf32>
    %375 = arith.mulf %371, %374 : vector<2x8x64xf32>
    %cst_172 = arith.constant 0.000000e+00 : f32
    %376 = vector.broadcast %cst_172 : f32 to vector<2x3x64xf32>
    %377 = vector.extract_strided_slice %371 {offsets = [0, 0, 0], sizes = [2, 5, 64], strides = [1, 1, 1]} : vector<2x8x64xf32> to vector<2x5x64xf32>
    %378 = tpu.concatenate %376, %377 in 1 : vector<2x3x64xf32>, vector<2x5x64xf32> -> vector<2x8x64xf32>
    %379 = vector.extract_strided_slice %343 {offsets = [0, 0], sizes = [1, 64], strides = [1, 1]} : vector<4x64xf32> to vector<1x64xf32>
    %380 = vector.shape_cast %379 : vector<1x64xf32> to vector<1x1x64xf32>
    %381 = vector.broadcast %380 : vector<1x1x64xf32> to vector<2x8x64xf32>
    %382 = arith.mulf %378, %381 : vector<2x8x64xf32>
    %383 = arith.addf %375, %382 : vector<2x8x64xf32>
    %cst_173 = arith.constant 0.000000e+00 : f32
    %384 = vector.broadcast %cst_173 : f32 to vector<2x2x64xf32>
    %385 = vector.extract_strided_slice %371 {offsets = [0, 0, 0], sizes = [2, 6, 64], strides = [1, 1, 1]} : vector<2x8x64xf32> to vector<2x6x64xf32>
    %386 = tpu.concatenate %384, %385 in 1 : vector<2x2x64xf32>, vector<2x6x64xf32> -> vector<2x8x64xf32>
    %387 = vector.extract_strided_slice %343 {offsets = [1, 0], sizes = [1, 64], strides = [1, 1]} : vector<4x64xf32> to vector<1x64xf32>
    %388 = vector.shape_cast %387 : vector<1x64xf32> to vector<1x1x64xf32>
    %389 = vector.broadcast %388 : vector<1x1x64xf32> to vector<2x8x64xf32>
    %390 = arith.mulf %386, %389 : vector<2x8x64xf32>
    %391 = arith.addf %383, %390 : vector<2x8x64xf32>
    %cst_174 = arith.constant 0.000000e+00 : f32
    %392 = vector.broadcast %cst_174 : f32 to vector<2x1x64xf32>
    %393 = vector.extract_strided_slice %371 {offsets = [0, 0, 0], sizes = [2, 7, 64], strides = [1, 1, 1]} : vector<2x8x64xf32> to vector<2x7x64xf32>
    %394 = tpu.concatenate %392, %393 in 1 : vector<2x1x64xf32>, vector<2x7x64xf32> -> vector<2x8x64xf32>
    %395 = vector.extract_strided_slice %343 {offsets = [2, 0], sizes = [1, 64], strides = [1, 1]} : vector<4x64xf32> to vector<1x64xf32>
    %396 = vector.shape_cast %395 : vector<1x64xf32> to vector<1x1x64xf32>
    %397 = vector.broadcast %396 : vector<1x1x64xf32> to vector<2x8x64xf32>
    %398 = arith.mulf %394, %397 : vector<2x8x64xf32>
    %399 = arith.addf %391, %398 : vector<2x8x64xf32>
    %400 = math.absf %399 : vector<2x8x64xf32>
    %cst_175 = arith.constant 0.000000e+00 : f32
    %401 = vector.broadcast %cst_175 : f32 to vector<2x8x64xf32>
    %402 = arith.subf %401, %400 : vector<2x8x64xf32>
    %403 = math.exp %402 : vector<2x8x64xf32>
    %cst_176 = arith.constant 0.000000e+00 : f32
    %404 = vector.broadcast %cst_176 : f32 to vector<2x8x64xf32>
    %405 = arith.cmpf oge, %399, %404 : vector<2x8x64xf32>
    %cst_177 = arith.constant 1.000000e+00 : f32
    %406 = vector.broadcast %cst_177 : f32 to vector<2x8x64xf32>
    %407 = arith.addf %406, %403 : vector<2x8x64xf32>
    %cst_178 = arith.constant 1.000000e+00 : f32
    %408 = vector.broadcast %cst_178 : f32 to vector<2x8x64xf32>
    %409 = arith.divf %408, %407 : vector<2x8x64xf32>
    %cst_179 = arith.constant 1.000000e+00 : f32
    %410 = vector.broadcast %cst_179 : f32 to vector<2x8x64xf32>
    %411 = arith.addf %410, %403 : vector<2x8x64xf32>
    %412 = arith.divf %403, %411 : vector<2x8x64xf32>
    %413 = arith.select %405, %409, %412 : vector<2x8x64xi1>, vector<2x8x64xf32>
    %414 = arith.mulf %399, %413 : vector<2x8x64xf32>
    %415 = vector.shape_cast %414 : vector<2x8x64xf32> to vector<16x64xf32>
    %cst_180 = arith.constant dense<0.000000e+00> : vector<16x8xf32>
    %416 = tpu.matmul %415, %331, %cst_180 {dimension_numbers = #tpu.dot_dimension_numbers<[1], [1], [0], [0], [0, 0, 1, 0], [], []>} : vector<16x64xf32>, vector<8x64xf32>, vector<16x8xf32> -> vector<16x8xf32>
    %cst_181 = arith.constant dense<0.000000e+00> : vector<16x16xf32>
    %417 = tpu.matmul %415, %333, %cst_181 {dimension_numbers = #tpu.dot_dimension_numbers<[1], [1], [0], [0], [0, 0, 1, 0], [], []>} : vector<16x64xf32>, vector<16x64xf32>, vector<16x16xf32> -> vector<16x16xf32>
    %cst_182 = arith.constant dense<0.000000e+00> : vector<16x16xf32>
    %418 = tpu.matmul %415, %335, %cst_182 {dimension_numbers = #tpu.dot_dimension_numbers<[1], [1], [0], [0], [0, 0, 1, 0], [], []>} : vector<16x64xf32>, vector<16x64xf32>, vector<16x16xf32> -> vector<16x16xf32>
    %cst_183 = arith.constant dense<0.000000e+00> : vector<16x64xf32>
    %419 = tpu.matmul %416, %337, %cst_183 {dimension_numbers = #tpu.dot_dimension_numbers<[1], [0], [0], [1], [0, 0, 1, 1], [], []>} : vector<16x8xf32>, vector<8x64xf32>, vector<16x64xf32> -> vector<16x64xf32>
    %420 = vector.broadcast %349 : vector<1x64xf32> to vector<16x64xf32>
    %421 = arith.addf %419, %420 : vector<16x64xf32>
    %cst_184 = arith.constant 0.000000e+00 : f32
    %422 = vector.broadcast %cst_184 : f32 to vector<16x64xf32>
    %423 = arith.maximumf %421, %422 : vector<16x64xf32>
    %424 = math.absf %421 : vector<16x64xf32>
    %cst_185 = arith.constant 0.000000e+00 : f32
    %425 = vector.broadcast %cst_185 : f32 to vector<16x64xf32>
    %426 = arith.subf %425, %424 : vector<16x64xf32>
    %427 = math.exp %426 : vector<16x64xf32>
    %428 = math.log1p %427 : vector<16x64xf32>
    %429 = arith.addf %423, %428 : vector<16x64xf32>
    %430 = math.exp %341 : vector<16x64xf32>
    %cst_186 = arith.constant 0.000000e+00 : f32
    %431 = vector.broadcast %cst_186 : f32 to vector<16x64xf32>
    %432 = arith.subf %431, %430 : vector<16x64xf32>
    %433 = vector.shape_cast %429 : vector<16x64xf32> to vector<2x8x64xf32>
    %434 = arith.mulf %429, %415 : vector<16x64xf32>
    %435 = vector.shape_cast %434 : vector<16x64xf32> to vector<2x8x64xf32>
    %436 = vector.shape_cast %417 : vector<16x16xf32> to vector<2x8x16xf32>
    %cst_187 = arith.constant 0.000000e+00 : f32
    %437 = vector.broadcast %cst_187 : f32 to vector<2x16x64xf32>
    %438 = vector.extract_strided_slice %433 {offsets = [0, 0, 0], sizes = [2, 1, 64], strides = [1, 1, 1]} : vector<2x8x64xf32> to vector<2x1x64xf32>
    %439 = vector.shape_cast %438 : vector<2x1x64xf32> to vector<2x64xf32>
    %440 = vector.shape_cast %439 : vector<2x64xf32> to vector<2x1x64xf32>
    %441 = vector.shape_cast %432 : vector<16x64xf32> to vector<1x16x64xf32>
    %442 = vector.broadcast %440 : vector<2x1x64xf32> to vector<2x16x64xf32>
    %443 = vector.broadcast %441 : vector<1x16x64xf32> to vector<2x16x64xf32>
    %444 = arith.mulf %442, %443 : vector<2x16x64xf32>
    %445 = math.exp %444 : vector<2x16x64xf32>
    %446 = vector.extract_strided_slice %435 {offsets = [0, 0, 0], sizes = [2, 1, 64], strides = [1, 1, 1]} : vector<2x8x64xf32> to vector<2x1x64xf32>
    %447 = vector.shape_cast %446 : vector<2x1x64xf32> to vector<2x64xf32>
    %448 = vector.shape_cast %447 : vector<2x64xf32> to vector<2x1x64xf32>
    %449 = vector.extract_strided_slice %436 {offsets = [0, 0, 0], sizes = [2, 1, 16], strides = [1, 1, 1]} : vector<2x8x16xf32> to vector<2x1x16xf32>
    %450 = vector.shape_cast %449 : vector<2x1x16xf32> to vector<2x16xf32>
    %451 = vector.shape_cast %450 : vector<2x16xf32> to vector<2x16x1xf32>
    %452 = vector.broadcast %448 : vector<2x1x64xf32> to vector<2x16x64xf32>
    %453 = vector.broadcast %451 : vector<2x16x1xf32> to vector<2x16x64xf32>
    %454 = arith.mulf %452, %453 : vector<2x16x64xf32>
    %455 = arith.mulf %437, %445 : vector<2x16x64xf32>
    %456 = arith.addf %455, %454 : vector<2x16x64xf32>
    %c0_188 = arith.constant 0 : index
    %c0_189 = arith.constant 0 : index
    %c0_190 = arith.constant 0 : index
    %c0_191 = arith.constant 0 : index
    %c0_192 = arith.constant 0 : index
    %457 = vector.load %arg4[%c0_188, %c0_189, %c0_190, %c0_191, %c0_192] : memref<2x2x8x16x64xf32, #tpu.memory_space<vmem>>, vector<1x2x1x16x64xf32>
    %458 = vector.shape_cast %457 : vector<1x2x1x16x64xf32> to vector<2x16x64xf32>
    %459 = vector.shape_cast %456 : vector<2x16x64xf32> to vector<1x2x1x16x64xf32>
    tpu.vector_store %arg4[%c0_188, %c0_189, %c0_190, %c0_191, %c0_192], %459 {strides = array<i32>} : memref<2x2x8x16x64xf32, #tpu.memory_space<vmem>>, vector<1x2x1x16x64xf32>,
    %460 = vector.extract_strided_slice %433 {offsets = [0, 1, 0], sizes = [2, 1, 64], strides = [1, 1, 1]} : vector<2x8x64xf32> to vector<2x1x64xf32>
    %461 = vector.shape_cast %460 : vector<2x1x64xf32> to vector<2x64xf32>
    %462 = vector.shape_cast %461 : vector<2x64xf32> to vector<2x1x64xf32>
    %463 = vector.shape_cast %432 : vector<16x64xf32> to vector<1x16x64xf32>
    %464 = vector.broadcast %462 : vector<2x1x64xf32> to vector<2x16x64xf32>
    %465 = vector.broadcast %463 : vector<1x16x64xf32> to vector<2x16x64xf32>
    %466 = arith.mulf %464, %465 : vector<2x16x64xf32>
    %467 = math.exp %466 : vector<2x16x64xf32>
    %468 = vector.extract_strided_slice %435 {offsets = [0, 1, 0], sizes = [2, 1, 64], strides = [1, 1, 1]} : vector<2x8x64xf32> to vector<2x1x64xf32>
    %469 = vector.shape_cast %468 : vector<2x1x64xf32> to vector<2x64xf32>
    %470 = vector.shape_cast %469 : vector<2x64xf32> to vector<2x1x64xf32>
    %471 = vector.extract_strided_slice %436 {offsets = [0, 1, 0], sizes = [2, 1, 16], strides = [1, 1, 1]} : vector<2x8x16xf32> to vector<2x1x16xf32>
    %472 = vector.shape_cast %471 : vector<2x1x16xf32> to vector<2x16xf32>
    %473 = vector.shape_cast %472 : vector<2x16xf32> to vector<2x16x1xf32>
    %474 = vector.broadcast %470 : vector<2x1x64xf32> to vector<2x16x64xf32>
    %475 = vector.broadcast %473 : vector<2x16x1xf32> to vector<2x16x64xf32>
    %476 = arith.mulf %474, %475 : vector<2x16x64xf32>
    %477 = arith.mulf %456, %467 : vector<2x16x64xf32>
    %478 = arith.addf %477, %476 : vector<2x16x64xf32>
    %c0_193 = arith.constant 0 : index
    %c0_194 = arith.constant 0 : index
    %c1_195 = arith.constant 1 : index
    %c0_196 = arith.constant 0 : index
    %c0_197 = arith.constant 0 : index
    %479 = vector.load %arg4[%c0_193, %c0_194, %c1_195, %c0_196, %c0_197] : memref<2x2x8x16x64xf32, #tpu.memory_space<vmem>>, vector<1x2x1x16x64xf32>
    %480 = vector.shape_cast %479 : vector<1x2x1x16x64xf32> to vector<2x16x64xf32>
    %481 = vector.shape_cast %478 : vector<2x16x64xf32> to vector<1x2x1x16x64xf32>
    tpu.vector_store %arg4[%c0_193, %c0_194, %c1_195, %c0_196, %c0_197], %481 {strides = array<i32>} : memref<2x2x8x16x64xf32, #tpu.memory_space<vmem>>, vector<1x2x1x16x64xf32>,
    %482 = vector.extract_strided_slice %433 {offsets = [0, 2, 0], sizes = [2, 1, 64], strides = [1, 1, 1]} : vector<2x8x64xf32> to vector<2x1x64xf32>
    %483 = vector.shape_cast %482 : vector<2x1x64xf32> to vector<2x64xf32>
    %484 = vector.shape_cast %483 : vector<2x64xf32> to vector<2x1x64xf32>
    %485 = vector.shape_cast %432 : vector<16x64xf32> to vector<1x16x64xf32>
    %486 = vector.broadcast %484 : vector<2x1x64xf32> to vector<2x16x64xf32>
    %487 = vector.broadcast %485 : vector<1x16x64xf32> to vector<2x16x64xf32>
    %488 = arith.mulf %486, %487 : vector<2x16x64xf32>
    %489 = math.exp %488 : vector<2x16x64xf32>
    %490 = vector.extract_strided_slice %435 {offsets = [0, 2, 0], sizes = [2, 1, 64], strides = [1, 1, 1]} : vector<2x8x64xf32> to vector<2x1x64xf32>
    %491 = vector.shape_cast %490 : vector<2x1x64xf32> to vector<2x64xf32>
    %492 = vector.shape_cast %491 : vector<2x64xf32> to vector<2x1x64xf32>
    %493 = vector.extract_strided_slice %436 {offsets = [0, 2, 0], sizes = [2, 1, 16], strides = [1, 1, 1]} : vector<2x8x16xf32> to vector<2x1x16xf32>
    %494 = vector.shape_cast %493 : vector<2x1x16xf32> to vector<2x16xf32>
    %495 = vector.shape_cast %494 : vector<2x16xf32> to vector<2x16x1xf32>
    %496 = vector.broadcast %492 : vector<2x1x64xf32> to vector<2x16x64xf32>
    %497 = vector.broadcast %495 : vector<2x16x1xf32> to vector<2x16x64xf32>
    %498 = arith.mulf %496, %497 : vector<2x16x64xf32>
    %499 = arith.mulf %478, %489 : vector<2x16x64xf32>
    %500 = arith.addf %499, %498 : vector<2x16x64xf32>
    %c0_198 = arith.constant 0 : index
    %c0_199 = arith.constant 0 : index
    %c2_200 = arith.constant 2 : index
    %c0_201 = arith.constant 0 : index
    %c0_202 = arith.constant 0 : index
    %501 = vector.load %arg4[%c0_198, %c0_199, %c2_200, %c0_201, %c0_202] : memref<2x2x8x16x64xf32, #tpu.memory_space<vmem>>, vector<1x2x1x16x64xf32>
    %502 = vector.shape_cast %501 : vector<1x2x1x16x64xf32> to vector<2x16x64xf32>
    %503 = vector.shape_cast %500 : vector<2x16x64xf32> to vector<1x2x1x16x64xf32>
    tpu.vector_store %arg4[%c0_198, %c0_199, %c2_200, %c0_201, %c0_202], %503 {strides = array<i32>} : memref<2x2x8x16x64xf32, #tpu.memory_space<vmem>>, vector<1x2x1x16x64xf32>,
    %504 = vector.extract_strided_slice %433 {offsets = [0, 3, 0], sizes = [2, 1, 64], strides = [1, 1, 1]} : vector<2x8x64xf32> to vector<2x1x64xf32>
    %505 = vector.shape_cast %504 : vector<2x1x64xf32> to vector<2x64xf32>
    %506 = vector.shape_cast %505 : vector<2x64xf32> to vector<2x1x64xf32>
    %507 = vector.shape_cast %432 : vector<16x64xf32> to vector<1x16x64xf32>
    %508 = vector.broadcast %506 : vector<2x1x64xf32> to vector<2x16x64xf32>
    %509 = vector.broadcast %507 : vector<1x16x64xf32> to vector<2x16x64xf32>
    %510 = arith.mulf %508, %509 : vector<2x16x64xf32>
    %511 = math.exp %510 : vector<2x16x64xf32>
    %512 = vector.extract_strided_slice %435 {offsets = [0, 3, 0], sizes = [2, 1, 64], strides = [1, 1, 1]} : vector<2x8x64xf32> to vector<2x1x64xf32>
    %513 = vector.shape_cast %512 : vector<2x1x64xf32> to vector<2x64xf32>
    %514 = vector.shape_cast %513 : vector<2x64xf32> to vector<2x1x64xf32>
    %515 = vector.extract_strided_slice %436 {offsets = [0, 3, 0], sizes = [2, 1, 16], strides = [1, 1, 1]} : vector<2x8x16xf32> to vector<2x1x16xf32>
    %516 = vector.shape_cast %515 : vector<2x1x16xf32> to vector<2x16xf32>
    %517 = vector.shape_cast %516 : vector<2x16xf32> to vector<2x16x1xf32>
    %518 = vector.broadcast %514 : vector<2x1x64xf32> to vector<2x16x64xf32>
    %519 = vector.broadcast %517 : vector<2x16x1xf32> to vector<2x16x64xf32>
    %520 = arith.mulf %518, %519 : vector<2x16x64xf32>
    %521 = arith.mulf %500, %511 : vector<2x16x64xf32>
    %522 = arith.addf %521, %520 : vector<2x16x64xf32>
    %c0_203 = arith.constant 0 : index
    %c0_204 = arith.constant 0 : index
    %c3_205 = arith.constant 3 : index
    %c0_206 = arith.constant 0 : index
    %c0_207 = arith.constant 0 : index
    %523 = vector.load %arg4[%c0_203, %c0_204, %c3_205, %c0_206, %c0_207] : memref<2x2x8x16x64xf32, #tpu.memory_space<vmem>>, vector<1x2x1x16x64xf32>
    %524 = vector.shape_cast %523 : vector<1x2x1x16x64xf32> to vector<2x16x64xf32>
    %525 = vector.shape_cast %522 : vector<2x16x64xf32> to vector<1x2x1x16x64xf32>
    tpu.vector_store %arg4[%c0_203, %c0_204, %c3_205, %c0_206, %c0_207], %525 {strides = array<i32>} : memref<2x2x8x16x64xf32, #tpu.memory_space<vmem>>, vector<1x2x1x16x64xf32>,
    %526 = vector.extract_strided_slice %433 {offsets = [0, 4, 0], sizes = [2, 1, 64], strides = [1, 1, 1]} : vector<2x8x64xf32> to vector<2x1x64xf32>
    %527 = vector.shape_cast %526 : vector<2x1x64xf32> to vector<2x64xf32>
    %528 = vector.shape_cast %527 : vector<2x64xf32> to vector<2x1x64xf32>
    %529 = vector.shape_cast %432 : vector<16x64xf32> to vector<1x16x64xf32>
    %530 = vector.broadcast %528 : vector<2x1x64xf32> to vector<2x16x64xf32>
    %531 = vector.broadcast %529 : vector<1x16x64xf32> to vector<2x16x64xf32>
    %532 = arith.mulf %530, %531 : vector<2x16x64xf32>
    %533 = math.exp %532 : vector<2x16x64xf32>
    %534 = vector.extract_strided_slice %435 {offsets = [0, 4, 0], sizes = [2, 1, 64], strides = [1, 1, 1]} : vector<2x8x64xf32> to vector<2x1x64xf32>
    %535 = vector.shape_cast %534 : vector<2x1x64xf32> to vector<2x64xf32>
    %536 = vector.shape_cast %535 : vector<2x64xf32> to vector<2x1x64xf32>
    %537 = vector.extract_strided_slice %436 {offsets = [0, 4, 0], sizes = [2, 1, 16], strides = [1, 1, 1]} : vector<2x8x16xf32> to vector<2x1x16xf32>
    %538 = vector.shape_cast %537 : vector<2x1x16xf32> to vector<2x16xf32>
    %539 = vector.shape_cast %538 : vector<2x16xf32> to vector<2x16x1xf32>
    %540 = vector.broadcast %536 : vector<2x1x64xf32> to vector<2x16x64xf32>
    %541 = vector.broadcast %539 : vector<2x16x1xf32> to vector<2x16x64xf32>
    %542 = arith.mulf %540, %541 : vector<2x16x64xf32>
    %543 = arith.mulf %522, %533 : vector<2x16x64xf32>
    %544 = arith.addf %543, %542 : vector<2x16x64xf32>
    %c0_208 = arith.constant 0 : index
    %c0_209 = arith.constant 0 : index
    %c4_210 = arith.constant 4 : index
    %c0_211 = arith.constant 0 : index
    %c0_212 = arith.constant 0 : index
    %545 = vector.load %arg4[%c0_208, %c0_209, %c4_210, %c0_211, %c0_212] : memref<2x2x8x16x64xf32, #tpu.memory_space<vmem>>, vector<1x2x1x16x64xf32>
    %546 = vector.shape_cast %545 : vector<1x2x1x16x64xf32> to vector<2x16x64xf32>
    %547 = vector.shape_cast %544 : vector<2x16x64xf32> to vector<1x2x1x16x64xf32>
    tpu.vector_store %arg4[%c0_208, %c0_209, %c4_210, %c0_211, %c0_212], %547 {strides = array<i32>} : memref<2x2x8x16x64xf32, #tpu.memory_space<vmem>>, vector<1x2x1x16x64xf32>,
    %548 = vector.extract_strided_slice %433 {offsets = [0, 5, 0], sizes = [2, 1, 64], strides = [1, 1, 1]} : vector<2x8x64xf32> to vector<2x1x64xf32>
    %549 = vector.shape_cast %548 : vector<2x1x64xf32> to vector<2x64xf32>
    %550 = vector.shape_cast %549 : vector<2x64xf32> to vector<2x1x64xf32>
    %551 = vector.shape_cast %432 : vector<16x64xf32> to vector<1x16x64xf32>
    %552 = vector.broadcast %550 : vector<2x1x64xf32> to vector<2x16x64xf32>
    %553 = vector.broadcast %551 : vector<1x16x64xf32> to vector<2x16x64xf32>
    %554 = arith.mulf %552, %553 : vector<2x16x64xf32>
    %555 = math.exp %554 : vector<2x16x64xf32>
    %556 = vector.extract_strided_slice %435 {offsets = [0, 5, 0], sizes = [2, 1, 64], strides = [1, 1, 1]} : vector<2x8x64xf32> to vector<2x1x64xf32>
    %557 = vector.shape_cast %556 : vector<2x1x64xf32> to vector<2x64xf32>
    %558 = vector.shape_cast %557 : vector<2x64xf32> to vector<2x1x64xf32>
    %559 = vector.extract_strided_slice %436 {offsets = [0, 5, 0], sizes = [2, 1, 16], strides = [1, 1, 1]} : vector<2x8x16xf32> to vector<2x1x16xf32>
    %560 = vector.shape_cast %559 : vector<2x1x16xf32> to vector<2x16xf32>
    %561 = vector.shape_cast %560 : vector<2x16xf32> to vector<2x16x1xf32>
    %562 = vector.broadcast %558 : vector<2x1x64xf32> to vector<2x16x64xf32>
    %563 = vector.broadcast %561 : vector<2x16x1xf32> to vector<2x16x64xf32>
    %564 = arith.mulf %562, %563 : vector<2x16x64xf32>
    %565 = arith.mulf %544, %555 : vector<2x16x64xf32>
    %566 = arith.addf %565, %564 : vector<2x16x64xf32>
    %c0_213 = arith.constant 0 : index
    %c0_214 = arith.constant 0 : index
    %c5_215 = arith.constant 5 : index
    %c0_216 = arith.constant 0 : index
    %c0_217 = arith.constant 0 : index
    %567 = vector.load %arg4[%c0_213, %c0_214, %c5_215, %c0_216, %c0_217] : memref<2x2x8x16x64xf32, #tpu.memory_space<vmem>>, vector<1x2x1x16x64xf32>
    %568 = vector.shape_cast %567 : vector<1x2x1x16x64xf32> to vector<2x16x64xf32>
    %569 = vector.shape_cast %566 : vector<2x16x64xf32> to vector<1x2x1x16x64xf32>
    tpu.vector_store %arg4[%c0_213, %c0_214, %c5_215, %c0_216, %c0_217], %569 {strides = array<i32>} : memref<2x2x8x16x64xf32, #tpu.memory_space<vmem>>, vector<1x2x1x16x64xf32>,
    %570 = vector.extract_strided_slice %433 {offsets = [0, 6, 0], sizes = [2, 1, 64], strides = [1, 1, 1]} : vector<2x8x64xf32> to vector<2x1x64xf32>
    %571 = vector.shape_cast %570 : vector<2x1x64xf32> to vector<2x64xf32>
    %572 = vector.shape_cast %571 : vector<2x64xf32> to vector<2x1x64xf32>
    %573 = vector.shape_cast %432 : vector<16x64xf32> to vector<1x16x64xf32>
    %574 = vector.broadcast %572 : vector<2x1x64xf32> to vector<2x16x64xf32>
    %575 = vector.broadcast %573 : vector<1x16x64xf32> to vector<2x16x64xf32>
    %576 = arith.mulf %574, %575 : vector<2x16x64xf32>
    %577 = math.exp %576 : vector<2x16x64xf32>
    %578 = vector.extract_strided_slice %435 {offsets = [0, 6, 0], sizes = [2, 1, 64], strides = [1, 1, 1]} : vector<2x8x64xf32> to vector<2x1x64xf32>
    %579 = vector.shape_cast %578 : vector<2x1x64xf32> to vector<2x64xf32>
    %580 = vector.shape_cast %579 : vector<2x64xf32> to vector<2x1x64xf32>
    %581 = vector.extract_strided_slice %436 {offsets = [0, 6, 0], sizes = [2, 1, 16], strides = [1, 1, 1]} : vector<2x8x16xf32> to vector<2x1x16xf32>
    %582 = vector.shape_cast %581 : vector<2x1x16xf32> to vector<2x16xf32>
    %583 = vector.shape_cast %582 : vector<2x16xf32> to vector<2x16x1xf32>
    %584 = vector.broadcast %580 : vector<2x1x64xf32> to vector<2x16x64xf32>
    %585 = vector.broadcast %583 : vector<2x16x1xf32> to vector<2x16x64xf32>
    %586 = arith.mulf %584, %585 : vector<2x16x64xf32>
    %587 = arith.mulf %566, %577 : vector<2x16x64xf32>
    %588 = arith.addf %587, %586 : vector<2x16x64xf32>
    %c0_218 = arith.constant 0 : index
    %c0_219 = arith.constant 0 : index
    %c6_220 = arith.constant 6 : index
    %c0_221 = arith.constant 0 : index
    %c0_222 = arith.constant 0 : index
    %589 = vector.load %arg4[%c0_218, %c0_219, %c6_220, %c0_221, %c0_222] : memref<2x2x8x16x64xf32, #tpu.memory_space<vmem>>, vector<1x2x1x16x64xf32>
    %590 = vector.shape_cast %589 : vector<1x2x1x16x64xf32> to vector<2x16x64xf32>
    %591 = vector.shape_cast %588 : vector<2x16x64xf32> to vector<1x2x1x16x64xf32>
    tpu.vector_store %arg4[%c0_218, %c0_219, %c6_220, %c0_221, %c0_222], %591 {strides = array<i32>} : memref<2x2x8x16x64xf32, #tpu.memory_space<vmem>>, vector<1x2x1x16x64xf32>,
    %592 = vector.extract_strided_slice %433 {offsets = [0, 7, 0], sizes = [2, 1, 64], strides = [1, 1, 1]} : vector<2x8x64xf32> to vector<2x1x64xf32>
    %593 = vector.shape_cast %592 : vector<2x1x64xf32> to vector<2x64xf32>
    %594 = vector.shape_cast %593 : vector<2x64xf32> to vector<2x1x64xf32>
    %595 = vector.shape_cast %432 : vector<16x64xf32> to vector<1x16x64xf32>
    %596 = vector.broadcast %594 : vector<2x1x64xf32> to vector<2x16x64xf32>
    %597 = vector.broadcast %595 : vector<1x16x64xf32> to vector<2x16x64xf32>
    %598 = arith.mulf %596, %597 : vector<2x16x64xf32>
    %599 = math.exp %598 : vector<2x16x64xf32>
    %600 = vector.extract_strided_slice %435 {offsets = [0, 7, 0], sizes = [2, 1, 64], strides = [1, 1, 1]} : vector<2x8x64xf32> to vector<2x1x64xf32>
    %601 = vector.shape_cast %600 : vector<2x1x64xf32> to vector<2x64xf32>
    %602 = vector.shape_cast %601 : vector<2x64xf32> to vector<2x1x64xf32>
    %603 = vector.extract_strided_slice %436 {offsets = [0, 7, 0], sizes = [2, 1, 16], strides = [1, 1, 1]} : vector<2x8x16xf32> to vector<2x1x16xf32>
    %604 = vector.shape_cast %603 : vector<2x1x16xf32> to vector<2x16xf32>
    %605 = vector.shape_cast %604 : vector<2x16xf32> to vector<2x16x1xf32>
    %606 = vector.broadcast %602 : vector<2x1x64xf32> to vector<2x16x64xf32>
    %607 = vector.broadcast %605 : vector<2x16x1xf32> to vector<2x16x64xf32>
    %608 = arith.mulf %606, %607 : vector<2x16x64xf32>
    %609 = arith.mulf %588, %599 : vector<2x16x64xf32>
    %610 = arith.addf %609, %608 : vector<2x16x64xf32>
    %c0_223 = arith.constant 0 : index
    %c0_224 = arith.constant 0 : index
    %c7_225 = arith.constant 7 : index
    %c0_226 = arith.constant 0 : index
    %c0_227 = arith.constant 0 : index
    %611 = vector.load %arg4[%c0_223, %c0_224, %c7_225, %c0_226, %c0_227] : memref<2x2x8x16x64xf32, #tpu.memory_space<vmem>>, vector<1x2x1x16x64xf32>
    %612 = vector.shape_cast %611 : vector<1x2x1x16x64xf32> to vector<2x16x64xf32>
    %613 = vector.shape_cast %610 : vector<2x16x64xf32> to vector<1x2x1x16x64xf32>
    tpu.vector_store %arg4[%c0_223, %c0_224, %c7_225, %c0_226, %c0_227], %613 {strides = array<i32>} : memref<2x2x8x16x64xf32, #tpu.memory_space<vmem>>, vector<1x2x1x16x64xf32>,
    %c0_228 = arith.constant 0 : index
    %c0_229 = arith.constant 0 : index
    %c0_230 = arith.constant 0 : index
    %c0_231 = arith.constant 0 : index
    %c0_232 = arith.constant 0 : index
    %614 = vector.load %arg4[%c0_228, %c0_229, %c0_230, %c0_231, %c0_232] : memref<2x2x8x16x64xf32, #tpu.memory_space<vmem>>, vector<1x2x8x16x64xf32>
    %615 = vector.shape_cast %614 : vector<1x2x8x16x64xf32> to vector<2x8x16x64xf32>
    %616 = vector.shape_cast %418 : vector<16x16xf32> to vector<16x16x1xf32>
    %617 = vector.shape_cast %616 : vector<16x16x1xf32> to vector<2x8x16x1xf32>
    %618 = vector.broadcast %617 : vector<2x8x16x1xf32> to vector<2x8x16x64xf32>
    %619 = arith.mulf %615, %618 : vector<2x8x16x64xf32>
    %cst_233 = arith.constant dense<0.000000e+00> : vector<2x8x64xf32>
    %620 = vector.multi_reduction <add>, %619, %cst_233 [2] : vector<2x8x16x64xf32> to vector<2x8x64xf32>
    %621 = vector.shape_cast %620 : vector<2x8x64xf32> to vector<16x64xf32>
    %622 = vector.broadcast %351 : vector<1x64xf32> to vector<16x64xf32>
    %623 = arith.mulf %415, %622 : vector<16x64xf32>
    %624 = arith.addf %621, %623 : vector<16x64xf32>
    %625 = math.absf %370 : vector<16x64xf32>
    %cst_234 = arith.constant 0.000000e+00 : f32
    %626 = vector.broadcast %cst_234 : f32 to vector<16x64xf32>
    %627 = arith.subf %626, %625 : vector<16x64xf32>
    %628 = math.exp %627 : vector<16x64xf32>
    %cst_235 = arith.constant 0.000000e+00 : f32
    %629 = vector.broadcast %cst_235 : f32 to vector<16x64xf32>
    %630 = arith.cmpf oge, %370, %629 : vector<16x64xf32>
    %cst_236 = arith.constant 1.000000e+00 : f32
    %631 = vector.broadcast %cst_236 : f32 to vector<16x64xf32>
    %632 = arith.addf %631, %628 : vector<16x64xf32>
    %cst_237 = arith.constant 1.000000e+00 : f32
    %633 = vector.broadcast %cst_237 : f32 to vector<16x64xf32>
    %634 = arith.divf %633, %632 : vector<16x64xf32>
    %cst_238 = arith.constant 1.000000e+00 : f32
    %635 = vector.broadcast %cst_238 : f32 to vector<16x64xf32>
    %636 = arith.addf %635, %628 : vector<16x64xf32>
    %637 = arith.divf %628, %636 : vector<16x64xf32>
    %638 = arith.select %630, %634, %637 : vector<16x64xi1>, vector<16x64xf32>
    %639 = arith.mulf %370, %638 : vector<16x64xf32>
    %640 = arith.mulf %624, %639 : vector<16x64xf32>
    %cst_239 = arith.constant dense<0.000000e+00> : vector<16x32xf32>
    %641 = tpu.matmul %640, %339, %cst_239 {dimension_numbers = #tpu.dot_dimension_numbers<[1], [1], [0], [0], [0, 0, 1, 0], [], []>} : vector<16x64xf32>, vector<32x64xf32>, vector<16x32xf32> -> vector<16x32xf32>
    %642 = arith.addf %323, %641 : vector<16x32xf32>
    %643 = vector.broadcast %329 : vector<1x32xf32> to vector<16x32xf32>
    %644 = arith.addf %642, %643 : vector<16x32xf32>
    %645 = vector.shape_cast %644 : vector<16x32xf32> to vector<2x8x32xf32>
    %c0_240 = arith.constant 0 : index
    %c0_241 = arith.constant 0 : index
    %c0_242 = arith.constant 0 : index
    %c0_243 = arith.constant 0 : index
    %646 = vector.load %arg3[%c0_240, %c0_241, %c0_242, %c0_243] : memref<2x2x8x32xf32, #tpu.memory_space<vmem>>, vector<1x2x8x32xf32>
    %647 = vector.shape_cast %646 : vector<1x2x8x32xf32> to vector<2x8x32xf32>
    %648 = vector.shape_cast %645 : vector<2x8x32xf32> to vector<1x2x8x32xf32>
    tpu.vector_store %arg3[%c0_240, %c0_241, %c0_242, %c0_243], %648 {strides = array<i32>} : memref<2x2x8x32xf32, #tpu.memory_space<vmem>>, vector<1x2x8x32xf32>,
    %c1_244 = arith.constant 1 : index
    %c0_245 = arith.constant 0 : index
    %c0_246 = arith.constant 0 : index
    %c0_247 = arith.constant 0 : index
    %649 = vector.load %arg0[%c1_244, %c0_245, %c0_246, %c0_247] : memref<2x2x8x32xf32, #tpu.memory_space<vmem>>, vector<1x2x8x32xf32>
    %650 = vector.shape_cast %649 : vector<1x2x8x32xf32> to vector<2x8x32xf32>
    %651 = vector.shape_cast %650 : vector<2x8x32xf32> to vector<16x32xf32>
    %c1_248 = arith.constant 1 : index
    %c0_249 = arith.constant 0 : index
    %c0_250 = arith.constant 0 : index
    %c0_251 = arith.constant 0 : index
    %652 = vector.load %arg2[%c1_248, %c0_249, %c0_250, %c0_251] : memref<2x2x144x32xf32, #tpu.memory_space<vmem>>, vector<1x1x128x32xf32>
    %653 = vector.shape_cast %652 : vector<1x1x128x32xf32> to vector<128x32xf32>
    %c1_252 = arith.constant 1 : index
    %c0_253 = arith.constant 0 : index
    %c128_254 = arith.constant 128 : index
    %c0_255 = arith.constant 0 : index
    %654 = vector.load %arg2[%c1_252, %c0_253, %c128_254, %c0_255] : memref<2x2x144x32xf32, #tpu.memory_space<vmem>>, vector<1x1x1x32xf32>
    %655 = vector.shape_cast %654 : vector<1x1x1x32xf32> to vector<1x32xf32>
    %c1_256 = arith.constant 1 : index
    %c0_257 = arith.constant 0 : index
    %c136_258 = arith.constant 136 : index
    %c0_259 = arith.constant 0 : index
    %656 = vector.load %arg2[%c1_256, %c0_257, %c136_258, %c0_259] : memref<2x2x144x32xf32, #tpu.memory_space<vmem>>, vector<1x1x1x32xf32>
    %657 = vector.shape_cast %656 : vector<1x1x1x32xf32> to vector<1x32xf32>
    %c1_260 = arith.constant 1 : index
    %c0_261 = arith.constant 0 : index
    %c0_262 = arith.constant 0 : index
    %c0_263 = arith.constant 0 : index
    %658 = vector.load %arg1[%c1_260, %c0_261, %c0_262, %c0_263] : memref<2x2x136x64xf32, #tpu.memory_space<vmem>>, vector<1x1x8x64xf32>
    %659 = vector.shape_cast %658 : vector<1x1x8x64xf32> to vector<8x64xf32>
    %c1_264 = arith.constant 1 : index
    %c0_265 = arith.constant 0 : index
    %c8_266 = arith.constant 8 : index
    %c0_267 = arith.constant 0 : index
    %660 = vector.load %arg1[%c1_264, %c0_265, %c8_266, %c0_267] : memref<2x2x136x64xf32, #tpu.memory_space<vmem>>, vector<1x1x16x64xf32>
    %661 = vector.shape_cast %660 : vector<1x1x16x64xf32> to vector<16x64xf32>
    %c1_268 = arith.constant 1 : index
    %c0_269 = arith.constant 0 : index
    %c24_270 = arith.constant 24 : index
    %c0_271 = arith.constant 0 : index
    %662 = vector.load %arg1[%c1_268, %c0_269, %c24_270, %c0_271] : memref<2x2x136x64xf32, #tpu.memory_space<vmem>>, vector<1x1x16x64xf32>
    %663 = vector.shape_cast %662 : vector<1x1x16x64xf32> to vector<16x64xf32>
    %c1_272 = arith.constant 1 : index
    %c0_273 = arith.constant 0 : index
    %c40_274 = arith.constant 40 : index
    %c0_275 = arith.constant 0 : index
    %664 = vector.load %arg1[%c1_272, %c0_273, %c40_274, %c0_275] : memref<2x2x136x64xf32, #tpu.memory_space<vmem>>, vector<1x1x8x64xf32>
    %665 = vector.shape_cast %664 : vector<1x1x8x64xf32> to vector<8x64xf32>
    %c1_276 = arith.constant 1 : index
    %c0_277 = arith.constant 0 : index
    %c48_278 = arith.constant 48 : index
    %c0_279 = arith.constant 0 : index
    %666 = vector.load %arg1[%c1_276, %c0_277, %c48_278, %c0_279] : memref<2x2x136x64xf32, #tpu.memory_space<vmem>>, vector<1x1x32x64xf32>
    %667 = vector.shape_cast %666 : vector<1x1x32x64xf32> to vector<32x64xf32>
    %c1_280 = arith.constant 1 : index
    %c0_281 = arith.constant 0 : index
    %c80_282 = arith.constant 80 : index
    %c0_283 = arith.constant 0 : index
    %668 = vector.load %arg1[%c1_280, %c0_281, %c80_282, %c0_283] : memref<2x2x136x64xf32, #tpu.memory_space<vmem>>, vector<1x1x16x64xf32>
    %669 = vector.shape_cast %668 : vector<1x1x16x64xf32> to vector<16x64xf32>
    %c1_284 = arith.constant 1 : index
    %c0_285 = arith.constant 0 : index
    %c96_286 = arith.constant 96 : index
    %c0_287 = arith.constant 0 : index
    %670 = vector.load %arg1[%c1_284, %c0_285, %c96_286, %c0_287] : memref<2x2x136x64xf32, #tpu.memory_space<vmem>>, vector<1x1x4x64xf32>
    %671 = vector.shape_cast %670 : vector<1x1x4x64xf32> to vector<4x64xf32>
    %c1_288 = arith.constant 1 : index
    %c0_289 = arith.constant 0 : index
    %c104_290 = arith.constant 104 : index
    %c0_291 = arith.constant 0 : index
    %672 = vector.load %arg1[%c1_288, %c0_289, %c104_290, %c0_291] : memref<2x2x136x64xf32, #tpu.memory_space<vmem>>, vector<1x1x1x64xf32>
    %673 = vector.shape_cast %672 : vector<1x1x1x64xf32> to vector<1x64xf32>
    %c1_292 = arith.constant 1 : index
    %c0_293 = arith.constant 0 : index
    %c112_294 = arith.constant 112 : index
    %c0_295 = arith.constant 0 : index
    %674 = vector.load %arg1[%c1_292, %c0_293, %c112_294, %c0_295] : memref<2x2x136x64xf32, #tpu.memory_space<vmem>>, vector<1x1x1x64xf32>
    %675 = vector.shape_cast %674 : vector<1x1x1x64xf32> to vector<1x64xf32>
    %c1_296 = arith.constant 1 : index
    %c0_297 = arith.constant 0 : index
    %c120_298 = arith.constant 120 : index
    %c0_299 = arith.constant 0 : index
    %676 = vector.load %arg1[%c1_296, %c0_297, %c120_298, %c0_299] : memref<2x2x136x64xf32, #tpu.memory_space<vmem>>, vector<1x1x1x64xf32>
    %677 = vector.shape_cast %676 : vector<1x1x1x64xf32> to vector<1x64xf32>
    %c1_300 = arith.constant 1 : index
    %c0_301 = arith.constant 0 : index
    %c128_302 = arith.constant 128 : index
    %c0_303 = arith.constant 0 : index
    %678 = vector.load %arg1[%c1_300, %c0_301, %c128_302, %c0_303] : memref<2x2x136x64xf32, #tpu.memory_space<vmem>>, vector<1x1x1x64xf32>
    %679 = vector.shape_cast %678 : vector<1x1x1x64xf32> to vector<1x64xf32>
    %680 = arith.mulf %651, %651 : vector<16x32xf32>
    %cst_304 = arith.constant dense<0.000000e+00> : vector<16xf32>
    %681 = vector.multi_reduction <add>, %680, %cst_304 [1] : vector<16x32xf32> to vector<16xf32>
    %682 = vector.shape_cast %681 : vector<16xf32> to vector<16x1xf32>
    %cst_305 = arith.constant 3.200000e+01 : f32
    %683 = vector.broadcast %cst_305 : f32 to vector<16x1xf32>
    %684 = arith.divf %682, %683 : vector<16x1xf32>
    %cst_306 = arith.constant 9.99999974E-6 : f32
    %685 = vector.broadcast %cst_306 : f32 to vector<16x1xf32>
    %686 = arith.addf %684, %685 : vector<16x1xf32>
    %687 = math.rsqrt %686 : vector<16x1xf32>
    %688 = vector.broadcast %687 : vector<16x1xf32> to vector<16x32xf32>
    %689 = arith.mulf %651, %688 : vector<16x32xf32>
    %690 = vector.broadcast %655 : vector<1x32xf32> to vector<16x32xf32>
    %691 = arith.mulf %689, %690 : vector<16x32xf32>
    %cst_307 = arith.constant dense<0.000000e+00> : vector<16x128xf32>
    %692 = tpu.matmul %691, %653, %cst_307 {dimension_numbers = #tpu.dot_dimension_numbers<[1], [1], [0], [0], [0, 0, 1, 0], [], []>} : vector<16x32xf32>, vector<128x32xf32>, vector<16x128xf32> -> vector<16x128xf32>
    %693 = vector.extract_strided_slice %692 {offsets = [0, 0], sizes = [16, 64], strides = [1, 1]} : vector<16x128xf32> to vector<16x64xf32>
    %694 = vector.broadcast %673 : vector<1x64xf32> to vector<16x64xf32>
    %695 = arith.addf %693, %694 : vector<16x64xf32>
    %696 = vector.extract_strided_slice %692 {offsets = [0, 64], sizes = [16, 64], strides = [1, 1]} : vector<16x128xf32> to vector<16x64xf32>
    %697 = vector.broadcast %675 : vector<1x64xf32> to vector<16x64xf32>
    %698 = arith.addf %696, %697 : vector<16x64xf32>
    %699 = vector.shape_cast %695 : vector<16x64xf32> to vector<2x8x64xf32>
    %700 = vector.extract_strided_slice %671 {offsets = [3, 0], sizes = [1, 64], strides = [1, 1]} : vector<4x64xf32> to vector<1x64xf32>
    %701 = vector.shape_cast %700 : vector<1x64xf32> to vector<1x1x64xf32>
    %702 = vector.broadcast %701 : vector<1x1x64xf32> to vector<2x8x64xf32>
    %703 = arith.mulf %699, %702 : vector<2x8x64xf32>
    %cst_308 = arith.constant 0.000000e+00 : f32
    %704 = vector.broadcast %cst_308 : f32 to vector<2x3x64xf32>
    %705 = vector.extract_strided_slice %699 {offsets = [0, 0, 0], sizes = [2, 5, 64], strides = [1, 1, 1]} : vector<2x8x64xf32> to vector<2x5x64xf32>
    %706 = tpu.concatenate %704, %705 in 1 : vector<2x3x64xf32>, vector<2x5x64xf32> -> vector<2x8x64xf32>
    %707 = vector.extract_strided_slice %671 {offsets = [0, 0], sizes = [1, 64], strides = [1, 1]} : vector<4x64xf32> to vector<1x64xf32>
    %708 = vector.shape_cast %707 : vector<1x64xf32> to vector<1x1x64xf32>
    %709 = vector.broadcast %708 : vector<1x1x64xf32> to vector<2x8x64xf32>
    %710 = arith.mulf %706, %709 : vector<2x8x64xf32>
    %711 = arith.addf %703, %710 : vector<2x8x64xf32>
    %cst_309 = arith.constant 0.000000e+00 : f32
    %712 = vector.broadcast %cst_309 : f32 to vector<2x2x64xf32>
    %713 = vector.extract_strided_slice %699 {offsets = [0, 0, 0], sizes = [2, 6, 64], strides = [1, 1, 1]} : vector<2x8x64xf32> to vector<2x6x64xf32>
    %714 = tpu.concatenate %712, %713 in 1 : vector<2x2x64xf32>, vector<2x6x64xf32> -> vector<2x8x64xf32>
    %715 = vector.extract_strided_slice %671 {offsets = [1, 0], sizes = [1, 64], strides = [1, 1]} : vector<4x64xf32> to vector<1x64xf32>
    %716 = vector.shape_cast %715 : vector<1x64xf32> to vector<1x1x64xf32>
    %717 = vector.broadcast %716 : vector<1x1x64xf32> to vector<2x8x64xf32>
    %718 = arith.mulf %714, %717 : vector<2x8x64xf32>
    %719 = arith.addf %711, %718 : vector<2x8x64xf32>
    %cst_310 = arith.constant 0.000000e+00 : f32
    %720 = vector.broadcast %cst_310 : f32 to vector<2x1x64xf32>
    %721 = vector.extract_strided_slice %699 {offsets = [0, 0, 0], sizes = [2, 7, 64], strides = [1, 1, 1]} : vector<2x8x64xf32> to vector<2x7x64xf32>
    %722 = tpu.concatenate %720, %721 in 1 : vector<2x1x64xf32>, vector<2x7x64xf32> -> vector<2x8x64xf32>
    %723 = vector.extract_strided_slice %671 {offsets = [2, 0], sizes = [1, 64], strides = [1, 1]} : vector<4x64xf32> to vector<1x64xf32>
    %724 = vector.shape_cast %723 : vector<1x64xf32> to vector<1x1x64xf32>
    %725 = vector.broadcast %724 : vector<1x1x64xf32> to vector<2x8x64xf32>
    %726 = arith.mulf %722, %725 : vector<2x8x64xf32>
    %727 = arith.addf %719, %726 : vector<2x8x64xf32>
    %728 = math.absf %727 : vector<2x8x64xf32>
    %cst_311 = arith.constant 0.000000e+00 : f32
    %729 = vector.broadcast %cst_311 : f32 to vector<2x8x64xf32>
    %730 = arith.subf %729, %728 : vector<2x8x64xf32>
    %731 = math.exp %730 : vector<2x8x64xf32>
    %cst_312 = arith.constant 0.000000e+00 : f32
    %732 = vector.broadcast %cst_312 : f32 to vector<2x8x64xf32>
    %733 = arith.cmpf oge, %727, %732 : vector<2x8x64xf32>
    %cst_313 = arith.constant 1.000000e+00 : f32
    %734 = vector.broadcast %cst_313 : f32 to vector<2x8x64xf32>
    %735 = arith.addf %734, %731 : vector<2x8x64xf32>
    %cst_314 = arith.constant 1.000000e+00 : f32
    %736 = vector.broadcast %cst_314 : f32 to vector<2x8x64xf32>
    %737 = arith.divf %736, %735 : vector<2x8x64xf32>
    %cst_315 = arith.constant 1.000000e+00 : f32
    %738 = vector.broadcast %cst_315 : f32 to vector<2x8x64xf32>
    %739 = arith.addf %738, %731 : vector<2x8x64xf32>
    %740 = arith.divf %731, %739 : vector<2x8x64xf32>
    %741 = arith.select %733, %737, %740 : vector<2x8x64xi1>, vector<2x8x64xf32>
    %742 = arith.mulf %727, %741 : vector<2x8x64xf32>
    %743 = vector.shape_cast %742 : vector<2x8x64xf32> to vector<16x64xf32>
    %cst_316 = arith.constant dense<0.000000e+00> : vector<16x8xf32>
    %744 = tpu.matmul %743, %659, %cst_316 {dimension_numbers = #tpu.dot_dimension_numbers<[1], [1], [0], [0], [0, 0, 1, 0], [], []>} : vector<16x64xf32>, vector<8x64xf32>, vector<16x8xf32> -> vector<16x8xf32>
    %cst_317 = arith.constant dense<0.000000e+00> : vector<16x16xf32>
    %745 = tpu.matmul %743, %661, %cst_317 {dimension_numbers = #tpu.dot_dimension_numbers<[1], [1], [0], [0], [0, 0, 1, 0], [], []>} : vector<16x64xf32>, vector<16x64xf32>, vector<16x16xf32> -> vector<16x16xf32>
    %cst_318 = arith.constant dense<0.000000e+00> : vector<16x16xf32>
    %746 = tpu.matmul %743, %663, %cst_318 {dimension_numbers = #tpu.dot_dimension_numbers<[1], [1], [0], [0], [0, 0, 1, 0], [], []>} : vector<16x64xf32>, vector<16x64xf32>, vector<16x16xf32> -> vector<16x16xf32>
    %cst_319 = arith.constant dense<0.000000e+00> : vector<16x64xf32>
    %747 = tpu.matmul %744, %665, %cst_319 {dimension_numbers = #tpu.dot_dimension_numbers<[1], [0], [0], [1], [0, 0, 1, 1], [], []>} : vector<16x8xf32>, vector<8x64xf32>, vector<16x64xf32> -> vector<16x64xf32>
    %748 = vector.broadcast %677 : vector<1x64xf32> to vector<16x64xf32>
    %749 = arith.addf %747, %748 : vector<16x64xf32>
    %cst_320 = arith.constant 0.000000e+00 : f32
    %750 = vector.broadcast %cst_320 : f32 to vector<16x64xf32>
    %751 = arith.maximumf %749, %750 : vector<16x64xf32>
    %752 = math.absf %749 : vector<16x64xf32>
    %cst_321 = arith.constant 0.000000e+00 : f32
    %753 = vector.broadcast %cst_321 : f32 to vector<16x64xf32>
    %754 = arith.subf %753, %752 : vector<16x64xf32>
    %755 = math.exp %754 : vector<16x64xf32>
    %756 = math.log1p %755 : vector<16x64xf32>
    %757 = arith.addf %751, %756 : vector<16x64xf32>
    %758 = math.exp %669 : vector<16x64xf32>
    %cst_322 = arith.constant 0.000000e+00 : f32
    %759 = vector.broadcast %cst_322 : f32 to vector<16x64xf32>
    %760 = arith.subf %759, %758 : vector<16x64xf32>
    %761 = vector.shape_cast %757 : vector<16x64xf32> to vector<2x8x64xf32>
    %762 = arith.mulf %757, %743 : vector<16x64xf32>
    %763 = vector.shape_cast %762 : vector<16x64xf32> to vector<2x8x64xf32>
    %764 = vector.shape_cast %745 : vector<16x16xf32> to vector<2x8x16xf32>
    %cst_323 = arith.constant 0.000000e+00 : f32
    %765 = vector.broadcast %cst_323 : f32 to vector<2x16x64xf32>
    %766 = vector.extract_strided_slice %761 {offsets = [0, 0, 0], sizes = [2, 1, 64], strides = [1, 1, 1]} : vector<2x8x64xf32> to vector<2x1x64xf32>
    %767 = vector.shape_cast %766 : vector<2x1x64xf32> to vector<2x64xf32>
    %768 = vector.shape_cast %767 : vector<2x64xf32> to vector<2x1x64xf32>
    %769 = vector.shape_cast %760 : vector<16x64xf32> to vector<1x16x64xf32>
    %770 = vector.broadcast %768 : vector<2x1x64xf32> to vector<2x16x64xf32>
    %771 = vector.broadcast %769 : vector<1x16x64xf32> to vector<2x16x64xf32>
    %772 = arith.mulf %770, %771 : vector<2x16x64xf32>
    %773 = math.exp %772 : vector<2x16x64xf32>
    %774 = vector.extract_strided_slice %763 {offsets = [0, 0, 0], sizes = [2, 1, 64], strides = [1, 1, 1]} : vector<2x8x64xf32> to vector<2x1x64xf32>
    %775 = vector.shape_cast %774 : vector<2x1x64xf32> to vector<2x64xf32>
    %776 = vector.shape_cast %775 : vector<2x64xf32> to vector<2x1x64xf32>
    %777 = vector.extract_strided_slice %764 {offsets = [0, 0, 0], sizes = [2, 1, 16], strides = [1, 1, 1]} : vector<2x8x16xf32> to vector<2x1x16xf32>
    %778 = vector.shape_cast %777 : vector<2x1x16xf32> to vector<2x16xf32>
    %779 = vector.shape_cast %778 : vector<2x16xf32> to vector<2x16x1xf32>
    %780 = vector.broadcast %776 : vector<2x1x64xf32> to vector<2x16x64xf32>
    %781 = vector.broadcast %779 : vector<2x16x1xf32> to vector<2x16x64xf32>
    %782 = arith.mulf %780, %781 : vector<2x16x64xf32>
    %783 = arith.mulf %765, %773 : vector<2x16x64xf32>
    %784 = arith.addf %783, %782 : vector<2x16x64xf32>
    %c1_324 = arith.constant 1 : index
    %c0_325 = arith.constant 0 : index
    %c0_326 = arith.constant 0 : index
    %c0_327 = arith.constant 0 : index
    %c0_328 = arith.constant 0 : index
    %785 = vector.load %arg4[%c1_324, %c0_325, %c0_326, %c0_327, %c0_328] : memref<2x2x8x16x64xf32, #tpu.memory_space<vmem>>, vector<1x2x1x16x64xf32>
    %786 = vector.shape_cast %785 : vector<1x2x1x16x64xf32> to vector<2x16x64xf32>
    %787 = vector.shape_cast %784 : vector<2x16x64xf32> to vector<1x2x1x16x64xf32>
    tpu.vector_store %arg4[%c1_324, %c0_325, %c0_326, %c0_327, %c0_328], %787 {strides = array<i32>} : memref<2x2x8x16x64xf32, #tpu.memory_space<vmem>>, vector<1x2x1x16x64xf32>,
    %788 = vector.extract_strided_slice %761 {offsets = [0, 1, 0], sizes = [2, 1, 64], strides = [1, 1, 1]} : vector<2x8x64xf32> to vector<2x1x64xf32>
    %789 = vector.shape_cast %788 : vector<2x1x64xf32> to vector<2x64xf32>
    %790 = vector.shape_cast %789 : vector<2x64xf32> to vector<2x1x64xf32>
    %791 = vector.shape_cast %760 : vector<16x64xf32> to vector<1x16x64xf32>
    %792 = vector.broadcast %790 : vector<2x1x64xf32> to vector<2x16x64xf32>
    %793 = vector.broadcast %791 : vector<1x16x64xf32> to vector<2x16x64xf32>
    %794 = arith.mulf %792, %793 : vector<2x16x64xf32>
    %795 = math.exp %794 : vector<2x16x64xf32>
    %796 = vector.extract_strided_slice %763 {offsets = [0, 1, 0], sizes = [2, 1, 64], strides = [1, 1, 1]} : vector<2x8x64xf32> to vector<2x1x64xf32>
    %797 = vector.shape_cast %796 : vector<2x1x64xf32> to vector<2x64xf32>
    %798 = vector.shape_cast %797 : vector<2x64xf32> to vector<2x1x64xf32>
    %799 = vector.extract_strided_slice %764 {offsets = [0, 1, 0], sizes = [2, 1, 16], strides = [1, 1, 1]} : vector<2x8x16xf32> to vector<2x1x16xf32>
    %800 = vector.shape_cast %799 : vector<2x1x16xf32> to vector<2x16xf32>
    %801 = vector.shape_cast %800 : vector<2x16xf32> to vector<2x16x1xf32>
    %802 = vector.broadcast %798 : vector<2x1x64xf32> to vector<2x16x64xf32>
    %803 = vector.broadcast %801 : vector<2x16x1xf32> to vector<2x16x64xf32>
    %804 = arith.mulf %802, %803 : vector<2x16x64xf32>
    %805 = arith.mulf %784, %795 : vector<2x16x64xf32>
    %806 = arith.addf %805, %804 : vector<2x16x64xf32>
    %c1_329 = arith.constant 1 : index
    %c0_330 = arith.constant 0 : index
    %c1_331 = arith.constant 1 : index
    %c0_332 = arith.constant 0 : index
    %c0_333 = arith.constant 0 : index
    %807 = vector.load %arg4[%c1_329, %c0_330, %c1_331, %c0_332, %c0_333] : memref<2x2x8x16x64xf32, #tpu.memory_space<vmem>>, vector<1x2x1x16x64xf32>
    %808 = vector.shape_cast %807 : vector<1x2x1x16x64xf32> to vector<2x16x64xf32>
    %809 = vector.shape_cast %806 : vector<2x16x64xf32> to vector<1x2x1x16x64xf32>
    tpu.vector_store %arg4[%c1_329, %c0_330, %c1_331, %c0_332, %c0_333], %809 {strides = array<i32>} : memref<2x2x8x16x64xf32, #tpu.memory_space<vmem>>, vector<1x2x1x16x64xf32>,
    %810 = vector.extract_strided_slice %761 {offsets = [0, 2, 0], sizes = [2, 1, 64], strides = [1, 1, 1]} : vector<2x8x64xf32> to vector<2x1x64xf32>
    %811 = vector.shape_cast %810 : vector<2x1x64xf32> to vector<2x64xf32>
    %812 = vector.shape_cast %811 : vector<2x64xf32> to vector<2x1x64xf32>
    %813 = vector.shape_cast %760 : vector<16x64xf32> to vector<1x16x64xf32>
    %814 = vector.broadcast %812 : vector<2x1x64xf32> to vector<2x16x64xf32>
    %815 = vector.broadcast %813 : vector<1x16x64xf32> to vector<2x16x64xf32>
    %816 = arith.mulf %814, %815 : vector<2x16x64xf32>
    %817 = math.exp %816 : vector<2x16x64xf32>
    %818 = vector.extract_strided_slice %763 {offsets = [0, 2, 0], sizes = [2, 1, 64], strides = [1, 1, 1]} : vector<2x8x64xf32> to vector<2x1x64xf32>
    %819 = vector.shape_cast %818 : vector<2x1x64xf32> to vector<2x64xf32>
    %820 = vector.shape_cast %819 : vector<2x64xf32> to vector<2x1x64xf32>
    %821 = vector.extract_strided_slice %764 {offsets = [0, 2, 0], sizes = [2, 1, 16], strides = [1, 1, 1]} : vector<2x8x16xf32> to vector<2x1x16xf32>
    %822 = vector.shape_cast %821 : vector<2x1x16xf32> to vector<2x16xf32>
    %823 = vector.shape_cast %822 : vector<2x16xf32> to vector<2x16x1xf32>
    %824 = vector.broadcast %820 : vector<2x1x64xf32> to vector<2x16x64xf32>
    %825 = vector.broadcast %823 : vector<2x16x1xf32> to vector<2x16x64xf32>
    %826 = arith.mulf %824, %825 : vector<2x16x64xf32>
    %827 = arith.mulf %806, %817 : vector<2x16x64xf32>
    %828 = arith.addf %827, %826 : vector<2x16x64xf32>
    %c1_334 = arith.constant 1 : index
    %c0_335 = arith.constant 0 : index
    %c2_336 = arith.constant 2 : index
    %c0_337 = arith.constant 0 : index
    %c0_338 = arith.constant 0 : index
    %829 = vector.load %arg4[%c1_334, %c0_335, %c2_336, %c0_337, %c0_338] : memref<2x2x8x16x64xf32, #tpu.memory_space<vmem>>, vector<1x2x1x16x64xf32>
    %830 = vector.shape_cast %829 : vector<1x2x1x16x64xf32> to vector<2x16x64xf32>
    %831 = vector.shape_cast %828 : vector<2x16x64xf32> to vector<1x2x1x16x64xf32>
    tpu.vector_store %arg4[%c1_334, %c0_335, %c2_336, %c0_337, %c0_338], %831 {strides = array<i32>} : memref<2x2x8x16x64xf32, #tpu.memory_space<vmem>>, vector<1x2x1x16x64xf32>,
    %832 = vector.extract_strided_slice %761 {offsets = [0, 3, 0], sizes = [2, 1, 64], strides = [1, 1, 1]} : vector<2x8x64xf32> to vector<2x1x64xf32>
    %833 = vector.shape_cast %832 : vector<2x1x64xf32> to vector<2x64xf32>
    %834 = vector.shape_cast %833 : vector<2x64xf32> to vector<2x1x64xf32>
    %835 = vector.shape_cast %760 : vector<16x64xf32> to vector<1x16x64xf32>
    %836 = vector.broadcast %834 : vector<2x1x64xf32> to vector<2x16x64xf32>
    %837 = vector.broadcast %835 : vector<1x16x64xf32> to vector<2x16x64xf32>
    %838 = arith.mulf %836, %837 : vector<2x16x64xf32>
    %839 = math.exp %838 : vector<2x16x64xf32>
    %840 = vector.extract_strided_slice %763 {offsets = [0, 3, 0], sizes = [2, 1, 64], strides = [1, 1, 1]} : vector<2x8x64xf32> to vector<2x1x64xf32>
    %841 = vector.shape_cast %840 : vector<2x1x64xf32> to vector<2x64xf32>
    %842 = vector.shape_cast %841 : vector<2x64xf32> to vector<2x1x64xf32>
    %843 = vector.extract_strided_slice %764 {offsets = [0, 3, 0], sizes = [2, 1, 16], strides = [1, 1, 1]} : vector<2x8x16xf32> to vector<2x1x16xf32>
    %844 = vector.shape_cast %843 : vector<2x1x16xf32> to vector<2x16xf32>
    %845 = vector.shape_cast %844 : vector<2x16xf32> to vector<2x16x1xf32>
    %846 = vector.broadcast %842 : vector<2x1x64xf32> to vector<2x16x64xf32>
    %847 = vector.broadcast %845 : vector<2x16x1xf32> to vector<2x16x64xf32>
    %848 = arith.mulf %846, %847 : vector<2x16x64xf32>
    %849 = arith.mulf %828, %839 : vector<2x16x64xf32>
    %850 = arith.addf %849, %848 : vector<2x16x64xf32>
    %c1_339 = arith.constant 1 : index
    %c0_340 = arith.constant 0 : index
    %c3_341 = arith.constant 3 : index
    %c0_342 = arith.constant 0 : index
    %c0_343 = arith.constant 0 : index
    %851 = vector.load %arg4[%c1_339, %c0_340, %c3_341, %c0_342, %c0_343] : memref<2x2x8x16x64xf32, #tpu.memory_space<vmem>>, vector<1x2x1x16x64xf32>
    %852 = vector.shape_cast %851 : vector<1x2x1x16x64xf32> to vector<2x16x64xf32>
    %853 = vector.shape_cast %850 : vector<2x16x64xf32> to vector<1x2x1x16x64xf32>
    tpu.vector_store %arg4[%c1_339, %c0_340, %c3_341, %c0_342, %c0_343], %853 {strides = array<i32>} : memref<2x2x8x16x64xf32, #tpu.memory_space<vmem>>, vector<1x2x1x16x64xf32>,
    %854 = vector.extract_strided_slice %761 {offsets = [0, 4, 0], sizes = [2, 1, 64], strides = [1, 1, 1]} : vector<2x8x64xf32> to vector<2x1x64xf32>
    %855 = vector.shape_cast %854 : vector<2x1x64xf32> to vector<2x64xf32>
    %856 = vector.shape_cast %855 : vector<2x64xf32> to vector<2x1x64xf32>
    %857 = vector.shape_cast %760 : vector<16x64xf32> to vector<1x16x64xf32>
    %858 = vector.broadcast %856 : vector<2x1x64xf32> to vector<2x16x64xf32>
    %859 = vector.broadcast %857 : vector<1x16x64xf32> to vector<2x16x64xf32>
    %860 = arith.mulf %858, %859 : vector<2x16x64xf32>
    %861 = math.exp %860 : vector<2x16x64xf32>
    %862 = vector.extract_strided_slice %763 {offsets = [0, 4, 0], sizes = [2, 1, 64], strides = [1, 1, 1]} : vector<2x8x64xf32> to vector<2x1x64xf32>
    %863 = vector.shape_cast %862 : vector<2x1x64xf32> to vector<2x64xf32>
    %864 = vector.shape_cast %863 : vector<2x64xf32> to vector<2x1x64xf32>
    %865 = vector.extract_strided_slice %764 {offsets = [0, 4, 0], sizes = [2, 1, 16], strides = [1, 1, 1]} : vector<2x8x16xf32> to vector<2x1x16xf32>
    %866 = vector.shape_cast %865 : vector<2x1x16xf32> to vector<2x16xf32>
    %867 = vector.shape_cast %866 : vector<2x16xf32> to vector<2x16x1xf32>
    %868 = vector.broadcast %864 : vector<2x1x64xf32> to vector<2x16x64xf32>
    %869 = vector.broadcast %867 : vector<2x16x1xf32> to vector<2x16x64xf32>
    %870 = arith.mulf %868, %869 : vector<2x16x64xf32>
    %871 = arith.mulf %850, %861 : vector<2x16x64xf32>
    %872 = arith.addf %871, %870 : vector<2x16x64xf32>
    %c1_344 = arith.constant 1 : index
    %c0_345 = arith.constant 0 : index
    %c4_346 = arith.constant 4 : index
    %c0_347 = arith.constant 0 : index
    %c0_348 = arith.constant 0 : index
    %873 = vector.load %arg4[%c1_344, %c0_345, %c4_346, %c0_347, %c0_348] : memref<2x2x8x16x64xf32, #tpu.memory_space<vmem>>, vector<1x2x1x16x64xf32>
    %874 = vector.shape_cast %873 : vector<1x2x1x16x64xf32> to vector<2x16x64xf32>
    %875 = vector.shape_cast %872 : vector<2x16x64xf32> to vector<1x2x1x16x64xf32>
    tpu.vector_store %arg4[%c1_344, %c0_345, %c4_346, %c0_347, %c0_348], %875 {strides = array<i32>} : memref<2x2x8x16x64xf32, #tpu.memory_space<vmem>>, vector<1x2x1x16x64xf32>,
    %876 = vector.extract_strided_slice %761 {offsets = [0, 5, 0], sizes = [2, 1, 64], strides = [1, 1, 1]} : vector<2x8x64xf32> to vector<2x1x64xf32>
    %877 = vector.shape_cast %876 : vector<2x1x64xf32> to vector<2x64xf32>
    %878 = vector.shape_cast %877 : vector<2x64xf32> to vector<2x1x64xf32>
    %879 = vector.shape_cast %760 : vector<16x64xf32> to vector<1x16x64xf32>
    %880 = vector.broadcast %878 : vector<2x1x64xf32> to vector<2x16x64xf32>
    %881 = vector.broadcast %879 : vector<1x16x64xf32> to vector<2x16x64xf32>
    %882 = arith.mulf %880, %881 : vector<2x16x64xf32>
    %883 = math.exp %882 : vector<2x16x64xf32>
    %884 = vector.extract_strided_slice %763 {offsets = [0, 5, 0], sizes = [2, 1, 64], strides = [1, 1, 1]} : vector<2x8x64xf32> to vector<2x1x64xf32>
    %885 = vector.shape_cast %884 : vector<2x1x64xf32> to vector<2x64xf32>
    %886 = vector.shape_cast %885 : vector<2x64xf32> to vector<2x1x64xf32>
    %887 = vector.extract_strided_slice %764 {offsets = [0, 5, 0], sizes = [2, 1, 16], strides = [1, 1, 1]} : vector<2x8x16xf32> to vector<2x1x16xf32>
    %888 = vector.shape_cast %887 : vector<2x1x16xf32> to vector<2x16xf32>
    %889 = vector.shape_cast %888 : vector<2x16xf32> to vector<2x16x1xf32>
    %890 = vector.broadcast %886 : vector<2x1x64xf32> to vector<2x16x64xf32>
    %891 = vector.broadcast %889 : vector<2x16x1xf32> to vector<2x16x64xf32>
    %892 = arith.mulf %890, %891 : vector<2x16x64xf32>
    %893 = arith.mulf %872, %883 : vector<2x16x64xf32>
    %894 = arith.addf %893, %892 : vector<2x16x64xf32>
    %c1_349 = arith.constant 1 : index
    %c0_350 = arith.constant 0 : index
    %c5_351 = arith.constant 5 : index
    %c0_352 = arith.constant 0 : index
    %c0_353 = arith.constant 0 : index
    %895 = vector.load %arg4[%c1_349, %c0_350, %c5_351, %c0_352, %c0_353] : memref<2x2x8x16x64xf32, #tpu.memory_space<vmem>>, vector<1x2x1x16x64xf32>
    %896 = vector.shape_cast %895 : vector<1x2x1x16x64xf32> to vector<2x16x64xf32>
    %897 = vector.shape_cast %894 : vector<2x16x64xf32> to vector<1x2x1x16x64xf32>
    tpu.vector_store %arg4[%c1_349, %c0_350, %c5_351, %c0_352, %c0_353], %897 {strides = array<i32>} : memref<2x2x8x16x64xf32, #tpu.memory_space<vmem>>, vector<1x2x1x16x64xf32>,
    %898 = vector.extract_strided_slice %761 {offsets = [0, 6, 0], sizes = [2, 1, 64], strides = [1, 1, 1]} : vector<2x8x64xf32> to vector<2x1x64xf32>
    %899 = vector.shape_cast %898 : vector<2x1x64xf32> to vector<2x64xf32>
    %900 = vector.shape_cast %899 : vector<2x64xf32> to vector<2x1x64xf32>
    %901 = vector.shape_cast %760 : vector<16x64xf32> to vector<1x16x64xf32>
    %902 = vector.broadcast %900 : vector<2x1x64xf32> to vector<2x16x64xf32>
    %903 = vector.broadcast %901 : vector<1x16x64xf32> to vector<2x16x64xf32>
    %904 = arith.mulf %902, %903 : vector<2x16x64xf32>
    %905 = math.exp %904 : vector<2x16x64xf32>
    %906 = vector.extract_strided_slice %763 {offsets = [0, 6, 0], sizes = [2, 1, 64], strides = [1, 1, 1]} : vector<2x8x64xf32> to vector<2x1x64xf32>
    %907 = vector.shape_cast %906 : vector<2x1x64xf32> to vector<2x64xf32>
    %908 = vector.shape_cast %907 : vector<2x64xf32> to vector<2x1x64xf32>
    %909 = vector.extract_strided_slice %764 {offsets = [0, 6, 0], sizes = [2, 1, 16], strides = [1, 1, 1]} : vector<2x8x16xf32> to vector<2x1x16xf32>
    %910 = vector.shape_cast %909 : vector<2x1x16xf32> to vector<2x16xf32>
    %911 = vector.shape_cast %910 : vector<2x16xf32> to vector<2x16x1xf32>
    %912 = vector.broadcast %908 : vector<2x1x64xf32> to vector<2x16x64xf32>
    %913 = vector.broadcast %911 : vector<2x16x1xf32> to vector<2x16x64xf32>
    %914 = arith.mulf %912, %913 : vector<2x16x64xf32>
    %915 = arith.mulf %894, %905 : vector<2x16x64xf32>
    %916 = arith.addf %915, %914 : vector<2x16x64xf32>
    %c1_354 = arith.constant 1 : index
    %c0_355 = arith.constant 0 : index
    %c6_356 = arith.constant 6 : index
    %c0_357 = arith.constant 0 : index
    %c0_358 = arith.constant 0 : index
    %917 = vector.load %arg4[%c1_354, %c0_355, %c6_356, %c0_357, %c0_358] : memref<2x2x8x16x64xf32, #tpu.memory_space<vmem>>, vector<1x2x1x16x64xf32>
    %918 = vector.shape_cast %917 : vector<1x2x1x16x64xf32> to vector<2x16x64xf32>
    %919 = vector.shape_cast %916 : vector<2x16x64xf32> to vector<1x2x1x16x64xf32>
    tpu.vector_store %arg4[%c1_354, %c0_355, %c6_356, %c0_357, %c0_358], %919 {strides = array<i32>} : memref<2x2x8x16x64xf32, #tpu.memory_space<vmem>>, vector<1x2x1x16x64xf32>,
    %920 = vector.extract_strided_slice %761 {offsets = [0, 7, 0], sizes = [2, 1, 64], strides = [1, 1, 1]} : vector<2x8x64xf32> to vector<2x1x64xf32>
    %921 = vector.shape_cast %920 : vector<2x1x64xf32> to vector<2x64xf32>
    %922 = vector.shape_cast %921 : vector<2x64xf32> to vector<2x1x64xf32>
    %923 = vector.shape_cast %760 : vector<16x64xf32> to vector<1x16x64xf32>
    %924 = vector.broadcast %922 : vector<2x1x64xf32> to vector<2x16x64xf32>
    %925 = vector.broadcast %923 : vector<1x16x64xf32> to vector<2x16x64xf32>
    %926 = arith.mulf %924, %925 : vector<2x16x64xf32>
    %927 = math.exp %926 : vector<2x16x64xf32>
    %928 = vector.extract_strided_slice %763 {offsets = [0, 7, 0], sizes = [2, 1, 64], strides = [1, 1, 1]} : vector<2x8x64xf32> to vector<2x1x64xf32>
    %929 = vector.shape_cast %928 : vector<2x1x64xf32> to vector<2x64xf32>
    %930 = vector.shape_cast %929 : vector<2x64xf32> to vector<2x1x64xf32>
    %931 = vector.extract_strided_slice %764 {offsets = [0, 7, 0], sizes = [2, 1, 16], strides = [1, 1, 1]} : vector<2x8x16xf32> to vector<2x1x16xf32>
    %932 = vector.shape_cast %931 : vector<2x1x16xf32> to vector<2x16xf32>
    %933 = vector.shape_cast %932 : vector<2x16xf32> to vector<2x16x1xf32>
    %934 = vector.broadcast %930 : vector<2x1x64xf32> to vector<2x16x64xf32>
    %935 = vector.broadcast %933 : vector<2x16x1xf32> to vector<2x16x64xf32>
    %936 = arith.mulf %934, %935 : vector<2x16x64xf32>
    %937 = arith.mulf %916, %927 : vector<2x16x64xf32>
    %938 = arith.addf %937, %936 : vector<2x16x64xf32>
    %c1_359 = arith.constant 1 : index
    %c0_360 = arith.constant 0 : index
    %c7_361 = arith.constant 7 : index
    %c0_362 = arith.constant 0 : index
    %c0_363 = arith.constant 0 : index
    %939 = vector.load %arg4[%c1_359, %c0_360, %c7_361, %c0_362, %c0_363] : memref<2x2x8x16x64xf32, #tpu.memory_space<vmem>>, vector<1x2x1x16x64xf32>
    %940 = vector.shape_cast %939 : vector<1x2x1x16x64xf32> to vector<2x16x64xf32>
    %941 = vector.shape_cast %938 : vector<2x16x64xf32> to vector<1x2x1x16x64xf32>
    tpu.vector_store %arg4[%c1_359, %c0_360, %c7_361, %c0_362, %c0_363], %941 {strides = array<i32>} : memref<2x2x8x16x64xf32, #tpu.memory_space<vmem>>, vector<1x2x1x16x64xf32>,
    %c1_364 = arith.constant 1 : index
    %c0_365 = arith.constant 0 : index
    %c0_366 = arith.constant 0 : index
    %c0_367 = arith.constant 0 : index
    %c0_368 = arith.constant 0 : index
    %942 = vector.load %arg4[%c1_364, %c0_365, %c0_366, %c0_367, %c0_368] : memref<2x2x8x16x64xf32, #tpu.memory_space<vmem>>, vector<1x2x8x16x64xf32>
    %943 = vector.shape_cast %942 : vector<1x2x8x16x64xf32> to vector<2x8x16x64xf32>
    %944 = vector.shape_cast %746 : vector<16x16xf32> to vector<16x16x1xf32>
    %945 = vector.shape_cast %944 : vector<16x16x1xf32> to vector<2x8x16x1xf32>
    %946 = vector.broadcast %945 : vector<2x8x16x1xf32> to vector<2x8x16x64xf32>
    %947 = arith.mulf %943, %946 : vector<2x8x16x64xf32>
    %cst_369 = arith.constant dense<0.000000e+00> : vector<2x8x64xf32>
    %948 = vector.multi_reduction <add>, %947, %cst_369 [2] : vector<2x8x16x64xf32> to vector<2x8x64xf32>
    %949 = vector.shape_cast %948 : vector<2x8x64xf32> to vector<16x64xf32>
    %950 = vector.broadcast %679 : vector<1x64xf32> to vector<16x64xf32>
    %951 = arith.mulf %743, %950 : vector<16x64xf32>
    %952 = arith.addf %949, %951 : vector<16x64xf32>
    %953 = math.absf %698 : vector<16x64xf32>
    %cst_370 = arith.constant 0.000000e+00 : f32
    %954 = vector.broadcast %cst_370 : f32 to vector<16x64xf32>
    %955 = arith.subf %954, %953 : vector<16x64xf32>
    %956 = math.exp %955 : vector<16x64xf32>
    %cst_371 = arith.constant 0.000000e+00 : f32
    %957 = vector.broadcast %cst_371 : f32 to vector<16x64xf32>
    %958 = arith.cmpf oge, %698, %957 : vector<16x64xf32>
    %cst_372 = arith.constant 1.000000e+00 : f32
    %959 = vector.broadcast %cst_372 : f32 to vector<16x64xf32>
    %960 = arith.addf %959, %956 : vector<16x64xf32>
    %cst_373 = arith.constant 1.000000e+00 : f32
    %961 = vector.broadcast %cst_373 : f32 to vector<16x64xf32>
    %962 = arith.divf %961, %960 : vector<16x64xf32>
    %cst_374 = arith.constant 1.000000e+00 : f32
    %963 = vector.broadcast %cst_374 : f32 to vector<16x64xf32>
    %964 = arith.addf %963, %956 : vector<16x64xf32>
    %965 = arith.divf %956, %964 : vector<16x64xf32>
    %966 = arith.select %958, %962, %965 : vector<16x64xi1>, vector<16x64xf32>
    %967 = arith.mulf %698, %966 : vector<16x64xf32>
    %968 = arith.mulf %952, %967 : vector<16x64xf32>
    %cst_375 = arith.constant dense<0.000000e+00> : vector<16x32xf32>
    %969 = tpu.matmul %968, %667, %cst_375 {dimension_numbers = #tpu.dot_dimension_numbers<[1], [1], [0], [0], [0, 0, 1, 0], [], []>} : vector<16x64xf32>, vector<32x64xf32>, vector<16x32xf32> -> vector<16x32xf32>
    %970 = arith.addf %651, %969 : vector<16x32xf32>
    %971 = vector.broadcast %657 : vector<1x32xf32> to vector<16x32xf32>
    %972 = arith.addf %970, %971 : vector<16x32xf32>
    %c1_376 = arith.constant 1 : index
    %c1_377 = arith.constant 1 : index
    %c0_378 = arith.constant 0 : index
    %c0_379 = arith.constant 0 : index
    %973 = vector.load %arg2[%c1_376, %c1_377, %c0_378, %c0_379] : memref<2x2x144x32xf32, #tpu.memory_space<vmem>>, vector<1x1x128x32xf32>
    %974 = vector.shape_cast %973 : vector<1x1x128x32xf32> to vector<128x32xf32>
    %c1_380 = arith.constant 1 : index
    %c1_381 = arith.constant 1 : index
    %c128_382 = arith.constant 128 : index
    %c0_383 = arith.constant 0 : index
    %975 = vector.load %arg2[%c1_380, %c1_381, %c128_382, %c0_383] : memref<2x2x144x32xf32, #tpu.memory_space<vmem>>, vector<1x1x1x32xf32>
    %976 = vector.shape_cast %975 : vector<1x1x1x32xf32> to vector<1x32xf32>
    %c1_384 = arith.constant 1 : index
    %c1_385 = arith.constant 1 : index
    %c136_386 = arith.constant 136 : index
    %c0_387 = arith.constant 0 : index
    %977 = vector.load %arg2[%c1_384, %c1_385, %c136_386, %c0_387] : memref<2x2x144x32xf32, #tpu.memory_space<vmem>>, vector<1x1x1x32xf32>
    %978 = vector.shape_cast %977 : vector<1x1x1x32xf32> to vector<1x32xf32>
    %c1_388 = arith.constant 1 : index
    %c1_389 = arith.constant 1 : index
    %c0_390 = arith.constant 0 : index
    %c0_391 = arith.constant 0 : index
    %979 = vector.load %arg1[%c1_388, %c1_389, %c0_390, %c0_391] : memref<2x2x136x64xf32, #tpu.memory_space<vmem>>, vector<1x1x8x64xf32>
    %980 = vector.shape_cast %979 : vector<1x1x8x64xf32> to vector<8x64xf32>
    %c1_392 = arith.constant 1 : index
    %c1_393 = arith.constant 1 : index
    %c8_394 = arith.constant 8 : index
    %c0_395 = arith.constant 0 : index
    %981 = vector.load %arg1[%c1_392, %c1_393, %c8_394, %c0_395] : memref<2x2x136x64xf32, #tpu.memory_space<vmem>>, vector<1x1x16x64xf32>
    %982 = vector.shape_cast %981 : vector<1x1x16x64xf32> to vector<16x64xf32>
    %c1_396 = arith.constant 1 : index
    %c1_397 = arith.constant 1 : index
    %c24_398 = arith.constant 24 : index
    %c0_399 = arith.constant 0 : index
    %983 = vector.load %arg1[%c1_396, %c1_397, %c24_398, %c0_399] : memref<2x2x136x64xf32, #tpu.memory_space<vmem>>, vector<1x1x16x64xf32>
    %984 = vector.shape_cast %983 : vector<1x1x16x64xf32> to vector<16x64xf32>
    %c1_400 = arith.constant 1 : index
    %c1_401 = arith.constant 1 : index
    %c40_402 = arith.constant 40 : index
    %c0_403 = arith.constant 0 : index
    %985 = vector.load %arg1[%c1_400, %c1_401, %c40_402, %c0_403] : memref<2x2x136x64xf32, #tpu.memory_space<vmem>>, vector<1x1x8x64xf32>
    %986 = vector.shape_cast %985 : vector<1x1x8x64xf32> to vector<8x64xf32>
    %c1_404 = arith.constant 1 : index
    %c1_405 = arith.constant 1 : index
    %c48_406 = arith.constant 48 : index
    %c0_407 = arith.constant 0 : index
    %987 = vector.load %arg1[%c1_404, %c1_405, %c48_406, %c0_407] : memref<2x2x136x64xf32, #tpu.memory_space<vmem>>, vector<1x1x32x64xf32>
    %988 = vector.shape_cast %987 : vector<1x1x32x64xf32> to vector<32x64xf32>
    %c1_408 = arith.constant 1 : index
    %c1_409 = arith.constant 1 : index
    %c80_410 = arith.constant 80 : index
    %c0_411 = arith.constant 0 : index
    %989 = vector.load %arg1[%c1_408, %c1_409, %c80_410, %c0_411] : memref<2x2x136x64xf32, #tpu.memory_space<vmem>>, vector<1x1x16x64xf32>
    %990 = vector.shape_cast %989 : vector<1x1x16x64xf32> to vector<16x64xf32>
    %c1_412 = arith.constant 1 : index
    %c1_413 = arith.constant 1 : index
    %c96_414 = arith.constant 96 : index
    %c0_415 = arith.constant 0 : index
    %991 = vector.load %arg1[%c1_412, %c1_413, %c96_414, %c0_415] : memref<2x2x136x64xf32, #tpu.memory_space<vmem>>, vector<1x1x4x64xf32>
    %992 = vector.shape_cast %991 : vector<1x1x4x64xf32> to vector<4x64xf32>
    %c1_416 = arith.constant 1 : index
    %c1_417 = arith.constant 1 : index
    %c104_418 = arith.constant 104 : index
    %c0_419 = arith.constant 0 : index
    %993 = vector.load %arg1[%c1_416, %c1_417, %c104_418, %c0_419] : memref<2x2x136x64xf32, #tpu.memory_space<vmem>>, vector<1x1x1x64xf32>
    %994 = vector.shape_cast %993 : vector<1x1x1x64xf32> to vector<1x64xf32>
    %c1_420 = arith.constant 1 : index
    %c1_421 = arith.constant 1 : index
    %c112_422 = arith.constant 112 : index
    %c0_423 = arith.constant 0 : index
    %995 = vector.load %arg1[%c1_420, %c1_421, %c112_422, %c0_423] : memref<2x2x136x64xf32, #tpu.memory_space<vmem>>, vector<1x1x1x64xf32>
    %996 = vector.shape_cast %995 : vector<1x1x1x64xf32> to vector<1x64xf32>
    %c1_424 = arith.constant 1 : index
    %c1_425 = arith.constant 1 : index
    %c120_426 = arith.constant 120 : index
    %c0_427 = arith.constant 0 : index
    %997 = vector.load %arg1[%c1_424, %c1_425, %c120_426, %c0_427] : memref<2x2x136x64xf32, #tpu.memory_space<vmem>>, vector<1x1x1x64xf32>
    %998 = vector.shape_cast %997 : vector<1x1x1x64xf32> to vector<1x64xf32>
    %c1_428 = arith.constant 1 : index
    %c1_429 = arith.constant 1 : index
    %c128_430 = arith.constant 128 : index
    %c0_431 = arith.constant 0 : index
    %999 = vector.load %arg1[%c1_428, %c1_429, %c128_430, %c0_431] : memref<2x2x136x64xf32, #tpu.memory_space<vmem>>, vector<1x1x1x64xf32>
    %1000 = vector.shape_cast %999 : vector<1x1x1x64xf32> to vector<1x64xf32>
    %1001 = arith.mulf %972, %972 : vector<16x32xf32>
    %cst_432 = arith.constant dense<0.000000e+00> : vector<16xf32>
    %1002 = vector.multi_reduction <add>, %1001, %cst_432 [1] : vector<16x32xf32> to vector<16xf32>
    %1003 = vector.shape_cast %1002 : vector<16xf32> to vector<16x1xf32>
    %cst_433 = arith.constant 3.200000e+01 : f32
    %1004 = vector.broadcast %cst_433 : f32 to vector<16x1xf32>
    %1005 = arith.divf %1003, %1004 : vector<16x1xf32>
    %cst_434 = arith.constant 9.99999974E-6 : f32
    %1006 = vector.broadcast %cst_434 : f32 to vector<16x1xf32>
    %1007 = arith.addf %1005, %1006 : vector<16x1xf32>
    %1008 = math.rsqrt %1007 : vector<16x1xf32>
    %1009 = vector.broadcast %1008 : vector<16x1xf32> to vector<16x32xf32>
    %1010 = arith.mulf %972, %1009 : vector<16x32xf32>
    %1011 = vector.broadcast %976 : vector<1x32xf32> to vector<16x32xf32>
    %1012 = arith.mulf %1010, %1011 : vector<16x32xf32>
    %cst_435 = arith.constant dense<0.000000e+00> : vector<16x128xf32>
    %1013 = tpu.matmul %1012, %974, %cst_435 {dimension_numbers = #tpu.dot_dimension_numbers<[1], [1], [0], [0], [0, 0, 1, 0], [], []>} : vector<16x32xf32>, vector<128x32xf32>, vector<16x128xf32> -> vector<16x128xf32>
    %1014 = vector.extract_strided_slice %1013 {offsets = [0, 0], sizes = [16, 64], strides = [1, 1]} : vector<16x128xf32> to vector<16x64xf32>
    %1015 = vector.broadcast %994 : vector<1x64xf32> to vector<16x64xf32>
    %1016 = arith.addf %1014, %1015 : vector<16x64xf32>
    %1017 = vector.extract_strided_slice %1013 {offsets = [0, 64], sizes = [16, 64], strides = [1, 1]} : vector<16x128xf32> to vector<16x64xf32>
    %1018 = vector.broadcast %996 : vector<1x64xf32> to vector<16x64xf32>
    %1019 = arith.addf %1017, %1018 : vector<16x64xf32>
    %1020 = vector.shape_cast %1016 : vector<16x64xf32> to vector<2x8x64xf32>
    %1021 = vector.extract_strided_slice %992 {offsets = [3, 0], sizes = [1, 64], strides = [1, 1]} : vector<4x64xf32> to vector<1x64xf32>
    %1022 = vector.shape_cast %1021 : vector<1x64xf32> to vector<1x1x64xf32>
    %1023 = vector.broadcast %1022 : vector<1x1x64xf32> to vector<2x8x64xf32>
    %1024 = arith.mulf %1020, %1023 : vector<2x8x64xf32>
    %cst_436 = arith.constant 0.000000e+00 : f32
    %1025 = vector.broadcast %cst_436 : f32 to vector<2x3x64xf32>
    %1026 = vector.extract_strided_slice %1020 {offsets = [0, 0, 0], sizes = [2, 5, 64], strides = [1, 1, 1]} : vector<2x8x64xf32> to vector<2x5x64xf32>
    %1027 = tpu.concatenate %1025, %1026 in 1 : vector<2x3x64xf32>, vector<2x5x64xf32> -> vector<2x8x64xf32>
    %1028 = vector.extract_strided_slice %992 {offsets = [0, 0], sizes = [1, 64], strides = [1, 1]} : vector<4x64xf32> to vector<1x64xf32>
    %1029 = vector.shape_cast %1028 : vector<1x64xf32> to vector<1x1x64xf32>
    %1030 = vector.broadcast %1029 : vector<1x1x64xf32> to vector<2x8x64xf32>
    %1031 = arith.mulf %1027, %1030 : vector<2x8x64xf32>
    %1032 = arith.addf %1024, %1031 : vector<2x8x64xf32>
    %cst_437 = arith.constant 0.000000e+00 : f32
    %1033 = vector.broadcast %cst_437 : f32 to vector<2x2x64xf32>
    %1034 = vector.extract_strided_slice %1020 {offsets = [0, 0, 0], sizes = [2, 6, 64], strides = [1, 1, 1]} : vector<2x8x64xf32> to vector<2x6x64xf32>
    %1035 = tpu.concatenate %1033, %1034 in 1 : vector<2x2x64xf32>, vector<2x6x64xf32> -> vector<2x8x64xf32>
    %1036 = vector.extract_strided_slice %992 {offsets = [1, 0], sizes = [1, 64], strides = [1, 1]} : vector<4x64xf32> to vector<1x64xf32>
    %1037 = vector.shape_cast %1036 : vector<1x64xf32> to vector<1x1x64xf32>
    %1038 = vector.broadcast %1037 : vector<1x1x64xf32> to vector<2x8x64xf32>
    %1039 = arith.mulf %1035, %1038 : vector<2x8x64xf32>
    %1040 = arith.addf %1032, %1039 : vector<2x8x64xf32>
    %cst_438 = arith.constant 0.000000e+00 : f32
    %1041 = vector.broadcast %cst_438 : f32 to vector<2x1x64xf32>
    %1042 = vector.extract_strided_slice %1020 {offsets = [0, 0, 0], sizes = [2, 7, 64], strides = [1, 1, 1]} : vector<2x8x64xf32> to vector<2x7x64xf32>
    %1043 = tpu.concatenate %1041, %1042 in 1 : vector<2x1x64xf32>, vector<2x7x64xf32> -> vector<2x8x64xf32>
    %1044 = vector.extract_strided_slice %992 {offsets = [2, 0], sizes = [1, 64], strides = [1, 1]} : vector<4x64xf32> to vector<1x64xf32>
    %1045 = vector.shape_cast %1044 : vector<1x64xf32> to vector<1x1x64xf32>
    %1046 = vector.broadcast %1045 : vector<1x1x64xf32> to vector<2x8x64xf32>
    %1047 = arith.mulf %1043, %1046 : vector<2x8x64xf32>
    %1048 = arith.addf %1040, %1047 : vector<2x8x64xf32>
    %1049 = math.absf %1048 : vector<2x8x64xf32>
    %cst_439 = arith.constant 0.000000e+00 : f32
    %1050 = vector.broadcast %cst_439 : f32 to vector<2x8x64xf32>
    %1051 = arith.subf %1050, %1049 : vector<2x8x64xf32>
    %1052 = math.exp %1051 : vector<2x8x64xf32>
    %cst_440 = arith.constant 0.000000e+00 : f32
    %1053 = vector.broadcast %cst_440 : f32 to vector<2x8x64xf32>
    %1054 = arith.cmpf oge, %1048, %1053 : vector<2x8x64xf32>
    %cst_441 = arith.constant 1.000000e+00 : f32
    %1055 = vector.broadcast %cst_441 : f32 to vector<2x8x64xf32>
    %1056 = arith.addf %1055, %1052 : vector<2x8x64xf32>
    %cst_442 = arith.constant 1.000000e+00 : f32
    %1057 = vector.broadcast %cst_442 : f32 to vector<2x8x64xf32>
    %1058 = arith.divf %1057, %1056 : vector<2x8x64xf32>
    %cst_443 = arith.constant 1.000000e+00 : f32
    %1059 = vector.broadcast %cst_443 : f32 to vector<2x8x64xf32>
    %1060 = arith.addf %1059, %1052 : vector<2x8x64xf32>
    %1061 = arith.divf %1052, %1060 : vector<2x8x64xf32>
    %1062 = arith.select %1054, %1058, %1061 : vector<2x8x64xi1>, vector<2x8x64xf32>
    %1063 = arith.mulf %1048, %1062 : vector<2x8x64xf32>
    %1064 = vector.shape_cast %1063 : vector<2x8x64xf32> to vector<16x64xf32>
    %cst_444 = arith.constant dense<0.000000e+00> : vector<16x8xf32>
    %1065 = tpu.matmul %1064, %980, %cst_444 {dimension_numbers = #tpu.dot_dimension_numbers<[1], [1], [0], [0], [0, 0, 1, 0], [], []>} : vector<16x64xf32>, vector<8x64xf32>, vector<16x8xf32> -> vector<16x8xf32>
    %cst_445 = arith.constant dense<0.000000e+00> : vector<16x16xf32>
    %1066 = tpu.matmul %1064, %982, %cst_445 {dimension_numbers = #tpu.dot_dimension_numbers<[1], [1], [0], [0], [0, 0, 1, 0], [], []>} : vector<16x64xf32>, vector<16x64xf32>, vector<16x16xf32> -> vector<16x16xf32>
    %cst_446 = arith.constant dense<0.000000e+00> : vector<16x16xf32>
    %1067 = tpu.matmul %1064, %984, %cst_446 {dimension_numbers = #tpu.dot_dimension_numbers<[1], [1], [0], [0], [0, 0, 1, 0], [], []>} : vector<16x64xf32>, vector<16x64xf32>, vector<16x16xf32> -> vector<16x16xf32>
    %cst_447 = arith.constant dense<0.000000e+00> : vector<16x64xf32>
    %1068 = tpu.matmul %1065, %986, %cst_447 {dimension_numbers = #tpu.dot_dimension_numbers<[1], [0], [0], [1], [0, 0, 1, 1], [], []>} : vector<16x8xf32>, vector<8x64xf32>, vector<16x64xf32> -> vector<16x64xf32>
    %1069 = vector.broadcast %998 : vector<1x64xf32> to vector<16x64xf32>
    %1070 = arith.addf %1068, %1069 : vector<16x64xf32>
    %cst_448 = arith.constant 0.000000e+00 : f32
    %1071 = vector.broadcast %cst_448 : f32 to vector<16x64xf32>
    %1072 = arith.maximumf %1070, %1071 : vector<16x64xf32>
    %1073 = math.absf %1070 : vector<16x64xf32>
    %cst_449 = arith.constant 0.000000e+00 : f32
    %1074 = vector.broadcast %cst_449 : f32 to vector<16x64xf32>
    %1075 = arith.subf %1074, %1073 : vector<16x64xf32>
    %1076 = math.exp %1075 : vector<16x64xf32>
    %1077 = math.log1p %1076 : vector<16x64xf32>
    %1078 = arith.addf %1072, %1077 : vector<16x64xf32>
    %1079 = math.exp %990 : vector<16x64xf32>
    %cst_450 = arith.constant 0.000000e+00 : f32
    %1080 = vector.broadcast %cst_450 : f32 to vector<16x64xf32>
    %1081 = arith.subf %1080, %1079 : vector<16x64xf32>
    %1082 = vector.shape_cast %1078 : vector<16x64xf32> to vector<2x8x64xf32>
    %1083 = arith.mulf %1078, %1064 : vector<16x64xf32>
    %1084 = vector.shape_cast %1083 : vector<16x64xf32> to vector<2x8x64xf32>
    %1085 = vector.shape_cast %1066 : vector<16x16xf32> to vector<2x8x16xf32>
    %cst_451 = arith.constant 0.000000e+00 : f32
    %1086 = vector.broadcast %cst_451 : f32 to vector<2x16x64xf32>
    %1087 = vector.extract_strided_slice %1082 {offsets = [0, 0, 0], sizes = [2, 1, 64], strides = [1, 1, 1]} : vector<2x8x64xf32> to vector<2x1x64xf32>
    %1088 = vector.shape_cast %1087 : vector<2x1x64xf32> to vector<2x64xf32>
    %1089 = vector.shape_cast %1088 : vector<2x64xf32> to vector<2x1x64xf32>
    %1090 = vector.shape_cast %1081 : vector<16x64xf32> to vector<1x16x64xf32>
    %1091 = vector.broadcast %1089 : vector<2x1x64xf32> to vector<2x16x64xf32>
    %1092 = vector.broadcast %1090 : vector<1x16x64xf32> to vector<2x16x64xf32>
    %1093 = arith.mulf %1091, %1092 : vector<2x16x64xf32>
    %1094 = math.exp %1093 : vector<2x16x64xf32>
    %1095 = vector.extract_strided_slice %1084 {offsets = [0, 0, 0], sizes = [2, 1, 64], strides = [1, 1, 1]} : vector<2x8x64xf32> to vector<2x1x64xf32>
    %1096 = vector.shape_cast %1095 : vector<2x1x64xf32> to vector<2x64xf32>
    %1097 = vector.shape_cast %1096 : vector<2x64xf32> to vector<2x1x64xf32>
    %1098 = vector.extract_strided_slice %1085 {offsets = [0, 0, 0], sizes = [2, 1, 16], strides = [1, 1, 1]} : vector<2x8x16xf32> to vector<2x1x16xf32>
    %1099 = vector.shape_cast %1098 : vector<2x1x16xf32> to vector<2x16xf32>
    %1100 = vector.shape_cast %1099 : vector<2x16xf32> to vector<2x16x1xf32>
    %1101 = vector.broadcast %1097 : vector<2x1x64xf32> to vector<2x16x64xf32>
    %1102 = vector.broadcast %1100 : vector<2x16x1xf32> to vector<2x16x64xf32>
    %1103 = arith.mulf %1101, %1102 : vector<2x16x64xf32>
    %1104 = arith.mulf %1086, %1094 : vector<2x16x64xf32>
    %1105 = arith.addf %1104, %1103 : vector<2x16x64xf32>
    %c1_452 = arith.constant 1 : index
    %c0_453 = arith.constant 0 : index
    %c0_454 = arith.constant 0 : index
    %c0_455 = arith.constant 0 : index
    %c0_456 = arith.constant 0 : index
    %1106 = vector.load %arg4[%c1_452, %c0_453, %c0_454, %c0_455, %c0_456] : memref<2x2x8x16x64xf32, #tpu.memory_space<vmem>>, vector<1x2x1x16x64xf32>
    %1107 = vector.shape_cast %1106 : vector<1x2x1x16x64xf32> to vector<2x16x64xf32>
    %1108 = vector.shape_cast %1105 : vector<2x16x64xf32> to vector<1x2x1x16x64xf32>
    tpu.vector_store %arg4[%c1_452, %c0_453, %c0_454, %c0_455, %c0_456], %1108 {strides = array<i32>} : memref<2x2x8x16x64xf32, #tpu.memory_space<vmem>>, vector<1x2x1x16x64xf32>,
    %1109 = vector.extract_strided_slice %1082 {offsets = [0, 1, 0], sizes = [2, 1, 64], strides = [1, 1, 1]} : vector<2x8x64xf32> to vector<2x1x64xf32>
    %1110 = vector.shape_cast %1109 : vector<2x1x64xf32> to vector<2x64xf32>
    %1111 = vector.shape_cast %1110 : vector<2x64xf32> to vector<2x1x64xf32>
    %1112 = vector.shape_cast %1081 : vector<16x64xf32> to vector<1x16x64xf32>
    %1113 = vector.broadcast %1111 : vector<2x1x64xf32> to vector<2x16x64xf32>
    %1114 = vector.broadcast %1112 : vector<1x16x64xf32> to vector<2x16x64xf32>
    %1115 = arith.mulf %1113, %1114 : vector<2x16x64xf32>
    %1116 = math.exp %1115 : vector<2x16x64xf32>
    %1117 = vector.extract_strided_slice %1084 {offsets = [0, 1, 0], sizes = [2, 1, 64], strides = [1, 1, 1]} : vector<2x8x64xf32> to vector<2x1x64xf32>
    %1118 = vector.shape_cast %1117 : vector<2x1x64xf32> to vector<2x64xf32>
    %1119 = vector.shape_cast %1118 : vector<2x64xf32> to vector<2x1x64xf32>
    %1120 = vector.extract_strided_slice %1085 {offsets = [0, 1, 0], sizes = [2, 1, 16], strides = [1, 1, 1]} : vector<2x8x16xf32> to vector<2x1x16xf32>
    %1121 = vector.shape_cast %1120 : vector<2x1x16xf32> to vector<2x16xf32>
    %1122 = vector.shape_cast %1121 : vector<2x16xf32> to vector<2x16x1xf32>
    %1123 = vector.broadcast %1119 : vector<2x1x64xf32> to vector<2x16x64xf32>
    %1124 = vector.broadcast %1122 : vector<2x16x1xf32> to vector<2x16x64xf32>
    %1125 = arith.mulf %1123, %1124 : vector<2x16x64xf32>
    %1126 = arith.mulf %1105, %1116 : vector<2x16x64xf32>
    %1127 = arith.addf %1126, %1125 : vector<2x16x64xf32>
    %c1_457 = arith.constant 1 : index
    %c0_458 = arith.constant 0 : index
    %c1_459 = arith.constant 1 : index
    %c0_460 = arith.constant 0 : index
    %c0_461 = arith.constant 0 : index
    %1128 = vector.load %arg4[%c1_457, %c0_458, %c1_459, %c0_460, %c0_461] : memref<2x2x8x16x64xf32, #tpu.memory_space<vmem>>, vector<1x2x1x16x64xf32>
    %1129 = vector.shape_cast %1128 : vector<1x2x1x16x64xf32> to vector<2x16x64xf32>
    %1130 = vector.shape_cast %1127 : vector<2x16x64xf32> to vector<1x2x1x16x64xf32>
    tpu.vector_store %arg4[%c1_457, %c0_458, %c1_459, %c0_460, %c0_461], %1130 {strides = array<i32>} : memref<2x2x8x16x64xf32, #tpu.memory_space<vmem>>, vector<1x2x1x16x64xf32>,
    %1131 = vector.extract_strided_slice %1082 {offsets = [0, 2, 0], sizes = [2, 1, 64], strides = [1, 1, 1]} : vector<2x8x64xf32> to vector<2x1x64xf32>
    %1132 = vector.shape_cast %1131 : vector<2x1x64xf32> to vector<2x64xf32>
    %1133 = vector.shape_cast %1132 : vector<2x64xf32> to vector<2x1x64xf32>
    %1134 = vector.shape_cast %1081 : vector<16x64xf32> to vector<1x16x64xf32>
    %1135 = vector.broadcast %1133 : vector<2x1x64xf32> to vector<2x16x64xf32>
    %1136 = vector.broadcast %1134 : vector<1x16x64xf32> to vector<2x16x64xf32>
    %1137 = arith.mulf %1135, %1136 : vector<2x16x64xf32>
    %1138 = math.exp %1137 : vector<2x16x64xf32>
    %1139 = vector.extract_strided_slice %1084 {offsets = [0, 2, 0], sizes = [2, 1, 64], strides = [1, 1, 1]} : vector<2x8x64xf32> to vector<2x1x64xf32>
    %1140 = vector.shape_cast %1139 : vector<2x1x64xf32> to vector<2x64xf32>
    %1141 = vector.shape_cast %1140 : vector<2x64xf32> to vector<2x1x64xf32>
    %1142 = vector.extract_strided_slice %1085 {offsets = [0, 2, 0], sizes = [2, 1, 16], strides = [1, 1, 1]} : vector<2x8x16xf32> to vector<2x1x16xf32>
    %1143 = vector.shape_cast %1142 : vector<2x1x16xf32> to vector<2x16xf32>
    %1144 = vector.shape_cast %1143 : vector<2x16xf32> to vector<2x16x1xf32>
    %1145 = vector.broadcast %1141 : vector<2x1x64xf32> to vector<2x16x64xf32>
    %1146 = vector.broadcast %1144 : vector<2x16x1xf32> to vector<2x16x64xf32>
    %1147 = arith.mulf %1145, %1146 : vector<2x16x64xf32>
    %1148 = arith.mulf %1127, %1138 : vector<2x16x64xf32>
    %1149 = arith.addf %1148, %1147 : vector<2x16x64xf32>
    %c1_462 = arith.constant 1 : index
    %c0_463 = arith.constant 0 : index
    %c2_464 = arith.constant 2 : index
    %c0_465 = arith.constant 0 : index
    %c0_466 = arith.constant 0 : index
    %1150 = vector.load %arg4[%c1_462, %c0_463, %c2_464, %c0_465, %c0_466] : memref<2x2x8x16x64xf32, #tpu.memory_space<vmem>>, vector<1x2x1x16x64xf32>
    %1151 = vector.shape_cast %1150 : vector<1x2x1x16x64xf32> to vector<2x16x64xf32>
    %1152 = vector.shape_cast %1149 : vector<2x16x64xf32> to vector<1x2x1x16x64xf32>
    tpu.vector_store %arg4[%c1_462, %c0_463, %c2_464, %c0_465, %c0_466], %1152 {strides = array<i32>} : memref<2x2x8x16x64xf32, #tpu.memory_space<vmem>>, vector<1x2x1x16x64xf32>,
    %1153 = vector.extract_strided_slice %1082 {offsets = [0, 3, 0], sizes = [2, 1, 64], strides = [1, 1, 1]} : vector<2x8x64xf32> to vector<2x1x64xf32>
    %1154 = vector.shape_cast %1153 : vector<2x1x64xf32> to vector<2x64xf32>
    %1155 = vector.shape_cast %1154 : vector<2x64xf32> to vector<2x1x64xf32>
    %1156 = vector.shape_cast %1081 : vector<16x64xf32> to vector<1x16x64xf32>
    %1157 = vector.broadcast %1155 : vector<2x1x64xf32> to vector<2x16x64xf32>
    %1158 = vector.broadcast %1156 : vector<1x16x64xf32> to vector<2x16x64xf32>
    %1159 = arith.mulf %1157, %1158 : vector<2x16x64xf32>
    %1160 = math.exp %1159 : vector<2x16x64xf32>
    %1161 = vector.extract_strided_slice %1084 {offsets = [0, 3, 0], sizes = [2, 1, 64], strides = [1, 1, 1]} : vector<2x8x64xf32> to vector<2x1x64xf32>
    %1162 = vector.shape_cast %1161 : vector<2x1x64xf32> to vector<2x64xf32>
    %1163 = vector.shape_cast %1162 : vector<2x64xf32> to vector<2x1x64xf32>
    %1164 = vector.extract_strided_slice %1085 {offsets = [0, 3, 0], sizes = [2, 1, 16], strides = [1, 1, 1]} : vector<2x8x16xf32> to vector<2x1x16xf32>
    %1165 = vector.shape_cast %1164 : vector<2x1x16xf32> to vector<2x16xf32>
    %1166 = vector.shape_cast %1165 : vector<2x16xf32> to vector<2x16x1xf32>
    %1167 = vector.broadcast %1163 : vector<2x1x64xf32> to vector<2x16x64xf32>
    %1168 = vector.broadcast %1166 : vector<2x16x1xf32> to vector<2x16x64xf32>
    %1169 = arith.mulf %1167, %1168 : vector<2x16x64xf32>
    %1170 = arith.mulf %1149, %1160 : vector<2x16x64xf32>
    %1171 = arith.addf %1170, %1169 : vector<2x16x64xf32>
    %c1_467 = arith.constant 1 : index
    %c0_468 = arith.constant 0 : index
    %c3_469 = arith.constant 3 : index
    %c0_470 = arith.constant 0 : index
    %c0_471 = arith.constant 0 : index
    %1172 = vector.load %arg4[%c1_467, %c0_468, %c3_469, %c0_470, %c0_471] : memref<2x2x8x16x64xf32, #tpu.memory_space<vmem>>, vector<1x2x1x16x64xf32>
    %1173 = vector.shape_cast %1172 : vector<1x2x1x16x64xf32> to vector<2x16x64xf32>
    %1174 = vector.shape_cast %1171 : vector<2x16x64xf32> to vector<1x2x1x16x64xf32>
    tpu.vector_store %arg4[%c1_467, %c0_468, %c3_469, %c0_470, %c0_471], %1174 {strides = array<i32>} : memref<2x2x8x16x64xf32, #tpu.memory_space<vmem>>, vector<1x2x1x16x64xf32>,
    %1175 = vector.extract_strided_slice %1082 {offsets = [0, 4, 0], sizes = [2, 1, 64], strides = [1, 1, 1]} : vector<2x8x64xf32> to vector<2x1x64xf32>
    %1176 = vector.shape_cast %1175 : vector<2x1x64xf32> to vector<2x64xf32>
    %1177 = vector.shape_cast %1176 : vector<2x64xf32> to vector<2x1x64xf32>
    %1178 = vector.shape_cast %1081 : vector<16x64xf32> to vector<1x16x64xf32>
    %1179 = vector.broadcast %1177 : vector<2x1x64xf32> to vector<2x16x64xf32>
    %1180 = vector.broadcast %1178 : vector<1x16x64xf32> to vector<2x16x64xf32>
    %1181 = arith.mulf %1179, %1180 : vector<2x16x64xf32>
    %1182 = math.exp %1181 : vector<2x16x64xf32>
    %1183 = vector.extract_strided_slice %1084 {offsets = [0, 4, 0], sizes = [2, 1, 64], strides = [1, 1, 1]} : vector<2x8x64xf32> to vector<2x1x64xf32>
    %1184 = vector.shape_cast %1183 : vector<2x1x64xf32> to vector<2x64xf32>
    %1185 = vector.shape_cast %1184 : vector<2x64xf32> to vector<2x1x64xf32>
    %1186 = vector.extract_strided_slice %1085 {offsets = [0, 4, 0], sizes = [2, 1, 16], strides = [1, 1, 1]} : vector<2x8x16xf32> to vector<2x1x16xf32>
    %1187 = vector.shape_cast %1186 : vector<2x1x16xf32> to vector<2x16xf32>
    %1188 = vector.shape_cast %1187 : vector<2x16xf32> to vector<2x16x1xf32>
    %1189 = vector.broadcast %1185 : vector<2x1x64xf32> to vector<2x16x64xf32>
    %1190 = vector.broadcast %1188 : vector<2x16x1xf32> to vector<2x16x64xf32>
    %1191 = arith.mulf %1189, %1190 : vector<2x16x64xf32>
    %1192 = arith.mulf %1171, %1182 : vector<2x16x64xf32>
    %1193 = arith.addf %1192, %1191 : vector<2x16x64xf32>
    %c1_472 = arith.constant 1 : index
    %c0_473 = arith.constant 0 : index
    %c4_474 = arith.constant 4 : index
    %c0_475 = arith.constant 0 : index
    %c0_476 = arith.constant 0 : index
    %1194 = vector.load %arg4[%c1_472, %c0_473, %c4_474, %c0_475, %c0_476] : memref<2x2x8x16x64xf32, #tpu.memory_space<vmem>>, vector<1x2x1x16x64xf32>
    %1195 = vector.shape_cast %1194 : vector<1x2x1x16x64xf32> to vector<2x16x64xf32>
    %1196 = vector.shape_cast %1193 : vector<2x16x64xf32> to vector<1x2x1x16x64xf32>
    tpu.vector_store %arg4[%c1_472, %c0_473, %c4_474, %c0_475, %c0_476], %1196 {strides = array<i32>} : memref<2x2x8x16x64xf32, #tpu.memory_space<vmem>>, vector<1x2x1x16x64xf32>,
    %1197 = vector.extract_strided_slice %1082 {offsets = [0, 5, 0], sizes = [2, 1, 64], strides = [1, 1, 1]} : vector<2x8x64xf32> to vector<2x1x64xf32>
    %1198 = vector.shape_cast %1197 : vector<2x1x64xf32> to vector<2x64xf32>
    %1199 = vector.shape_cast %1198 : vector<2x64xf32> to vector<2x1x64xf32>
    %1200 = vector.shape_cast %1081 : vector<16x64xf32> to vector<1x16x64xf32>
    %1201 = vector.broadcast %1199 : vector<2x1x64xf32> to vector<2x16x64xf32>
    %1202 = vector.broadcast %1200 : vector<1x16x64xf32> to vector<2x16x64xf32>
    %1203 = arith.mulf %1201, %1202 : vector<2x16x64xf32>
    %1204 = math.exp %1203 : vector<2x16x64xf32>
    %1205 = vector.extract_strided_slice %1084 {offsets = [0, 5, 0], sizes = [2, 1, 64], strides = [1, 1, 1]} : vector<2x8x64xf32> to vector<2x1x64xf32>
    %1206 = vector.shape_cast %1205 : vector<2x1x64xf32> to vector<2x64xf32>
    %1207 = vector.shape_cast %1206 : vector<2x64xf32> to vector<2x1x64xf32>
    %1208 = vector.extract_strided_slice %1085 {offsets = [0, 5, 0], sizes = [2, 1, 16], strides = [1, 1, 1]} : vector<2x8x16xf32> to vector<2x1x16xf32>
    %1209 = vector.shape_cast %1208 : vector<2x1x16xf32> to vector<2x16xf32>
    %1210 = vector.shape_cast %1209 : vector<2x16xf32> to vector<2x16x1xf32>
    %1211 = vector.broadcast %1207 : vector<2x1x64xf32> to vector<2x16x64xf32>
    %1212 = vector.broadcast %1210 : vector<2x16x1xf32> to vector<2x16x64xf32>
    %1213 = arith.mulf %1211, %1212 : vector<2x16x64xf32>
    %1214 = arith.mulf %1193, %1204 : vector<2x16x64xf32>
    %1215 = arith.addf %1214, %1213 : vector<2x16x64xf32>
    %c1_477 = arith.constant 1 : index
    %c0_478 = arith.constant 0 : index
    %c5_479 = arith.constant 5 : index
    %c0_480 = arith.constant 0 : index
    %c0_481 = arith.constant 0 : index
    %1216 = vector.load %arg4[%c1_477, %c0_478, %c5_479, %c0_480, %c0_481] : memref<2x2x8x16x64xf32, #tpu.memory_space<vmem>>, vector<1x2x1x16x64xf32>
    %1217 = vector.shape_cast %1216 : vector<1x2x1x16x64xf32> to vector<2x16x64xf32>
    %1218 = vector.shape_cast %1215 : vector<2x16x64xf32> to vector<1x2x1x16x64xf32>
    tpu.vector_store %arg4[%c1_477, %c0_478, %c5_479, %c0_480, %c0_481], %1218 {strides = array<i32>} : memref<2x2x8x16x64xf32, #tpu.memory_space<vmem>>, vector<1x2x1x16x64xf32>,
    %1219 = vector.extract_strided_slice %1082 {offsets = [0, 6, 0], sizes = [2, 1, 64], strides = [1, 1, 1]} : vector<2x8x64xf32> to vector<2x1x64xf32>
    %1220 = vector.shape_cast %1219 : vector<2x1x64xf32> to vector<2x64xf32>
    %1221 = vector.shape_cast %1220 : vector<2x64xf32> to vector<2x1x64xf32>
    %1222 = vector.shape_cast %1081 : vector<16x64xf32> to vector<1x16x64xf32>
    %1223 = vector.broadcast %1221 : vector<2x1x64xf32> to vector<2x16x64xf32>
    %1224 = vector.broadcast %1222 : vector<1x16x64xf32> to vector<2x16x64xf32>
    %1225 = arith.mulf %1223, %1224 : vector<2x16x64xf32>
    %1226 = math.exp %1225 : vector<2x16x64xf32>
    %1227 = vector.extract_strided_slice %1084 {offsets = [0, 6, 0], sizes = [2, 1, 64], strides = [1, 1, 1]} : vector<2x8x64xf32> to vector<2x1x64xf32>
    %1228 = vector.shape_cast %1227 : vector<2x1x64xf32> to vector<2x64xf32>
    %1229 = vector.shape_cast %1228 : vector<2x64xf32> to vector<2x1x64xf32>
    %1230 = vector.extract_strided_slice %1085 {offsets = [0, 6, 0], sizes = [2, 1, 16], strides = [1, 1, 1]} : vector<2x8x16xf32> to vector<2x1x16xf32>
    %1231 = vector.shape_cast %1230 : vector<2x1x16xf32> to vector<2x16xf32>
    %1232 = vector.shape_cast %1231 : vector<2x16xf32> to vector<2x16x1xf32>
    %1233 = vector.broadcast %1229 : vector<2x1x64xf32> to vector<2x16x64xf32>
    %1234 = vector.broadcast %1232 : vector<2x16x1xf32> to vector<2x16x64xf32>
    %1235 = arith.mulf %1233, %1234 : vector<2x16x64xf32>
    %1236 = arith.mulf %1215, %1226 : vector<2x16x64xf32>
    %1237 = arith.addf %1236, %1235 : vector<2x16x64xf32>
    %c1_482 = arith.constant 1 : index
    %c0_483 = arith.constant 0 : index
    %c6_484 = arith.constant 6 : index
    %c0_485 = arith.constant 0 : index
    %c0_486 = arith.constant 0 : index
    %1238 = vector.load %arg4[%c1_482, %c0_483, %c6_484, %c0_485, %c0_486] : memref<2x2x8x16x64xf32, #tpu.memory_space<vmem>>, vector<1x2x1x16x64xf32>
    %1239 = vector.shape_cast %1238 : vector<1x2x1x16x64xf32> to vector<2x16x64xf32>
    %1240 = vector.shape_cast %1237 : vector<2x16x64xf32> to vector<1x2x1x16x64xf32>
    tpu.vector_store %arg4[%c1_482, %c0_483, %c6_484, %c0_485, %c0_486], %1240 {strides = array<i32>} : memref<2x2x8x16x64xf32, #tpu.memory_space<vmem>>, vector<1x2x1x16x64xf32>,
    %1241 = vector.extract_strided_slice %1082 {offsets = [0, 7, 0], sizes = [2, 1, 64], strides = [1, 1, 1]} : vector<2x8x64xf32> to vector<2x1x64xf32>
    %1242 = vector.shape_cast %1241 : vector<2x1x64xf32> to vector<2x64xf32>
    %1243 = vector.shape_cast %1242 : vector<2x64xf32> to vector<2x1x64xf32>
    %1244 = vector.shape_cast %1081 : vector<16x64xf32> to vector<1x16x64xf32>
    %1245 = vector.broadcast %1243 : vector<2x1x64xf32> to vector<2x16x64xf32>
    %1246 = vector.broadcast %1244 : vector<1x16x64xf32> to vector<2x16x64xf32>
    %1247 = arith.mulf %1245, %1246 : vector<2x16x64xf32>
    %1248 = math.exp %1247 : vector<2x16x64xf32>
    %1249 = vector.extract_strided_slice %1084 {offsets = [0, 7, 0], sizes = [2, 1, 64], strides = [1, 1, 1]} : vector<2x8x64xf32> to vector<2x1x64xf32>
    %1250 = vector.shape_cast %1249 : vector<2x1x64xf32> to vector<2x64xf32>
    %1251 = vector.shape_cast %1250 : vector<2x64xf32> to vector<2x1x64xf32>
    %1252 = vector.extract_strided_slice %1085 {offsets = [0, 7, 0], sizes = [2, 1, 16], strides = [1, 1, 1]} : vector<2x8x16xf32> to vector<2x1x16xf32>
    %1253 = vector.shape_cast %1252 : vector<2x1x16xf32> to vector<2x16xf32>
    %1254 = vector.shape_cast %1253 : vector<2x16xf32> to vector<2x16x1xf32>
    %1255 = vector.broadcast %1251 : vector<2x1x64xf32> to vector<2x16x64xf32>
    %1256 = vector.broadcast %1254 : vector<2x16x1xf32> to vector<2x16x64xf32>
    %1257 = arith.mulf %1255, %1256 : vector<2x16x64xf32>
    %1258 = arith.mulf %1237, %1248 : vector<2x16x64xf32>
    %1259 = arith.addf %1258, %1257 : vector<2x16x64xf32>
    %c1_487 = arith.constant 1 : index
    %c0_488 = arith.constant 0 : index
    %c7_489 = arith.constant 7 : index
    %c0_490 = arith.constant 0 : index
    %c0_491 = arith.constant 0 : index
    %1260 = vector.load %arg4[%c1_487, %c0_488, %c7_489, %c0_490, %c0_491] : memref<2x2x8x16x64xf32, #tpu.memory_space<vmem>>, vector<1x2x1x16x64xf32>
    %1261 = vector.shape_cast %1260 : vector<1x2x1x16x64xf32> to vector<2x16x64xf32>
    %1262 = vector.shape_cast %1259 : vector<2x16x64xf32> to vector<1x2x1x16x64xf32>
    tpu.vector_store %arg4[%c1_487, %c0_488, %c7_489, %c0_490, %c0_491], %1262 {strides = array<i32>} : memref<2x2x8x16x64xf32, #tpu.memory_space<vmem>>, vector<1x2x1x16x64xf32>,
    %c1_492 = arith.constant 1 : index
    %c0_493 = arith.constant 0 : index
    %c0_494 = arith.constant 0 : index
    %c0_495 = arith.constant 0 : index
    %c0_496 = arith.constant 0 : index
    %1263 = vector.load %arg4[%c1_492, %c0_493, %c0_494, %c0_495, %c0_496] : memref<2x2x8x16x64xf32, #tpu.memory_space<vmem>>, vector<1x2x8x16x64xf32>
    %1264 = vector.shape_cast %1263 : vector<1x2x8x16x64xf32> to vector<2x8x16x64xf32>
    %1265 = vector.shape_cast %1067 : vector<16x16xf32> to vector<16x16x1xf32>
    %1266 = vector.shape_cast %1265 : vector<16x16x1xf32> to vector<2x8x16x1xf32>
    %1267 = vector.broadcast %1266 : vector<2x8x16x1xf32> to vector<2x8x16x64xf32>
    %1268 = arith.mulf %1264, %1267 : vector<2x8x16x64xf32>
    %cst_497 = arith.constant dense<0.000000e+00> : vector<2x8x64xf32>
    %1269 = vector.multi_reduction <add>, %1268, %cst_497 [2] : vector<2x8x16x64xf32> to vector<2x8x64xf32>
    %1270 = vector.shape_cast %1269 : vector<2x8x64xf32> to vector<16x64xf32>
    %1271 = vector.broadcast %1000 : vector<1x64xf32> to vector<16x64xf32>
    %1272 = arith.mulf %1064, %1271 : vector<16x64xf32>
    %1273 = arith.addf %1270, %1272 : vector<16x64xf32>
    %1274 = math.absf %1019 : vector<16x64xf32>
    %cst_498 = arith.constant 0.000000e+00 : f32
    %1275 = vector.broadcast %cst_498 : f32 to vector<16x64xf32>
    %1276 = arith.subf %1275, %1274 : vector<16x64xf32>
    %1277 = math.exp %1276 : vector<16x64xf32>
    %cst_499 = arith.constant 0.000000e+00 : f32
    %1278 = vector.broadcast %cst_499 : f32 to vector<16x64xf32>
    %1279 = arith.cmpf oge, %1019, %1278 : vector<16x64xf32>
    %cst_500 = arith.constant 1.000000e+00 : f32
    %1280 = vector.broadcast %cst_500 : f32 to vector<16x64xf32>
    %1281 = arith.addf %1280, %1277 : vector<16x64xf32>
    %cst_501 = arith.constant 1.000000e+00 : f32
    %1282 = vector.broadcast %cst_501 : f32 to vector<16x64xf32>
    %1283 = arith.divf %1282, %1281 : vector<16x64xf32>
    %cst_502 = arith.constant 1.000000e+00 : f32
    %1284 = vector.broadcast %cst_502 : f32 to vector<16x64xf32>
    %1285 = arith.addf %1284, %1277 : vector<16x64xf32>
    %1286 = arith.divf %1277, %1285 : vector<16x64xf32>
    %1287 = arith.select %1279, %1283, %1286 : vector<16x64xi1>, vector<16x64xf32>
    %1288 = arith.mulf %1019, %1287 : vector<16x64xf32>
    %1289 = arith.mulf %1273, %1288 : vector<16x64xf32>
    %cst_503 = arith.constant dense<0.000000e+00> : vector<16x32xf32>
    %1290 = tpu.matmul %1289, %988, %cst_503 {dimension_numbers = #tpu.dot_dimension_numbers<[1], [1], [0], [0], [0, 0, 1, 0], [], []>} : vector<16x64xf32>, vector<32x64xf32>, vector<16x32xf32> -> vector<16x32xf32>
    %1291 = arith.addf %972, %1290 : vector<16x32xf32>
    %1292 = vector.broadcast %978 : vector<1x32xf32> to vector<16x32xf32>
    %1293 = arith.addf %1291, %1292 : vector<16x32xf32>
    %1294 = vector.shape_cast %1293 : vector<16x32xf32> to vector<2x8x32xf32>
    %c1_504 = arith.constant 1 : index
    %c0_505 = arith.constant 0 : index
    %c0_506 = arith.constant 0 : index
    %c0_507 = arith.constant 0 : index
    %1295 = vector.load %arg3[%c1_504, %c0_505, %c0_506, %c0_507] : memref<2x2x8x32xf32, #tpu.memory_space<vmem>>, vector<1x2x8x32xf32>
    %1296 = vector.shape_cast %1295 : vector<1x2x8x32xf32> to vector<2x8x32xf32>
    %1297 = vector.shape_cast %1294 : vector<2x8x32xf32> to vector<1x2x8x32xf32>
    tpu.vector_store %arg3[%c1_504, %c0_505, %c0_506, %c0_507], %1297 {strides = array<i32>} : memref<2x2x8x32xf32, #tpu.memory_space<vmem>>, vector<1x2x8x32xf32>,
    return
  }
}

</mosaic_0001>

<llo_original>
// kernel: mamba_original_forward.1
$region0: #{mamba_original_forward.1}
  #allocation0 [shape = 'u32[]', space=smem, size = 0x4, offset = 0x4, fixed_abs, tag = 'smem constant byte address 0x4 - core index']
  #allocation1 [shape = 'u32[72,128]{1,0:T(1,128)}', space=vmem, size = 0x9000, scoped, tag = 'internal scratch']
  #allocation2 [shape = 'f32[2,2,8,16,64]{4,3,2,1,0:T(8,128)}', space=vmem, size = 0x40000, scoped, tag = 'scratch operand']
  %s0 = inlined_call_operand.vmem [shape: f32[2,2,8,32], index: 0, kind: input, shape index: {}]
  %s1 = inlined_call_operand.vmem [shape: f32[2,2,136,64], index: 1, kind: input, shape index: {}]
  %s2 = inlined_call_operand.vmem [shape: f32[2,2,144,32], index: 2, kind: input, shape index: {}]
  %s3 = inlined_call_operand.vmem [shape: f32[2,2,8,32], index: 3, kind: output, shape index: {}]
  %s4 = sld [smem:[#allocation0]]
  $region22: #{mamba_original_forward.1} parent=0
    _
  %s6 = ssub.s32 1, %s4
  %s7 = scalar_select 0, %s6, %s4
  // Predicated region
  $region2: #{mamba_original_forward.1} parent=0 // pred_check
    _
  $region3: #{mamba_original_forward.1} parent=0 // pred_check_branch
    %9 = sbr.rel (0) target = $region5
  $region4: #{mamba_original_forward.1} parent=0 // pred_region
    _
  $region5: #{mamba_original_forward.1} parent=0 // pred_fallthru
    _
  // Predicated region
  $region6: #{mamba_original_forward.1} parent=0 // pred_check
    _
  $region7: #{mamba_original_forward.1} parent=0 // pred_check_branch
    %11 = sbr.rel (0) target = $region9
  $region8: #{mamba_original_forward.1} parent=0 // pred_region
    _
  $region9: #{mamba_original_forward.1} parent=0 // pred_fallthru
    _
  // Predicated region
  $region10: #{mamba_original_forward.1} parent=0 // pred_check
    _
  $region11: #{mamba_original_forward.1} parent=0 // pred_check_branch
    %13 = sbr.rel (0) target = $region13
  $region12: #{mamba_original_forward.1} parent=0 // pred_region
    _
  $region13: #{mamba_original_forward.1} parent=0 // pred_fallthru
    _
  %v14 = vld [vmem:[%s0] sm:$0xff]
  %v15 = vld [vmem:[%s0 + $0x8] sm:$0xff]
  %v16 = vld [vmem:[%s2] sm:$0xff]
  %v17 = vld [vmem:[%s2 + $0x8] sm:$0xff]
  %v18 = vld [vmem:[%s2 + $0x10] sm:$0xff]
  %v19 = vld [vmem:[%s2 + $0x18] sm:$0xff]
  %v20 = vld [vmem:[%s2 + $0x20] sm:$0xff]
  %v21 = vld [vmem:[%s2 + $0x28] sm:$0xff]
  %v22 = vld [vmem:[%s2 + $0x30] sm:$0xff]
  %v23 = vld [vmem:[%s2 + $0x38] sm:$0xff]
  %v24 = vld [vmem:[%s2 + $0x40] sm:$0xff]
  %v25 = vld [vmem:[%s2 + $0x48] sm:$0xff]
  %v26 = vld [vmem:[%s2 + $0x50] sm:$0xff]
  %v27 = vld [vmem:[%s2 + $0x58] sm:$0xff]
  %v28 = vld [vmem:[%s2 + $0x60] sm:$0xff]
  %v29 = vld [vmem:[%s2 + $0x68] sm:$0xff]
  %v30 = vld [vmem:[%s2 + $0x70] sm:$0xff]
  %v31 = vld [vmem:[%s2 + $0x78] sm:$0xff]
  %v32 = vld [vmem:[%s2 + $0x80] sm:$0x1]
  %v33 = vld [vmem:[%s2 + $0x88] sm:$0x1]
  %v34 = vld [vmem:[%s1] sm:$0xff]
  %v35 = vld [vmem:[%s1 + $0x8] sm:$0xff]
  %v36 = vld [vmem:[%s1 + $0x10] sm:$0xff]
  %v37 = vld [vmem:[%s1 + $0x18] sm:$0xff]
  %v38 = vld [vmem:[%s1 + $0x20] sm:$0xff]
  %v39 = vld [vmem:[%s1 + $0x28] sm:$0xff]
  %v40 = vld [vmem:[%s1 + $0x30] sm:$0xff]
  %v41 = vld [vmem:[%s1 + $0x38] sm:$0xff]
  %v42 = vld [vmem:[%s1 + $0x40] sm:$0xff]
  %v43 = vld [vmem:[%s1 + $0x48] sm:$0xff]
  %v44 = vld [vmem:[%s1 + $0x50] sm:$0xff]
  %v45 = vld [vmem:[%s1 + $0x58] sm:$0xff]
  %v46 = vld [vmem:[%s1 + $0x60] sm:$0xf]
  %v47 = vld [vmem:[%s1 + $0x68] sm:$0x1]
  %v48 = vld [vmem:[%s1 + $0x70] sm:$0x1]
  %v49 = vld [vmem:[%s1 + $0x78] sm:$0x1]
  %v50 = vld [vmem:[%s1 + $0x80] sm:$0x1]
  %v51 = vmul.f32 %v14, %v14
  %v52 = vmul.f32 %v15, %v15
  %vm53 = vcmask 261120
  %v54 = vsel %vm53, %v51, 0.0
  %55 = vadd.xlane.f32.xlu0 %v54
  %v56 = vpop.xlane.xlu0 %55
  %v57 = vsel %vm53, %v52, 0.0
  %58 = vadd.xlane.f32.xlu0 %v57
  %v59 = vpop.xlane.xlu0 %58
  %v60 = vrcp.pop 32.0
  %v61 = vmul.f32 32.0, %v60
  %v62 = vsub.f32 1.0, %v61
  %v63 = vmul.f32 %v60, %v62
  %v64 = vadd.f32 %v60, %v63
  %vm65 = vweird.f32 %v60
  %v66 = vsel %vm65, %v60, %v64
  %v67 = vmul.f32 %v56, %v66
  %v68 = vmul.f32 %v59, %v66
  %v69 = vadd.f32 %v67, 1e-05
  %v70 = vadd.f32 %v68, 1e-05
  %v71 = vrsqrt.pop %v69
  %v72 = vmul.f32 %v71, %v69
  %v73 = vmul.f32 %v72, %v71
  %v74 = vmul.f32 0.5, %v73
  %v75 = vsub.f32 1.5, %v74
  %v76 = vmul.f32 %v71, %v75
  %vm77 = vweird.f32 %v69
  %vm78 = vweird.f32 %v71
  %vm79 = vmor %vm77, %vm78
  %v80 = vsel %vm79, %v71, %v76
  %v81 = vrsqrt.pop %v70
  %v82 = vmul.f32 %v81, %v70
  %v83 = vmul.f32 %v82, %v81
  %v84 = vmul.f32 0.5, %v83
  %v85 = vsub.f32 1.5, %v84
  %v86 = vmul.f32 %v81, %v85
  %vm87 = vweird.f32 %v70
  %vm88 = vweird.f32 %v81
  %vm89 = vmor %vm87, %vm88
  %v90 = vsel %vm89, %v81, %v86
  %v91 = vmul.f32 %v14, %v80
  %v92 = vmul.f32 %v15, %v90
  %v93 = vperm.slane %v32, 0
  %v94 = vmul.f32 %v91, %v93
  %v95 = vmul.f32 %v92, %v93
  %v97 = vsel %vm53, %v94, 0
  %v100 = vsel %vm53, %v95, 0
  %v103 = vsel %vm53, %v16, 0
  %v106 = vsel %vm53, %v17, 0
  %v109 = vsel %vm53, %v18, 0
  %v112 = vsel %vm53, %v19, 0
  %v115 = vsel %vm53, %v20, 0
  %v118 = vsel %vm53, %v21, 0
  %v121 = vsel %vm53, %v22, 0
  %v124 = vsel %vm53, %v23, 0
  %v127 = vsel %vm53, %v24, 0
  %v130 = vsel %vm53, %v25, 0
  %v133 = vsel %vm53, %v26, 0
  %v136 = vsel %vm53, %v27, 0
  %v139 = vsel %vm53, %v28, 0
  %v142 = vsel %vm53, %v29, 0
  %v145 = vsel %vm53, %v30, 0
  %v148 = vsel %vm53, %v31, 0
  %150 = vmatpush.xpose.msra.mxu0 %v148
  %151 = vmatpush.xpose.msra.mxu0 %v145
  %152 = vmatpush.xpose.msra.mxu0 %v142
  %153 = vmatpush.xpose.msra.mxu0 %v139
  %154 = vmatpush.xpose.msra.mxu0 %v136
  %155 = vmatpush.xpose.msra.mxu0 %v133
  %156 = vmatpush.xpose.msra.mxu0 %v130
  %157 = vmatpush.xpose.msra.mxu0 %v127
  %158 = vmatpush.xpose.msra.mxu0 %v124
  %159 = vmatpush.xpose.msra.mxu0 %v121
  %160 = vmatpush.xpose.msra.mxu0 %v118
  %161 = vmatpush.xpose.msra.mxu0 %v115
  %162 = vmatpush.xpose.msra.mxu0 %v112
  %163 = vmatpush.xpose.msra.mxu0 %v109
  %164 = vmatpush.xpose.msra.mxu0 %v106
  %165 = vmatpush.xpose.msra.mxu0 %v103
  %166 = vmatmul.f32.gmra.mxu0 %v97
  %v167 = vpop.f32.mrf.mxu0
  %v168 = vadd.f32 0.0, %v167
  %169 = vmatmul.f32.gmra.mxu0 %v100
  %v170 = vpop.f32.mrf.mxu0
  %v171 = vadd.f32 0.0, %v170
  %172 = vdwg.mxu0
  %v173 = vperm.slane %v47, 0
  %v174 = vadd.f32 %v168, %v173
  %v175 = vadd.f32 %v171, %v173
  %v176 = vperm.slane %v48, 0
  %178 = vrot.lane.b32.xlu0 %v176, 64
  %v179 = vpop.permute.xlu0 %178
  %v181 = vadd.f32 %v168, %v179
  %v182 = vadd.f32 %v171, %v179
  %v183 = vperm.slane %v46, 3
  %v184 = vmul.f32 %v174, %v183
  %v185 = vmul.f32 %v175, %v183
  %v188 = vrot.slane %v174, 5
  %v189 = vrot.slane %v175, 5
  %vm192 = vcmask 1042432
  %v193 = vsel %vm192, 0.0, %v188
  %v194 = vsel %vm192, 0.0, %v189
  %v195 = vperm.slane %v46, 0
  %v196 = vmul.f32 %v193, %v195
  %v197 = vmul.f32 %v194, %v195
  %v198 = vadd.f32 %v184, %v196
  %v199 = vadd.f32 %v185, %v197
  %v200 = vrot.slane %v174, 6
  %v201 = vrot.slane %v175, 6
  %vm204 = vcmask 1041408
  %v205 = vsel %vm204, 0.0, %v200
  %v206 = vsel %vm204, 0.0, %v201
  %v207 = vperm.slane %v46, 1
  %v208 = vmul.f32 %v205, %v207
  %v209 = vmul.f32 %v206, %v207
  %v210 = vadd.f32 %v198, %v208
  %v211 = vadd.f32 %v199, %v209
  %v212 = vrot.slane %v174, 7
  %v213 = vrot.slane %v175, 7
  %vm216 = vcmask 1040384
  %v217 = vsel %vm216, 0.0, %v212
  %v218 = vsel %vm216, 0.0, %v213
  %v219 = vperm.slane %v46, 2
  %v220 = vmul.f32 %v217, %v219
  %v221 = vmul.f32 %v218, %v219
  %v222 = vadd.f32 %v210, %v220
  %v223 = vadd.f32 %v211, %v221
  %v224 = vand.u32 2147483647, %v222
  %v225 = vand.u32 2147483647, %v223
  %v226 = vsub.f32 0.0, %v224
  %v227 = vsub.f32 0.0, %v225
  %v228 = vmul.f32 %v226, 1.442695
  %v229 = vpow.pop %v228
  %v230 = vmul.f32 %v227, 1.442695
  %v231 = vpow.pop %v230
  %vm232 = vcmp.ge.f32.partialorder %v222, 0.0
  %vm233 = vcmp.ge.f32.partialorder %v223, 0.0
  %v234 = vadd.f32 %v229, 1.0
  %v235 = vadd.f32 %v231, 1.0
  %v236 = vrcp.pop %v234
  %v237 = vmul.f32 %v234, %v236
  %v238 = vsub.f32 1.0, %v237
  %v239 = vmul.f32 %v236, %v238
  %v240 = vadd.f32 %v236, %v239
  %vm241 = vweird.f32 %v234
  %vm242 = vweird.f32 %v236
  %vm243 = vmor %vm241, %vm242
  %v244 = vsel %vm243, %v236, %v240
  %v245 = vand.u32 2147483647, %v234
  %vm246 = vcmp.eq.f32.partialorder %v245, 8.507059e+37
  %v247 = vand.u32 %v234, 2147483648
  %v248 = vor.u32 1.1754944e-38, %v247
  %v249 = vsel %vm246, %v248, %v244
  %v250 = vmul.f32 1.0, %v249
  %v251 = vrcp.pop %v235
  %v252 = vmul.f32 %v235, %v251
  %v253 = vsub.f32 1.0, %v252
  %v254 = vmul.f32 %v251, %v253
  %v255 = vadd.f32 %v251, %v254
  %vm256 = vweird.f32 %v235
  %vm257 = vweird.f32 %v251
  %vm258 = vmor %vm256, %vm257
  %v259 = vsel %vm258, %v251, %v255
  %v260 = vand.u32 2147483647, %v235
  %vm261 = vcmp.eq.f32.partialorder %v260, 8.507059e+37
  %v262 = vand.u32 %v235, 2147483648
  %v263 = vor.u32 1.1754944e-38, %v262
  %v264 = vsel %vm261, %v263, %v259
  %v265 = vmul.f32 1.0, %v264
  %v266 = vmul.f32 %v229, %v249
  %v267 = vmul.f32 %v231, %v264
  %v268 = vsel %vm232, %v250, %v266
  %v269 = vsel %vm233, %v265, %v267
  %v270 = vmul.f32 %v222, %v268
  %v271 = vmul.f32 %v223, %v269
  %vm272 = vcmask 523264
  %v274 = vsel %vm272, %v270, 0
  %v277 = vsel %vm272, %v271, 0
  %v280 = vsel %vm272, %v34, 0
  %282 = vmatpush.xpose.msra.mxu0 0.0
  %283 = vmatpush.xpose.msra.mxu0 0.0
  %284 = vmatpush.xpose.msra.mxu0 0.0
  %285 = vmatpush.xpose.msra.mxu0 0.0
  %286 = vmatpush.xpose.msra.mxu0 0.0
  %287 = vmatpush.xpose.msra.mxu0 0.0
  %288 = vmatpush.xpose.msra.mxu0 0.0
  %289 = vmatpush.xpose.msra.mxu0 0.0
  %290 = vmatpush.xpose.msra.mxu0 0.0
  %291 = vmatpush.xpose.msra.mxu0 0.0
  %292 = vmatpush.xpose.msra.mxu0 0.0
  %293 = vmatpush.xpose.msra.mxu0 0.0
  %294 = vmatpush.xpose.msra.mxu0 0.0
  %295 = vmatpush.xpose.msra.mxu0 0.0
  %296 = vmatpush.xpose.msra.mxu0 0.0
  %297 = vmatpush.xpose.msra.mxu0 %v280
  %298 = vmatmul.f32.gmra.mxu0 %v274
  %v299 = vpop.f32.mrf.mxu0
  %v300 = vadd.f32 0.0, %v299
  %301 = vmatmul.f32.gmra.mxu0 %v277
  %v302 = vpop.f32.mrf.mxu0
  %v303 = vadd.f32 0.0, %v302
  %304 = vdwg.mxu0
  %v306 = vsel %vm272, %v35, 0
  %v309 = vsel %vm272, %v36, 0
  %311 = vmatpush.xpose.msra.mxu0 0.0
  %312 = vmatpush.xpose.msra.mxu0 0.0
  %313 = vmatpush.xpose.msra.mxu0 0.0
  %314 = vmatpush.xpose.msra.mxu0 0.0
  %315 = vmatpush.xpose.msra.mxu0 0.0
  %316 = vmatpush.xpose.msra.mxu0 0.0
  %317 = vmatpush.xpose.msra.mxu0 0.0
  %318 = vmatpush.xpose.msra.mxu0 0.0
  %319 = vmatpush.xpose.msra.mxu0 0.0
  %320 = vmatpush.xpose.msra.mxu0 0.0
  %321 = vmatpush.xpose.msra.mxu0 0.0
  %322 = vmatpush.xpose.msra.mxu0 0.0
  %323 = vmatpush.xpose.msra.mxu0 0.0
  %324 = vmatpush.xpose.msra.mxu0 0.0
  %325 = vmatpush.xpose.msra.mxu0 %v309
  %326 = vmatpush.xpose.msra.mxu0 %v306
  %327 = vmatmul.f32.gmra.mxu0 %v274
  %v328 = vpop.f32.mrf.mxu0
  %v329 = vadd.f32 0.0, %v328
  %330 = vmatmul.f32.gmra.mxu0 %v277
  %v331 = vpop.f32.mrf.mxu0
  %v332 = vadd.f32 0.0, %v331
  %333 = vdwg.mxu0
  %v335 = vsel %vm272, %v37, 0
  %v338 = vsel %vm272, %v38, 0
  %340 = vmatpush.xpose.msra.mxu0 0.0
  %341 = vmatpush.xpose.msra.mxu0 0.0
  %342 = vmatpush.xpose.msra.mxu0 0.0
  %343 = vmatpush.xpose.msra.mxu0 0.0
  %344 = vmatpush.xpose.msra.mxu0 0.0
  %345 = vmatpush.xpose.msra.mxu0 0.0
  %346 = vmatpush.xpose.msra.mxu0 0.0
  %347 = vmatpush.xpose.msra.mxu0 0.0
  %348 = vmatpush.xpose.msra.mxu0 0.0
  %349 = vmatpush.xpose.msra.mxu0 0.0
  %350 = vmatpush.xpose.msra.mxu0 0.0
  %351 = vmatpush.xpose.msra.mxu0 0.0
  %352 = vmatpush.xpose.msra.mxu0 0.0
  %353 = vmatpush.xpose.msra.mxu0 0.0
  %354 = vmatpush.xpose.msra.mxu0 %v338
  %355 = vmatpush.xpose.msra.mxu0 %v335
  %356 = vmatmul.f32.gmra.mxu0 %v274
  %v357 = vpop.f32.mrf.mxu0
  %v358 = vadd.f32 0.0, %v357
  %359 = vmatmul.f32.gmra.mxu0 %v277
  %v360 = vpop.f32.mrf.mxu0
  %v361 = vadd.f32 0.0, %v360
  %362 = vdwg.mxu0
  %v363 = vperm.slane %v49, 0
  %vm364 = vcmask 64512
  %v366 = vsel %vm364, %v300, 0
  %v369 = vsel %vm364, %v303, 0
  %371 = vmatpush.msra.mxu0 0.0
  %372 = vmatpush.msra.mxu0 0.0
  %373 = vmatpush.msra.mxu0 0.0
  %374 = vmatpush.msra.mxu0 0.0
  %375 = vmatpush.msra.mxu0 0.0
  %376 = vmatpush.msra.mxu0 0.0
  %377 = vmatpush.msra.mxu0 0.0
  %378 = vmatpush.msra.mxu0 0.0
  %379 = vmatpush.msra.mxu0 0.0
  %380 = vmatpush.msra.mxu0 0.0
  %381 = vmatpush.msra.mxu0 0.0
  %382 = vmatpush.msra.mxu0 0.0
  %383 = vmatpush.msra.mxu0 0.0
  %384 = vmatpush.msra.mxu0 0.0
  %385 = vmatpush.msra.mxu0 0.0
  %386 = vmatpush.msra.mxu0 %v39
  %387 = vmatmul.f32.gmra.mxu0 %v366
  %v388 = vpop.f32.mrf.mxu0
  %v389 = vadd.f32 %v363, %v388
  %390 = vmatmul.f32.gmra.mxu0 %v369
  %v391 = vpop.f32.mrf.mxu0
  %v392 = vadd.f32 %v363, %v391
  %393 = vdwg.mxu0
  %v394 = vmax.f32 %v389, 0.0
  %v395 = vmax.f32 %v392, 0.0
  %v396 = vand.u32 2147483647, %v389
  %v397 = vand.u32 2147483647, %v392
  %v398 = vsub.f32 0.0, %v396
  %v399 = vsub.f32 0.0, %v397
  %v400 = vmul.f32 %v398, 1.442695
  %v401 = vpow.pop %v400
  %v402 = vmul.f32 %v399, 1.442695
  %v403 = vpow.pop %v402
  %v404 = vadd.f32 %v401, 1.0
  %v405 = vlog2.pop %v404
  %v406 = vmul.f32 %v405, 0.6931472
  %v407 = vmul.f32 -0.5, %v401
  %v408 = vadd.f32 %v407, 1.0
  %v409 = vmul.f32 %v408, %v401
  %v410 = vand.u32 2147483647, %v401
  %vm411 = vcmp.lt.f32.partialorder %v410, 0.0004427343
  %v412 = vsel %vm411, %v409, %v406
  %v413 = vadd.f32 %v403, 1.0
  %v414 = vlog2.pop %v413
  %v415 = vmul.f32 %v414, 0.6931472
  %v416 = vmul.f32 -0.5, %v403
  %v417 = vadd.f32 %v416, 1.0
  %v418 = vmul.f32 %v417, %v403
  %v419 = vand.u32 2147483647, %v403
  %vm420 = vcmp.lt.f32.partialorder %v419, 0.0004427343
  %v421 = vsel %vm420, %v418, %v415
  %v422 = vadd.f32 %v394, %v412
  %v423 = vadd.f32 %v395, %v421
  %v424 = vmul.f32 %v44, 1.442695
  %v425 = vpow.pop %v424
  %v426 = vmul.f32 %v45, 1.442695
  %v427 = vpow.pop %v426
  %v428 = vsub.f32 0.0, %v425
  %v429 = vsub.f32 0.0, %v427
  %v430 = vmul.f32 %v422, %v270
  %v431 = vmul.f32 %v423, %v271
  %v432 = vperm.slane %v422, 0
  %v433 = vperm.slane %v423, 0
  %v434 = vmul.f32 %v432, %v428
  %v435 = vmul.f32 %v432, %v429
  %v436 = vmul.f32 %v433, %v428
  %v437 = vmul.f32 %v433, %v429
  %v438 = vmul.f32 %v434, 1.442695
  %v439 = vpow.pop %v438
  %v440 = vmul.f32 %v435, 1.442695
  %v441 = vpow.pop %v440
  %v442 = vmul.f32 %v436, 1.442695
  %v443 = vpow.pop %v442
  %v444 = vmul.f32 %v437, 1.442695
  %v445 = vpow.pop %v444
  %v446 = vperm.slane %v329, 0
  %v447 = vlaneseq
  %v448 = vshrl.u32 %v447, 7
  %450 = vset.pattern.permute.xlu0 %v448
  %451 = vperm.xlu0 %450, %v446
  %v452 = vpop.permute.xlu0 %451
  %v453 = vlaneseq
  %v454 = vshrl.u32 %v453, 7
  %v455 = vadd.s32 %v454, 8
  %456 = vset.pattern.permute.xlu0 %v455
  %457 = vperm.xlu0 %456, %v446
  %v458 = vpop.permute.xlu0 %457
  %v459 = vperm.slane %v332, 0
  %v460 = vlaneseq
  %v461 = vshrl.u32 %v460, 7
  %463 = vset.pattern.permute.xlu0 %v461
  %464 = vperm.xlu0 %463, %v459
  %v465 = vpop.permute.xlu0 %464
  %v466 = vlaneseq
  %v467 = vshrl.u32 %v466, 7
  %v468 = vadd.s32 %v467, 8
  %469 = vset.pattern.permute.xlu0 %v468
  %470 = vperm.xlu0 %469, %v459
  %v471 = vpop.permute.xlu0 %470
  %v472 = vperm.slane %v430, 0
  %v473 = vperm.slane %v431, 0
  %v474 = vmul.f32 %v472, %v452
  %v475 = vmul.f32 %v472, %v458
  %v476 = vmul.f32 %v473, %v465
  %v477 = vmul.f32 %v473, %v471
  %v478 = vmul.f32 %v439, 0.0
  %v479 = vmul.f32 %v441, 0.0
  %v480 = vmul.f32 %v443, 0.0
  %v481 = vmul.f32 %v445, 0.0
  %v482 = vadd.f32 %v478, %v474
  %v483 = vadd.f32 %v479, %v475
  %v484 = vadd.f32 %v480, %v476
  %v485 = vadd.f32 %v481, %v477
  %486 = vst.msk [vmem:[#allocation2] sm:$0xff] %vm272, %v482
  %487 = vst.msk [vmem:[#allocation2 + $0x8] sm:$0xff] %vm272, %v483
  %488 = vst.msk [vmem:[#allocation2 + $0x80] sm:$0xff] %vm272, %v484
  %489 = vst.msk [vmem:[#allocation2 + $0x88] sm:$0xff] %vm272, %v485
  %v490 = vperm.slane %v422, 1
  %v491 = vperm.slane %v423, 1
  %v492 = vmul.f32 %v490, %v428
  %v493 = vmul.f32 %v490, %v429
  %v494 = vmul.f32 %v491, %v428
  %v495 = vmul.f32 %v491, %v429
  %v496 = vmul.f32 %v492, 1.442695
  %v497 = vpow.pop %v496
  %v498 = vmul.f32 %v493, 1.442695
  %v499 = vpow.pop %v498
  %v500 = vmul.f32 %v494, 1.442695
  %v501 = vpow.pop %v500
  %v502 = vmul.f32 %v495, 1.442695
  %v503 = vpow.pop %v502
  %v504 = vperm.slane %v329, 1
  %v505 = vlaneseq
  %v506 = vshrl.u32 %v505, 7
  %508 = vset.pattern.permute.xlu0 %v506
  %509 = vperm.xlu0 %508, %v504
  %v510 = vpop.permute.xlu0 %509
  %v511 = vlaneseq
  %v512 = vshrl.u32 %v511, 7
  %v513 = vadd.s32 %v512, 8
  %514 = vset.pattern.permute.xlu0 %v513
  %515 = vperm.xlu0 %514, %v504
  %v516 = vpop.permute.xlu0 %515
  %v517 = vperm.slane %v332, 1
  %v518 = vlaneseq
  %v519 = vshrl.u32 %v518, 7
  %521 = vset.pattern.permute.xlu0 %v519
  %522 = vperm.xlu0 %521, %v517
  %v523 = vpop.permute.xlu0 %522
  %v524 = vlaneseq
  %v525 = vshrl.u32 %v524, 7
  %v526 = vadd.s32 %v525, 8
  %527 = vset.pattern.permute.xlu0 %v526
  %528 = vperm.xlu0 %527, %v517
  %v529 = vpop.permute.xlu0 %528
  %v530 = vperm.slane %v430, 1
  %v531 = vperm.slane %v431, 1
  %v532 = vmul.f32 %v530, %v510
  %v533 = vmul.f32 %v530, %v516
  %v534 = vmul.f32 %v531, %v523
  %v535 = vmul.f32 %v531, %v529
  %v536 = vmul.f32 %v482, %v497
  %v537 = vmul.f32 %v483, %v499
  %v538 = vmul.f32 %v484, %v501
  %v539 = vmul.f32 %v485, %v503
  %v540 = vadd.f32 %v536, %v532
  %v541 = vadd.f32 %v537, %v533
  %v542 = vadd.f32 %v538, %v534
  %v543 = vadd.f32 %v539, %v535
  %s544 = scalar_lea.vmem [#allocation2], 16
  %545 = vst.msk [vmem:[%s544] sm:$0xff] %vm272, %v540
  %546 = vst.msk [vmem:[%s544 + $0x8] sm:$0xff] %vm272, %v541
  %547 = vst.msk [vmem:[%s544 + $0x80] sm:$0xff] %vm272, %v542
  %548 = vst.msk [vmem:[%s544 + $0x88] sm:$0xff] %vm272, %v543
  %v549 = vperm.slane %v422, 2
  %v550 = vperm.slane %v423, 2
  %v551 = vmul.f32 %v549, %v428
  %v552 = vmul.f32 %v549, %v429
  %v553 = vmul.f32 %v550, %v428
  %v554 = vmul.f32 %v550, %v429
  %v555 = vmul.f32 %v551, 1.442695
  %v556 = vpow.pop %v555
  %v557 = vmul.f32 %v552, 1.442695
  %v558 = vpow.pop %v557
  %v559 = vmul.f32 %v553, 1.442695
  %v560 = vpow.pop %v559
  %v561 = vmul.f32 %v554, 1.442695
  %v562 = vpow.pop %v561
  %v563 = vperm.slane %v329, 2
  %v564 = vlaneseq
  %v565 = vshrl.u32 %v564, 7
  %567 = vset.pattern.permute.xlu0 %v565
  %568 = vperm.xlu0 %567, %v563
  %v569 = vpop.permute.xlu0 %568
  %v570 = vlaneseq
  %v571 = vshrl.u32 %v570, 7
  %v572 = vadd.s32 %v571, 8
  %573 = vset.pattern.permute.xlu0 %v572
  %574 = vperm.xlu0 %573, %v563
  %v575 = vpop.permute.xlu0 %574
  %v576 = vperm.slane %v332, 2
  %v577 = vlaneseq
  %v578 = vshrl.u32 %v577, 7
  %580 = vset.pattern.permute.xlu0 %v578
  %581 = vperm.xlu0 %580, %v576
  %v582 = vpop.permute.xlu0 %581
  %v583 = vlaneseq
  %v584 = vshrl.u32 %v583, 7
  %v585 = vadd.s32 %v584, 8
  %586 = vset.pattern.permute.xlu0 %v585
  %587 = vperm.xlu0 %586, %v576
  %v588 = vpop.permute.xlu0 %587
  %v589 = vperm.slane %v430, 2
  %v590 = vperm.slane %v431, 2
  %v591 = vmul.f32 %v589, %v569
  %v592 = vmul.f32 %v589, %v575
  %v593 = vmul.f32 %v590, %v582
  %v594 = vmul.f32 %v590, %v588
  %v595 = vmul.f32 %v540, %v556
  %v596 = vmul.f32 %v541, %v558
  %v597 = vmul.f32 %v542, %v560
  %v598 = vmul.f32 %v543, %v562
  %v599 = vadd.f32 %v595, %v591
  %v600 = vadd.f32 %v596, %v592
  %v601 = vadd.f32 %v597, %v593
  %v602 = vadd.f32 %v598, %v594
  %s603 = scalar_lea.vmem [#allocation2], 32
  %604 = vst.msk [vmem:[%s603] sm:$0xff] %vm272, %v599
  %605 = vst.msk [vmem:[%s603 + $0x8] sm:$0xff] %vm272, %v600
  %606 = vst.msk [vmem:[%s603 + $0x80] sm:$0xff] %vm272, %v601
  %607 = vst.msk [vmem:[%s603 + $0x88] sm:$0xff] %vm272, %v602
  %v608 = vperm.slane %v422, 3
  %v609 = vperm.slane %v423, 3
  %v610 = vmul.f32 %v608, %v428
  %v611 = vmul.f32 %v608, %v429
  %v612 = vmul.f32 %v609, %v428
  %v613 = vmul.f32 %v609, %v429
  %v614 = vmul.f32 %v610, 1.442695
  %v615 = vpow.pop %v614
  %v616 = vmul.f32 %v611, 1.442695
  %v617 = vpow.pop %v616
  %v618 = vmul.f32 %v612, 1.442695
  %v619 = vpow.pop %v618
  %v620 = vmul.f32 %v613, 1.442695
  %v621 = vpow.pop %v620
  %v622 = vperm.slane %v329, 3
  %v623 = vlaneseq
  %v624 = vshrl.u32 %v623, 7
  %626 = vset.pattern.permute.xlu0 %v624
  %627 = vperm.xlu0 %626, %v622
  %v628 = vpop.permute.xlu0 %627
  %v629 = vlaneseq
  %v630 = vshrl.u32 %v629, 7
  %v631 = vadd.s32 %v630, 8
  %632 = vset.pattern.permute.xlu0 %v631
  %633 = vperm.xlu0 %632, %v622
  %v634 = vpop.permute.xlu0 %633
  %v635 = vperm.slane %v332, 3
  %v636 = vlaneseq
  %v637 = vshrl.u32 %v636, 7
  %639 = vset.pattern.permute.xlu0 %v637
  %640 = vperm.xlu0 %639, %v635
  %v641 = vpop.permute.xlu0 %640
  %v642 = vlaneseq
  %v643 = vshrl.u32 %v642, 7
  %v644 = vadd.s32 %v643, 8
  %645 = vset.pattern.permute.xlu0 %v644
  %646 = vperm.xlu0 %645, %v635
  %v647 = vpop.permute.xlu0 %646
  %v648 = vperm.slane %v430, 3
  %v649 = vperm.slane %v431, 3
  %v650 = vmul.f32 %v648, %v628
  %v651 = vmul.f32 %v648, %v634
  %v652 = vmul.f32 %v649, %v641
  %v653 = vmul.f32 %v649, %v647
  %v654 = vmul.f32 %v599, %v615
  %v655 = vmul.f32 %v600, %v617
  %v656 = vmul.f32 %v601, %v619
  %v657 = vmul.f32 %v602, %v621
  %v658 = vadd.f32 %v654, %v650
  %v659 = vadd.f32 %v655, %v651
  %v660 = vadd.f32 %v656, %v652
  %v661 = vadd.f32 %v657, %v653
  %s662 = scalar_lea.vmem [#allocation2], 48
  %663 = vst.msk [vmem:[%s662] sm:$0xff] %vm272, %v658
  %664 = vst.msk [vmem:[%s662 + $0x8] sm:$0xff] %vm272, %v659
  %665 = vst.msk [vmem:[%s662 + $0x80] sm:$0xff] %vm272, %v660
  %666 = vst.msk [vmem:[%s662 + $0x88] sm:$0xff] %vm272, %v661
  %v667 = vperm.slane %v422, 4
  %v668 = vperm.slane %v423, 4
  %v669 = vmul.f32 %v667, %v428
  %v670 = vmul.f32 %v667, %v429
  %v671 = vmul.f32 %v668, %v428
  %v672 = vmul.f32 %v668, %v429
  %v673 = vmul.f32 %v669, 1.442695
  %v674 = vpow.pop %v673
  %v675 = vmul.f32 %v670, 1.442695
  %v676 = vpow.pop %v675
  %v677 = vmul.f32 %v671, 1.442695
  %v678 = vpow.pop %v677
  %v679 = vmul.f32 %v672, 1.442695
  %v680 = vpow.pop %v679
  %v681 = vperm.slane %v329, 4
  %v682 = vlaneseq
  %v683 = vshrl.u32 %v682, 7
  %685 = vset.pattern.permute.xlu0 %v683
  %686 = vperm.xlu0 %685, %v681
  %v687 = vpop.permute.xlu0 %686
  %v688 = vlaneseq
  %v689 = vshrl.u32 %v688, 7
  %v690 = vadd.s32 %v689, 8
  %691 = vset.pattern.permute.xlu0 %v690
  %692 = vperm.xlu0 %691, %v681
  %v693 = vpop.permute.xlu0 %692
  %v694 = vperm.slane %v332, 4
  %v695 = vlaneseq
  %v696 = vshrl.u32 %v695, 7
  %698 = vset.pattern.permute.xlu0 %v696
  %699 = vperm.xlu0 %698, %v694
  %v700 = vpop.permute.xlu0 %699
  %v701 = vlaneseq
  %v702 = vshrl.u32 %v701, 7
  %v703 = vadd.s32 %v702, 8
  %704 = vset.pattern.permute.xlu0 %v703
  %705 = vperm.xlu0 %704, %v694
  %v706 = vpop.permute.xlu0 %705
  %v707 = vperm.slane %v430, 4
  %v708 = vperm.slane %v431, 4
  %v709 = vmul.f32 %v707, %v687
  %v710 = vmul.f32 %v707, %v693
  %v711 = vmul.f32 %v708, %v700
  %v712 = vmul.f32 %v708, %v706
  %v713 = vmul.f32 %v658, %v674
  %v714 = vmul.f32 %v659, %v676
  %v715 = vmul.f32 %v660, %v678
  %v716 = vmul.f32 %v661, %v680
  %v717 = vadd.f32 %v713, %v709
  %v718 = vadd.f32 %v714, %v710
  %v719 = vadd.f32 %v715, %v711
  %v720 = vadd.f32 %v716, %v712
  %s721 = scalar_lea.vmem [#allocation2], 64
  %722 = vst.msk [vmem:[%s721] sm:$0xff] %vm272, %v717
  %723 = vst.msk [vmem:[%s721 + $0x8] sm:$0xff] %vm272, %v718
  %724 = vst.msk [vmem:[%s721 + $0x80] sm:$0xff] %vm272, %v719
  %725 = vst.msk [vmem:[%s721 + $0x88] sm:$0xff] %vm272, %v720
  %v726 = vperm.slane %v422, 5
  %v727 = vperm.slane %v423, 5
  %v728 = vmul.f32 %v726, %v428
  %v729 = vmul.f32 %v726, %v429
  %v730 = vmul.f32 %v727, %v428
  %v731 = vmul.f32 %v727, %v429
  %v732 = vmul.f32 %v728, 1.442695
  %v733 = vpow.pop %v732
  %v734 = vmul.f32 %v729, 1.442695
  %v735 = vpow.pop %v734
  %v736 = vmul.f32 %v730, 1.442695
  %v737 = vpow.pop %v736
  %v738 = vmul.f32 %v731, 1.442695
  %v739 = vpow.pop %v738
  %v740 = vperm.slane %v329, 5
  %v741 = vlaneseq
  %v742 = vshrl.u32 %v741, 7
  %744 = vset.pattern.permute.xlu0 %v742
  %745 = vperm.xlu0 %744, %v740
  %v746 = vpop.permute.xlu0 %745
  %v747 = vlaneseq
  %v748 = vshrl.u32 %v747, 7
  %v749 = vadd.s32 %v748, 8
  %750 = vset.pattern.permute.xlu0 %v749
  %751 = vperm.xlu0 %750, %v740
  %v752 = vpop.permute.xlu0 %751
  %v753 = vperm.slane %v332, 5
  %v754 = vlaneseq
  %v755 = vshrl.u32 %v754, 7
  %757 = vset.pattern.permute.xlu0 %v755
  %758 = vperm.xlu0 %757, %v753
  %v759 = vpop.permute.xlu0 %758
  %v760 = vlaneseq
  %v761 = vshrl.u32 %v760, 7
  %v762 = vadd.s32 %v761, 8
  %763 = vset.pattern.permute.xlu0 %v762
  %764 = vperm.xlu0 %763, %v753
  %v765 = vpop.permute.xlu0 %764
  %v766 = vperm.slane %v430, 5
  %v767 = vperm.slane %v431, 5
  %v768 = vmul.f32 %v766, %v746
  %v769 = vmul.f32 %v766, %v752
  %v770 = vmul.f32 %v767, %v759
  %v771 = vmul.f32 %v767, %v765
  %v772 = vmul.f32 %v717, %v733
  %v773 = vmul.f32 %v718, %v735
  %v774 = vmul.f32 %v719, %v737
  %v775 = vmul.f32 %v720, %v739
  %v776 = vadd.f32 %v772, %v768
  %v777 = vadd.f32 %v773, %v769
  %v778 = vadd.f32 %v774, %v770
  %v779 = vadd.f32 %v775, %v771
  %s780 = scalar_lea.vmem [#allocation2], 80
  %781 = vst.msk [vmem:[%s780] sm:$0xff] %vm272, %v776
  %782 = vst.msk [vmem:[%s780 + $0x8] sm:$0xff] %vm272, %v777
  %783 = vst.msk [vmem:[%s780 + $0x80] sm:$0xff] %vm272, %v778
  %784 = vst.msk [vmem:[%s780 + $0x88] sm:$0xff] %vm272, %v779
  %v785 = vperm.slane %v422, 6
  %v786 = vperm.slane %v423, 6
  %v787 = vmul.f32 %v785, %v428
  %v788 = vmul.f32 %v785, %v429
  %v789 = vmul.f32 %v786, %v428
  %v790 = vmul.f32 %v786, %v429
  %v791 = vmul.f32 %v787, 1.442695
  %v792 = vpow.pop %v791
  %v793 = vmul.f32 %v788, 1.442695
  %v794 = vpow.pop %v793
  %v795 = vmul.f32 %v789, 1.442695
  %v796 = vpow.pop %v795
  %v797 = vmul.f32 %v790, 1.442695
  %v798 = vpow.pop %v797
  %v799 = vperm.slane %v329, 6
  %v800 = vlaneseq
  %v801 = vshrl.u32 %v800, 7
  %803 = vset.pattern.permute.xlu0 %v801
  %804 = vperm.xlu0 %803, %v799
  %v805 = vpop.permute.xlu0 %804
  %v806 = vlaneseq
  %v807 = vshrl.u32 %v806, 7
  %v808 = vadd.s32 %v807, 8
  %809 = vset.pattern.permute.xlu0 %v808
  %810 = vperm.xlu0 %809, %v799
  %v811 = vpop.permute.xlu0 %810
  %v812 = vperm.slane %v332, 6
  %v813 = vlaneseq
  %v814 = vshrl.u32 %v813, 7
  %816 = vset.pattern.permute.xlu0 %v814
  %817 = vperm.xlu0 %816, %v812
  %v818 = vpop.permute.xlu0 %817
  %v819 = vlaneseq
  %v820 = vshrl.u32 %v819, 7
  %v821 = vadd.s32 %v820, 8
  %822 = vset.pattern.permute.xlu0 %v821
  %823 = vperm.xlu0 %822, %v812
  %v824 = vpop.permute.xlu0 %823
  %v825 = vperm.slane %v430, 6
  %v826 = vperm.slane %v431, 6
  %v827 = vmul.f32 %v825, %v805
  %v828 = vmul.f32 %v825, %v811
  %v829 = vmul.f32 %v826, %v818
  %v830 = vmul.f32 %v826, %v824
  %v831 = vmul.f32 %v776, %v792
  %v832 = vmul.f32 %v777, %v794
  %v833 = vmul.f32 %v778, %v796
  %v834 = vmul.f32 %v779, %v798
  %v835 = vadd.f32 %v831, %v827
  %v836 = vadd.f32 %v832, %v828
  %v837 = vadd.f32 %v833, %v829
  %v838 = vadd.f32 %v834, %v830
  %s839 = scalar_lea.vmem [#allocation2], 96
  %840 = vst.msk [vmem:[%s839] sm:$0xff] %vm272, %v835
  %841 = vst.msk [vmem:[%s839 + $0x8] sm:$0xff] %vm272, %v836
  %842 = vst.msk [vmem:[%s839 + $0x80] sm:$0xff] %vm272, %v837
  %843 = vst.msk [vmem:[%s839 + $0x88] sm:$0xff] %vm272, %v838
  %v844 = vperm.slane %v422, 7
  %v845 = vperm.slane %v423, 7
  %v846 = vmul.f32 %v844, %v428
  %v847 = vmul.f32 %v844, %v429
  %v848 = vmul.f32 %v845, %v428
  %v849 = vmul.f32 %v845, %v429
  %v850 = vmul.f32 %v846, 1.442695
  %v851 = vpow.pop %v850
  %v852 = vmul.f32 %v847, 1.442695
  %v853 = vpow.pop %v852
  %v854 = vmul.f32 %v848, 1.442695
  %v855 = vpow.pop %v854
  %v856 = vmul.f32 %v849, 1.442695
  %v857 = vpow.pop %v856
  %v858 = vperm.slane %v329, 7
  %v859 = vlaneseq
  %v860 = vshrl.u32 %v859, 7
  %862 = vset.pattern.permute.xlu0 %v860
  %863 = vperm.xlu0 %862, %v858
  %v864 = vpop.permute.xlu0 %863
  %v865 = vlaneseq
  %v866 = vshrl.u32 %v865, 7
  %v867 = vadd.s32 %v866, 8
  %868 = vset.pattern.permute.xlu0 %v867
  %869 = vperm.xlu0 %868, %v858
  %v870 = vpop.permute.xlu0 %869
  %v871 = vperm.slane %v332, 7
  %v872 = vlaneseq
  %v873 = vshrl.u32 %v872, 7
  %875 = vset.pattern.permute.xlu0 %v873
  %876 = vperm.xlu0 %875, %v871
  %v877 = vpop.permute.xlu0 %876
  %v878 = vlaneseq
  %v879 = vshrl.u32 %v878, 7
  %v880 = vadd.s32 %v879, 8
  %881 = vset.pattern.permute.xlu0 %v880
  %882 = vperm.xlu0 %881, %v871
  %v883 = vpop.permute.xlu0 %882
  %v884 = vperm.slane %v430, 7
  %v885 = vperm.slane %v431, 7
  %v886 = vmul.f32 %v884, %v864
  %v887 = vmul.f32 %v884, %v870
  %v888 = vmul.f32 %v885, %v877
  %v889 = vmul.f32 %v885, %v883
  %v890 = vmul.f32 %v835, %v851
  %v891 = vmul.f32 %v836, %v853
  %v892 = vmul.f32 %v837, %v855
  %v893 = vmul.f32 %v838, %v857
  %v894 = vadd.f32 %v890, %v886
  %v895 = vadd.f32 %v891, %v887
  %v896 = vadd.f32 %v892, %v888
  %v897 = vadd.f32 %v893, %v889
  %s898 = scalar_lea.vmem [#allocation2], 112
  %899 = vst.msk [vmem:[%s898] sm:$0xff] %vm272, %v894
  %900 = vst.msk [vmem:[%s898 + $0x8] sm:$0xff] %vm272, %v895
  %901 = vst.msk [vmem:[%s898 + $0x80] sm:$0xff] %vm272, %v896
  %902 = vst.msk [vmem:[%s898 + $0x88] sm:$0xff] %vm272, %v897
  %v903 = vld [vmem:[#allocation2] sm:$0xff]
  %v904 = vld [vmem:[#allocation2 + $0x8] sm:$0xff]
  %v905 = vld [vmem:[#allocation2 + $0x10] sm:$0xff]
  %v906 = vld [vmem:[#allocation2 + $0x18] sm:$0xff]
  %v907 = vld [vmem:[#allocation2 + $0x20] sm:$0xff]
  %v908 = vld [vmem:[#allocation2 + $0x28] sm:$0xff]
  %v909 = vld [vmem:[#allocation2 + $0x30] sm:$0xff]
  %v910 = vld [vmem:[#allocation2 + $0x38] sm:$0xff]
  %v911 = vld [vmem:[#allocation2 + $0x40] sm:$0xff]
  %v912 = vld [vmem:[#allocation2 + $0x48] sm:$0xff]
  %v913 = vld [vmem:[#allocation2 + $0x50] sm:$0xff]
  %v914 = vld [vmem:[#allocation2 + $0x58] sm:$0xff]
  %v915 = vld [vmem:[#allocation2 + $0x60] sm:$0xff]
  %v916 = vld [vmem:[#allocation2 + $0x68] sm:$0xff]
  %v917 = vld [vmem:[#allocation2 + $0x70] sm:$0xff]
  %v918 = vld [vmem:[#allocation2 + $0x78] sm:$0xff]
  %v919 = vld [vmem:[#allocation2 + $0x80] sm:$0xff]
  %v920 = vld [vmem:[#allocation2 + $0x88] sm:$0xff]
  %v921 = vld [vmem:[#allocation2 + $0x90] sm:$0xff]
  %v922 = vld [vmem:[#allocation2 + $0x98] sm:$0xff]
  %v923 = vld [vmem:[#allocation2 + $0xa0] sm:$0xff]
  %v924 = vld [vmem:[#allocation2 + $0xa8] sm:$0xff]
  %v925 = vld [vmem:[#allocation2 + $0xb0] sm:$0xff]
  %v926 = vld [vmem:[#allocation2 + $0xb8] sm:$0xff]
  %v927 = vld [vmem:[#allocation2 + $0xc0] sm:$0xff]
  %v928 = vld [vmem:[#allocation2 + $0xc8] sm:$0xff]
  %v929 = vld [vmem:[#allocation2 + $0xd0] sm:$0xff]
  %v930 = vld [vmem:[#allocation2 + $0xd8] sm:$0xff]
  %v931 = vld [vmem:[#allocation2 + $0xe0] sm:$0xff]
  %v932 = vld [vmem:[#allocation2 + $0xe8] sm:$0xff]
  %v933 = vld [vmem:[#allocation2 + $0xf0] sm:$0xff]
  %v934 = vld [vmem:[#allocation2 + $0xf8] sm:$0xff]
  %v935 = vperm.slane %v358, 0
  %v936 = vlaneseq
  %v937 = vshrl.u32 %v936, 7
  %939 = vset.pattern.permute.xlu0 %v937
  %940 = vperm.xlu0 %939, %v935
  %v941 = vpop.permute.xlu0 %940
  %v942 = vlaneseq
  %v943 = vshrl.u32 %v942, 7
  %v944 = vadd.s32 %v943, 8
  %945 = vset.pattern.permute.xlu0 %v944
  %946 = vperm.xlu0 %945, %v935
  %v947 = vpop.permute.xlu0 %946
  %v948 = vperm.slane %v358, 1
  %v949 = vlaneseq
  %v950 = vshrl.u32 %v949, 7
  %952 = vset.pattern.permute.xlu0 %v950
  %953 = vperm.xlu0 %952, %v948
  %v954 = vpop.permute.xlu0 %953
  %v955 = vlaneseq
  %v956 = vshrl.u32 %v955, 7
  %v957 = vadd.s32 %v956, 8
  %958 = vset.pattern.permute.xlu0 %v957
  %959 = vperm.xlu0 %958, %v948
  %v960 = vpop.permute.xlu0 %959
  %v961 = vperm.slane %v358, 2
  %v962 = vlaneseq
  %v963 = vshrl.u32 %v962, 7
  %965 = vset.pattern.permute.xlu0 %v963
  %966 = vperm.xlu0 %965, %v961
  %v967 = vpop.permute.xlu0 %966
  %v968 = vlaneseq
  %v969 = vshrl.u32 %v968, 7
  %v970 = vadd.s32 %v969, 8
  %971 = vset.pattern.permute.xlu0 %v970
  %972 = vperm.xlu0 %971, %v961
  %v973 = vpop.permute.xlu0 %972
  %v974 = vperm.slane %v358, 3
  %v975 = vlaneseq
  %v976 = vshrl.u32 %v975, 7
  %978 = vset.pattern.permute.xlu0 %v976
  %979 = vperm.xlu0 %978, %v974
  %v980 = vpop.permute.xlu0 %979
  %v981 = vlaneseq
  %v982 = vshrl.u32 %v981, 7
  %v983 = vadd.s32 %v982, 8
  %984 = vset.pattern.permute.xlu0 %v983
  %985 = vperm.xlu0 %984, %v974
  %v986 = vpop.permute.xlu0 %985
  %v987 = vperm.slane %v358, 4
  %v988 = vlaneseq
  %v989 = vshrl.u32 %v988, 7
  %991 = vset.pattern.permute.xlu0 %v989
  %992 = vperm.xlu0 %991, %v987
  %v993 = vpop.permute.xlu0 %992
  %v994 = vlaneseq
  %v995 = vshrl.u32 %v994, 7
  %v996 = vadd.s32 %v995, 8
  %997 = vset.pattern.permute.xlu0 %v996
  %998 = vperm.xlu0 %997, %v987
  %v999 = vpop.permute.xlu0 %998
  %v1000 = vperm.slane %v358, 5
  %v1001 = vlaneseq
  %v1002 = vshrl.u32 %v1001, 7
  %1004 = vset.pattern.permute.xlu0 %v1002
  %1005 = vperm.xlu0 %1004, %v1000
  %v1006 = vpop.permute.xlu0 %1005
  %v1007 = vlaneseq
  %v1008 = vshrl.u32 %v1007, 7
  %v1009 = vadd.s32 %v1008, 8
  %1010 = vset.pattern.permute.xlu0 %v1009
  %1011 = vperm.xlu0 %1010, %v1000
  %v1012 = vpop.permute.xlu0 %1011
  %v1013 = vperm.slane %v358, 6
  %v1014 = vlaneseq
  %v1015 = vshrl.u32 %v1014, 7
  %1017 = vset.pattern.permute.xlu0 %v1015
  %1018 = vperm.xlu0 %1017, %v1013
  %v1019 = vpop.permute.xlu0 %1018
  %v1020 = vlaneseq
  %v1021 = vshrl.u32 %v1020, 7
  %v1022 = vadd.s32 %v1021, 8
  %1023 = vset.pattern.permute.xlu0 %v1022
  %1024 = vperm.xlu0 %1023, %v1013
  %v1025 = vpop.permute.xlu0 %1024
  %v1026 = vperm.slane %v358, 7
  %v1027 = vlaneseq
  %v1028 = vshrl.u32 %v1027, 7
  %1030 = vset.pattern.permute.xlu0 %v1028
  %1031 = vperm.xlu0 %1030, %v1026
  %v1032 = vpop.permute.xlu0 %1031
  %v1033 = vlaneseq
  %v1034 = vshrl.u32 %v1033, 7
  %v1035 = vadd.s32 %v1034, 8
  %1036 = vset.pattern.permute.xlu0 %v1035
  %1037 = vperm.xlu0 %1036, %v1026
  %v1038 = vpop.permute.xlu0 %1037
  %v1039 = vperm.slane %v361, 0
  %v1040 = vlaneseq
  %v1041 = vshrl.u32 %v1040, 7
  %1043 = vset.pattern.permute.xlu0 %v1041
  %1044 = vperm.xlu0 %1043, %v1039
  %v1045 = vpop.permute.xlu0 %1044
  %v1046 = vlaneseq
  %v1047 = vshrl.u32 %v1046, 7
  %v1048 = vadd.s32 %v1047, 8
  %1049 = vset.pattern.permute.xlu0 %v1048
  %1050 = vperm.xlu0 %1049, %v1039
  %v1051 = vpop.permute.xlu0 %1050
  %v1052 = vperm.slane %v361, 1
  %v1053 = vlaneseq
  %v1054 = vshrl.u32 %v1053, 7
  %1056 = vset.pattern.permute.xlu0 %v1054
  %1057 = vperm.xlu0 %1056, %v1052
  %v1058 = vpop.permute.xlu0 %1057
  %v1059 = vlaneseq
  %v1060 = vshrl.u32 %v1059, 7
  %v1061 = vadd.s32 %v1060, 8
  %1062 = vset.pattern.permute.xlu0 %v1061
  %1063 = vperm.xlu0 %1062, %v1052
  %v1064 = vpop.permute.xlu0 %1063
  %v1065 = vperm.slane %v361, 2
  %v1066 = vlaneseq
  %v1067 = vshrl.u32 %v1066, 7
  %1069 = vset.pattern.permute.xlu0 %v1067
  %1070 = vperm.xlu0 %1069, %v1065
  %v1071 = vpop.permute.xlu0 %1070
  %v1072 = vlaneseq
  %v1073 = vshrl.u32 %v1072, 7
  %v1074 = vadd.s32 %v1073, 8
  %1075 = vset.pattern.permute.xlu0 %v1074
  %1076 = vperm.xlu0 %1075, %v1065
  %v1077 = vpop.permute.xlu0 %1076
  %v1078 = vperm.slane %v361, 3
  %v1079 = vlaneseq
  %v1080 = vshrl.u32 %v1079, 7
  %1082 = vset.pattern.permute.xlu0 %v1080
  %1083 = vperm.xlu0 %1082, %v1078
  %v1084 = vpop.permute.xlu0 %1083
  %v1085 = vlaneseq
  %v1086 = vshrl.u32 %v1085, 7
  %v1087 = vadd.s32 %v1086, 8
  %1088 = vset.pattern.permute.xlu0 %v1087
  %1089 = vperm.xlu0 %1088, %v1078
  %v1090 = vpop.permute.xlu0 %1089
  %v1091 = vperm.slane %v361, 4
  %v1092 = vlaneseq
  %v1093 = vshrl.u32 %v1092, 7
  %1095 = vset.pattern.permute.xlu0 %v1093
  %1096 = vperm.xlu0 %1095, %v1091
  %v1097 = vpop.permute.xlu0 %1096
  %v1098 = vlaneseq
  %v1099 = vshrl.u32 %v1098, 7
  %v1100 = vadd.s32 %v1099, 8
  %1101 = vset.pattern.permute.xlu0 %v1100
  %1102 = vperm.xlu0 %1101, %v1091
  %v1103 = vpop.permute.xlu0 %1102
  %v1104 = vperm.slane %v361, 5
  %v1105 = vlaneseq
  %v1106 = vshrl.u32 %v1105, 7
  %1108 = vset.pattern.permute.xlu0 %v1106
  %1109 = vperm.xlu0 %1108, %v1104
  %v1110 = vpop.permute.xlu0 %1109
  %v1111 = vlaneseq
  %v1112 = vshrl.u32 %v1111, 7
  %v1113 = vadd.s32 %v1112, 8
  %1114 = vset.pattern.permute.xlu0 %v1113
  %1115 = vperm.xlu0 %1114, %v1104
  %v1116 = vpop.permute.xlu0 %1115
  %v1117 = vperm.slane %v361, 6
  %v1118 = vlaneseq
  %v1119 = vshrl.u32 %v1118, 7
  %1121 = vset.pattern.permute.xlu0 %v1119
  %1122 = vperm.xlu0 %1121, %v1117
  %v1123 = vpop.permute.xlu0 %1122
  %v1124 = vlaneseq
  %v1125 = vshrl.u32 %v1124, 7
  %v1126 = vadd.s32 %v1125, 8
  %1127 = vset.pattern.permute.xlu0 %v1126
  %1128 = vperm.xlu0 %1127, %v1117
  %v1129 = vpop.permute.xlu0 %1128
  %v1130 = vperm.slane %v361, 7
  %v1131 = vlaneseq
  %v1132 = vshrl.u32 %v1131, 7
  %1134 = vset.pattern.permute.xlu0 %v1132
  %1135 = vperm.xlu0 %1134, %v1130
  %v1136 = vpop.permute.xlu0 %1135
  %v1137 = vlaneseq
  %v1138 = vshrl.u32 %v1137, 7
  %v1139 = vadd.s32 %v1138, 8
  %1140 = vset.pattern.permute.xlu0 %v1139
  %1141 = vperm.xlu0 %1140, %v1130
  %v1142 = vpop.permute.xlu0 %1141
  %v1143 = vmul.f32 %v903, %v941
  %v1144 = vmul.f32 %v904, %v947
  %v1145 = vmul.f32 %v905, %v954
  %v1146 = vmul.f32 %v906, %v960
  %v1147 = vmul.f32 %v907, %v967
  %v1148 = vmul.f32 %v908, %v973
  %v1149 = vmul.f32 %v909, %v980
  %v1150 = vmul.f32 %v910, %v986
  %v1151 = vmul.f32 %v911, %v993
  %v1152 = vmul.f32 %v912, %v999
  %v1153 = vmul.f32 %v913, %v1006
  %v1154 = vmul.f32 %v914, %v1012
  %v1155 = vmul.f32 %v915, %v1019
  %v1156 = vmul.f32 %v916, %v1025
  %v1157 = vmul.f32 %v917, %v1032
  %v1158 = vmul.f32 %v918, %v1038
  %v1159 = vmul.f32 %v919, %v1045
  %v1160 = vmul.f32 %v920, %v1051
  %v1161 = vmul.f32 %v921, %v1058
  %v1162 = vmul.f32 %v922, %v1064
  %v1163 = vmul.f32 %v923, %v1071
  %v1164 = vmul.f32 %v924, %v1077
  %v1165 = vmul.f32 %v925, %v1084
  %v1166 = vmul.f32 %v926, %v1090
  %v1167 = vmul.f32 %v927, %v1097
  %v1168 = vmul.f32 %v928, %v1103
  %v1169 = vmul.f32 %v929, %v1110
  %v1170 = vmul.f32 %v930, %v1116
  %v1171 = vmul.f32 %v931, %v1123
  %v1172 = vmul.f32 %v932, %v1129
  %v1173 = vmul.f32 %v933, %v1136
  %v1174 = vmul.f32 %v934, %v1142
  %v1175 = vsel %vm272, %v1143, 0.0
  %v1176 = vsel %vm272, %v1144, 0.0
  %v1177 = vadd.f32 %v1175, %v1176
  %v1178 = vrot.slane %v1177, 4
  %v1179 = vadd.f32 %v1177, %v1178
  %v1180 = vrot.slane %v1179, 2
  %v1181 = vadd.f32 %v1179, %v1180
  %v1182 = vrot.slane %v1181, 1
  %v1183 = vadd.f32 %v1181, %v1182
  %v1184 = vsel %vm272, %v1145, 0.0
  %v1185 = vsel %vm272, %v1146, 0.0
  %v1186 = vadd.f32 %v1184, %v1185
  %v1187 = vrot.slane %v1186, 4
  %v1188 = vadd.f32 %v1186, %v1187
  %v1189 = vrot.slane %v1188, 2
  %v1190 = vadd.f32 %v1188, %v1189
  %v1191 = vrot.slane %v1190, 1
  %v1192 = vadd.f32 %v1190, %v1191
  %v1193 = vsel %vm272, %v1147, 0.0
  %v1194 = vsel %vm272, %v1148, 0.0
  %v1195 = vadd.f32 %v1193, %v1194
  %v1196 = vrot.slane %v1195, 4
  %v1197 = vadd.f32 %v1195, %v1196
  %v1198 = vrot.slane %v1197, 2
  %v1199 = vadd.f32 %v1197, %v1198
  %v1200 = vrot.slane %v1199, 1
  %v1201 = vadd.f32 %v1199, %v1200
  %v1202 = vsel %vm272, %v1149, 0.0
  %v1203 = vsel %vm272, %v1150, 0.0
  %v1204 = vadd.f32 %v1202, %v1203
  %v1205 = vrot.slane %v1204, 4
  %v1206 = vadd.f32 %v1204, %v1205
  %v1207 = vrot.slane %v1206, 2
  %v1208 = vadd.f32 %v1206, %v1207
  %v1209 = vrot.slane %v1208, 1
  %v1210 = vadd.f32 %v1208, %v1209
  %v1211 = vsel %vm272, %v1151, 0.0
  %v1212 = vsel %vm272, %v1152, 0.0
  %v1213 = vadd.f32 %v1211, %v1212
  %v1214 = vrot.slane %v1213, 4
  %v1215 = vadd.f32 %v1213, %v1214
  %v1216 = vrot.slane %v1215, 2
  %v1217 = vadd.f32 %v1215, %v1216
  %v1218 = vrot.slane %v1217, 1
  %v1219 = vadd.f32 %v1217, %v1218
  %v1220 = vsel %vm272, %v1153, 0.0
  %v1221 = vsel %vm272, %v1154, 0.0
  %v1222 = vadd.f32 %v1220, %v1221
  %v1223 = vrot.slane %v1222, 4
  %v1224 = vadd.f32 %v1222, %v1223
  %v1225 = vrot.slane %v1224, 2
  %v1226 = vadd.f32 %v1224, %v1225
  %v1227 = vrot.slane %v1226, 1
  %v1228 = vadd.f32 %v1226, %v1227
  %v1229 = vsel %vm272, %v1155, 0.0
  %v1230 = vsel %vm272, %v1156, 0.0
  %v1231 = vadd.f32 %v1229, %v1230
  %v1232 = vrot.slane %v1231, 4
  %v1233 = vadd.f32 %v1231, %v1232
  %v1234 = vrot.slane %v1233, 2
  %v1235 = vadd.f32 %v1233, %v1234
  %v1236 = vrot.slane %v1235, 1
  %v1237 = vadd.f32 %v1235, %v1236
  %v1238 = vsel %vm272, %v1157, 0.0
  %v1239 = vsel %vm272, %v1158, 0.0
  %v1240 = vadd.f32 %v1238, %v1239
  %v1241 = vrot.slane %v1240, 4
  %v1242 = vadd.f32 %v1240, %v1241
  %v1243 = vrot.slane %v1242, 2
  %v1244 = vadd.f32 %v1242, %v1243
  %v1245 = vrot.slane %v1244, 1
  %v1246 = vadd.f32 %v1244, %v1245
  %v1247 = vsel %vm272, %v1159, 0.0
  %v1248 = vsel %vm272, %v1160, 0.0
  %v1249 = vadd.f32 %v1247, %v1248
  %v1250 = vrot.slane %v1249, 4
  %v1251 = vadd.f32 %v1249, %v1250
  %v1252 = vrot.slane %v1251, 2
  %v1253 = vadd.f32 %v1251, %v1252
  %v1254 = vrot.slane %v1253, 1
  %v1255 = vadd.f32 %v1253, %v1254
  %v1256 = vsel %vm272, %v1161, 0.0
  %v1257 = vsel %vm272, %v1162, 0.0
  %v1258 = vadd.f32 %v1256, %v1257
  %v1259 = vrot.slane %v1258, 4
  %v1260 = vadd.f32 %v1258, %v1259
  %v1261 = vrot.slane %v1260, 2
  %v1262 = vadd.f32 %v1260, %v1261
  %v1263 = vrot.slane %v1262, 1
  %v1264 = vadd.f32 %v1262, %v1263
  %v1265 = vsel %vm272, %v1163, 0.0
  %v1266 = vsel %vm272, %v1164, 0.0
  %v1267 = vadd.f32 %v1265, %v1266
  %v1268 = vrot.slane %v1267, 4
  %v1269 = vadd.f32 %v1267, %v1268
  %v1270 = vrot.slane %v1269, 2
  %v1271 = vadd.f32 %v1269, %v1270
  %v1272 = vrot.slane %v1271, 1
  %v1273 = vadd.f32 %v1271, %v1272
  %v1274 = vsel %vm272, %v1165, 0.0
  %v1275 = vsel %vm272, %v1166, 0.0
  %v1276 = vadd.f32 %v1274, %v1275
  %v1277 = vrot.slane %v1276, 4
  %v1278 = vadd.f32 %v1276, %v1277
  %v1279 = vrot.slane %v1278, 2
  %v1280 = vadd.f32 %v1278, %v1279
  %v1281 = vrot.slane %v1280, 1
  %v1282 = vadd.f32 %v1280, %v1281
  %v1283 = vsel %vm272, %v1167, 0.0
  %v1284 = vsel %vm272, %v1168, 0.0
  %v1285 = vadd.f32 %v1283, %v1284
  %v1286 = vrot.slane %v1285, 4
  %v1287 = vadd.f32 %v1285, %v1286
  %v1288 = vrot.slane %v1287, 2
  %v1289 = vadd.f32 %v1287, %v1288
  %v1290 = vrot.slane %v1289, 1
  %v1291 = vadd.f32 %v1289, %v1290
  %v1292 = vsel %vm272, %v1169, 0.0
  %v1293 = vsel %vm272, %v1170, 0.0
  %v1294 = vadd.f32 %v1292, %v1293
  %v1295 = vrot.slane %v1294, 4
  %v1296 = vadd.f32 %v1294, %v1295
  %v1297 = vrot.slane %v1296, 2
  %v1298 = vadd.f32 %v1296, %v1297
  %v1299 = vrot.slane %v1298, 1
  %v1300 = vadd.f32 %v1298, %v1299
  %v1301 = vsel %vm272, %v1171, 0.0
  %v1302 = vsel %vm272, %v1172, 0.0
  %v1303 = vadd.f32 %v1301, %v1302
  %v1304 = vrot.slane %v1303, 4
  %v1305 = vadd.f32 %v1303, %v1304
  %v1306 = vrot.slane %v1305, 2
  %v1307 = vadd.f32 %v1305, %v1306
  %v1308 = vrot.slane %v1307, 1
  %v1309 = vadd.f32 %v1307, %v1308
  %v1310 = vsel %vm272, %v1173, 0.0
  %v1311 = vsel %vm272, %v1174, 0.0
  %v1312 = vadd.f32 %v1310, %v1311
  %v1313 = vrot.slane %v1312, 4
  %v1314 = vadd.f32 %v1312, %v1313
  %v1315 = vrot.slane %v1314, 2
  %v1316 = vadd.f32 %v1314, %v1315
  %v1317 = vrot.slane %v1316, 1
  %v1318 = vadd.f32 %v1316, %v1317
  %v1319 = vperm.slane %v50, 0
  %v1320 = vmul.f32 %v270, %v1319
  %v1321 = vmul.f32 %v271, %v1319
  %v1324 = vrot.slane %v1320, 1
  %v1325 = vrot.slane %v1320, 2
  %v1326 = vrot.slane %v1320, 3
  %v1327 = vrot.slane %v1320, 4
  %v1328 = vrot.slane %v1320, 5
  %v1329 = vrot.slane %v1320, 6
  %v1330 = vrot.slane %v1320, 7
  %v1331 = vrot.slane %v1321, 1
  %v1332 = vrot.slane %v1321, 2
  %v1333 = vrot.slane %v1321, 3
  %v1334 = vrot.slane %v1321, 4
  %v1335 = vrot.slane %v1321, 5
  %v1336 = vrot.slane %v1321, 6
  %v1337 = vrot.slane %v1321, 7
  %v1354 = vadd.f32 %v1183, %v1320
  %v1355 = vadd.f32 %v1192, %v1324
  %v1356 = vadd.f32 %v1201, %v1325
  %v1357 = vadd.f32 %v1210, %v1326
  %v1358 = vadd.f32 %v1219, %v1327
  %v1359 = vadd.f32 %v1228, %v1328
  %v1360 = vadd.f32 %v1237, %v1329
  %v1361 = vadd.f32 %v1246, %v1330
  %v1362 = vadd.f32 %v1255, %v1321
  %v1363 = vadd.f32 %v1264, %v1331
  %v1364 = vadd.f32 %v1273, %v1332
  %v1365 = vadd.f32 %v1282, %v1333
  %v1366 = vadd.f32 %v1291, %v1334
  %v1367 = vadd.f32 %v1300, %v1335
  %v1368 = vadd.f32 %v1309, %v1336
  %v1369 = vadd.f32 %v1318, %v1337
  %v1370 = vand.u32 2147483647, %v181
  %v1371 = vand.u32 2147483647, %v182
  %v1372 = vsub.f32 0.0, %v1370
  %v1373 = vsub.f32 0.0, %v1371
  %v1374 = vmul.f32 %v1372, 1.442695
  %v1375 = vpow.pop %v1374
  %v1376 = vmul.f32 %v1373, 1.442695
  %v1377 = vpow.pop %v1376
  %vm1378 = vcmp.ge.f32.partialorder %v181, 0.0
  %vm1379 = vcmp.ge.f32.partialorder %v182, 0.0
  %v1380 = vadd.f32 %v1375, 1.0
  %v1381 = vadd.f32 %v1377, 1.0
  %v1382 = vrcp.pop %v1380
  %v1383 = vmul.f32 %v1380, %v1382
  %v1384 = vsub.f32 1.0, %v1383
  %v1385 = vmul.f32 %v1382, %v1384
  %v1386 = vadd.f32 %v1382, %v1385
  %vm1387 = vweird.f32 %v1380
  %vm1388 = vweird.f32 %v1382
  %vm1389 = vmor %vm1387, %vm1388
  %v1390 = vsel %vm1389, %v1382, %v1386
  %v1391 = vand.u32 2147483647, %v1380
  %vm1392 = vcmp.eq.f32.partialorder %v1391, 8.507059e+37
  %v1393 = vand.u32 %v1380, 2147483648
  %v1394 = vor.u32 1.1754944e-38, %v1393
  %v1395 = vsel %vm1392, %v1394, %v1390
  %v1396 = vmul.f32 1.0, %v1395
  %v1397 = vrcp.pop %v1381
  %v1398 = vmul.f32 %v1381, %v1397
  %v1399 = vsub.f32 1.0, %v1398
  %v1400 = vmul.f32 %v1397, %v1399
  %v1401 = vadd.f32 %v1397, %v1400
  %vm1402 = vweird.f32 %v1381
  %vm1403 = vweird.f32 %v1397
  %vm1404 = vmor %vm1402, %vm1403
  %v1405 = vsel %vm1404, %v1397, %v1401
  %v1406 = vand.u32 2147483647, %v1381
  %vm1407 = vcmp.eq.f32.partialorder %v1406, 8.507059e+37
  %v1408 = vand.u32 %v1381, 2147483648
  %v1409 = vor.u32 1.1754944e-38, %v1408
  %v1410 = vsel %vm1407, %v1409, %v1405
  %v1411 = vmul.f32 1.0, %v1410
  %v1412 = vmul.f32 %v1375, %v1395
  %v1413 = vmul.f32 %v1377, %v1410
  %v1414 = vsel %vm1378, %v1396, %v1412
  %v1415 = vsel %vm1379, %v1411, %v1413
  %v1416 = vmul.f32 %v181, %v1414
  %v1417 = vmul.f32 %v182, %v1415
  %v1420 = vrot.slane %v1416, 1
  %v1421 = vrot.slane %v1416, 2
  %v1422 = vrot.slane %v1416, 3
  %v1423 = vrot.slane %v1416, 4
  %v1424 = vrot.slane %v1416, 5
  %v1425 = vrot.slane %v1416, 6
  %v1426 = vrot.slane %v1416, 7
  %v1427 = vrot.slane %v1417, 1
  %v1428 = vrot.slane %v1417, 2
  %v1429 = vrot.slane %v1417, 3
  %v1430 = vrot.slane %v1417, 4
  %v1431 = vrot.slane %v1417, 5
  %v1432 = vrot.slane %v1417, 6
  %v1433 = vrot.slane %v1417, 7
  %1434 = vrot.lane.b32.xlu0 %v1416, 64
  %v1435 = vpop.permute.xlu0 %1434
  %1436 = vrot.lane.b32.xlu0 %v1420, 64
  %v1437 = vpop.permute.xlu0 %1436
  %1438 = vrot.lane.b32.xlu0 %v1421, 64
  %v1439 = vpop.permute.xlu0 %1438
  %1440 = vrot.lane.b32.xlu0 %v1422, 64
  %v1441 = vpop.permute.xlu0 %1440
  %1442 = vrot.lane.b32.xlu0 %v1423, 64
  %v1443 = vpop.permute.xlu0 %1442
  %1444 = vrot.lane.b32.xlu0 %v1424, 64
  %v1445 = vpop.permute.xlu0 %1444
  %1446 = vrot.lane.b32.xlu0 %v1425, 64
  %v1447 = vpop.permute.xlu0 %1446
  %1448 = vrot.lane.b32.xlu0 %v1426, 64
  %v1449 = vpop.permute.xlu0 %1448
  %1450 = vrot.lane.b32.xlu0 %v1417, 64
  %v1451 = vpop.permute.xlu0 %1450
  %1452 = vrot.lane.b32.xlu0 %v1427, 64
  %v1453 = vpop.permute.xlu0 %1452
  %1454 = vrot.lane.b32.xlu0 %v1428, 64
  %v1455 = vpop.permute.xlu0 %1454
  %1456 = vrot.lane.b32.xlu0 %v1429, 64
  %v1457 = vpop.permute.xlu0 %1456
  %1458 = vrot.lane.b32.xlu0 %v1430, 64
  %v1459 = vpop.permute.xlu0 %1458
  %1460 = vrot.lane.b32.xlu0 %v1431, 64
  %v1461 = vpop.permute.xlu0 %1460
  %1462 = vrot.lane.b32.xlu0 %v1432, 64
  %v1463 = vpop.permute.xlu0 %1462
  %1464 = vrot.lane.b32.xlu0 %v1433, 64
  %v1465 = vpop.permute.xlu0 %1464
  %v1482 = vmul.f32 %v1354, %v1435
  %v1483 = vmul.f32 %v1355, %v1437
  %v1484 = vmul.f32 %v1356, %v1439
  %v1485 = vmul.f32 %v1357, %v1441
  %v1486 = vmul.f32 %v1358, %v1443
  %v1487 = vmul.f32 %v1359, %v1445
  %v1488 = vmul.f32 %v1360, %v1447
  %v1489 = vmul.f32 %v1361, %v1449
  %v1490 = vmul.f32 %v1362, %v1451
  %v1491 = vmul.f32 %v1363, %v1453
  %v1492 = vmul.f32 %v1364, %v1455
  %v1493 = vmul.f32 %v1365, %v1457
  %v1494 = vmul.f32 %v1366, %v1459
  %v1495 = vmul.f32 %v1367, %v1461
  %v1496 = vmul.f32 %v1368, %v1463
  %v1497 = vmul.f32 %v1369, %v1465
  %v1514 = vrot.slane %v1483, 7
  %vm1515 = vcmask 1041409
  %v1516 = vsel %vm1515, %v1514, %v1482
  %v1517 = vrot.slane %v1484, 6
  %vm1518 = vcmask 1042434
  %v1519 = vsel %vm1518, %v1517, %v1516
  %v1520 = vrot.slane %v1485, 5
  %vm1521 = vcmask 1043459
  %v1522 = vsel %vm1521, %v1520, %v1519
  %v1523 = vrot.slane %v1486, 4
  %vm1524 = vcmask 1044484
  %v1525 = vsel %vm1524, %v1523, %v1522
  %v1526 = vrot.slane %v1487, 3
  %vm1527 = vcmask 1045509
  %v1528 = vsel %vm1527, %v1526, %v1525
  %v1529 = vrot.slane %v1488, 2
  %vm1530 = vcmask 1046534
  %v1531 = vsel %vm1530, %v1529, %v1528
  %v1532 = vrot.slane %v1489, 1
  %vm1533 = vcmask 1047559
  %v1534 = vsel %vm1533, %v1532, %v1531
  %v1535 = vrot.slane %v1491, 7
  %v1536 = vsel %vm1515, %v1535, %v1490
  %v1537 = vrot.slane %v1492, 6
  %v1538 = vsel %vm1518, %v1537, %v1536
  %v1539 = vrot.slane %v1493, 5
  %v1540 = vsel %vm1521, %v1539, %v1538
  %v1541 = vrot.slane %v1494, 4
  %v1542 = vsel %vm1524, %v1541, %v1540
  %v1543 = vrot.slane %v1495, 3
  %v1544 = vsel %vm1527, %v1543, %v1542
  %v1545 = vrot.slane %v1496, 2
  %v1546 = vsel %vm1530, %v1545, %v1544
  %v1547 = vrot.slane %v1497, 1
  %v1548 = vsel %vm1533, %v1547, %v1546
  %v1549 = vsel %vm272, %v1534, 0
  %v1551 = vsel %vm272, %v1548, 0
  %v1554 = vsel %vm272, %v40, 0
  %v1557 = vsel %vm272, %v41, 0
  %v1560 = vsel %vm272, %v42, 0
  %v1563 = vsel %vm272, %v43, 0
  %1565 = vmatpush.xpose.msra.mxu0 0.0
  %1566 = vmatpush.xpose.msra.mxu0 0.0
  %1567 = vmatpush.xpose.msra.mxu0 0.0
  %1568 = vmatpush.xpose.msra.mxu0 0.0
  %1569 = vmatpush.xpose.msra.mxu0 0.0
  %1570 = vmatpush.xpose.msra.mxu0 0.0
  %1571 = vmatpush.xpose.msra.mxu0 0.0
  %1572 = vmatpush.xpose.msra.mxu0 0.0
  %1573 = vmatpush.xpose.msra.mxu0 0.0
  %1574 = vmatpush.xpose.msra.mxu0 0.0
  %1575 = vmatpush.xpose.msra.mxu0 0.0
  %1576 = vmatpush.xpose.msra.mxu0 0.0
  %1577 = vmatpush.xpose.msra.mxu0 %v1563
  %1578 = vmatpush.xpose.msra.mxu0 %v1560
  %1579 = vmatpush.xpose.msra.mxu0 %v1557
  %1580 = vmatpush.xpose.msra.mxu0 %v1554
  %1581 = vmatmul.f32.gmra.mxu0 %v1549
  %v1582 = vpop.f32.mrf.mxu0
  %v1583 = vadd.f32 0.0, %v1582
  %1584 = vmatmul.f32.gmra.mxu0 %v1551
  %v1585 = vpop.f32.mrf.mxu0
  %v1586 = vadd.f32 0.0, %v1585
  %1587 = vdwg.mxu0
  %v1588 = vadd.f32 %v14, %v1583
  %v1589 = vadd.f32 %v15, %v1586
  %v1590 = vperm.slane %v33, 0
  %v1591 = vadd.f32 %v1588, %v1590
  %v1592 = vadd.f32 %v1589, %v1590
  %s1593 = scalar_lea.vmem %s2, 144
  %v1594 = vld [vmem:[%s1593] sm:$0xff]
  %v1595 = vld [vmem:[%s1593 + $0x8] sm:$0xff]
  %v1596 = vld [vmem:[%s1593 + $0x10] sm:$0xff]
  %v1597 = vld [vmem:[%s1593 + $0x18] sm:$0xff]
  %v1598 = vld [vmem:[%s1593 + $0x20] sm:$0xff]
  %v1599 = vld [vmem:[%s1593 + $0x28] sm:$0xff]
  %v1600 = vld [vmem:[%s1593 + $0x30] sm:$0xff]
  %v1601 = vld [vmem:[%s1593 + $0x38] sm:$0xff]
  %v1602 = vld [vmem:[%s1593 + $0x40] sm:$0xff]
  %v1603 = vld [vmem:[%s1593 + $0x48] sm:$0xff]
  %v1604 = vld [vmem:[%s1593 + $0x50] sm:$0xff]
  %v1605 = vld [vmem:[%s1593 + $0x58] sm:$0xff]
  %v1606 = vld [vmem:[%s1593 + $0x60] sm:$0xff]
  %v1607 = vld [vmem:[%s1593 + $0x68] sm:$0xff]
  %v1608 = vld [vmem:[%s1593 + $0x70] sm:$0xff]
  %v1609 = vld [vmem:[%s1593 + $0x78] sm:$0xff]
  %v1610 = vld [vmem:[%s1593 + $0x80] sm:$0x1]
  %v1611 = vld [vmem:[%s1593 + $0x88] sm:$0x1]
  %s1612 = scalar_lea.vmem %s1, 136
  %v1613 = vld [vmem:[%s1612] sm:$0xff]
  %v1614 = vld [vmem:[%s1612 + $0x8] sm:$0xff]
  %v1615 = vld [vmem:[%s1612 + $0x10] sm:$0xff]
  %v1616 = vld [vmem:[%s1612 + $0x18] sm:$0xff]
  %v1617 = vld [vmem:[%s1612 + $0x20] sm:$0xff]
  %v1618 = vld [vmem:[%s1612 + $0x28] sm:$0xff]
  %v1619 = vld [vmem:[%s1612 + $0x30] sm:$0xff]
  %v1620 = vld [vmem:[%s1612 + $0x38] sm:$0xff]
  %v1621 = vld [vmem:[%s1612 + $0x40] sm:$0xff]
  %v1622 = vld [vmem:[%s1612 + $0x48] sm:$0xff]
  %v1623 = vld [vmem:[%s1612 + $0x50] sm:$0xff]
  %v1624 = vld [vmem:[%s1612 + $0x58] sm:$0xff]
  %v1625 = vld [vmem:[%s1612 + $0x60] sm:$0xf]
  %v1626 = vld [vmem:[%s1612 + $0x68] sm:$0x1]
  %v1627 = vld [vmem:[%s1612 + $0x70] sm:$0x1]
  %v1628 = vld [vmem:[%s1612 + $0x78] sm:$0x1]
  %v1629 = vld [vmem:[%s1612 + $0x80] sm:$0x1]
  %v1630 = vmul.f32 %v1591, %v1591
  %v1631 = vmul.f32 %v1592, %v1592
  %v1632 = vsel %vm53, %v1630, 0.0
  %1633 = vadd.xlane.f32.xlu0 %v1632
  %v1634 = vpop.xlane.xlu0 %1633
  %v1635 = vsel %vm53, %v1631, 0.0
  %1636 = vadd.xlane.f32.xlu0 %v1635
  %v1637 = vpop.xlane.xlu0 %1636
  %v1638 = vmul.f32 %v1634, %v66
  %v1639 = vmul.f32 %v1637, %v66
  %v1640 = vadd.f32 %v1638, 1e-05
  %v1641 = vadd.f32 %v1639, 1e-05
  %v1642 = vrsqrt.pop %v1640
  %v1643 = vmul.f32 %v1642, %v1640
  %v1644 = vmul.f32 %v1643, %v1642
  %v1645 = vmul.f32 0.5, %v1644
  %v1646 = vsub.f32 1.5, %v1645
  %v1647 = vmul.f32 %v1642, %v1646
  %vm1648 = vweird.f32 %v1640
  %vm1649 = vweird.f32 %v1642
  %vm1650 = vmor %vm1648, %vm1649
  %v1651 = vsel %vm1650, %v1642, %v1647
  %v1652 = vrsqrt.pop %v1641
  %v1653 = vmul.f32 %v1652, %v1641
  %v1654 = vmul.f32 %v1653, %v1652
  %v1655 = vmul.f32 0.5, %v1654
  %v1656 = vsub.f32 1.5, %v1655
  %v1657 = vmul.f32 %v1652, %v1656
  %vm1658 = vweird.f32 %v1641
  %vm1659 = vweird.f32 %v1652
  %vm1660 = vmor %vm1658, %vm1659
  %v1661 = vsel %vm1660, %v1652, %v1657
  %v1662 = vmul.f32 %v1591, %v1651
  %v1663 = vmul.f32 %v1592, %v1661
  %v1664 = vperm.slane %v1610, 0
  %v1665 = vmul.f32 %v1662, %v1664
  %v1666 = vmul.f32 %v1663, %v1664
  %v1668 = vsel %vm53, %v1665, 0
  %v1671 = vsel %vm53, %v1666, 0
  %v1674 = vsel %vm53, %v1594, 0
  %v1677 = vsel %vm53, %v1595, 0
  %v1680 = vsel %vm53, %v1596, 0
  %v1683 = vsel %vm53, %v1597, 0
  %v1686 = vsel %vm53, %v1598, 0
  %v1689 = vsel %vm53, %v1599, 0
  %v1692 = vsel %vm53, %v1600, 0
  %v1695 = vsel %vm53, %v1601, 0
  %v1698 = vsel %vm53, %v1602, 0
  %v1701 = vsel %vm53, %v1603, 0
  %v1704 = vsel %vm53, %v1604, 0
  %v1707 = vsel %vm53, %v1605, 0
  %v1710 = vsel %vm53, %v1606, 0
  %v1713 = vsel %vm53, %v1607, 0
  %v1716 = vsel %vm53, %v1608, 0
  %v1719 = vsel %vm53, %v1609, 0
  %1721 = vmatpush.xpose.msra.mxu0 %v1719
  %1722 = vmatpush.xpose.msra.mxu0 %v1716
  %1723 = vmatpush.xpose.msra.mxu0 %v1713
  %1724 = vmatpush.xpose.msra.mxu0 %v1710
  %1725 = vmatpush.xpose.msra.mxu0 %v1707
  %1726 = vmatpush.xpose.msra.mxu0 %v1704
  %1727 = vmatpush.xpose.msra.mxu0 %v1701
  %1728 = vmatpush.xpose.msra.mxu0 %v1698
  %1729 = vmatpush.xpose.msra.mxu0 %v1695
  %1730 = vmatpush.xpose.msra.mxu0 %v1692
  %1731 = vmatpush.xpose.msra.mxu0 %v1689
  %1732 = vmatpush.xpose.msra.mxu0 %v1686
  %1733 = vmatpush.xpose.msra.mxu0 %v1683
  %1734 = vmatpush.xpose.msra.mxu0 %v1680
  %1735 = vmatpush.xpose.msra.mxu0 %v1677
  %1736 = vmatpush.xpose.msra.mxu0 %v1674
  %1737 = vmatmul.f32.gmra.mxu0 %v1668
  %v1738 = vpop.f32.mrf.mxu0
  %v1739 = vadd.f32 0.0, %v1738
  %1740 = vmatmul.f32.gmra.mxu0 %v1671
  %v1741 = vpop.f32.mrf.mxu0
  %v1742 = vadd.f32 0.0, %v1741
  %1743 = vdwg.mxu0
  %v1744 = vperm.slane %v1626, 0
  %v1745 = vadd.f32 %v1739, %v1744
  %v1746 = vadd.f32 %v1742, %v1744
  %v1747 = vperm.slane %v1627, 0
  %1749 = vrot.lane.b32.xlu0 %v1747, 64
  %v1750 = vpop.permute.xlu0 %1749
  %v1752 = vadd.f32 %v1739, %v1750
  %v1753 = vadd.f32 %v1742, %v1750
  %v1754 = vperm.slane %v1625, 3
  %v1755 = vmul.f32 %v1745, %v1754
  %v1756 = vmul.f32 %v1746, %v1754
  %v1759 = vrot.slane %v1745, 5
  %v1760 = vrot.slane %v1746, 5
  %v1763 = vsel %vm192, 0.0, %v1759
  %v1764 = vsel %vm192, 0.0, %v1760
  %v1765 = vperm.slane %v1625, 0
  %v1766 = vmul.f32 %v1763, %v1765
  %v1767 = vmul.f32 %v1764, %v1765
  %v1768 = vadd.f32 %v1755, %v1766
  %v1769 = vadd.f32 %v1756, %v1767
  %v1770 = vrot.slane %v1745, 6
  %v1771 = vrot.slane %v1746, 6
  %v1774 = vsel %vm204, 0.0, %v1770
  %v1775 = vsel %vm204, 0.0, %v1771
  %v1776 = vperm.slane %v1625, 1
  %v1777 = vmul.f32 %v1774, %v1776
  %v1778 = vmul.f32 %v1775, %v1776
  %v1779 = vadd.f32 %v1768, %v1777
  %v1780 = vadd.f32 %v1769, %v1778
  %v1781 = vrot.slane %v1745, 7
  %v1782 = vrot.slane %v1746, 7
  %v1785 = vsel %vm216, 0.0, %v1781
  %v1786 = vsel %vm216, 0.0, %v1782
  %v1787 = vperm.slane %v1625, 2
  %v1788 = vmul.f32 %v1785, %v1787
  %v1789 = vmul.f32 %v1786, %v1787
  %v1790 = vadd.f32 %v1779, %v1788
  %v1791 = vadd.f32 %v1780, %v1789
  %v1792 = vand.u32 2147483647, %v1790
  %v1793 = vand.u32 2147483647, %v1791
  %v1794 = vsub.f32 0.0, %v1792
  %v1795 = vsub.f32 0.0, %v1793
  %v1796 = vmul.f32 %v1794, 1.442695
  %v1797 = vpow.pop %v1796
  %v1798 = vmul.f32 %v1795, 1.442695
  %v1799 = vpow.pop %v1798
  %vm1800 = vcmp.ge.f32.partialorder %v1790, 0.0
  %vm1801 = vcmp.ge.f32.partialorder %v1791, 0.0
  %v1802 = vadd.f32 %v1797, 1.0
  %v1803 = vadd.f32 %v1799, 1.0
  %v1804 = vrcp.pop %v1802
  %v1805 = vmul.f32 %v1802, %v1804
  %v1806 = vsub.f32 1.0, %v1805
  %v1807 = vmul.f32 %v1804, %v1806
  %v1808 = vadd.f32 %v1804, %v1807
  %vm1809 = vweird.f32 %v1802
  %vm1810 = vweird.f32 %v1804
  %vm1811 = vmor %vm1809, %vm1810
  %v1812 = vsel %vm1811, %v1804, %v1808
  %v1813 = vand.u32 2147483647, %v1802
  %vm1814 = vcmp.eq.f32.partialorder %v1813, 8.507059e+37
  %v1815 = vand.u32 %v1802, 2147483648
  %v1816 = vor.u32 1.1754944e-38, %v1815
  %v1817 = vsel %vm1814, %v1816, %v1812
  %v1818 = vmul.f32 1.0, %v1817
  %v1819 = vrcp.pop %v1803
  %v1820 = vmul.f32 %v1803, %v1819
  %v1821 = vsub.f32 1.0, %v1820
  %v1822 = vmul.f32 %v1819, %v1821
  %v1823 = vadd.f32 %v1819, %v1822
  %vm1824 = vweird.f32 %v1803
  %vm1825 = vweird.f32 %v1819
  %vm1826 = vmor %vm1824, %vm1825
  %v1827 = vsel %vm1826, %v1819, %v1823
  %v1828 = vand.u32 2147483647, %v1803
  %vm1829 = vcmp.eq.f32.partialorder %v1828, 8.507059e+37
  %v1830 = vand.u32 %v1803, 2147483648
  %v1831 = vor.u32 1.1754944e-38, %v1830
  %v1832 = vsel %vm1829, %v1831, %v1827
  %v1833 = vmul.f32 1.0, %v1832
  %v1834 = vmul.f32 %v1797, %v1817
  %v1835 = vmul.f32 %v1799, %v1832
  %v1836 = vsel %vm1800, %v1818, %v1834
  %v1837 = vsel %vm1801, %v1833, %v1835
  %v1838 = vmul.f32 %v1790, %v1836
  %v1839 = vmul.f32 %v1791, %v1837
  %v1841 = vsel %vm272, %v1838, 0
  %v1844 = vsel %vm272, %v1839, 0
  %v1847 = vsel %vm272, %v1613, 0
  %1849 = vmatpush.xpose.msra.mxu0 0.0
  %1850 = vmatpush.xpose.msra.mxu0 0.0
  %1851 = vmatpush.xpose.msra.mxu0 0.0
  %1852 = vmatpush.xpose.msra.mxu0 0.0
  %1853 = vmatpush.xpose.msra.mxu0 0.0
  %1854 = vmatpush.xpose.msra.mxu0 0.0
  %1855 = vmatpush.xpose.msra.mxu0 0.0
  %1856 = vmatpush.xpose.msra.mxu0 0.0
  %1857 = vmatpush.xpose.msra.mxu0 0.0
  %1858 = vmatpush.xpose.msra.mxu0 0.0
  %1859 = vmatpush.xpose.msra.mxu0 0.0
  %1860 = vmatpush.xpose.msra.mxu0 0.0
  %1861 = vmatpush.xpose.msra.mxu0 0.0
  %1862 = vmatpush.xpose.msra.mxu0 0.0
  %1863 = vmatpush.xpose.msra.mxu0 0.0
  %1864 = vmatpush.xpose.msra.mxu0 %v1847
  %1865 = vmatmul.f32.gmra.mxu0 %v1841
  %v1866 = vpop.f32.mrf.mxu0
  %v1867 = vadd.f32 0.0, %v1866
  %1868 = vmatmul.f32.gmra.mxu0 %v1844
  %v1869 = vpop.f32.mrf.mxu0
  %v1870 = vadd.f32 0.0, %v1869
  %1871 = vdwg.mxu0
  %v1873 = vsel %vm272, %v1614, 0
  %v1876 = vsel %vm272, %v1615, 0
  %1878 = vmatpush.xpose.msra.mxu0 0.0
  %1879 = vmatpush.xpose.msra.mxu0 0.0
  %1880 = vmatpush.xpose.msra.mxu0 0.0
  %1881 = vmatpush.xpose.msra.mxu0 0.0
  %1882 = vmatpush.xpose.msra.mxu0 0.0
  %1883 = vmatpush.xpose.msra.mxu0 0.0
  %1884 = vmatpush.xpose.msra.mxu0 0.0
  %1885 = vmatpush.xpose.msra.mxu0 0.0
  %1886 = vmatpush.xpose.msra.mxu0 0.0
  %1887 = vmatpush.xpose.msra.mxu0 0.0
  %1888 = vmatpush.xpose.msra.mxu0 0.0
  %1889 = vmatpush.xpose.msra.mxu0 0.0
  %1890 = vmatpush.xpose.msra.mxu0 0.0
  %1891 = vmatpush.xpose.msra.mxu0 0.0
  %1892 = vmatpush.xpose.msra.mxu0 %v1876
  %1893 = vmatpush.xpose.msra.mxu0 %v1873
  %1894 = vmatmul.f32.gmra.mxu0 %v1841
  %v1895 = vpop.f32.mrf.mxu0
  %v1896 = vadd.f32 0.0, %v1895
  %1897 = vmatmul.f32.gmra.mxu0 %v1844
  %v1898 = vpop.f32.mrf.mxu0
  %v1899 = vadd.f32 0.0, %v1898
  %1900 = vdwg.mxu0
  %v1902 = vsel %vm272, %v1616, 0
  %v1905 = vsel %vm272, %v1617, 0
  %1907 = vmatpush.xpose.msra.mxu0 0.0
  %1908 = vmatpush.xpose.msra.mxu0 0.0
  %1909 = vmatpush.xpose.msra.mxu0 0.0
  %1910 = vmatpush.xpose.msra.mxu0 0.0
  %1911 = vmatpush.xpose.msra.mxu0 0.0
  %1912 = vmatpush.xpose.msra.mxu0 0.0
  %1913 = vmatpush.xpose.msra.mxu0 0.0
  %1914 = vmatpush.xpose.msra.mxu0 0.0
  %1915 = vmatpush.xpose.msra.mxu0 0.0
  %1916 = vmatpush.xpose.msra.mxu0 0.0
  %1917 = vmatpush.xpose.msra.mxu0 0.0
  %1918 = vmatpush.xpose.msra.mxu0 0.0
  %1919 = vmatpush.xpose.msra.mxu0 0.0
  %1920 = vmatpush.xpose.msra.mxu0 0.0
  %1921 = vmatpush.xpose.msra.mxu0 %v1905
  %1922 = vmatpush.xpose.msra.mxu0 %v1902
  %1923 = vmatmul.f32.gmra.mxu0 %v1841
  %v1924 = vpop.f32.mrf.mxu0
  %v1925 = vadd.f32 0.0, %v1924
  %1926 = vmatmul.f32.gmra.mxu0 %v1844
  %v1927 = vpop.f32.mrf.mxu0
  %v1928 = vadd.f32 0.0, %v1927
  %1929 = vdwg.mxu0
  %v1930 = vperm.slane %v1628, 0
  %v1932 = vsel %vm364, %v1867, 0
  %v1935 = vsel %vm364, %v1870, 0
  %1937 = vmatpush.msra.mxu0 0.0
  %1938 = vmatpush.msra.mxu0 0.0
  %1939 = vmatpush.msra.mxu0 0.0
  %1940 = vmatpush.msra.mxu0 0.0
  %1941 = vmatpush.msra.mxu0 0.0
  %1942 = vmatpush.msra.mxu0 0.0
  %1943 = vmatpush.msra.mxu0 0.0
  %1944 = vmatpush.msra.mxu0 0.0
  %1945 = vmatpush.msra.mxu0 0.0
  %1946 = vmatpush.msra.mxu0 0.0
  %1947 = vmatpush.msra.mxu0 0.0
  %1948 = vmatpush.msra.mxu0 0.0
  %1949 = vmatpush.msra.mxu0 0.0
  %1950 = vmatpush.msra.mxu0 0.0
  %1951 = vmatpush.msra.mxu0 0.0
  %1952 = vmatpush.msra.mxu0 %v1618
  %1953 = vmatmul.f32.gmra.mxu0 %v1932
  %v1954 = vpop.f32.mrf.mxu0
  %v1955 = vadd.f32 %v1930, %v1954
  %1956 = vmatmul.f32.gmra.mxu0 %v1935
  %v1957 = vpop.f32.mrf.mxu0
  %v1958 = vadd.f32 %v1930, %v1957
  %1959 = vdwg.mxu0
  %v1960 = vmax.f32 %v1955, 0.0
  %v1961 = vmax.f32 %v1958, 0.0
  %v1962 = vand.u32 2147483647, %v1955
  %v1963 = vand.u32 2147483647, %v1958
  %v1964 = vsub.f32 0.0, %v1962
  %v1965 = vsub.f32 0.0, %v1963
  %v1966 = vmul.f32 %v1964, 1.442695
  %v1967 = vpow.pop %v1966
  %v1968 = vmul.f32 %v1965, 1.442695
  %v1969 = vpow.pop %v1968
  %v1970 = vadd.f32 %v1967, 1.0
  %v1971 = vlog2.pop %v1970
  %v1972 = vmul.f32 %v1971, 0.6931472
  %v1973 = vmul.f32 -0.5, %v1967
  %v1974 = vadd.f32 %v1973, 1.0
  %v1975 = vmul.f32 %v1974, %v1967
  %v1976 = vand.u32 2147483647, %v1967
  %vm1977 = vcmp.lt.f32.partialorder %v1976, 0.0004427343
  %v1978 = vsel %vm1977, %v1975, %v1972
  %v1979 = vadd.f32 %v1969, 1.0
  %v1980 = vlog2.pop %v1979
  %v1981 = vmul.f32 %v1980, 0.6931472
  %v1982 = vmul.f32 -0.5, %v1969
  %v1983 = vadd.f32 %v1982, 1.0
  %v1984 = vmul.f32 %v1983, %v1969
  %v1985 = vand.u32 2147483647, %v1969
  %vm1986 = vcmp.lt.f32.partialorder %v1985, 0.0004427343
  %v1987 = vsel %vm1986, %v1984, %v1981
  %v1988 = vadd.f32 %v1960, %v1978
  %v1989 = vadd.f32 %v1961, %v1987
  %v1990 = vmul.f32 %v1623, 1.442695
  %v1991 = vpow.pop %v1990
  %v1992 = vmul.f32 %v1624, 1.442695
  %v1993 = vpow.pop %v1992
  %v1994 = vsub.f32 0.0, %v1991
  %v1995 = vsub.f32 0.0, %v1993
  %v1996 = vmul.f32 %v1988, %v1838
  %v1997 = vmul.f32 %v1989, %v1839
  %v1998 = vperm.slane %v1988, 0
  %v1999 = vperm.slane %v1989, 0
  %v2000 = vmul.f32 %v1998, %v1994
  %v2001 = vmul.f32 %v1998, %v1995
  %v2002 = vmul.f32 %v1999, %v1994
  %v2003 = vmul.f32 %v1999, %v1995
  %v2004 = vmul.f32 %v2000, 1.442695
  %v2005 = vpow.pop %v2004
  %v2006 = vmul.f32 %v2001, 1.442695
  %v2007 = vpow.pop %v2006
  %v2008 = vmul.f32 %v2002, 1.442695
  %v2009 = vpow.pop %v2008
  %v2010 = vmul.f32 %v2003, 1.442695
  %v2011 = vpow.pop %v2010
  %v2012 = vperm.slane %v1896, 0
  %v2013 = vlaneseq
  %v2014 = vshrl.u32 %v2013, 7
  %2016 = vset.pattern.permute.xlu0 %v2014
  %2017 = vperm.xlu0 %2016, %v2012
  %v2018 = vpop.permute.xlu0 %2017
  %v2019 = vlaneseq
  %v2020 = vshrl.u32 %v2019, 7
  %v2021 = vadd.s32 %v2020, 8
  %2022 = vset.pattern.permute.xlu0 %v2021
  %2023 = vperm.xlu0 %2022, %v2012
  %v2024 = vpop.permute.xlu0 %2023
  %v2025 = vperm.slane %v1899, 0
  %v2026 = vlaneseq
  %v2027 = vshrl.u32 %v2026, 7
  %2029 = vset.pattern.permute.xlu0 %v2027
  %2030 = vperm.xlu0 %2029, %v2025
  %v2031 = vpop.permute.xlu0 %2030
  %v2032 = vlaneseq
  %v2033 = vshrl.u32 %v2032, 7
  %v2034 = vadd.s32 %v2033, 8
  %2035 = vset.pattern.permute.xlu0 %v2034
  %2036 = vperm.xlu0 %2035, %v2025
  %v2037 = vpop.permute.xlu0 %2036
  %v2038 = vperm.slane %v1996, 0
  %v2039 = vperm.slane %v1997, 0
  %v2040 = vmul.f32 %v2038, %v2018
  %v2041 = vmul.f32 %v2038, %v2024
  %v2042 = vmul.f32 %v2039, %v2031
  %v2043 = vmul.f32 %v2039, %v2037
  %v2044 = vmul.f32 %v2005, 0.0
  %v2045 = vmul.f32 %v2007, 0.0
  %v2046 = vmul.f32 %v2009, 0.0
  %v2047 = vmul.f32 %v2011, 0.0
  %v2048 = vadd.f32 %v2044, %v2040
  %v2049 = vadd.f32 %v2045, %v2041
  %v2050 = vadd.f32 %v2046, %v2042
  %v2051 = vadd.f32 %v2047, %v2043
  %2052 = vst.msk [vmem:[#allocation2] sm:$0xff] %vm272, %v2048
  %2053 = vst.msk [vmem:[#allocation2 + $0x8] sm:$0xff] %vm272, %v2049
  %2054 = vst.msk [vmem:[#allocation2 + $0x80] sm:$0xff] %vm272, %v2050
  %2055 = vst.msk [vmem:[#allocation2 + $0x88] sm:$0xff] %vm272, %v2051
  %v2056 = vperm.slane %v1988, 1
  %v2057 = vperm.slane %v1989, 1
  %v2058 = vmul.f32 %v2056, %v1994
  %v2059 = vmul.f32 %v2056, %v1995
  %v2060 = vmul.f32 %v2057, %v1994
  %v2061 = vmul.f32 %v2057, %v1995
  %v2062 = vmul.f32 %v2058, 1.442695
  %v2063 = vpow.pop %v2062
  %v2064 = vmul.f32 %v2059, 1.442695
  %v2065 = vpow.pop %v2064
  %v2066 = vmul.f32 %v2060, 1.442695
  %v2067 = vpow.pop %v2066
  %v2068 = vmul.f32 %v2061, 1.442695
  %v2069 = vpow.pop %v2068
  %v2070 = vperm.slane %v1896, 1
  %v2071 = vlaneseq
  %v2072 = vshrl.u32 %v2071, 7
  %2074 = vset.pattern.permute.xlu0 %v2072
  %2075 = vperm.xlu0 %2074, %v2070
  %v2076 = vpop.permute.xlu0 %2075
  %v2077 = vlaneseq
  %v2078 = vshrl.u32 %v2077, 7
  %v2079 = vadd.s32 %v2078, 8
  %2080 = vset.pattern.permute.xlu0 %v2079
  %2081 = vperm.xlu0 %2080, %v2070
  %v2082 = vpop.permute.xlu0 %2081
  %v2083 = vperm.slane %v1899, 1
  %v2084 = vlaneseq
  %v2085 = vshrl.u32 %v2084, 7
  %2087 = vset.pattern.permute.xlu0 %v2085
  %2088 = vperm.xlu0 %2087, %v2083
  %v2089 = vpop.permute.xlu0 %2088
  %v2090 = vlaneseq
  %v2091 = vshrl.u32 %v2090, 7
  %v2092 = vadd.s32 %v2091, 8
  %2093 = vset.pattern.permute.xlu0 %v2092
  %2094 = vperm.xlu0 %2093, %v2083
  %v2095 = vpop.permute.xlu0 %2094
  %v2096 = vperm.slane %v1996, 1
  %v2097 = vperm.slane %v1997, 1
  %v2098 = vmul.f32 %v2096, %v2076
  %v2099 = vmul.f32 %v2096, %v2082
  %v2100 = vmul.f32 %v2097, %v2089
  %v2101 = vmul.f32 %v2097, %v2095
  %v2102 = vmul.f32 %v2048, %v2063
  %v2103 = vmul.f32 %v2049, %v2065
  %v2104 = vmul.f32 %v2050, %v2067
  %v2105 = vmul.f32 %v2051, %v2069
  %v2106 = vadd.f32 %v2102, %v2098
  %v2107 = vadd.f32 %v2103, %v2099
  %v2108 = vadd.f32 %v2104, %v2100
  %v2109 = vadd.f32 %v2105, %v2101
  %2110 = vst.msk [vmem:[%s544] sm:$0xff] %vm272, %v2106
  %2111 = vst.msk [vmem:[%s544 + $0x8] sm:$0xff] %vm272, %v2107
  %2112 = vst.msk [vmem:[%s544 + $0x80] sm:$0xff] %vm272, %v2108
  %2113 = vst.msk [vmem:[%s544 + $0x88] sm:$0xff] %vm272, %v2109
  %v2114 = vperm.slane %v1988, 2
  %v2115 = vperm.slane %v1989, 2
  %v2116 = vmul.f32 %v2114, %v1994
  %v2117 = vmul.f32 %v2114, %v1995
  %v2118 = vmul.f32 %v2115, %v1994
  %v2119 = vmul.f32 %v2115, %v1995
  %v2120 = vmul.f32 %v2116, 1.442695
  %v2121 = vpow.pop %v2120
  %v2122 = vmul.f32 %v2117, 1.442695
  %v2123 = vpow.pop %v2122
  %v2124 = vmul.f32 %v2118, 1.442695
  %v2125 = vpow.pop %v2124
  %v2126 = vmul.f32 %v2119, 1.442695
  %v2127 = vpow.pop %v2126
  %v2128 = vperm.slane %v1896, 2
  %v2129 = vlaneseq
  %v2130 = vshrl.u32 %v2129, 7
  %2132 = vset.pattern.permute.xlu0 %v2130
  %2133 = vperm.xlu0 %2132, %v2128
  %v2134 = vpop.permute.xlu0 %2133
  %v2135 = vlaneseq
  %v2136 = vshrl.u32 %v2135, 7
  %v2137 = vadd.s32 %v2136, 8
  %2138 = vset.pattern.permute.xlu0 %v2137
  %2139 = vperm.xlu0 %2138, %v2128
  %v2140 = vpop.permute.xlu0 %2139
  %v2141 = vperm.slane %v1899, 2
  %v2142 = vlaneseq
  %v2143 = vshrl.u32 %v2142, 7
  %2145 = vset.pattern.permute.xlu0 %v2143
  %2146 = vperm.xlu0 %2145, %v2141
  %v2147 = vpop.permute.xlu0 %2146
  %v2148 = vlaneseq
  %v2149 = vshrl.u32 %v2148, 7
  %v2150 = vadd.s32 %v2149, 8
  %2151 = vset.pattern.permute.xlu0 %v2150
  %2152 = vperm.xlu0 %2151, %v2141
  %v2153 = vpop.permute.xlu0 %2152
  %v2154 = vperm.slane %v1996, 2
  %v2155 = vperm.slane %v1997, 2
  %v2156 = vmul.f32 %v2154, %v2134
  %v2157 = vmul.f32 %v2154, %v2140
  %v2158 = vmul.f32 %v2155, %v2147
  %v2159 = vmul.f32 %v2155, %v2153
  %v2160 = vmul.f32 %v2106, %v2121
  %v2161 = vmul.f32 %v2107, %v2123
  %v2162 = vmul.f32 %v2108, %v2125
  %v2163 = vmul.f32 %v2109, %v2127
  %v2164 = vadd.f32 %v2160, %v2156
  %v2165 = vadd.f32 %v2161, %v2157
  %v2166 = vadd.f32 %v2162, %v2158
  %v2167 = vadd.f32 %v2163, %v2159
  %2168 = vst.msk [vmem:[%s603] sm:$0xff] %vm272, %v2164
  %2169 = vst.msk [vmem:[%s603 + $0x8] sm:$0xff] %vm272, %v2165
  %2170 = vst.msk [vmem:[%s603 + $0x80] sm:$0xff] %vm272, %v2166
  %2171 = vst.msk [vmem:[%s603 + $0x88] sm:$0xff] %vm272, %v2167
  %v2172 = vperm.slane %v1988, 3
  %v2173 = vperm.slane %v1989, 3
  %v2174 = vmul.f32 %v2172, %v1994
  %v2175 = vmul.f32 %v2172, %v1995
  %v2176 = vmul.f32 %v2173, %v1994
  %v2177 = vmul.f32 %v2173, %v1995
  %v2178 = vmul.f32 %v2174, 1.442695
  %v2179 = vpow.pop %v2178
  %v2180 = vmul.f32 %v2175, 1.442695
  %v2181 = vpow.pop %v2180
  %v2182 = vmul.f32 %v2176, 1.442695
  %v2183 = vpow.pop %v2182
  %v2184 = vmul.f32 %v2177, 1.442695
  %v2185 = vpow.pop %v2184
  %v2186 = vperm.slane %v1896, 3
  %v2187 = vlaneseq
  %v2188 = vshrl.u32 %v2187, 7
  %2190 = vset.pattern.permute.xlu0 %v2188
  %2191 = vperm.xlu0 %2190, %v2186
  %v2192 = vpop.permute.xlu0 %2191
  %v2193 = vlaneseq
  %v2194 = vshrl.u32 %v2193, 7
  %v2195 = vadd.s32 %v2194, 8
  %2196 = vset.pattern.permute.xlu0 %v2195
  %2197 = vperm.xlu0 %2196, %v2186
  %v2198 = vpop.permute.xlu0 %2197
  %v2199 = vperm.slane %v1899, 3
  %v2200 = vlaneseq
  %v2201 = vshrl.u32 %v2200, 7
  %2203 = vset.pattern.permute.xlu0 %v2201
  %2204 = vperm.xlu0 %2203, %v2199
  %v2205 = vpop.permute.xlu0 %2204
  %v2206 = vlaneseq
  %v2207 = vshrl.u32 %v2206, 7
  %v2208 = vadd.s32 %v2207, 8
  %2209 = vset.pattern.permute.xlu0 %v2208
  %2210 = vperm.xlu0 %2209, %v2199
  %v2211 = vpop.permute.xlu0 %2210
  %v2212 = vperm.slane %v1996, 3
  %v2213 = vperm.slane %v1997, 3
  %v2214 = vmul.f32 %v2212, %v2192
  %v2215 = vmul.f32 %v2212, %v2198
  %v2216 = vmul.f32 %v2213, %v2205
  %v2217 = vmul.f32 %v2213, %v2211
  %v2218 = vmul.f32 %v2164, %v2179
  %v2219 = vmul.f32 %v2165, %v2181
  %v2220 = vmul.f32 %v2166, %v2183
  %v2221 = vmul.f32 %v2167, %v2185
  %v2222 = vadd.f32 %v2218, %v2214
  %v2223 = vadd.f32 %v2219, %v2215
  %v2224 = vadd.f32 %v2220, %v2216
  %v2225 = vadd.f32 %v2221, %v2217
  %2226 = vst.msk [vmem:[%s662] sm:$0xff] %vm272, %v2222
  %2227 = vst.msk [vmem:[%s662 + $0x8] sm:$0xff] %vm272, %v2223
  %2228 = vst.msk [vmem:[%s662 + $0x80] sm:$0xff] %vm272, %v2224
  %2229 = vst.msk [vmem:[%s662 + $0x88] sm:$0xff] %vm272, %v2225
  %v2230 = vperm.slane %v1988, 4
  %v2231 = vperm.slane %v1989, 4
  %v2232 = vmul.f32 %v2230, %v1994
  %v2233 = vmul.f32 %v2230, %v1995
  %v2234 = vmul.f32 %v2231, %v1994
  %v2235 = vmul.f32 %v2231, %v1995
  %v2236 = vmul.f32 %v2232, 1.442695
  %v2237 = vpow.pop %v2236
  %v2238 = vmul.f32 %v2233, 1.442695
  %v2239 = vpow.pop %v2238
  %v2240 = vmul.f32 %v2234, 1.442695
  %v2241 = vpow.pop %v2240
  %v2242 = vmul.f32 %v2235, 1.442695
  %v2243 = vpow.pop %v2242
  %v2244 = vperm.slane %v1896, 4
  %v2245 = vlaneseq
  %v2246 = vshrl.u32 %v2245, 7
  %2248 = vset.pattern.permute.xlu0 %v2246
  %2249 = vperm.xlu0 %2248, %v2244
  %v2250 = vpop.permute.xlu0 %2249
  %v2251 = vlaneseq
  %v2252 = vshrl.u32 %v2251, 7
  %v2253 = vadd.s32 %v2252, 8
  %2254 = vset.pattern.permute.xlu0 %v2253
  %2255 = vperm.xlu0 %2254, %v2244
  %v2256 = vpop.permute.xlu0 %2255
  %v2257 = vperm.slane %v1899, 4
  %v2258 = vlaneseq
  %v2259 = vshrl.u32 %v2258, 7
  %2261 = vset.pattern.permute.xlu0 %v2259
  %2262 = vperm.xlu0 %2261, %v2257
  %v2263 = vpop.permute.xlu0 %2262
  %v2264 = vlaneseq
  %v2265 = vshrl.u32 %v2264, 7
  %v2266 = vadd.s32 %v2265, 8
  %2267 = vset.pattern.permute.xlu0 %v2266
  %2268 = vperm.xlu0 %2267, %v2257
  %v2269 = vpop.permute.xlu0 %2268
  %v2270 = vperm.slane %v1996, 4
  %v2271 = vperm.slane %v1997, 4
  %v2272 = vmul.f32 %v2270, %v2250
  %v2273 = vmul.f32 %v2270, %v2256
  %v2274 = vmul.f32 %v2271, %v2263
  %v2275 = vmul.f32 %v2271, %v2269
  %v2276 = vmul.f32 %v2222, %v2237
  %v2277 = vmul.f32 %v2223, %v2239
  %v2278 = vmul.f32 %v2224, %v2241
  %v2279 = vmul.f32 %v2225, %v2243
  %v2280 = vadd.f32 %v2276, %v2272
  %v2281 = vadd.f32 %v2277, %v2273
  %v2282 = vadd.f32 %v2278, %v2274
  %v2283 = vadd.f32 %v2279, %v2275
  %2284 = vst.msk [vmem:[%s721] sm:$0xff] %vm272, %v2280
  %2285 = vst.msk [vmem:[%s721 + $0x8] sm:$0xff] %vm272, %v2281
  %2286 = vst.msk [vmem:[%s721 + $0x80] sm:$0xff] %vm272, %v2282
  %2287 = vst.msk [vmem:[%s721 + $0x88] sm:$0xff] %vm272, %v2283
  %v2288 = vperm.slane %v1988, 5
  %v2289 = vperm.slane %v1989, 5
  %v2290 = vmul.f32 %v2288, %v1994
  %v2291 = vmul.f32 %v2288, %v1995
  %v2292 = vmul.f32 %v2289, %v1994
  %v2293 = vmul.f32 %v2289, %v1995
  %v2294 = vmul.f32 %v2290, 1.442695
  %v2295 = vpow.pop %v2294
  %v2296 = vmul.f32 %v2291, 1.442695
  %v2297 = vpow.pop %v2296
  %v2298 = vmul.f32 %v2292, 1.442695
  %v2299 = vpow.pop %v2298
  %v2300 = vmul.f32 %v2293, 1.442695
  %v2301 = vpow.pop %v2300
  %v2302 = vperm.slane %v1896, 5
  %v2303 = vlaneseq
  %v2304 = vshrl.u32 %v2303, 7
  %2306 = vset.pattern.permute.xlu0 %v2304
  %2307 = vperm.xlu0 %2306, %v2302
  %v2308 = vpop.permute.xlu0 %2307
  %v2309 = vlaneseq
  %v2310 = vshrl.u32 %v2309, 7
  %v2311 = vadd.s32 %v2310, 8
  %2312 = vset.pattern.permute.xlu0 %v2311
  %2313 = vperm.xlu0 %2312, %v2302
  %v2314 = vpop.permute.xlu0 %2313
  %v2315 = vperm.slane %v1899, 5
  %v2316 = vlaneseq
  %v2317 = vshrl.u32 %v2316, 7
  %2319 = vset.pattern.permute.xlu0 %v2317
  %2320 = vperm.xlu0 %2319, %v2315
  %v2321 = vpop.permute.xlu0 %2320
  %v2322 = vlaneseq
  %v2323 = vshrl.u32 %v2322, 7
  %v2324 = vadd.s32 %v2323, 8
  %2325 = vset.pattern.permute.xlu0 %v2324
  %2326 = vperm.xlu0 %2325, %v2315
  %v2327 = vpop.permute.xlu0 %2326
  %v2328 = vperm.slane %v1996, 5
  %v2329 = vperm.slane %v1997, 5
  %v2330 = vmul.f32 %v2328, %v2308
  %v2331 = vmul.f32 %v2328, %v2314
  %v2332 = vmul.f32 %v2329, %v2321
  %v2333 = vmul.f32 %v2329, %v2327
  %v2334 = vmul.f32 %v2280, %v2295
  %v2335 = vmul.f32 %v2281, %v2297
  %v2336 = vmul.f32 %v2282, %v2299
  %v2337 = vmul.f32 %v2283, %v2301
  %v2338 = vadd.f32 %v2334, %v2330
  %v2339 = vadd.f32 %v2335, %v2331
  %v2340 = vadd.f32 %v2336, %v2332
  %v2341 = vadd.f32 %v2337, %v2333
  %2342 = vst.msk [vmem:[%s780] sm:$0xff] %vm272, %v2338
  %2343 = vst.msk [vmem:[%s780 + $0x8] sm:$0xff] %vm272, %v2339
  %2344 = vst.msk [vmem:[%s780 + $0x80] sm:$0xff] %vm272, %v2340
  %2345 = vst.msk [vmem:[%s780 + $0x88] sm:$0xff] %vm272, %v2341
  %v2346 = vperm.slane %v1988, 6
  %v2347 = vperm.slane %v1989, 6
  %v2348 = vmul.f32 %v2346, %v1994
  %v2349 = vmul.f32 %v2346, %v1995
  %v2350 = vmul.f32 %v2347, %v1994
  %v2351 = vmul.f32 %v2347, %v1995
  %v2352 = vmul.f32 %v2348, 1.442695
  %v2353 = vpow.pop %v2352
  %v2354 = vmul.f32 %v2349, 1.442695
  %v2355 = vpow.pop %v2354
  %v2356 = vmul.f32 %v2350, 1.442695
  %v2357 = vpow.pop %v2356
  %v2358 = vmul.f32 %v2351, 1.442695
  %v2359 = vpow.pop %v2358
  %v2360 = vperm.slane %v1896, 6
  %v2361 = vlaneseq
  %v2362 = vshrl.u32 %v2361, 7
  %2364 = vset.pattern.permute.xlu0 %v2362
  %2365 = vperm.xlu0 %2364, %v2360
  %v2366 = vpop.permute.xlu0 %2365
  %v2367 = vlaneseq
  %v2368 = vshrl.u32 %v2367, 7
  %v2369 = vadd.s32 %v2368, 8
  %2370 = vset.pattern.permute.xlu0 %v2369
  %2371 = vperm.xlu0 %2370, %v2360
  %v2372 = vpop.permute.xlu0 %2371
  %v2373 = vperm.slane %v1899, 6
  %v2374 = vlaneseq
  %v2375 = vshrl.u32 %v2374, 7
  %2377 = vset.pattern.permute.xlu0 %v2375
  %2378 = vperm.xlu0 %2377, %v2373
  %v2379 = vpop.permute.xlu0 %2378
  %v2380 = vlaneseq
  %v2381 = vshrl.u32 %v2380, 7
  %v2382 = vadd.s32 %v2381, 8
  %2383 = vset.pattern.permute.xlu0 %v2382
  %2384 = vperm.xlu0 %2383, %v2373
  %v2385 = vpop.permute.xlu0 %2384
  %v2386 = vperm.slane %v1996, 6
  %v2387 = vperm.slane %v1997, 6
  %v2388 = vmul.f32 %v2386, %v2366
  %v2389 = vmul.f32 %v2386, %v2372
  %v2390 = vmul.f32 %v2387, %v2379
  %v2391 = vmul.f32 %v2387, %v2385
  %v2392 = vmul.f32 %v2338, %v2353
  %v2393 = vmul.f32 %v2339, %v2355
  %v2394 = vmul.f32 %v2340, %v2357
  %v2395 = vmul.f32 %v2341, %v2359
  %v2396 = vadd.f32 %v2392, %v2388
  %v2397 = vadd.f32 %v2393, %v2389
  %v2398 = vadd.f32 %v2394, %v2390
  %v2399 = vadd.f32 %v2395, %v2391
  %2400 = vst.msk [vmem:[%s839] sm:$0xff] %vm272, %v2396
  %2401 = vst.msk [vmem:[%s839 + $0x8] sm:$0xff] %vm272, %v2397
  %2402 = vst.msk [vmem:[%s839 + $0x80] sm:$0xff] %vm272, %v2398
  %2403 = vst.msk [vmem:[%s839 + $0x88] sm:$0xff] %vm272, %v2399
  %v2404 = vperm.slane %v1988, 7
  %v2405 = vperm.slane %v1989, 7
  %v2406 = vmul.f32 %v2404, %v1994
  %v2407 = vmul.f32 %v2404, %v1995
  %v2408 = vmul.f32 %v2405, %v1994
  %v2409 = vmul.f32 %v2405, %v1995
  %v2410 = vmul.f32 %v2406, 1.442695
  %v2411 = vpow.pop %v2410
  %v2412 = vmul.f32 %v2407, 1.442695
  %v2413 = vpow.pop %v2412
  %v2414 = vmul.f32 %v2408, 1.442695
  %v2415 = vpow.pop %v2414
  %v2416 = vmul.f32 %v2409, 1.442695
  %v2417 = vpow.pop %v2416
  %v2418 = vperm.slane %v1896, 7
  %v2419 = vlaneseq
  %v2420 = vshrl.u32 %v2419, 7
  %2422 = vset.pattern.permute.xlu0 %v2420
  %2423 = vperm.xlu0 %2422, %v2418
  %v2424 = vpop.permute.xlu0 %2423
  %v2425 = vlaneseq
  %v2426 = vshrl.u32 %v2425, 7
  %v2427 = vadd.s32 %v2426, 8
  %2428 = vset.pattern.permute.xlu0 %v2427
  %2429 = vperm.xlu0 %2428, %v2418
  %v2430 = vpop.permute.xlu0 %2429
  %v2431 = vperm.slane %v1899, 7
  %v2432 = vlaneseq
  %v2433 = vshrl.u32 %v2432, 7
  %2435 = vset.pattern.permute.xlu0 %v2433
  %2436 = vperm.xlu0 %2435, %v2431
  %v2437 = vpop.permute.xlu0 %2436
  %v2438 = vlaneseq
  %v2439 = vshrl.u32 %v2438, 7
  %v2440 = vadd.s32 %v2439, 8
  %2441 = vset.pattern.permute.xlu0 %v2440
  %2442 = vperm.xlu0 %2441, %v2431
  %v2443 = vpop.permute.xlu0 %2442
  %v2444 = vperm.slane %v1996, 7
  %v2445 = vperm.slane %v1997, 7
  %v2446 = vmul.f32 %v2444, %v2424
  %v2447 = vmul.f32 %v2444, %v2430
  %v2448 = vmul.f32 %v2445, %v2437
  %v2449 = vmul.f32 %v2445, %v2443
  %v2450 = vmul.f32 %v2396, %v2411
  %v2451 = vmul.f32 %v2397, %v2413
  %v2452 = vmul.f32 %v2398, %v2415
  %v2453 = vmul.f32 %v2399, %v2417
  %v2454 = vadd.f32 %v2450, %v2446
  %v2455 = vadd.f32 %v2451, %v2447
  %v2456 = vadd.f32 %v2452, %v2448
  %v2457 = vadd.f32 %v2453, %v2449
  %2458 = vst.msk [vmem:[%s898] sm:$0xff] %vm272, %v2454
  %2459 = vst.msk [vmem:[%s898 + $0x8] sm:$0xff] %vm272, %v2455
  %2460 = vst.msk [vmem:[%s898 + $0x80] sm:$0xff] %vm272, %v2456
  %2461 = vst.msk [vmem:[%s898 + $0x88] sm:$0xff] %vm272, %v2457
  %v2462 = vld [vmem:[#allocation2] sm:$0xff]
  %v2463 = vld [vmem:[#allocation2 + $0x8] sm:$0xff]
  %v2464 = vld [vmem:[#allocation2 + $0x10] sm:$0xff]
  %v2465 = vld [vmem:[#allocation2 + $0x18] sm:$0xff]
  %v2466 = vld [vmem:[#allocation2 + $0x20] sm:$0xff]
  %v2467 = vld [vmem:[#allocation2 + $0x28] sm:$0xff]
  %v2468 = vld [vmem:[#allocation2 + $0x30] sm:$0xff]
  %v2469 = vld [vmem:[#allocation2 + $0x38] sm:$0xff]
  %v2470 = vld [vmem:[#allocation2 + $0x40] sm:$0xff]
  %v2471 = vld [vmem:[#allocation2 + $0x48] sm:$0xff]
  %v2472 = vld [vmem:[#allocation2 + $0x50] sm:$0xff]
  %v2473 = vld [vmem:[#allocation2 + $0x58] sm:$0xff]
  %v2474 = vld [vmem:[#allocation2 + $0x60] sm:$0xff]
  %v2475 = vld [vmem:[#allocation2 + $0x68] sm:$0xff]
  %v2476 = vld [vmem:[#allocation2 + $0x70] sm:$0xff]
  %v2477 = vld [vmem:[#allocation2 + $0x78] sm:$0xff]
  %v2478 = vld [vmem:[#allocation2 + $0x80] sm:$0xff]
  %v2479 = vld [vmem:[#allocation2 + $0x88] sm:$0xff]
  %v2480 = vld [vmem:[#allocation2 + $0x90] sm:$0xff]
  %v2481 = vld [vmem:[#allocation2 + $0x98] sm:$0xff]
  %v2482 = vld [vmem:[#allocation2 + $0xa0] sm:$0xff]
  %v2483 = vld [vmem:[#allocation2 + $0xa8] sm:$0xff]
  %v2484 = vld [vmem:[#allocation2 + $0xb0] sm:$0xff]
  %v2485 = vld [vmem:[#allocation2 + $0xb8] sm:$0xff]
  %v2486 = vld [vmem:[#allocation2 + $0xc0] sm:$0xff]
  %v2487 = vld [vmem:[#allocation2 + $0xc8] sm:$0xff]
  %v2488 = vld [vmem:[#allocation2 + $0xd0] sm:$0xff]
  %v2489 = vld [vmem:[#allocation2 + $0xd8] sm:$0xff]
  %v2490 = vld [vmem:[#allocation2 + $0xe0] sm:$0xff]
  %v2491 = vld [vmem:[#allocation2 + $0xe8] sm:$0xff]
  %v2492 = vld [vmem:[#allocation2 + $0xf0] sm:$0xff]
  %v2493 = vld [vmem:[#allocation2 + $0xf8] sm:$0xff]
  %v2494 = vperm.slane %v1925, 0
  %v2495 = vlaneseq
  %v2496 = vshrl.u32 %v2495, 7
  %2498 = vset.pattern.permute.xlu0 %v2496
  %2499 = vperm.xlu0 %2498, %v2494
  %v2500 = vpop.permute.xlu0 %2499
  %v2501 = vlaneseq
  %v2502 = vshrl.u32 %v2501, 7
  %v2503 = vadd.s32 %v2502, 8
  %2504 = vset.pattern.permute.xlu0 %v2503
  %2505 = vperm.xlu0 %2504, %v2494
  %v2506 = vpop.permute.xlu0 %2505
  %v2507 = vperm.slane %v1925, 1
  %v2508 = vlaneseq
  %v2509 = vshrl.u32 %v2508, 7
  %2511 = vset.pattern.permute.xlu0 %v2509
  %2512 = vperm.xlu0 %2511, %v2507
  %v2513 = vpop.permute.xlu0 %2512
  %v2514 = vlaneseq
  %v2515 = vshrl.u32 %v2514, 7
  %v2516 = vadd.s32 %v2515, 8
  %2517 = vset.pattern.permute.xlu0 %v2516
  %2518 = vperm.xlu0 %2517, %v2507
  %v2519 = vpop.permute.xlu0 %2518
  %v2520 = vperm.slane %v1925, 2
  %v2521 = vlaneseq
  %v2522 = vshrl.u32 %v2521, 7
  %2524 = vset.pattern.permute.xlu0 %v2522
  %2525 = vperm.xlu0 %2524, %v2520
  %v2526 = vpop.permute.xlu0 %2525
  %v2527 = vlaneseq
  %v2528 = vshrl.u32 %v2527, 7
  %v2529 = vadd.s32 %v2528, 8
  %2530 = vset.pattern.permute.xlu0 %v2529
  %2531 = vperm.xlu0 %2530, %v2520
  %v2532 = vpop.permute.xlu0 %2531
  %v2533 = vperm.slane %v1925, 3
  %v2534 = vlaneseq
  %v2535 = vshrl.u32 %v2534, 7
  %2537 = vset.pattern.permute.xlu0 %v2535
  %2538 = vperm.xlu0 %2537, %v2533
  %v2539 = vpop.permute.xlu0 %2538
  %v2540 = vlaneseq
  %v2541 = vshrl.u32 %v2540, 7
  %v2542 = vadd.s32 %v2541, 8
  %2543 = vset.pattern.permute.xlu0 %v2542
  %2544 = vperm.xlu0 %2543, %v2533
  %v2545 = vpop.permute.xlu0 %2544
  %v2546 = vperm.slane %v1925, 4
  %v2547 = vlaneseq
  %v2548 = vshrl.u32 %v2547, 7
  %2550 = vset.pattern.permute.xlu0 %v2548
  %2551 = vperm.xlu0 %2550, %v2546
  %v2552 = vpop.permute.xlu0 %2551
  %v2553 = vlaneseq
  %v2554 = vshrl.u32 %v2553, 7
  %v2555 = vadd.s32 %v2554, 8
  %2556 = vset.pattern.permute.xlu0 %v2555
  %2557 = vperm.xlu0 %2556, %v2546
  %v2558 = vpop.permute.xlu0 %2557
  %v2559 = vperm.slane %v1925, 5
  %v2560 = vlaneseq
  %v2561 = vshrl.u32 %v2560, 7
  %2563 = vset.pattern.permute.xlu0 %v2561
  %2564 = vperm.xlu0 %2563, %v2559
  %v2565 = vpop.permute.xlu0 %2564
  %v2566 = vlaneseq
  %v2567 = vshrl.u32 %v2566, 7
  %v2568 = vadd.s32 %v2567, 8
  %2569 = vset.pattern.permute.xlu0 %v2568
  %2570 = vperm.xlu0 %2569, %v2559
  %v2571 = vpop.permute.xlu0 %2570
  %v2572 = vperm.slane %v1925, 6
  %v2573 = vlaneseq
  %v2574 = vshrl.u32 %v2573, 7
  %2576 = vset.pattern.permute.xlu0 %v2574
  %2577 = vperm.xlu0 %2576, %v2572
  %v2578 = vpop.permute.xlu0 %2577
  %v2579 = vlaneseq
  %v2580 = vshrl.u32 %v2579, 7
  %v2581 = vadd.s32 %v2580, 8
  %2582 = vset.pattern.permute.xlu0 %v2581
  %2583 = vperm.xlu0 %2582, %v2572
  %v2584 = vpop.permute.xlu0 %2583
  %v2585 = vperm.slane %v1925, 7
  %v2586 = vlaneseq
  %v2587 = vshrl.u32 %v2586, 7
  %2589 = vset.pattern.permute.xlu0 %v2587
  %2590 = vperm.xlu0 %2589, %v2585
  %v2591 = vpop.permute.xlu0 %2590
  %v2592 = vlaneseq
  %v2593 = vshrl.u32 %v2592, 7
  %v2594 = vadd.s32 %v2593, 8
  %2595 = vset.pattern.permute.xlu0 %v2594
  %2596 = vperm.xlu0 %2595, %v2585
  %v2597 = vpop.permute.xlu0 %2596
  %v2598 = vperm.slane %v1928, 0
  %v2599 = vlaneseq
  %v2600 = vshrl.u32 %v2599, 7
  %2602 = vset.pattern.permute.xlu0 %v2600
  %2603 = vperm.xlu0 %2602, %v2598
  %v2604 = vpop.permute.xlu0 %2603
  %v2605 = vlaneseq
  %v2606 = vshrl.u32 %v2605, 7
  %v2607 = vadd.s32 %v2606, 8
  %2608 = vset.pattern.permute.xlu0 %v2607
  %2609 = vperm.xlu0 %2608, %v2598
  %v2610 = vpop.permute.xlu0 %2609
  %v2611 = vperm.slane %v1928, 1
  %v2612 = vlaneseq
  %v2613 = vshrl.u32 %v2612, 7
  %2615 = vset.pattern.permute.xlu0 %v2613
  %2616 = vperm.xlu0 %2615, %v2611
  %v2617 = vpop.permute.xlu0 %2616
  %v2618 = vlaneseq
  %v2619 = vshrl.u32 %v2618, 7
  %v2620 = vadd.s32 %v2619, 8
  %2621 = vset.pattern.permute.xlu0 %v2620
  %2622 = vperm.xlu0 %2621, %v2611
  %v2623 = vpop.permute.xlu0 %2622
  %v2624 = vperm.slane %v1928, 2
  %v2625 = vlaneseq
  %v2626 = vshrl.u32 %v2625, 7
  %2628 = vset.pattern.permute.xlu0 %v2626
  %2629 = vperm.xlu0 %2628, %v2624
  %v2630 = vpop.permute.xlu0 %2629
  %v2631 = vlaneseq
  %v2632 = vshrl.u32 %v2631, 7
  %v2633 = vadd.s32 %v2632, 8
  %2634 = vset.pattern.permute.xlu0 %v2633
  %2635 = vperm.xlu0 %2634, %v2624
  %v2636 = vpop.permute.xlu0 %2635
  %v2637 = vperm.slane %v1928, 3
  %v2638 = vlaneseq
  %v2639 = vshrl.u32 %v2638, 7
  %2641 = vset.pattern.permute.xlu0 %v2639
  %2642 = vperm.xlu0 %2641, %v2637
  %v2643 = vpop.permute.xlu0 %2642
  %v2644 = vlaneseq
  %v2645 = vshrl.u32 %v2644, 7
  %v2646 = vadd.s32 %v2645, 8
  %2647 = vset.pattern.permute.xlu0 %v2646
  %2648 = vperm.xlu0 %2647, %v2637
  %v2649 = vpop.permute.xlu0 %2648
  %v2650 = vperm.slane %v1928, 4
  %v2651 = vlaneseq
  %v2652 = vshrl.u32 %v2651, 7
  %2654 = vset.pattern.permute.xlu0 %v2652
  %2655 = vperm.xlu0 %2654, %v2650
  %v2656 = vpop.permute.xlu0 %2655
  %v2657 = vlaneseq
  %v2658 = vshrl.u32 %v2657, 7
  %v2659 = vadd.s32 %v2658, 8
  %2660 = vset.pattern.permute.xlu0 %v2659
  %2661 = vperm.xlu0 %2660, %v2650
  %v2662 = vpop.permute.xlu0 %2661
  %v2663 = vperm.slane %v1928, 5
  %v2664 = vlaneseq
  %v2665 = vshrl.u32 %v2664, 7
  %2667 = vset.pattern.permute.xlu0 %v2665
  %2668 = vperm.xlu0 %2667, %v2663
  %v2669 = vpop.permute.xlu0 %2668
  %v2670 = vlaneseq
  %v2671 = vshrl.u32 %v2670, 7
  %v2672 = vadd.s32 %v2671, 8
  %2673 = vset.pattern.permute.xlu0 %v2672
  %2674 = vperm.xlu0 %2673, %v2663
  %v2675 = vpop.permute.xlu0 %2674
  %v2676 = vperm.slane %v1928, 6
  %v2677 = vlaneseq
  %v2678 = vshrl.u32 %v2677, 7
  %2680 = vset.pattern.permute.xlu0 %v2678
  %2681 = vperm.xlu0 %2680, %v2676
  %v2682 = vpop.permute.xlu0 %2681
  %v2683 = vlaneseq
  %v2684 = vshrl.u32 %v2683, 7
  %v2685 = vadd.s32 %v2684, 8
  %2686 = vset.pattern.permute.xlu0 %v2685
  %2687 = vperm.xlu0 %2686, %v2676
  %v2688 = vpop.permute.xlu0 %2687
  %v2689 = vperm.slane %v1928, 7
  %v2690 = vlaneseq
  %v2691 = vshrl.u32 %v2690, 7
  %2693 = vset.pattern.permute.xlu0 %v2691
  %2694 = vperm.xlu0 %2693, %v2689
  %v2695 = vpop.permute.xlu0 %2694
  %v2696 = vlaneseq
  %v2697 = vshrl.u32 %v2696, 7
  %v2698 = vadd.s32 %v2697, 8
  %2699 = vset.pattern.permute.xlu0 %v2698
  %2700 = vperm.xlu0 %2699, %v2689
  %v2701 = vpop.permute.xlu0 %2700
  %v2702 = vmul.f32 %v2462, %v2500
  %v2703 = vmul.f32 %v2463, %v2506
  %v2704 = vmul.f32 %v2464, %v2513
  %v2705 = vmul.f32 %v2465, %v2519
  %v2706 = vmul.f32 %v2466, %v2526
  %v2707 = vmul.f32 %v2467, %v2532
  %v2708 = vmul.f32 %v2468, %v2539
  %v2709 = vmul.f32 %v2469, %v2545
  %v2710 = vmul.f32 %v2470, %v2552
  %v2711 = vmul.f32 %v2471, %v2558
  %v2712 = vmul.f32 %v2472, %v2565
  %v2713 = vmul.f32 %v2473, %v2571
  %v2714 = vmul.f32 %v2474, %v2578
  %v2715 = vmul.f32 %v2475, %v2584
  %v2716 = vmul.f32 %v2476, %v2591
  %v2717 = vmul.f32 %v2477, %v2597
  %v2718 = vmul.f32 %v2478, %v2604
  %v2719 = vmul.f32 %v2479, %v2610
  %v2720 = vmul.f32 %v2480, %v2617
  %v2721 = vmul.f32 %v2481, %v2623
  %v2722 = vmul.f32 %v2482, %v2630
  %v2723 = vmul.f32 %v2483, %v2636
  %v2724 = vmul.f32 %v2484, %v2643
  %v2725 = vmul.f32 %v2485, %v2649
  %v2726 = vmul.f32 %v2486, %v2656
  %v2727 = vmul.f32 %v2487, %v2662
  %v2728 = vmul.f32 %v2488, %v2669
  %v2729 = vmul.f32 %v2489, %v2675
  %v2730 = vmul.f32 %v2490, %v2682
  %v2731 = vmul.f32 %v2491, %v2688
  %v2732 = vmul.f32 %v2492, %v2695
  %v2733 = vmul.f32 %v2493, %v2701
  %v2734 = vsel %vm272, %v2702, 0.0
  %v2735 = vsel %vm272, %v2703, 0.0
  %v2736 = vadd.f32 %v2734, %v2735
  %v2737 = vrot.slane %v2736, 4
  %v2738 = vadd.f32 %v2736, %v2737
  %v2739 = vrot.slane %v2738, 2
  %v2740 = vadd.f32 %v2738, %v2739
  %v2741 = vrot.slane %v2740, 1
  %v2742 = vadd.f32 %v2740, %v2741
  %v2743 = vsel %vm272, %v2704, 0.0
  %v2744 = vsel %vm272, %v2705, 0.0
  %v2745 = vadd.f32 %v2743, %v2744
  %v2746 = vrot.slane %v2745, 4
  %v2747 = vadd.f32 %v2745, %v2746
  %v2748 = vrot.slane %v2747, 2
  %v2749 = vadd.f32 %v2747, %v2748
  %v2750 = vrot.slane %v2749, 1
  %v2751 = vadd.f32 %v2749, %v2750
  %v2752 = vsel %vm272, %v2706, 0.0
  %v2753 = vsel %vm272, %v2707, 0.0
  %v2754 = vadd.f32 %v2752, %v2753
  %v2755 = vrot.slane %v2754, 4
  %v2756 = vadd.f32 %v2754, %v2755
  %v2757 = vrot.slane %v2756, 2
  %v2758 = vadd.f32 %v2756, %v2757
  %v2759 = vrot.slane %v2758, 1
  %v2760 = vadd.f32 %v2758, %v2759
  %v2761 = vsel %vm272, %v2708, 0.0
  %v2762 = vsel %vm272, %v2709, 0.0
  %v2763 = vadd.f32 %v2761, %v2762
  %v2764 = vrot.slane %v2763, 4
  %v2765 = vadd.f32 %v2763, %v2764
  %v2766 = vrot.slane %v2765, 2
  %v2767 = vadd.f32 %v2765, %v2766
  %v2768 = vrot.slane %v2767, 1
  %v2769 = vadd.f32 %v2767, %v2768
  %v2770 = vsel %vm272, %v2710, 0.0
  %v2771 = vsel %vm272, %v2711, 0.0
  %v2772 = vadd.f32 %v2770, %v2771
  %v2773 = vrot.slane %v2772, 4
  %v2774 = vadd.f32 %v2772, %v2773
  %v2775 = vrot.slane %v2774, 2
  %v2776 = vadd.f32 %v2774, %v2775
  %v2777 = vrot.slane %v2776, 1
  %v2778 = vadd.f32 %v2776, %v2777
  %v2779 = vsel %vm272, %v2712, 0.0
  %v2780 = vsel %vm272, %v2713, 0.0
  %v2781 = vadd.f32 %v2779, %v2780
  %v2782 = vrot.slane %v2781, 4
  %v2783 = vadd.f32 %v2781, %v2782
  %v2784 = vrot.slane %v2783, 2
  %v2785 = vadd.f32 %v2783, %v2784
  %v2786 = vrot.slane %v2785, 1
  %v2787 = vadd.f32 %v2785, %v2786
  %v2788 = vsel %vm272, %v2714, 0.0
  %v2789 = vsel %vm272, %v2715, 0.0
  %v2790 = vadd.f32 %v2788, %v2789
  %v2791 = vrot.slane %v2790, 4
  %v2792 = vadd.f32 %v2790, %v2791
  %v2793 = vrot.slane %v2792, 2
  %v2794 = vadd.f32 %v2792, %v2793
  %v2795 = vrot.slane %v2794, 1
  %v2796 = vadd.f32 %v2794, %v2795
  %v2797 = vsel %vm272, %v2716, 0.0
  %v2798 = vsel %vm272, %v2717, 0.0
  %v2799 = vadd.f32 %v2797, %v2798
  %v2800 = vrot.slane %v2799, 4
  %v2801 = vadd.f32 %v2799, %v2800
  %v2802 = vrot.slane %v2801, 2
  %v2803 = vadd.f32 %v2801, %v2802
  %v2804 = vrot.slane %v2803, 1
  %v2805 = vadd.f32 %v2803, %v2804
  %v2806 = vsel %vm272, %v2718, 0.0
  %v2807 = vsel %vm272, %v2719, 0.0
  %v2808 = vadd.f32 %v2806, %v2807
  %v2809 = vrot.slane %v2808, 4
  %v2810 = vadd.f32 %v2808, %v2809
  %v2811 = vrot.slane %v2810, 2
  %v2812 = vadd.f32 %v2810, %v2811
  %v2813 = vrot.slane %v2812, 1
  %v2814 = vadd.f32 %v2812, %v2813
  %v2815 = vsel %vm272, %v2720, 0.0
  %v2816 = vsel %vm272, %v2721, 0.0
  %v2817 = vadd.f32 %v2815, %v2816
  %v2818 = vrot.slane %v2817, 4
  %v2819 = vadd.f32 %v2817, %v2818
  %v2820 = vrot.slane %v2819, 2
  %v2821 = vadd.f32 %v2819, %v2820
  %v2822 = vrot.slane %v2821, 1
  %v2823 = vadd.f32 %v2821, %v2822
  %v2824 = vsel %vm272, %v2722, 0.0
  %v2825 = vsel %vm272, %v2723, 0.0
  %v2826 = vadd.f32 %v2824, %v2825
  %v2827 = vrot.slane %v2826, 4
  %v2828 = vadd.f32 %v2826, %v2827
  %v2829 = vrot.slane %v2828, 2
  %v2830 = vadd.f32 %v2828, %v2829
  %v2831 = vrot.slane %v2830, 1
  %v2832 = vadd.f32 %v2830, %v2831
  %v2833 = vsel %vm272, %v2724, 0.0
  %v2834 = vsel %vm272, %v2725, 0.0
  %v2835 = vadd.f32 %v2833, %v2834
  %v2836 = vrot.slane %v2835, 4
  %v2837 = vadd.f32 %v2835, %v2836
  %v2838 = vrot.slane %v2837, 2
  %v2839 = vadd.f32 %v2837, %v2838
  %v2840 = vrot.slane %v2839, 1
  %v2841 = vadd.f32 %v2839, %v2840
  %v2842 = vsel %vm272, %v2726, 0.0
  %v2843 = vsel %vm272, %v2727, 0.0
  %v2844 = vadd.f32 %v2842, %v2843
  %v2845 = vrot.slane %v2844, 4
  %v2846 = vadd.f32 %v2844, %v2845
  %v2847 = vrot.slane %v2846, 2
  %v2848 = vadd.f32 %v2846, %v2847
  %v2849 = vrot.slane %v2848, 1
  %v2850 = vadd.f32 %v2848, %v2849
  %v2851 = vsel %vm272, %v2728, 0.0
  %v2852 = vsel %vm272, %v2729, 0.0
  %v2853 = vadd.f32 %v2851, %v2852
  %v2854 = vrot.slane %v2853, 4
  %v2855 = vadd.f32 %v2853, %v2854
  %v2856 = vrot.slane %v2855, 2
  %v2857 = vadd.f32 %v2855, %v2856
  %v2858 = vrot.slane %v2857, 1
  %v2859 = vadd.f32 %v2857, %v2858
  %v2860 = vsel %vm272, %v2730, 0.0
  %v2861 = vsel %vm272, %v2731, 0.0
  %v2862 = vadd.f32 %v2860, %v2861
  %v2863 = vrot.slane %v2862, 4
  %v2864 = vadd.f32 %v2862, %v2863
  %v2865 = vrot.slane %v2864, 2
  %v2866 = vadd.f32 %v2864, %v2865
  %v2867 = vrot.slane %v2866, 1
  %v2868 = vadd.f32 %v2866, %v2867
  %v2869 = vsel %vm272, %v2732, 0.0
  %v2870 = vsel %vm272, %v2733, 0.0
  %v2871 = vadd.f32 %v2869, %v2870
  %v2872 = vrot.slane %v2871, 4
  %v2873 = vadd.f32 %v2871, %v2872
  %v2874 = vrot.slane %v2873, 2
  %v2875 = vadd.f32 %v2873, %v2874
  %v2876 = vrot.slane %v2875, 1
  %v2877 = vadd.f32 %v2875, %v2876
  %v2878 = vperm.slane %v1629, 0
  %v2879 = vmul.f32 %v1838, %v2878
  %v2880 = vmul.f32 %v1839, %v2878
  %v2883 = vrot.slane %v2879, 1
  %v2884 = vrot.slane %v2879, 2
  %v2885 = vrot.slane %v2879, 3
  %v2886 = vrot.slane %v2879, 4
  %v2887 = vrot.slane %v2879, 5
  %v2888 = vrot.slane %v2879, 6
  %v2889 = vrot.slane %v2879, 7
  %v2890 = vrot.slane %v2880, 1
  %v2891 = vrot.slane %v2880, 2
  %v2892 = vrot.slane %v2880, 3
  %v2893 = vrot.slane %v2880, 4
  %v2894 = vrot.slane %v2880, 5
  %v2895 = vrot.slane %v2880, 6
  %v2896 = vrot.slane %v2880, 7
  %v2913 = vadd.f32 %v2742, %v2879
  %v2914 = vadd.f32 %v2751, %v2883
  %v2915 = vadd.f32 %v2760, %v2884
  %v2916 = vadd.f32 %v2769, %v2885
  %v2917 = vadd.f32 %v2778, %v2886
  %v2918 = vadd.f32 %v2787, %v2887
  %v2919 = vadd.f32 %v2796, %v2888
  %v2920 = vadd.f32 %v2805, %v2889
  %v2921 = vadd.f32 %v2814, %v2880
  %v2922 = vadd.f32 %v2823, %v2890
  %v2923 = vadd.f32 %v2832, %v2891
  %v2924 = vadd.f32 %v2841, %v2892
  %v2925 = vadd.f32 %v2850, %v2893
  %v2926 = vadd.f32 %v2859, %v2894
  %v2927 = vadd.f32 %v2868, %v2895
  %v2928 = vadd.f32 %v2877, %v2896
  %v2929 = vand.u32 2147483647, %v1752
  %v2930 = vand.u32 2147483647, %v1753
  %v2931 = vsub.f32 0.0, %v2929
  %v2932 = vsub.f32 0.0, %v2930
  %v2933 = vmul.f32 %v2931, 1.442695
  %v2934 = vpow.pop %v2933
  %v2935 = vmul.f32 %v2932, 1.442695
  %v2936 = vpow.pop %v2935
  %vm2937 = vcmp.ge.f32.partialorder %v1752, 0.0
  %vm2938 = vcmp.ge.f32.partialorder %v1753, 0.0
  %v2939 = vadd.f32 %v2934, 1.0
  %v2940 = vadd.f32 %v2936, 1.0
  %v2941 = vrcp.pop %v2939
  %v2942 = vmul.f32 %v2939, %v2941
  %v2943 = vsub.f32 1.0, %v2942
  %v2944 = vmul.f32 %v2941, %v2943
  %v2945 = vadd.f32 %v2941, %v2944
  %vm2946 = vweird.f32 %v2939
  %vm2947 = vweird.f32 %v2941
  %vm2948 = vmor %vm2946, %vm2947
  %v2949 = vsel %vm2948, %v2941, %v2945
  %v2950 = vand.u32 2147483647, %v2939
  %vm2951 = vcmp.eq.f32.partialorder %v2950, 8.507059e+37
  %v2952 = vand.u32 %v2939, 2147483648
  %v2953 = vor.u32 1.1754944e-38, %v2952
  %v2954 = vsel %vm2951, %v2953, %v2949
  %v2955 = vmul.f32 1.0, %v2954
  %v2956 = vrcp.pop %v2940
  %v2957 = vmul.f32 %v2940, %v2956
  %v2958 = vsub.f32 1.0, %v2957
  %v2959 = vmul.f32 %v2956, %v2958
  %v2960 = vadd.f32 %v2956, %v2959
  %vm2961 = vweird.f32 %v2940
  %vm2962 = vweird.f32 %v2956
  %vm2963 = vmor %vm2961, %vm2962
  %v2964 = vsel %vm2963, %v2956, %v2960
  %v2965 = vand.u32 2147483647, %v2940
  %vm2966 = vcmp.eq.f32.partialorder %v2965, 8.507059e+37
  %v2967 = vand.u32 %v2940, 2147483648
  %v2968 = vor.u32 1.1754944e-38, %v2967
  %v2969 = vsel %vm2966, %v2968, %v2964
  %v2970 = vmul.f32 1.0, %v2969
  %v2971 = vmul.f32 %v2934, %v2954
  %v2972 = vmul.f32 %v2936, %v2969
  %v2973 = vsel %vm2937, %v2955, %v2971
  %v2974 = vsel %vm2938, %v2970, %v2972
  %v2975 = vmul.f32 %v1752, %v2973
  %v2976 = vmul.f32 %v1753, %v2974
  %v2979 = vrot.slane %v2975, 1
  %v2980 = vrot.slane %v2975, 2
  %v2981 = vrot.slane %v2975, 3
  %v2982 = vrot.slane %v2975, 4
  %v2983 = vrot.slane %v2975, 5
  %v2984 = vrot.slane %v2975, 6
  %v2985 = vrot.slane %v2975, 7
  %v2986 = vrot.slane %v2976, 1
  %v2987 = vrot.slane %v2976, 2
  %v2988 = vrot.slane %v2976, 3
  %v2989 = vrot.slane %v2976, 4
  %v2990 = vrot.slane %v2976, 5
  %v2991 = vrot.slane %v2976, 6
  %v2992 = vrot.slane %v2976, 7
  %2993 = vrot.lane.b32.xlu0 %v2975, 64
  %v2994 = vpop.permute.xlu0 %2993
  %2995 = vrot.lane.b32.xlu0 %v2979, 64
  %v2996 = vpop.permute.xlu0 %2995
  %2997 = vrot.lane.b32.xlu0 %v2980, 64
  %v2998 = vpop.permute.xlu0 %2997
  %2999 = vrot.lane.b32.xlu0 %v2981, 64
  %v3000 = vpop.permute.xlu0 %2999
  %3001 = vrot.lane.b32.xlu0 %v2982, 64
  %v3002 = vpop.permute.xlu0 %3001
  %3003 = vrot.lane.b32.xlu0 %v2983, 64
  %v3004 = vpop.permute.xlu0 %3003
  %3005 = vrot.lane.b32.xlu0 %v2984, 64
  %v3006 = vpop.permute.xlu0 %3005
  %3007 = vrot.lane.b32.xlu0 %v2985, 64
  %v3008 = vpop.permute.xlu0 %3007
  %3009 = vrot.lane.b32.xlu0 %v2976, 64
  %v3010 = vpop.permute.xlu0 %3009
  %3011 = vrot.lane.b32.xlu0 %v2986, 64
  %v3012 = vpop.permute.xlu0 %3011
  %3013 = vrot.lane.b32.xlu0 %v2987, 64
  %v3014 = vpop.permute.xlu0 %3013
  %3015 = vrot.lane.b32.xlu0 %v2988, 64
  %v3016 = vpop.permute.xlu0 %3015
  %3017 = vrot.lane.b32.xlu0 %v2989, 64
  %v3018 = vpop.permute.xlu0 %3017
  %3019 = vrot.lane.b32.xlu0 %v2990, 64
  %v3020 = vpop.permute.xlu0 %3019
  %3021 = vrot.lane.b32.xlu0 %v2991, 64
  %v3022 = vpop.permute.xlu0 %3021
  %3023 = vrot.lane.b32.xlu0 %v2992, 64
  %v3024 = vpop.permute.xlu0 %3023
  %v3041 = vmul.f32 %v2913, %v2994
  %v3042 = vmul.f32 %v2914, %v2996
  %v3043 = vmul.f32 %v2915, %v2998
  %v3044 = vmul.f32 %v2916, %v3000
  %v3045 = vmul.f32 %v2917, %v3002
  %v3046 = vmul.f32 %v2918, %v3004
  %v3047 = vmul.f32 %v2919, %v3006
  %v3048 = vmul.f32 %v2920, %v3008
  %v3049 = vmul.f32 %v2921, %v3010
  %v3050 = vmul.f32 %v2922, %v3012
  %v3051 = vmul.f32 %v2923, %v3014
  %v3052 = vmul.f32 %v2924, %v3016
  %v3053 = vmul.f32 %v2925, %v3018
  %v3054 = vmul.f32 %v2926, %v3020
  %v3055 = vmul.f32 %v2927, %v3022
  %v3056 = vmul.f32 %v2928, %v3024
  %v3073 = vrot.slane %v3042, 7
  %v3074 = vsel %vm1515, %v3073, %v3041
  %v3075 = vrot.slane %v3043, 6
  %v3076 = vsel %vm1518, %v3075, %v3074
  %v3077 = vrot.slane %v3044, 5
  %v3078 = vsel %vm1521, %v3077, %v3076
  %v3079 = vrot.slane %v3045, 4
  %v3080 = vsel %vm1524, %v3079, %v3078
  %v3081 = vrot.slane %v3046, 3
  %v3082 = vsel %vm1527, %v3081, %v3080
  %v3083 = vrot.slane %v3047, 2
  %v3084 = vsel %vm1530, %v3083, %v3082
  %v3085 = vrot.slane %v3048, 1
  %v3086 = vsel %vm1533, %v3085, %v3084
  %v3087 = vrot.slane %v3050, 7
  %v3088 = vsel %vm1515, %v3087, %v3049
  %v3089 = vrot.slane %v3051, 6
  %v3090 = vsel %vm1518, %v3089, %v3088
  %v3091 = vrot.slane %v3052, 5
  %v3092 = vsel %vm1521, %v3091, %v3090
  %v3093 = vrot.slane %v3053, 4
  %v3094 = vsel %vm1524, %v3093, %v3092
  %v3095 = vrot.slane %v3054, 3
  %v3096 = vsel %vm1527, %v3095, %v3094
  %v3097 = vrot.slane %v3055, 2
  %v3098 = vsel %vm1530, %v3097, %v3096
  %v3099 = vrot.slane %v3056, 1
  %v3100 = vsel %vm1533, %v3099, %v3098
  %v3101 = vsel %vm272, %v3086, 0
  %v3103 = vsel %vm272, %v3100, 0
  %v3106 = vsel %vm272, %v1619, 0
  %v3109 = vsel %vm272, %v1620, 0
  %v3112 = vsel %vm272, %v1621, 0
  %v3115 = vsel %vm272, %v1622, 0
  %3117 = vmatpush.xpose.msra.mxu0 0.0
  %3118 = vmatpush.xpose.msra.mxu0 0.0
  %3119 = vmatpush.xpose.msra.mxu0 0.0
  %3120 = vmatpush.xpose.msra.mxu0 0.0
  %3121 = vmatpush.xpose.msra.mxu0 0.0
  %3122 = vmatpush.xpose.msra.mxu0 0.0
  %3123 = vmatpush.xpose.msra.mxu0 0.0
  %3124 = vmatpush.xpose.msra.mxu0 0.0
  %3125 = vmatpush.xpose.msra.mxu0 0.0
  %3126 = vmatpush.xpose.msra.mxu0 0.0
  %3127 = vmatpush.xpose.msra.mxu0 0.0
  %3128 = vmatpush.xpose.msra.mxu0 0.0
  %3129 = vmatpush.xpose.msra.mxu0 %v3115
  %3130 = vmatpush.xpose.msra.mxu0 %v3112
  %3131 = vmatpush.xpose.msra.mxu0 %v3109
  %3132 = vmatpush.xpose.msra.mxu0 %v3106
  %3133 = vmatmul.f32.gmra.mxu0 %v3101
  %v3134 = vpop.f32.mrf.mxu0
  %v3135 = vadd.f32 0.0, %v3134
  %3136 = vmatmul.f32.gmra.mxu0 %v3103
  %v3137 = vpop.f32.mrf.mxu0
  %v3138 = vadd.f32 0.0, %v3137
  %3139 = vdwg.mxu0
  %v3140 = vadd.f32 %v1591, %v3135
  %v3141 = vadd.f32 %v1592, %v3138
  %v3142 = vperm.slane %v1611, 0
  %v3143 = vadd.f32 %v3140, %v3142
  %v3144 = vadd.f32 %v3141, %v3142
  %3145 = vst.msk [vmem:[%s3] sm:$0xff] %vm53, %v3143
  %3146 = vst.msk [vmem:[%s3 + $0x8] sm:$0xff] %vm53, %v3144
  %s3147 = scalar_lea.vmem %s0, 16
  %v3148 = vld [vmem:[%s3147] sm:$0xff]
  %v3149 = vld [vmem:[%s3147 + $0x8] sm:$0xff]
  %s3150 = scalar_lea.vmem %s2, 288
  %v3151 = vld [vmem:[%s3150] sm:$0xff]
  %v3152 = vld [vmem:[%s3150 + $0x8] sm:$0xff]
  %v3153 = vld [vmem:[%s3150 + $0x10] sm:$0xff]
  %v3154 = vld [vmem:[%s3150 + $0x18] sm:$0xff]
  %v3155 = vld [vmem:[%s3150 + $0x20] sm:$0xff]
  %v3156 = vld [vmem:[%s3150 + $0x28] sm:$0xff]
  %v3157 = vld [vmem:[%s3150 + $0x30] sm:$0xff]
  %v3158 = vld [vmem:[%s3150 + $0x38] sm:$0xff]
  %v3159 = vld [vmem:[%s3150 + $0x40] sm:$0xff]
  %v3160 = vld [vmem:[%s3150 + $0x48] sm:$0xff]
  %v3161 = vld [vmem:[%s3150 + $0x50] sm:$0xff]
  %v3162 = vld [vmem:[%s3150 + $0x58] sm:$0xff]
  %v3163 = vld [vmem:[%s3150 + $0x60] sm:$0xff]
  %v3164 = vld [vmem:[%s3150 + $0x68] sm:$0xff]
  %v3165 = vld [vmem:[%s3150 + $0x70] sm:$0xff]
  %v3166 = vld [vmem:[%s3150 + $0x78] sm:$0xff]
  %v3167 = vld [vmem:[%s3150 + $0x80] sm:$0x1]
  %v3168 = vld [vmem:[%s3150 + $0x88] sm:$0x1]
  %s3169 = scalar_lea.vmem %s1, 272
  %v3170 = vld [vmem:[%s3169] sm:$0xff]
  %v3171 = vld [vmem:[%s3169 + $0x8] sm:$0xff]
  %v3172 = vld [vmem:[%s3169 + $0x10] sm:$0xff]
  %v3173 = vld [vmem:[%s3169 + $0x18] sm:$0xff]
  %v3174 = vld [vmem:[%s3169 + $0x20] sm:$0xff]
  %v3175 = vld [vmem:[%s3169 + $0x28] sm:$0xff]
  %v3176 = vld [vmem:[%s3169 + $0x30] sm:$0xff]
  %v3177 = vld [vmem:[%s3169 + $0x38] sm:$0xff]
  %v3178 = vld [vmem:[%s3169 + $0x40] sm:$0xff]
  %v3179 = vld [vmem:[%s3169 + $0x48] sm:$0xff]
  %v3180 = vld [vmem:[%s3169 + $0x50] sm:$0xff]
  %v3181 = vld [vmem:[%s3169 + $0x58] sm:$0xff]
  %v3182 = vld [vmem:[%s3169 + $0x60] sm:$0xf]
  %v3183 = vld [vmem:[%s3169 + $0x68] sm:$0x1]
  %v3184 = vld [vmem:[%s3169 + $0x70] sm:$0x1]
  %v3185 = vld [vmem:[%s3169 + $0x78] sm:$0x1]
  %v3186 = vld [vmem:[%s3169 + $0x80] sm:$0x1]
  %v3187 = vmul.f32 %v3148, %v3148
  %v3188 = vmul.f32 %v3149, %v3149
  %v3189 = vsel %vm53, %v3187, 0.0
  %3190 = vadd.xlane.f32.xlu0 %v3189
  %v3191 = vpop.xlane.xlu0 %3190
  %v3192 = vsel %vm53, %v3188, 0.0
  %3193 = vadd.xlane.f32.xlu0 %v3192
  %v3194 = vpop.xlane.xlu0 %3193
  %v3195 = vmul.f32 %v3191, %v66
  %v3196 = vmul.f32 %v3194, %v66
  %v3197 = vadd.f32 %v3195, 1e-05
  %v3198 = vadd.f32 %v3196, 1e-05
  %v3199 = vrsqrt.pop %v3197
  %v3200 = vmul.f32 %v3199, %v3197
  %v3201 = vmul.f32 %v3200, %v3199
  %v3202 = vmul.f32 0.5, %v3201
  %v3203 = vsub.f32 1.5, %v3202
  %v3204 = vmul.f32 %v3199, %v3203
  %vm3205 = vweird.f32 %v3197
  %vm3206 = vweird.f32 %v3199
  %vm3207 = vmor %vm3205, %vm3206
  %v3208 = vsel %vm3207, %v3199, %v3204
  %v3209 = vrsqrt.pop %v3198
  %v3210 = vmul.f32 %v3209, %v3198
  %v3211 = vmul.f32 %v3210, %v3209
  %v3212 = vmul.f32 0.5, %v3211
  %v3213 = vsub.f32 1.5, %v3212
  %v3214 = vmul.f32 %v3209, %v3213
  %vm3215 = vweird.f32 %v3198
  %vm3216 = vweird.f32 %v3209
  %vm3217 = vmor %vm3215, %vm3216
  %v3218 = vsel %vm3217, %v3209, %v3214
  %v3219 = vmul.f32 %v3148, %v3208
  %v3220 = vmul.f32 %v3149, %v3218
  %v3221 = vperm.slane %v3167, 0
  %v3222 = vmul.f32 %v3219, %v3221
  %v3223 = vmul.f32 %v3220, %v3221
  %v3225 = vsel %vm53, %v3222, 0
  %v3228 = vsel %vm53, %v3223, 0
  %v3231 = vsel %vm53, %v3151, 0
  %v3234 = vsel %vm53, %v3152, 0
  %v3237 = vsel %vm53, %v3153, 0
  %v3240 = vsel %vm53, %v3154, 0
  %v3243 = vsel %vm53, %v3155, 0
  %v3246 = vsel %vm53, %v3156, 0
  %v3249 = vsel %vm53, %v3157, 0
  %v3252 = vsel %vm53, %v3158, 0
  %v3255 = vsel %vm53, %v3159, 0
  %v3258 = vsel %vm53, %v3160, 0
  %v3261 = vsel %vm53, %v3161, 0
  %v3264 = vsel %vm53, %v3162, 0
  %v3267 = vsel %vm53, %v3163, 0
  %v3270 = vsel %vm53, %v3164, 0
  %v3273 = vsel %vm53, %v3165, 0
  %v3276 = vsel %vm53, %v3166, 0
  %3278 = vmatpush.xpose.msra.mxu0 %v3276
  %3279 = vmatpush.xpose.msra.mxu0 %v3273
  %3280 = vmatpush.xpose.msra.mxu0 %v3270
  %3281 = vmatpush.xpose.msra.mxu0 %v3267
  %3282 = vmatpush.xpose.msra.mxu0 %v3264
  %3283 = vmatpush.xpose.msra.mxu0 %v3261
  %3284 = vmatpush.xpose.msra.mxu0 %v3258
  %3285 = vmatpush.xpose.msra.mxu0 %v3255
  %3286 = vmatpush.xpose.msra.mxu0 %v3252
  %3287 = vmatpush.xpose.msra.mxu0 %v3249
  %3288 = vmatpush.xpose.msra.mxu0 %v3246
  %3289 = vmatpush.xpose.msra.mxu0 %v3243
  %3290 = vmatpush.xpose.msra.mxu0 %v3240
  %3291 = vmatpush.xpose.msra.mxu0 %v3237
  %3292 = vmatpush.xpose.msra.mxu0 %v3234
  %3293 = vmatpush.xpose.msra.mxu0 %v3231
  %3294 = vmatmul.f32.gmra.mxu0 %v3225
  %v3295 = vpop.f32.mrf.mxu0
  %v3296 = vadd.f32 0.0, %v3295
  %3297 = vmatmul.f32.gmra.mxu0 %v3228
  %v3298 = vpop.f32.mrf.mxu0
  %v3299 = vadd.f32 0.0, %v3298
  %3300 = vdwg.mxu0
  %v3301 = vperm.slane %v3183, 0
  %v3302 = vadd.f32 %v3296, %v3301
  %v3303 = vadd.f32 %v3299, %v3301
  %v3304 = vperm.slane %v3184, 0
  %3306 = vrot.lane.b32.xlu0 %v3304, 64
  %v3307 = vpop.permute.xlu0 %3306
  %v3309 = vadd.f32 %v3296, %v3307
  %v3310 = vadd.f32 %v3299, %v3307
  %v3311 = vperm.slane %v3182, 3
  %v3312 = vmul.f32 %v3302, %v3311
  %v3313 = vmul.f32 %v3303, %v3311
  %v3316 = vrot.slane %v3302, 5
  %v3317 = vrot.slane %v3303, 5
  %v3320 = vsel %vm192, 0.0, %v3316
  %v3321 = vsel %vm192, 0.0, %v3317
  %v3322 = vperm.slane %v3182, 0
  %v3323 = vmul.f32 %v3320, %v3322
  %v3324 = vmul.f32 %v3321, %v3322
  %v3325 = vadd.f32 %v3312, %v3323
  %v3326 = vadd.f32 %v3313, %v3324
  %v3327 = vrot.slane %v3302, 6
  %v3328 = vrot.slane %v3303, 6
  %v3331 = vsel %vm204, 0.0, %v3327
  %v3332 = vsel %vm204, 0.0, %v3328
  %v3333 = vperm.slane %v3182, 1
  %v3334 = vmul.f32 %v3331, %v3333
  %v3335 = vmul.f32 %v3332, %v3333
  %v3336 = vadd.f32 %v3325, %v3334
  %v3337 = vadd.f32 %v3326, %v3335
  %v3338 = vrot.slane %v3302, 7
  %v3339 = vrot.slane %v3303, 7
  %v3342 = vsel %vm216, 0.0, %v3338
  %v3343 = vsel %vm216, 0.0, %v3339
  %v3344 = vperm.slane %v3182, 2
  %v3345 = vmul.f32 %v3342, %v3344
  %v3346 = vmul.f32 %v3343, %v3344
  %v3347 = vadd.f32 %v3336, %v3345
  %v3348 = vadd.f32 %v3337, %v3346
  %v3349 = vand.u32 2147483647, %v3347
  %v3350 = vand.u32 2147483647, %v3348
  %v3351 = vsub.f32 0.0, %v3349
  %v3352 = vsub.f32 0.0, %v3350
  %v3353 = vmul.f32 %v3351, 1.442695
  %v3354 = vpow.pop %v3353
  %v3355 = vmul.f32 %v3352, 1.442695
  %v3356 = vpow.pop %v3355
  %vm3357 = vcmp.ge.f32.partialorder %v3347, 0.0
  %vm3358 = vcmp.ge.f32.partialorder %v3348, 0.0
  %v3359 = vadd.f32 %v3354, 1.0
  %v3360 = vadd.f32 %v3356, 1.0
  %v3361 = vrcp.pop %v3359
  %v3362 = vmul.f32 %v3359, %v3361
  %v3363 = vsub.f32 1.0, %v3362
  %v3364 = vmul.f32 %v3361, %v3363
  %v3365 = vadd.f32 %v3361, %v3364
  %vm3366 = vweird.f32 %v3359
  %vm3367 = vweird.f32 %v3361
  %vm3368 = vmor %vm3366, %vm3367
  %v3369 = vsel %vm3368, %v3361, %v3365
  %v3370 = vand.u32 2147483647, %v3359
  %vm3371 = vcmp.eq.f32.partialorder %v3370, 8.507059e+37
  %v3372 = vand.u32 %v3359, 2147483648
  %v3373 = vor.u32 1.1754944e-38, %v3372
  %v3374 = vsel %vm3371, %v3373, %v3369
  %v3375 = vmul.f32 1.0, %v3374
  %v3376 = vrcp.pop %v3360
  %v3377 = vmul.f32 %v3360, %v3376
  %v3378 = vsub.f32 1.0, %v3377
  %v3379 = vmul.f32 %v3376, %v3378
  %v3380 = vadd.f32 %v3376, %v3379
  %vm3381 = vweird.f32 %v3360
  %vm3382 = vweird.f32 %v3376
  %vm3383 = vmor %vm3381, %vm3382
  %v3384 = vsel %vm3383, %v3376, %v3380
  %v3385 = vand.u32 2147483647, %v3360
  %vm3386 = vcmp.eq.f32.partialorder %v3385, 8.507059e+37
  %v3387 = vand.u32 %v3360, 2147483648
  %v3388 = vor.u32 1.1754944e-38, %v3387
  %v3389 = vsel %vm3386, %v3388, %v3384
  %v3390 = vmul.f32 1.0, %v3389
  %v3391 = vmul.f32 %v3354, %v3374
  %v3392 = vmul.f32 %v3356, %v3389
  %v3393 = vsel %vm3357, %v3375, %v3391
  %v3394 = vsel %vm3358, %v3390, %v3392
  %v3395 = vmul.f32 %v3347, %v3393
  %v3396 = vmul.f32 %v3348, %v3394
  %v3398 = vsel %vm272, %v3395, 0
  %v3401 = vsel %vm272, %v3396, 0
  %v3404 = vsel %vm272, %v3170, 0
  %3406 = vmatpush.xpose.msra.mxu0 0.0
  %3407 = vmatpush.xpose.msra.mxu0 0.0
  %3408 = vmatpush.xpose.msra.mxu0 0.0
  %3409 = vmatpush.xpose.msra.mxu0 0.0
  %3410 = vmatpush.xpose.msra.mxu0 0.0
  %3411 = vmatpush.xpose.msra.mxu0 0.0
  %3412 = vmatpush.xpose.msra.mxu0 0.0
  %3413 = vmatpush.xpose.msra.mxu0 0.0
  %3414 = vmatpush.xpose.msra.mxu0 0.0
  %3415 = vmatpush.xpose.msra.mxu0 0.0
  %3416 = vmatpush.xpose.msra.mxu0 0.0
  %3417 = vmatpush.xpose.msra.mxu0 0.0
  %3418 = vmatpush.xpose.msra.mxu0 0.0
  %3419 = vmatpush.xpose.msra.mxu0 0.0
  %3420 = vmatpush.xpose.msra.mxu0 0.0
  %3421 = vmatpush.xpose.msra.mxu0 %v3404
  %3422 = vmatmul.f32.gmra.mxu0 %v3398
  %v3423 = vpop.f32.mrf.mxu0
  %v3424 = vadd.f32 0.0, %v3423
  %3425 = vmatmul.f32.gmra.mxu0 %v3401
  %v3426 = vpop.f32.mrf.mxu0
  %v3427 = vadd.f32 0.0, %v3426
  %3428 = vdwg.mxu0
  %v3430 = vsel %vm272, %v3171, 0
  %v3433 = vsel %vm272, %v3172, 0
  %3435 = vmatpush.xpose.msra.mxu0 0.0
  %3436 = vmatpush.xpose.msra.mxu0 0.0
  %3437 = vmatpush.xpose.msra.mxu0 0.0
  %3438 = vmatpush.xpose.msra.mxu0 0.0
  %3439 = vmatpush.xpose.msra.mxu0 0.0
  %3440 = vmatpush.xpose.msra.mxu0 0.0
  %3441 = vmatpush.xpose.msra.mxu0 0.0
  %3442 = vmatpush.xpose.msra.mxu0 0.0
  %3443 = vmatpush.xpose.msra.mxu0 0.0
  %3444 = vmatpush.xpose.msra.mxu0 0.0
  %3445 = vmatpush.xpose.msra.mxu0 0.0
  %3446 = vmatpush.xpose.msra.mxu0 0.0
  %3447 = vmatpush.xpose.msra.mxu0 0.0
  %3448 = vmatpush.xpose.msra.mxu0 0.0
  %3449 = vmatpush.xpose.msra.mxu0 %v3433
  %3450 = vmatpush.xpose.msra.mxu0 %v3430
  %3451 = vmatmul.f32.gmra.mxu0 %v3398
  %v3452 = vpop.f32.mrf.mxu0
  %v3453 = vadd.f32 0.0, %v3452
  %3454 = vmatmul.f32.gmra.mxu0 %v3401
  %v3455 = vpop.f32.mrf.mxu0
  %v3456 = vadd.f32 0.0, %v3455
  %3457 = vdwg.mxu0
  %v3459 = vsel %vm272, %v3173, 0
  %v3462 = vsel %vm272, %v3174, 0
  %3464 = vmatpush.xpose.msra.mxu0 0.0
  %3465 = vmatpush.xpose.msra.mxu0 0.0
  %3466 = vmatpush.xpose.msra.mxu0 0.0
  %3467 = vmatpush.xpose.msra.mxu0 0.0
  %3468 = vmatpush.xpose.msra.mxu0 0.0
  %3469 = vmatpush.xpose.msra.mxu0 0.0
  %3470 = vmatpush.xpose.msra.mxu0 0.0
  %3471 = vmatpush.xpose.msra.mxu0 0.0
  %3472 = vmatpush.xpose.msra.mxu0 0.0
  %3473 = vmatpush.xpose.msra.mxu0 0.0
  %3474 = vmatpush.xpose.msra.mxu0 0.0
  %3475 = vmatpush.xpose.msra.mxu0 0.0
  %3476 = vmatpush.xpose.msra.mxu0 0.0
  %3477 = vmatpush.xpose.msra.mxu0 0.0
  %3478 = vmatpush.xpose.msra.mxu0 %v3462
  %3479 = vmatpush.xpose.msra.mxu0 %v3459
  %3480 = vmatmul.f32.gmra.mxu0 %v3398
  %v3481 = vpop.f32.mrf.mxu0
  %v3482 = vadd.f32 0.0, %v3481
  %3483 = vmatmul.f32.gmra.mxu0 %v3401
  %v3484 = vpop.f32.mrf.mxu0
  %v3485 = vadd.f32 0.0, %v3484
  %3486 = vdwg.mxu0
  %v3487 = vperm.slane %v3185, 0
  %v3489 = vsel %vm364, %v3424, 0
  %v3492 = vsel %vm364, %v3427, 0
  %3494 = vmatpush.msra.mxu0 0.0
  %3495 = vmatpush.msra.mxu0 0.0
  %3496 = vmatpush.msra.mxu0 0.0
  %3497 = vmatpush.msra.mxu0 0.0
  %3498 = vmatpush.msra.mxu0 0.0
  %3499 = vmatpush.msra.mxu0 0.0
  %3500 = vmatpush.msra.mxu0 0.0
  %3501 = vmatpush.msra.mxu0 0.0
  %3502 = vmatpush.msra.mxu0 0.0
  %3503 = vmatpush.msra.mxu0 0.0
  %3504 = vmatpush.msra.mxu0 0.0
  %3505 = vmatpush.msra.mxu0 0.0
  %3506 = vmatpush.msra.mxu0 0.0
  %3507 = vmatpush.msra.mxu0 0.0
  %3508 = vmatpush.msra.mxu0 0.0
  %3509 = vmatpush.msra.mxu0 %v3175
  %3510 = vmatmul.f32.gmra.mxu0 %v3489
  %v3511 = vpop.f32.mrf.mxu0
  %v3512 = vadd.f32 %v3487, %v3511
  %3513 = vmatmul.f32.gmra.mxu0 %v3492
  %v3514 = vpop.f32.mrf.mxu0
  %v3515 = vadd.f32 %v3487, %v3514
  %3516 = vdwg.mxu0
  %v3517 = vmax.f32 %v3512, 0.0
  %v3518 = vmax.f32 %v3515, 0.0
  %v3519 = vand.u32 2147483647, %v3512
  %v3520 = vand.u32 2147483647, %v3515
  %v3521 = vsub.f32 0.0, %v3519
  %v3522 = vsub.f32 0.0, %v3520
  %v3523 = vmul.f32 %v3521, 1.442695
  %v3524 = vpow.pop %v3523
  %v3525 = vmul.f32 %v3522, 1.442695
  %v3526 = vpow.pop %v3525
  %v3527 = vadd.f32 %v3524, 1.0
  %v3528 = vlog2.pop %v3527
  %v3529 = vmul.f32 %v3528, 0.6931472
  %v3530 = vmul.f32 -0.5, %v3524
  %v3531 = vadd.f32 %v3530, 1.0
  %v3532 = vmul.f32 %v3531, %v3524
  %v3533 = vand.u32 2147483647, %v3524
  %vm3534 = vcmp.lt.f32.partialorder %v3533, 0.0004427343
  %v3535 = vsel %vm3534, %v3532, %v3529
  %v3536 = vadd.f32 %v3526, 1.0
  %v3537 = vlog2.pop %v3536
  %v3538 = vmul.f32 %v3537, 0.6931472
  %v3539 = vmul.f32 -0.5, %v3526
  %v3540 = vadd.f32 %v3539, 1.0
  %v3541 = vmul.f32 %v3540, %v3526
  %v3542 = vand.u32 2147483647, %v3526
  %vm3543 = vcmp.lt.f32.partialorder %v3542, 0.0004427343
  %v3544 = vsel %vm3543, %v3541, %v3538
  %v3545 = vadd.f32 %v3517, %v3535
  %v3546 = vadd.f32 %v3518, %v3544
  %v3547 = vmul.f32 %v3180, 1.442695
  %v3548 = vpow.pop %v3547
  %v3549 = vmul.f32 %v3181, 1.442695
  %v3550 = vpow.pop %v3549
  %v3551 = vsub.f32 0.0, %v3548
  %v3552 = vsub.f32 0.0, %v3550
  %v3553 = vmul.f32 %v3545, %v3395
  %v3554 = vmul.f32 %v3546, %v3396
  %v3555 = vperm.slane %v3545, 0
  %v3556 = vperm.slane %v3546, 0
  %v3557 = vmul.f32 %v3555, %v3551
  %v3558 = vmul.f32 %v3555, %v3552
  %v3559 = vmul.f32 %v3556, %v3551
  %v3560 = vmul.f32 %v3556, %v3552
  %v3561 = vmul.f32 %v3557, 1.442695
  %v3562 = vpow.pop %v3561
  %v3563 = vmul.f32 %v3558, 1.442695
  %v3564 = vpow.pop %v3563
  %v3565 = vmul.f32 %v3559, 1.442695
  %v3566 = vpow.pop %v3565
  %v3567 = vmul.f32 %v3560, 1.442695
  %v3568 = vpow.pop %v3567
  %v3569 = vperm.slane %v3453, 0
  %v3570 = vlaneseq
  %v3571 = vshrl.u32 %v3570, 7
  %3573 = vset.pattern.permute.xlu0 %v3571
  %3574 = vperm.xlu0 %3573, %v3569
  %v3575 = vpop.permute.xlu0 %3574
  %v3576 = vlaneseq
  %v3577 = vshrl.u32 %v3576, 7
  %v3578 = vadd.s32 %v3577, 8
  %3579 = vset.pattern.permute.xlu0 %v3578
  %3580 = vperm.xlu0 %3579, %v3569
  %v3581 = vpop.permute.xlu0 %3580
  %v3582 = vperm.slane %v3456, 0
  %v3583 = vlaneseq
  %v3584 = vshrl.u32 %v3583, 7
  %3586 = vset.pattern.permute.xlu0 %v3584
  %3587 = vperm.xlu0 %3586, %v3582
  %v3588 = vpop.permute.xlu0 %3587
  %v3589 = vlaneseq
  %v3590 = vshrl.u32 %v3589, 7
  %v3591 = vadd.s32 %v3590, 8
  %3592 = vset.pattern.permute.xlu0 %v3591
  %3593 = vperm.xlu0 %3592, %v3582
  %v3594 = vpop.permute.xlu0 %3593
  %v3595 = vperm.slane %v3553, 0
  %v3596 = vperm.slane %v3554, 0
  %v3597 = vmul.f32 %v3595, %v3575
  %v3598 = vmul.f32 %v3595, %v3581
  %v3599 = vmul.f32 %v3596, %v3588
  %v3600 = vmul.f32 %v3596, %v3594
  %v3601 = vmul.f32 %v3562, 0.0
  %v3602 = vmul.f32 %v3564, 0.0
  %v3603 = vmul.f32 %v3566, 0.0
  %v3604 = vmul.f32 %v3568, 0.0
  %v3605 = vadd.f32 %v3601, %v3597
  %v3606 = vadd.f32 %v3602, %v3598
  %v3607 = vadd.f32 %v3603, %v3599
  %v3608 = vadd.f32 %v3604, %v3600
  %s3609 = scalar_lea.vmem [#allocation2], 256
  %3610 = vst.msk [vmem:[%s3609] sm:$0xff] %vm272, %v3605
  %3611 = vst.msk [vmem:[%s3609 + $0x8] sm:$0xff] %vm272, %v3606
  %3612 = vst.msk [vmem:[%s3609 + $0x80] sm:$0xff] %vm272, %v3607
  %3613 = vst.msk [vmem:[%s3609 + $0x88] sm:$0xff] %vm272, %v3608
  %v3614 = vperm.slane %v3545, 1
  %v3615 = vperm.slane %v3546, 1
  %v3616 = vmul.f32 %v3614, %v3551
  %v3617 = vmul.f32 %v3614, %v3552
  %v3618 = vmul.f32 %v3615, %v3551
  %v3619 = vmul.f32 %v3615, %v3552
  %v3620 = vmul.f32 %v3616, 1.442695
  %v3621 = vpow.pop %v3620
  %v3622 = vmul.f32 %v3617, 1.442695
  %v3623 = vpow.pop %v3622
  %v3624 = vmul.f32 %v3618, 1.442695
  %v3625 = vpow.pop %v3624
  %v3626 = vmul.f32 %v3619, 1.442695
  %v3627 = vpow.pop %v3626
  %v3628 = vperm.slane %v3453, 1
  %v3629 = vlaneseq
  %v3630 = vshrl.u32 %v3629, 7
  %3632 = vset.pattern.permute.xlu0 %v3630
  %3633 = vperm.xlu0 %3632, %v3628
  %v3634 = vpop.permute.xlu0 %3633
  %v3635 = vlaneseq
  %v3636 = vshrl.u32 %v3635, 7
  %v3637 = vadd.s32 %v3636, 8
  %3638 = vset.pattern.permute.xlu0 %v3637
  %3639 = vperm.xlu0 %3638, %v3628
  %v3640 = vpop.permute.xlu0 %3639
  %v3641 = vperm.slane %v3456, 1
  %v3642 = vlaneseq
  %v3643 = vshrl.u32 %v3642, 7
  %3645 = vset.pattern.permute.xlu0 %v3643
  %3646 = vperm.xlu0 %3645, %v3641
  %v3647 = vpop.permute.xlu0 %3646
  %v3648 = vlaneseq
  %v3649 = vshrl.u32 %v3648, 7
  %v3650 = vadd.s32 %v3649, 8
  %3651 = vset.pattern.permute.xlu0 %v3650
  %3652 = vperm.xlu0 %3651, %v3641
  %v3653 = vpop.permute.xlu0 %3652
  %v3654 = vperm.slane %v3553, 1
  %v3655 = vperm.slane %v3554, 1
  %v3656 = vmul.f32 %v3654, %v3634
  %v3657 = vmul.f32 %v3654, %v3640
  %v3658 = vmul.f32 %v3655, %v3647
  %v3659 = vmul.f32 %v3655, %v3653
  %v3660 = vmul.f32 %v3605, %v3621
  %v3661 = vmul.f32 %v3606, %v3623
  %v3662 = vmul.f32 %v3607, %v3625
  %v3663 = vmul.f32 %v3608, %v3627
  %v3664 = vadd.f32 %v3660, %v3656
  %v3665 = vadd.f32 %v3661, %v3657
  %v3666 = vadd.f32 %v3662, %v3658
  %v3667 = vadd.f32 %v3663, %v3659
  %s3668 = scalar_lea.vmem [#allocation2], 272
  %3669 = vst.msk [vmem:[%s3668] sm:$0xff] %vm272, %v3664
  %3670 = vst.msk [vmem:[%s3668 + $0x8] sm:$0xff] %vm272, %v3665
  %3671 = vst.msk [vmem:[%s3668 + $0x80] sm:$0xff] %vm272, %v3666
  %3672 = vst.msk [vmem:[%s3668 + $0x88] sm:$0xff] %vm272, %v3667
  %v3673 = vperm.slane %v3545, 2
  %v3674 = vperm.slane %v3546, 2
  %v3675 = vmul.f32 %v3673, %v3551
  %v3676 = vmul.f32 %v3673, %v3552
  %v3677 = vmul.f32 %v3674, %v3551
  %v3678 = vmul.f32 %v3674, %v3552
  %v3679 = vmul.f32 %v3675, 1.442695
  %v3680 = vpow.pop %v3679
  %v3681 = vmul.f32 %v3676, 1.442695
  %v3682 = vpow.pop %v3681
  %v3683 = vmul.f32 %v3677, 1.442695
  %v3684 = vpow.pop %v3683
  %v3685 = vmul.f32 %v3678, 1.442695
  %v3686 = vpow.pop %v3685
  %v3687 = vperm.slane %v3453, 2
  %v3688 = vlaneseq
  %v3689 = vshrl.u32 %v3688, 7
  %3691 = vset.pattern.permute.xlu0 %v3689
  %3692 = vperm.xlu0 %3691, %v3687
  %v3693 = vpop.permute.xlu0 %3692
  %v3694 = vlaneseq
  %v3695 = vshrl.u32 %v3694, 7
  %v3696 = vadd.s32 %v3695, 8
  %3697 = vset.pattern.permute.xlu0 %v3696
  %3698 = vperm.xlu0 %3697, %v3687
  %v3699 = vpop.permute.xlu0 %3698
  %v3700 = vperm.slane %v3456, 2
  %v3701 = vlaneseq
  %v3702 = vshrl.u32 %v3701, 7
  %3704 = vset.pattern.permute.xlu0 %v3702
  %3705 = vperm.xlu0 %3704, %v3700
  %v3706 = vpop.permute.xlu0 %3705
  %v3707 = vlaneseq
  %v3708 = vshrl.u32 %v3707, 7
  %v3709 = vadd.s32 %v3708, 8
  %3710 = vset.pattern.permute.xlu0 %v3709
  %3711 = vperm.xlu0 %3710, %v3700
  %v3712 = vpop.permute.xlu0 %3711
  %v3713 = vperm.slane %v3553, 2
  %v3714 = vperm.slane %v3554, 2
  %v3715 = vmul.f32 %v3713, %v3693
  %v3716 = vmul.f32 %v3713, %v3699
  %v3717 = vmul.f32 %v3714, %v3706
  %v3718 = vmul.f32 %v3714, %v3712
  %v3719 = vmul.f32 %v3664, %v3680
  %v3720 = vmul.f32 %v3665, %v3682
  %v3721 = vmul.f32 %v3666, %v3684
  %v3722 = vmul.f32 %v3667, %v3686
  %v3723 = vadd.f32 %v3719, %v3715
  %v3724 = vadd.f32 %v3720, %v3716
  %v3725 = vadd.f32 %v3721, %v3717
  %v3726 = vadd.f32 %v3722, %v3718
  %s3727 = scalar_lea.vmem [#allocation2], 288
  %3728 = vst.msk [vmem:[%s3727] sm:$0xff] %vm272, %v3723
  %3729 = vst.msk [vmem:[%s3727 + $0x8] sm:$0xff] %vm272, %v3724
  %3730 = vst.msk [vmem:[%s3727 + $0x80] sm:$0xff] %vm272, %v3725
  %3731 = vst.msk [vmem:[%s3727 + $0x88] sm:$0xff] %vm272, %v3726
  %v3732 = vperm.slane %v3545, 3
  %v3733 = vperm.slane %v3546, 3
  %v3734 = vmul.f32 %v3732, %v3551
  %v3735 = vmul.f32 %v3732, %v3552
  %v3736 = vmul.f32 %v3733, %v3551
  %v3737 = vmul.f32 %v3733, %v3552
  %v3738 = vmul.f32 %v3734, 1.442695
  %v3739 = vpow.pop %v3738
  %v3740 = vmul.f32 %v3735, 1.442695
  %v3741 = vpow.pop %v3740
  %v3742 = vmul.f32 %v3736, 1.442695
  %v3743 = vpow.pop %v3742
  %v3744 = vmul.f32 %v3737, 1.442695
  %v3745 = vpow.pop %v3744
  %v3746 = vperm.slane %v3453, 3
  %v3747 = vlaneseq
  %v3748 = vshrl.u32 %v3747, 7
  %3750 = vset.pattern.permute.xlu0 %v3748
  %3751 = vperm.xlu0 %3750, %v3746
  %v3752 = vpop.permute.xlu0 %3751
  %v3753 = vlaneseq
  %v3754 = vshrl.u32 %v3753, 7
  %v3755 = vadd.s32 %v3754, 8
  %3756 = vset.pattern.permute.xlu0 %v3755
  %3757 = vperm.xlu0 %3756, %v3746
  %v3758 = vpop.permute.xlu0 %3757
  %v3759 = vperm.slane %v3456, 3
  %v3760 = vlaneseq
  %v3761 = vshrl.u32 %v3760, 7
  %3763 = vset.pattern.permute.xlu0 %v3761
  %3764 = vperm.xlu0 %3763, %v3759
  %v3765 = vpop.permute.xlu0 %3764
  %v3766 = vlaneseq
  %v3767 = vshrl.u32 %v3766, 7
  %v3768 = vadd.s32 %v3767, 8
  %3769 = vset.pattern.permute.xlu0 %v3768
  %3770 = vperm.xlu0 %3769, %v3759
  %v3771 = vpop.permute.xlu0 %3770
  %v3772 = vperm.slane %v3553, 3
  %v3773 = vperm.slane %v3554, 3
  %v3774 = vmul.f32 %v3772, %v3752
  %v3775 = vmul.f32 %v3772, %v3758
  %v3776 = vmul.f32 %v3773, %v3765
  %v3777 = vmul.f32 %v3773, %v3771
  %v3778 = vmul.f32 %v3723, %v3739
  %v3779 = vmul.f32 %v3724, %v3741
  %v3780 = vmul.f32 %v3725, %v3743
  %v3781 = vmul.f32 %v3726, %v3745
  %v3782 = vadd.f32 %v3778, %v3774
  %v3783 = vadd.f32 %v3779, %v3775
  %v3784 = vadd.f32 %v3780, %v3776
  %v3785 = vadd.f32 %v3781, %v3777
  %s3786 = scalar_lea.vmem [#allocation2], 304
  %3787 = vst.msk [vmem:[%s3786] sm:$0xff] %vm272, %v3782
  %3788 = vst.msk [vmem:[%s3786 + $0x8] sm:$0xff] %vm272, %v3783
  %3789 = vst.msk [vmem:[%s3786 + $0x80] sm:$0xff] %vm272, %v3784
  %3790 = vst.msk [vmem:[%s3786 + $0x88] sm:$0xff] %vm272, %v3785
  %v3791 = vperm.slane %v3545, 4
  %v3792 = vperm.slane %v3546, 4
  %v3793 = vmul.f32 %v3791, %v3551
  %v3794 = vmul.f32 %v3791, %v3552
  %v3795 = vmul.f32 %v3792, %v3551
  %v3796 = vmul.f32 %v3792, %v3552
  %v3797 = vmul.f32 %v3793, 1.442695
  %v3798 = vpow.pop %v3797
  %v3799 = vmul.f32 %v3794, 1.442695
  %v3800 = vpow.pop %v3799
  %v3801 = vmul.f32 %v3795, 1.442695
  %v3802 = vpow.pop %v3801
  %v3803 = vmul.f32 %v3796, 1.442695
  %v3804 = vpow.pop %v3803
  %v3805 = vperm.slane %v3453, 4
  %v3806 = vlaneseq
  %v3807 = vshrl.u32 %v3806, 7
  %3809 = vset.pattern.permute.xlu0 %v3807
  %3810 = vperm.xlu0 %3809, %v3805
  %v3811 = vpop.permute.xlu0 %3810
  %v3812 = vlaneseq
  %v3813 = vshrl.u32 %v3812, 7
  %v3814 = vadd.s32 %v3813, 8
  %3815 = vset.pattern.permute.xlu0 %v3814
  %3816 = vperm.xlu0 %3815, %v3805
  %v3817 = vpop.permute.xlu0 %3816
  %v3818 = vperm.slane %v3456, 4
  %v3819 = vlaneseq
  %v3820 = vshrl.u32 %v3819, 7
  %3822 = vset.pattern.permute.xlu0 %v3820
  %3823 = vperm.xlu0 %3822, %v3818
  %v3824 = vpop.permute.xlu0 %3823
  %v3825 = vlaneseq
  %v3826 = vshrl.u32 %v3825, 7
  %v3827 = vadd.s32 %v3826, 8
  %3828 = vset.pattern.permute.xlu0 %v3827
  %3829 = vperm.xlu0 %3828, %v3818
  %v3830 = vpop.permute.xlu0 %3829
  %v3831 = vperm.slane %v3553, 4
  %v3832 = vperm.slane %v3554, 4
  %v3833 = vmul.f32 %v3831, %v3811
  %v3834 = vmul.f32 %v3831, %v3817
  %v3835 = vmul.f32 %v3832, %v3824
  %v3836 = vmul.f32 %v3832, %v3830
  %v3837 = vmul.f32 %v3782, %v3798
  %v3838 = vmul.f32 %v3783, %v3800
  %v3839 = vmul.f32 %v3784, %v3802
  %v3840 = vmul.f32 %v3785, %v3804
  %v3841 = vadd.f32 %v3837, %v3833
  %v3842 = vadd.f32 %v3838, %v3834
  %v3843 = vadd.f32 %v3839, %v3835
  %v3844 = vadd.f32 %v3840, %v3836
  %s3845 = scalar_lea.vmem [#allocation2], 320
  %3846 = vst.msk [vmem:[%s3845] sm:$0xff] %vm272, %v3841
  %3847 = vst.msk [vmem:[%s3845 + $0x8] sm:$0xff] %vm272, %v3842
  %3848 = vst.msk [vmem:[%s3845 + $0x80] sm:$0xff] %vm272, %v3843
  %3849 = vst.msk [vmem:[%s3845 + $0x88] sm:$0xff] %vm272, %v3844
  %v3850 = vperm.slane %v3545, 5
  %v3851 = vperm.slane %v3546, 5
  %v3852 = vmul.f32 %v3850, %v3551
  %v3853 = vmul.f32 %v3850, %v3552
  %v3854 = vmul.f32 %v3851, %v3551
  %v3855 = vmul.f32 %v3851, %v3552
  %v3856 = vmul.f32 %v3852, 1.442695
  %v3857 = vpow.pop %v3856
  %v3858 = vmul.f32 %v3853, 1.442695
  %v3859 = vpow.pop %v3858
  %v3860 = vmul.f32 %v3854, 1.442695
  %v3861 = vpow.pop %v3860
  %v3862 = vmul.f32 %v3855, 1.442695
  %v3863 = vpow.pop %v3862
  %v3864 = vperm.slane %v3453, 5
  %v3865 = vlaneseq
  %v3866 = vshrl.u32 %v3865, 7
  %3868 = vset.pattern.permute.xlu0 %v3866
  %3869 = vperm.xlu0 %3868, %v3864
  %v3870 = vpop.permute.xlu0 %3869
  %v3871 = vlaneseq
  %v3872 = vshrl.u32 %v3871, 7
  %v3873 = vadd.s32 %v3872, 8
  %3874 = vset.pattern.permute.xlu0 %v3873
  %3875 = vperm.xlu0 %3874, %v3864
  %v3876 = vpop.permute.xlu0 %3875
  %v3877 = vperm.slane %v3456, 5
  %v3878 = vlaneseq
  %v3879 = vshrl.u32 %v3878, 7
  %3881 = vset.pattern.permute.xlu0 %v3879
  %3882 = vperm.xlu0 %3881, %v3877
  %v3883 = vpop.permute.xlu0 %3882
  %v3884 = vlaneseq
  %v3885 = vshrl.u32 %v3884, 7
  %v3886 = vadd.s32 %v3885, 8
  %3887 = vset.pattern.permute.xlu0 %v3886
  %3888 = vperm.xlu0 %3887, %v3877
  %v3889 = vpop.permute.xlu0 %3888
  %v3890 = vperm.slane %v3553, 5
  %v3891 = vperm.slane %v3554, 5
  %v3892 = vmul.f32 %v3890, %v3870
  %v3893 = vmul.f32 %v3890, %v3876
  %v3894 = vmul.f32 %v3891, %v3883
  %v3895 = vmul.f32 %v3891, %v3889
  %v3896 = vmul.f32 %v3841, %v3857
  %v3897 = vmul.f32 %v3842, %v3859
  %v3898 = vmul.f32 %v3843, %v3861
  %v3899 = vmul.f32 %v3844, %v3863
  %v3900 = vadd.f32 %v3896, %v3892
  %v3901 = vadd.f32 %v3897, %v3893
  %v3902 = vadd.f32 %v3898, %v3894
  %v3903 = vadd.f32 %v3899, %v3895
  %s3904 = scalar_lea.vmem [#allocation2], 336
  %3905 = vst.msk [vmem:[%s3904] sm:$0xff] %vm272, %v3900
  %3906 = vst.msk [vmem:[%s3904 + $0x8] sm:$0xff] %vm272, %v3901
  %3907 = vst.msk [vmem:[%s3904 + $0x80] sm:$0xff] %vm272, %v3902
  %3908 = vst.msk [vmem:[%s3904 + $0x88] sm:$0xff] %vm272, %v3903
  %v3909 = vperm.slane %v3545, 6
  %v3910 = vperm.slane %v3546, 6
  %v3911 = vmul.f32 %v3909, %v3551
  %v3912 = vmul.f32 %v3909, %v3552
  %v3913 = vmul.f32 %v3910, %v3551
  %v3914 = vmul.f32 %v3910, %v3552
  %v3915 = vmul.f32 %v3911, 1.442695
  %v3916 = vpow.pop %v3915
  %v3917 = vmul.f32 %v3912, 1.442695
  %v3918 = vpow.pop %v3917
  %v3919 = vmul.f32 %v3913, 1.442695
  %v3920 = vpow.pop %v3919
  %v3921 = vmul.f32 %v3914, 1.442695
  %v3922 = vpow.pop %v3921
  %v3923 = vperm.slane %v3453, 6
  %v3924 = vlaneseq
  %v3925 = vshrl.u32 %v3924, 7
  %3927 = vset.pattern.permute.xlu0 %v3925
  %3928 = vperm.xlu0 %3927, %v3923
  %v3929 = vpop.permute.xlu0 %3928
  %v3930 = vlaneseq
  %v3931 = vshrl.u32 %v3930, 7
  %v3932 = vadd.s32 %v3931, 8
  %3933 = vset.pattern.permute.xlu0 %v3932
  %3934 = vperm.xlu0 %3933, %v3923
  %v3935 = vpop.permute.xlu0 %3934
  %v3936 = vperm.slane %v3456, 6
  %v3937 = vlaneseq
  %v3938 = vshrl.u32 %v3937, 7
  %3940 = vset.pattern.permute.xlu0 %v3938
  %3941 = vperm.xlu0 %3940, %v3936
  %v3942 = vpop.permute.xlu0 %3941
  %v3943 = vlaneseq
  %v3944 = vshrl.u32 %v3943, 7
  %v3945 = vadd.s32 %v3944, 8
  %3946 = vset.pattern.permute.xlu0 %v3945
  %3947 = vperm.xlu0 %3946, %v3936
  %v3948 = vpop.permute.xlu0 %3947
  %v3949 = vperm.slane %v3553, 6
  %v3950 = vperm.slane %v3554, 6
  %v3951 = vmul.f32 %v3949, %v3929
  %v3952 = vmul.f32 %v3949, %v3935
  %v3953 = vmul.f32 %v3950, %v3942
  %v3954 = vmul.f32 %v3950, %v3948
  %v3955 = vmul.f32 %v3900, %v3916
  %v3956 = vmul.f32 %v3901, %v3918
  %v3957 = vmul.f32 %v3902, %v3920
  %v3958 = vmul.f32 %v3903, %v3922
  %v3959 = vadd.f32 %v3955, %v3951
  %v3960 = vadd.f32 %v3956, %v3952
  %v3961 = vadd.f32 %v3957, %v3953
  %v3962 = vadd.f32 %v3958, %v3954
  %s3963 = scalar_lea.vmem [#allocation2], 352
  %3964 = vst.msk [vmem:[%s3963] sm:$0xff] %vm272, %v3959
  %3965 = vst.msk [vmem:[%s3963 + $0x8] sm:$0xff] %vm272, %v3960
  %3966 = vst.msk [vmem:[%s3963 + $0x80] sm:$0xff] %vm272, %v3961
  %3967 = vst.msk [vmem:[%s3963 + $0x88] sm:$0xff] %vm272, %v3962
  %v3968 = vperm.slane %v3545, 7
  %v3969 = vperm.slane %v3546, 7
  %v3970 = vmul.f32 %v3968, %v3551
  %v3971 = vmul.f32 %v3968, %v3552
  %v3972 = vmul.f32 %v3969, %v3551
  %v3973 = vmul.f32 %v3969, %v3552
  %v3974 = vmul.f32 %v3970, 1.442695
  %v3975 = vpow.pop %v3974
  %v3976 = vmul.f32 %v3971, 1.442695
  %v3977 = vpow.pop %v3976
  %v3978 = vmul.f32 %v3972, 1.442695
  %v3979 = vpow.pop %v3978
  %v3980 = vmul.f32 %v3973, 1.442695
  %v3981 = vpow.pop %v3980
  %v3982 = vperm.slane %v3453, 7
  %v3983 = vlaneseq
  %v3984 = vshrl.u32 %v3983, 7
  %3986 = vset.pattern.permute.xlu0 %v3984
  %3987 = vperm.xlu0 %3986, %v3982
  %v3988 = vpop.permute.xlu0 %3987
  %v3989 = vlaneseq
  %v3990 = vshrl.u32 %v3989, 7
  %v3991 = vadd.s32 %v3990, 8
  %3992 = vset.pattern.permute.xlu0 %v3991
  %3993 = vperm.xlu0 %3992, %v3982
  %v3994 = vpop.permute.xlu0 %3993
  %v3995 = vperm.slane %v3456, 7
  %v3996 = vlaneseq
  %v3997 = vshrl.u32 %v3996, 7
  %3999 = vset.pattern.permute.xlu0 %v3997
  %4000 = vperm.xlu0 %3999, %v3995
  %v4001 = vpop.permute.xlu0 %4000
  %v4002 = vlaneseq
  %v4003 = vshrl.u32 %v4002, 7
  %v4004 = vadd.s32 %v4003, 8
  %4005 = vset.pattern.permute.xlu0 %v4004
  %4006 = vperm.xlu0 %4005, %v3995
  %v4007 = vpop.permute.xlu0 %4006
  %v4008 = vperm.slane %v3553, 7
  %v4009 = vperm.slane %v3554, 7
  %v4010 = vmul.f32 %v4008, %v3988
  %v4011 = vmul.f32 %v4008, %v3994
  %v4012 = vmul.f32 %v4009, %v4001
  %v4013 = vmul.f32 %v4009, %v4007
  %v4014 = vmul.f32 %v3959, %v3975
  %v4015 = vmul.f32 %v3960, %v3977
  %v4016 = vmul.f32 %v3961, %v3979
  %v4017 = vmul.f32 %v3962, %v3981
  %v4018 = vadd.f32 %v4014, %v4010
  %v4019 = vadd.f32 %v4015, %v4011
  %v4020 = vadd.f32 %v4016, %v4012
  %v4021 = vadd.f32 %v4017, %v4013
  %s4022 = scalar_lea.vmem [#allocation2], 368
  %4023 = vst.msk [vmem:[%s4022] sm:$0xff] %vm272, %v4018
  %4024 = vst.msk [vmem:[%s4022 + $0x8] sm:$0xff] %vm272, %v4019
  %4025 = vst.msk [vmem:[%s4022 + $0x80] sm:$0xff] %vm272, %v4020
  %4026 = vst.msk [vmem:[%s4022 + $0x88] sm:$0xff] %vm272, %v4021
  %v4027 = vld [vmem:[%s3609] sm:$0xff]
  %v4028 = vld [vmem:[%s3609 + $0x8] sm:$0xff]
  %v4029 = vld [vmem:[%s3609 + $0x10] sm:$0xff]
  %v4030 = vld [vmem:[%s3609 + $0x18] sm:$0xff]
  %v4031 = vld [vmem:[%s3609 + $0x20] sm:$0xff]
  %v4032 = vld [vmem:[%s3609 + $0x28] sm:$0xff]
  %v4033 = vld [vmem:[%s3609 + $0x30] sm:$0xff]
  %v4034 = vld [vmem:[%s3609 + $0x38] sm:$0xff]
  %v4035 = vld [vmem:[%s3609 + $0x40] sm:$0xff]
  %v4036 = vld [vmem:[%s3609 + $0x48] sm:$0xff]
  %v4037 = vld [vmem:[%s3609 + $0x50] sm:$0xff]
  %v4038 = vld [vmem:[%s3609 + $0x58] sm:$0xff]
  %v4039 = vld [vmem:[%s3609 + $0x60] sm:$0xff]
  %v4040 = vld [vmem:[%s3609 + $0x68] sm:$0xff]
  %v4041 = vld [vmem:[%s3609 + $0x70] sm:$0xff]
  %v4042 = vld [vmem:[%s3609 + $0x78] sm:$0xff]
  %v4043 = vld [vmem:[%s3609 + $0x80] sm:$0xff]
  %v4044 = vld [vmem:[%s3609 + $0x88] sm:$0xff]
  %v4045 = vld [vmem:[%s3609 + $0x90] sm:$0xff]
  %v4046 = vld [vmem:[%s3609 + $0x98] sm:$0xff]
  %v4047 = vld [vmem:[%s3609 + $0xa0] sm:$0xff]
  %v4048 = vld [vmem:[%s3609 + $0xa8] sm:$0xff]
  %v4049 = vld [vmem:[%s3609 + $0xb0] sm:$0xff]
  %v4050 = vld [vmem:[%s3609 + $0xb8] sm:$0xff]
  %v4051 = vld [vmem:[%s3609 + $0xc0] sm:$0xff]
  %v4052 = vld [vmem:[%s3609 + $0xc8] sm:$0xff]
  %v4053 = vld [vmem:[%s3609 + $0xd0] sm:$0xff]
  %v4054 = vld [vmem:[%s3609 + $0xd8] sm:$0xff]
  %v4055 = vld [vmem:[%s3609 + $0xe0] sm:$0xff]
  %v4056 = vld [vmem:[%s3609 + $0xe8] sm:$0xff]
  %v4057 = vld [vmem:[%s3609 + $0xf0] sm:$0xff]
  %v4058 = vld [vmem:[%s3609 + $0xf8] sm:$0xff]
  %v4059 = vperm.slane %v3482, 0
  %v4060 = vlaneseq
  %v4061 = vshrl.u32 %v4060, 7
  %4063 = vset.pattern.permute.xlu0 %v4061
  %4064 = vperm.xlu0 %4063, %v4059
  %v4065 = vpop.permute.xlu0 %4064
  %v4066 = vlaneseq
  %v4067 = vshrl.u32 %v4066, 7
  %v4068 = vadd.s32 %v4067, 8
  %4069 = vset.pattern.permute.xlu0 %v4068
  %4070 = vperm.xlu0 %4069, %v4059
  %v4071 = vpop.permute.xlu0 %4070
  %v4072 = vperm.slane %v3482, 1
  %v4073 = vlaneseq
  %v4074 = vshrl.u32 %v4073, 7
  %4076 = vset.pattern.permute.xlu0 %v4074
  %4077 = vperm.xlu0 %4076, %v4072
  %v4078 = vpop.permute.xlu0 %4077
  %v4079 = vlaneseq
  %v4080 = vshrl.u32 %v4079, 7
  %v4081 = vadd.s32 %v4080, 8
  %4082 = vset.pattern.permute.xlu0 %v4081
  %4083 = vperm.xlu0 %4082, %v4072
  %v4084 = vpop.permute.xlu0 %4083
  %v4085 = vperm.slane %v3482, 2
  %v4086 = vlaneseq
  %v4087 = vshrl.u32 %v4086, 7
  %4089 = vset.pattern.permute.xlu0 %v4087
  %4090 = vperm.xlu0 %4089, %v4085
  %v4091 = vpop.permute.xlu0 %4090
  %v4092 = vlaneseq
  %v4093 = vshrl.u32 %v4092, 7
  %v4094 = vadd.s32 %v4093, 8
  %4095 = vset.pattern.permute.xlu0 %v4094
  %4096 = vperm.xlu0 %4095, %v4085
  %v4097 = vpop.permute.xlu0 %4096
  %v4098 = vperm.slane %v3482, 3
  %v4099 = vlaneseq
  %v4100 = vshrl.u32 %v4099, 7
  %4102 = vset.pattern.permute.xlu0 %v4100
  %4103 = vperm.xlu0 %4102, %v4098
  %v4104 = vpop.permute.xlu0 %4103
  %v4105 = vlaneseq
  %v4106 = vshrl.u32 %v4105, 7
  %v4107 = vadd.s32 %v4106, 8
  %4108 = vset.pattern.permute.xlu0 %v4107
  %4109 = vperm.xlu0 %4108, %v4098
  %v4110 = vpop.permute.xlu0 %4109
  %v4111 = vperm.slane %v3482, 4
  %v4112 = vlaneseq
  %v4113 = vshrl.u32 %v4112, 7
  %4115 = vset.pattern.permute.xlu0 %v4113
  %4116 = vperm.xlu0 %4115, %v4111
  %v4117 = vpop.permute.xlu0 %4116
  %v4118 = vlaneseq
  %v4119 = vshrl.u32 %v4118, 7
  %v4120 = vadd.s32 %v4119, 8
  %4121 = vset.pattern.permute.xlu0 %v4120
  %4122 = vperm.xlu0 %4121, %v4111
  %v4123 = vpop.permute.xlu0 %4122
  %v4124 = vperm.slane %v3482, 5
  %v4125 = vlaneseq
  %v4126 = vshrl.u32 %v4125, 7
  %4128 = vset.pattern.permute.xlu0 %v4126
  %4129 = vperm.xlu0 %4128, %v4124
  %v4130 = vpop.permute.xlu0 %4129
  %v4131 = vlaneseq
  %v4132 = vshrl.u32 %v4131, 7
  %v4133 = vadd.s32 %v4132, 8
  %4134 = vset.pattern.permute.xlu0 %v4133
  %4135 = vperm.xlu0 %4134, %v4124
  %v4136 = vpop.permute.xlu0 %4135
  %v4137 = vperm.slane %v3482, 6
  %v4138 = vlaneseq
  %v4139 = vshrl.u32 %v4138, 7
  %4141 = vset.pattern.permute.xlu0 %v4139
  %4142 = vperm.xlu0 %4141, %v4137
  %v4143 = vpop.permute.xlu0 %4142
  %v4144 = vlaneseq
  %v4145 = vshrl.u32 %v4144, 7
  %v4146 = vadd.s32 %v4145, 8
  %4147 = vset.pattern.permute.xlu0 %v4146
  %4148 = vperm.xlu0 %4147, %v4137
  %v4149 = vpop.permute.xlu0 %4148
  %v4150 = vperm.slane %v3482, 7
  %v4151 = vlaneseq
  %v4152 = vshrl.u32 %v4151, 7
  %4154 = vset.pattern.permute.xlu0 %v4152
  %4155 = vperm.xlu0 %4154, %v4150
  %v4156 = vpop.permute.xlu0 %4155
  %v4157 = vlaneseq
  %v4158 = vshrl.u32 %v4157, 7
  %v4159 = vadd.s32 %v4158, 8
  %4160 = vset.pattern.permute.xlu0 %v4159
  %4161 = vperm.xlu0 %4160, %v4150
  %v4162 = vpop.permute.xlu0 %4161
  %v4163 = vperm.slane %v3485, 0
  %v4164 = vlaneseq
  %v4165 = vshrl.u32 %v4164, 7
  %4167 = vset.pattern.permute.xlu0 %v4165
  %4168 = vperm.xlu0 %4167, %v4163
  %v4169 = vpop.permute.xlu0 %4168
  %v4170 = vlaneseq
  %v4171 = vshrl.u32 %v4170, 7
  %v4172 = vadd.s32 %v4171, 8
  %4173 = vset.pattern.permute.xlu0 %v4172
  %4174 = vperm.xlu0 %4173, %v4163
  %v4175 = vpop.permute.xlu0 %4174
  %v4176 = vperm.slane %v3485, 1
  %v4177 = vlaneseq
  %v4178 = vshrl.u32 %v4177, 7
  %4180 = vset.pattern.permute.xlu0 %v4178
  %4181 = vperm.xlu0 %4180, %v4176
  %v4182 = vpop.permute.xlu0 %4181
  %v4183 = vlaneseq
  %v4184 = vshrl.u32 %v4183, 7
  %v4185 = vadd.s32 %v4184, 8
  %4186 = vset.pattern.permute.xlu0 %v4185
  %4187 = vperm.xlu0 %4186, %v4176
  %v4188 = vpop.permute.xlu0 %4187
  %v4189 = vperm.slane %v3485, 2
  %v4190 = vlaneseq
  %v4191 = vshrl.u32 %v4190, 7
  %4193 = vset.pattern.permute.xlu0 %v4191
  %4194 = vperm.xlu0 %4193, %v4189
  %v4195 = vpop.permute.xlu0 %4194
  %v4196 = vlaneseq
  %v4197 = vshrl.u32 %v4196, 7
  %v4198 = vadd.s32 %v4197, 8
  %4199 = vset.pattern.permute.xlu0 %v4198
  %4200 = vperm.xlu0 %4199, %v4189
  %v4201 = vpop.permute.xlu0 %4200
  %v4202 = vperm.slane %v3485, 3
  %v4203 = vlaneseq
  %v4204 = vshrl.u32 %v4203, 7
  %4206 = vset.pattern.permute.xlu0 %v4204
  %4207 = vperm.xlu0 %4206, %v4202
  %v4208 = vpop.permute.xlu0 %4207
  %v4209 = vlaneseq
  %v4210 = vshrl.u32 %v4209, 7
  %v4211 = vadd.s32 %v4210, 8
  %4212 = vset.pattern.permute.xlu0 %v4211
  %4213 = vperm.xlu0 %4212, %v4202
  %v4214 = vpop.permute.xlu0 %4213
  %v4215 = vperm.slane %v3485, 4
  %v4216 = vlaneseq
  %v4217 = vshrl.u32 %v4216, 7
  %4219 = vset.pattern.permute.xlu0 %v4217
  %4220 = vperm.xlu0 %4219, %v4215
  %v4221 = vpop.permute.xlu0 %4220
  %v4222 = vlaneseq
  %v4223 = vshrl.u32 %v4222, 7
  %v4224 = vadd.s32 %v4223, 8
  %4225 = vset.pattern.permute.xlu0 %v4224
  %4226 = vperm.xlu0 %4225, %v4215
  %v4227 = vpop.permute.xlu0 %4226
  %v4228 = vperm.slane %v3485, 5
  %v4229 = vlaneseq
  %v4230 = vshrl.u32 %v4229, 7
  %4232 = vset.pattern.permute.xlu0 %v4230
  %4233 = vperm.xlu0 %4232, %v4228
  %v4234 = vpop.permute.xlu0 %4233
  %v4235 = vlaneseq
  %v4236 = vshrl.u32 %v4235, 7
  %v4237 = vadd.s32 %v4236, 8
  %4238 = vset.pattern.permute.xlu0 %v4237
  %4239 = vperm.xlu0 %4238, %v4228
  %v4240 = vpop.permute.xlu0 %4239
  %v4241 = vperm.slane %v3485, 6
  %v4242 = vlaneseq
  %v4243 = vshrl.u32 %v4242, 7
  %4245 = vset.pattern.permute.xlu0 %v4243
  %4246 = vperm.xlu0 %4245, %v4241
  %v4247 = vpop.permute.xlu0 %4246
  %v4248 = vlaneseq
  %v4249 = vshrl.u32 %v4248, 7
  %v4250 = vadd.s32 %v4249, 8
  %4251 = vset.pattern.permute.xlu0 %v4250
  %4252 = vperm.xlu0 %4251, %v4241
  %v4253 = vpop.permute.xlu0 %4252
  %v4254 = vperm.slane %v3485, 7
  %v4255 = vlaneseq
  %v4256 = vshrl.u32 %v4255, 7
  %4258 = vset.pattern.permute.xlu0 %v4256
  %4259 = vperm.xlu0 %4258, %v4254
  %v4260 = vpop.permute.xlu0 %4259
  %v4261 = vlaneseq
  %v4262 = vshrl.u32 %v4261, 7
  %v4263 = vadd.s32 %v4262, 8
  %4264 = vset.pattern.permute.xlu0 %v4263
  %4265 = vperm.xlu0 %4264, %v4254
  %v4266 = vpop.permute.xlu0 %4265
  %v4267 = vmul.f32 %v4027, %v4065
  %v4268 = vmul.f32 %v4028, %v4071
  %v4269 = vmul.f32 %v4029, %v4078
  %v4270 = vmul.f32 %v4030, %v4084
  %v4271 = vmul.f32 %v4031, %v4091
  %v4272 = vmul.f32 %v4032, %v4097
  %v4273 = vmul.f32 %v4033, %v4104
  %v4274 = vmul.f32 %v4034, %v4110
  %v4275 = vmul.f32 %v4035, %v4117
  %v4276 = vmul.f32 %v4036, %v4123
  %v4277 = vmul.f32 %v4037, %v4130
  %v4278 = vmul.f32 %v4038, %v4136
  %v4279 = vmul.f32 %v4039, %v4143
  %v4280 = vmul.f32 %v4040, %v4149
  %v4281 = vmul.f32 %v4041, %v4156
  %v4282 = vmul.f32 %v4042, %v4162
  %v4283 = vmul.f32 %v4043, %v4169
  %v4284 = vmul.f32 %v4044, %v4175
  %v4285 = vmul.f32 %v4045, %v4182
  %v4286 = vmul.f32 %v4046, %v4188
  %v4287 = vmul.f32 %v4047, %v4195
  %v4288 = vmul.f32 %v4048, %v4201
  %v4289 = vmul.f32 %v4049, %v4208
  %v4290 = vmul.f32 %v4050, %v4214
  %v4291 = vmul.f32 %v4051, %v4221
  %v4292 = vmul.f32 %v4052, %v4227
  %v4293 = vmul.f32 %v4053, %v4234
  %v4294 = vmul.f32 %v4054, %v4240
  %v4295 = vmul.f32 %v4055, %v4247
  %v4296 = vmul.f32 %v4056, %v4253
  %v4297 = vmul.f32 %v4057, %v4260
  %v4298 = vmul.f32 %v4058, %v4266
  %v4299 = vsel %vm272, %v4267, 0.0
  %v4300 = vsel %vm272, %v4268, 0.0
  %v4301 = vadd.f32 %v4299, %v4300
  %v4302 = vrot.slane %v4301, 4
  %v4303 = vadd.f32 %v4301, %v4302
  %v4304 = vrot.slane %v4303, 2
  %v4305 = vadd.f32 %v4303, %v4304
  %v4306 = vrot.slane %v4305, 1
  %v4307 = vadd.f32 %v4305, %v4306
  %v4308 = vsel %vm272, %v4269, 0.0
  %v4309 = vsel %vm272, %v4270, 0.0
  %v4310 = vadd.f32 %v4308, %v4309
  %v4311 = vrot.slane %v4310, 4
  %v4312 = vadd.f32 %v4310, %v4311
  %v4313 = vrot.slane %v4312, 2
  %v4314 = vadd.f32 %v4312, %v4313
  %v4315 = vrot.slane %v4314, 1
  %v4316 = vadd.f32 %v4314, %v4315
  %v4317 = vsel %vm272, %v4271, 0.0
  %v4318 = vsel %vm272, %v4272, 0.0
  %v4319 = vadd.f32 %v4317, %v4318
  %v4320 = vrot.slane %v4319, 4
  %v4321 = vadd.f32 %v4319, %v4320
  %v4322 = vrot.slane %v4321, 2
  %v4323 = vadd.f32 %v4321, %v4322
  %v4324 = vrot.slane %v4323, 1
  %v4325 = vadd.f32 %v4323, %v4324
  %v4326 = vsel %vm272, %v4273, 0.0
  %v4327 = vsel %vm272, %v4274, 0.0
  %v4328 = vadd.f32 %v4326, %v4327
  %v4329 = vrot.slane %v4328, 4
  %v4330 = vadd.f32 %v4328, %v4329
  %v4331 = vrot.slane %v4330, 2
  %v4332 = vadd.f32 %v4330, %v4331
  %v4333 = vrot.slane %v4332, 1
  %v4334 = vadd.f32 %v4332, %v4333
  %v4335 = vsel %vm272, %v4275, 0.0
  %v4336 = vsel %vm272, %v4276, 0.0
  %v4337 = vadd.f32 %v4335, %v4336
  %v4338 = vrot.slane %v4337, 4
  %v4339 = vadd.f32 %v4337, %v4338
  %v4340 = vrot.slane %v4339, 2
  %v4341 = vadd.f32 %v4339, %v4340
  %v4342 = vrot.slane %v4341, 1
  %v4343 = vadd.f32 %v4341, %v4342
  %v4344 = vsel %vm272, %v4277, 0.0
  %v4345 = vsel %vm272, %v4278, 0.0
  %v4346 = vadd.f32 %v4344, %v4345
  %v4347 = vrot.slane %v4346, 4
  %v4348 = vadd.f32 %v4346, %v4347
  %v4349 = vrot.slane %v4348, 2
  %v4350 = vadd.f32 %v4348, %v4349
  %v4351 = vrot.slane %v4350, 1
  %v4352 = vadd.f32 %v4350, %v4351
  %v4353 = vsel %vm272, %v4279, 0.0
  %v4354 = vsel %vm272, %v4280, 0.0
  %v4355 = vadd.f32 %v4353, %v4354
  %v4356 = vrot.slane %v4355, 4
  %v4357 = vadd.f32 %v4355, %v4356
  %v4358 = vrot.slane %v4357, 2
  %v4359 = vadd.f32 %v4357, %v4358
  %v4360 = vrot.slane %v4359, 1
  %v4361 = vadd.f32 %v4359, %v4360
  %v4362 = vsel %vm272, %v4281, 0.0
  %v4363 = vsel %vm272, %v4282, 0.0
  %v4364 = vadd.f32 %v4362, %v4363
  %v4365 = vrot.slane %v4364, 4
  %v4366 = vadd.f32 %v4364, %v4365
  %v4367 = vrot.slane %v4366, 2
  %v4368 = vadd.f32 %v4366, %v4367
  %v4369 = vrot.slane %v4368, 1
  %v4370 = vadd.f32 %v4368, %v4369
  %v4371 = vsel %vm272, %v4283, 0.0
  %v4372 = vsel %vm272, %v4284, 0.0
  %v4373 = vadd.f32 %v4371, %v4372
  %v4374 = vrot.slane %v4373, 4
  %v4375 = vadd.f32 %v4373, %v4374
  %v4376 = vrot.slane %v4375, 2
  %v4377 = vadd.f32 %v4375, %v4376
  %v4378 = vrot.slane %v4377, 1
  %v4379 = vadd.f32 %v4377, %v4378
  %v4380 = vsel %vm272, %v4285, 0.0
  %v4381 = vsel %vm272, %v4286, 0.0
  %v4382 = vadd.f32 %v4380, %v4381
  %v4383 = vrot.slane %v4382, 4
  %v4384 = vadd.f32 %v4382, %v4383
  %v4385 = vrot.slane %v4384, 2
  %v4386 = vadd.f32 %v4384, %v4385
  %v4387 = vrot.slane %v4386, 1
  %v4388 = vadd.f32 %v4386, %v4387
  %v4389 = vsel %vm272, %v4287, 0.0
  %v4390 = vsel %vm272, %v4288, 0.0
  %v4391 = vadd.f32 %v4389, %v4390
  %v4392 = vrot.slane %v4391, 4
  %v4393 = vadd.f32 %v4391, %v4392
  %v4394 = vrot.slane %v4393, 2
  %v4395 = vadd.f32 %v4393, %v4394
  %v4396 = vrot.slane %v4395, 1
  %v4397 = vadd.f32 %v4395, %v4396
  %v4398 = vsel %vm272, %v4289, 0.0
  %v4399 = vsel %vm272, %v4290, 0.0
  %v4400 = vadd.f32 %v4398, %v4399
  %v4401 = vrot.slane %v4400, 4
  %v4402 = vadd.f32 %v4400, %v4401
  %v4403 = vrot.slane %v4402, 2
  %v4404 = vadd.f32 %v4402, %v4403
  %v4405 = vrot.slane %v4404, 1
  %v4406 = vadd.f32 %v4404, %v4405
  %v4407 = vsel %vm272, %v4291, 0.0
  %v4408 = vsel %vm272, %v4292, 0.0
  %v4409 = vadd.f32 %v4407, %v4408
  %v4410 = vrot.slane %v4409, 4
  %v4411 = vadd.f32 %v4409, %v4410
  %v4412 = vrot.slane %v4411, 2
  %v4413 = vadd.f32 %v4411, %v4412
  %v4414 = vrot.slane %v4413, 1
  %v4415 = vadd.f32 %v4413, %v4414
  %v4416 = vsel %vm272, %v4293, 0.0
  %v4417 = vsel %vm272, %v4294, 0.0
  %v4418 = vadd.f32 %v4416, %v4417
  %v4419 = vrot.slane %v4418, 4
  %v4420 = vadd.f32 %v4418, %v4419
  %v4421 = vrot.slane %v4420, 2
  %v4422 = vadd.f32 %v4420, %v4421
  %v4423 = vrot.slane %v4422, 1
  %v4424 = vadd.f32 %v4422, %v4423
  %v4425 = vsel %vm272, %v4295, 0.0
  %v4426 = vsel %vm272, %v4296, 0.0
  %v4427 = vadd.f32 %v4425, %v4426
  %v4428 = vrot.slane %v4427, 4
  %v4429 = vadd.f32 %v4427, %v4428
  %v4430 = vrot.slane %v4429, 2
  %v4431 = vadd.f32 %v4429, %v4430
  %v4432 = vrot.slane %v4431, 1
  %v4433 = vadd.f32 %v4431, %v4432
  %v4434 = vsel %vm272, %v4297, 0.0
  %v4435 = vsel %vm272, %v4298, 0.0
  %v4436 = vadd.f32 %v4434, %v4435
  %v4437 = vrot.slane %v4436, 4
  %v4438 = vadd.f32 %v4436, %v4437
  %v4439 = vrot.slane %v4438, 2
  %v4440 = vadd.f32 %v4438, %v4439
  %v4441 = vrot.slane %v4440, 1
  %v4442 = vadd.f32 %v4440, %v4441
  %v4443 = vperm.slane %v3186, 0
  %v4444 = vmul.f32 %v3395, %v4443
  %v4445 = vmul.f32 %v3396, %v4443
  %v4448 = vrot.slane %v4444, 1
  %v4449 = vrot.slane %v4444, 2
  %v4450 = vrot.slane %v4444, 3
  %v4451 = vrot.slane %v4444, 4
  %v4452 = vrot.slane %v4444, 5
  %v4453 = vrot.slane %v4444, 6
  %v4454 = vrot.slane %v4444, 7
  %v4455 = vrot.slane %v4445, 1
  %v4456 = vrot.slane %v4445, 2
  %v4457 = vrot.slane %v4445, 3
  %v4458 = vrot.slane %v4445, 4
  %v4459 = vrot.slane %v4445, 5
  %v4460 = vrot.slane %v4445, 6
  %v4461 = vrot.slane %v4445, 7
  %v4478 = vadd.f32 %v4307, %v4444
  %v4479 = vadd.f32 %v4316, %v4448
  %v4480 = vadd.f32 %v4325, %v4449
  %v4481 = vadd.f32 %v4334, %v4450
  %v4482 = vadd.f32 %v4343, %v4451
  %v4483 = vadd.f32 %v4352, %v4452
  %v4484 = vadd.f32 %v4361, %v4453
  %v4485 = vadd.f32 %v4370, %v4454
  %v4486 = vadd.f32 %v4379, %v4445
  %v4487 = vadd.f32 %v4388, %v4455
  %v4488 = vadd.f32 %v4397, %v4456
  %v4489 = vadd.f32 %v4406, %v4457
  %v4490 = vadd.f32 %v4415, %v4458
  %v4491 = vadd.f32 %v4424, %v4459
  %v4492 = vadd.f32 %v4433, %v4460
  %v4493 = vadd.f32 %v4442, %v4461
  %v4494 = vand.u32 2147483647, %v3309
  %v4495 = vand.u32 2147483647, %v3310
  %v4496 = vsub.f32 0.0, %v4494
  %v4497 = vsub.f32 0.0, %v4495
  %v4498 = vmul.f32 %v4496, 1.442695
  %v4499 = vpow.pop %v4498
  %v4500 = vmul.f32 %v4497, 1.442695
  %v4501 = vpow.pop %v4500
  %vm4502 = vcmp.ge.f32.partialorder %v3309, 0.0
  %vm4503 = vcmp.ge.f32.partialorder %v3310, 0.0
  %v4504 = vadd.f32 %v4499, 1.0
  %v4505 = vadd.f32 %v4501, 1.0
  %v4506 = vrcp.pop %v4504
  %v4507 = vmul.f32 %v4504, %v4506
  %v4508 = vsub.f32 1.0, %v4507
  %v4509 = vmul.f32 %v4506, %v4508
  %v4510 = vadd.f32 %v4506, %v4509
  %vm4511 = vweird.f32 %v4504
  %vm4512 = vweird.f32 %v4506
  %vm4513 = vmor %vm4511, %vm4512
  %v4514 = vsel %vm4513, %v4506, %v4510
  %v4515 = vand.u32 2147483647, %v4504
  %vm4516 = vcmp.eq.f32.partialorder %v4515, 8.507059e+37
  %v4517 = vand.u32 %v4504, 2147483648
  %v4518 = vor.u32 1.1754944e-38, %v4517
  %v4519 = vsel %vm4516, %v4518, %v4514
  %v4520 = vmul.f32 1.0, %v4519
  %v4521 = vrcp.pop %v4505
  %v4522 = vmul.f32 %v4505, %v4521
  %v4523 = vsub.f32 1.0, %v4522
  %v4524 = vmul.f32 %v4521, %v4523
  %v4525 = vadd.f32 %v4521, %v4524
  %vm4526 = vweird.f32 %v4505
  %vm4527 = vweird.f32 %v4521
  %vm4528 = vmor %vm4526, %vm4527
  %v4529 = vsel %vm4528, %v4521, %v4525
  %v4530 = vand.u32 2147483647, %v4505
  %vm4531 = vcmp.eq.f32.partialorder %v4530, 8.507059e+37
  %v4532 = vand.u32 %v4505, 2147483648
  %v4533 = vor.u32 1.1754944e-38, %v4532
  %v4534 = vsel %vm4531, %v4533, %v4529
  %v4535 = vmul.f32 1.0, %v4534
  %v4536 = vmul.f32 %v4499, %v4519
  %v4537 = vmul.f32 %v4501, %v4534
  %v4538 = vsel %vm4502, %v4520, %v4536
  %v4539 = vsel %vm4503, %v4535, %v4537
  %v4540 = vmul.f32 %v3309, %v4538
  %v4541 = vmul.f32 %v3310, %v4539
  %v4544 = vrot.slane %v4540, 1
  %v4545 = vrot.slane %v4540, 2
  %v4546 = vrot.slane %v4540, 3
  %v4547 = vrot.slane %v4540, 4
  %v4548 = vrot.slane %v4540, 5
  %v4549 = vrot.slane %v4540, 6
  %v4550 = vrot.slane %v4540, 7
  %v4551 = vrot.slane %v4541, 1
  %v4552 = vrot.slane %v4541, 2
  %v4553 = vrot.slane %v4541, 3
  %v4554 = vrot.slane %v4541, 4
  %v4555 = vrot.slane %v4541, 5
  %v4556 = vrot.slane %v4541, 6
  %v4557 = vrot.slane %v4541, 7
  %4558 = vrot.lane.b32.xlu0 %v4540, 64
  %v4559 = vpop.permute.xlu0 %4558
  %4560 = vrot.lane.b32.xlu0 %v4544, 64
  %v4561 = vpop.permute.xlu0 %4560
  %4562 = vrot.lane.b32.xlu0 %v4545, 64
  %v4563 = vpop.permute.xlu0 %4562
  %4564 = vrot.lane.b32.xlu0 %v4546, 64
  %v4565 = vpop.permute.xlu0 %4564
  %4566 = vrot.lane.b32.xlu0 %v4547, 64
  %v4567 = vpop.permute.xlu0 %4566
  %4568 = vrot.lane.b32.xlu0 %v4548, 64
  %v4569 = vpop.permute.xlu0 %4568
  %4570 = vrot.lane.b32.xlu0 %v4549, 64
  %v4571 = vpop.permute.xlu0 %4570
  %4572 = vrot.lane.b32.xlu0 %v4550, 64
  %v4573 = vpop.permute.xlu0 %4572
  %4574 = vrot.lane.b32.xlu0 %v4541, 64
  %v4575 = vpop.permute.xlu0 %4574
  %4576 = vrot.lane.b32.xlu0 %v4551, 64
  %v4577 = vpop.permute.xlu0 %4576
  %4578 = vrot.lane.b32.xlu0 %v4552, 64
  %v4579 = vpop.permute.xlu0 %4578
  %4580 = vrot.lane.b32.xlu0 %v4553, 64
  %v4581 = vpop.permute.xlu0 %4580
  %4582 = vrot.lane.b32.xlu0 %v4554, 64
  %v4583 = vpop.permute.xlu0 %4582
  %4584 = vrot.lane.b32.xlu0 %v4555, 64
  %v4585 = vpop.permute.xlu0 %4584
  %4586 = vrot.lane.b32.xlu0 %v4556, 64
  %v4587 = vpop.permute.xlu0 %4586
  %4588 = vrot.lane.b32.xlu0 %v4557, 64
  %v4589 = vpop.permute.xlu0 %4588
  %v4606 = vmul.f32 %v4478, %v4559
  %v4607 = vmul.f32 %v4479, %v4561
  %v4608 = vmul.f32 %v4480, %v4563
  %v4609 = vmul.f32 %v4481, %v4565
  %v4610 = vmul.f32 %v4482, %v4567
  %v4611 = vmul.f32 %v4483, %v4569
  %v4612 = vmul.f32 %v4484, %v4571
  %v4613 = vmul.f32 %v4485, %v4573
  %v4614 = vmul.f32 %v4486, %v4575
  %v4615 = vmul.f32 %v4487, %v4577
  %v4616 = vmul.f32 %v4488, %v4579
  %v4617 = vmul.f32 %v4489, %v4581
  %v4618 = vmul.f32 %v4490, %v4583
  %v4619 = vmul.f32 %v4491, %v4585
  %v4620 = vmul.f32 %v4492, %v4587
  %v4621 = vmul.f32 %v4493, %v4589
  %v4638 = vrot.slane %v4607, 7
  %v4639 = vsel %vm1515, %v4638, %v4606
  %v4640 = vrot.slane %v4608, 6
  %v4641 = vsel %vm1518, %v4640, %v4639
  %v4642 = vrot.slane %v4609, 5
  %v4643 = vsel %vm1521, %v4642, %v4641
  %v4644 = vrot.slane %v4610, 4
  %v4645 = vsel %vm1524, %v4644, %v4643
  %v4646 = vrot.slane %v4611, 3
  %v4647 = vsel %vm1527, %v4646, %v4645
  %v4648 = vrot.slane %v4612, 2
  %v4649 = vsel %vm1530, %v4648, %v4647
  %v4650 = vrot.slane %v4613, 1
  %v4651 = vsel %vm1533, %v4650, %v4649
  %v4652 = vrot.slane %v4615, 7
  %v4653 = vsel %vm1515, %v4652, %v4614
  %v4654 = vrot.slane %v4616, 6
  %v4655 = vsel %vm1518, %v4654, %v4653
  %v4656 = vrot.slane %v4617, 5
  %v4657 = vsel %vm1521, %v4656, %v4655
  %v4658 = vrot.slane %v4618, 4
  %v4659 = vsel %vm1524, %v4658, %v4657
  %v4660 = vrot.slane %v4619, 3
  %v4661 = vsel %vm1527, %v4660, %v4659
  %v4662 = vrot.slane %v4620, 2
  %v4663 = vsel %vm1530, %v4662, %v4661
  %v4664 = vrot.slane %v4621, 1
  %v4665 = vsel %vm1533, %v4664, %v4663
  %v4666 = vsel %vm272, %v4651, 0
  %v4668 = vsel %vm272, %v4665, 0
  %v4671 = vsel %vm272, %v3176, 0
  %v4674 = vsel %vm272, %v3177, 0
  %v4677 = vsel %vm272, %v3178, 0
  %v4680 = vsel %vm272, %v3179, 0
  %4682 = vmatpush.xpose.msra.mxu0 0.0
  %4683 = vmatpush.xpose.msra.mxu0 0.0
  %4684 = vmatpush.xpose.msra.mxu0 0.0
  %4685 = vmatpush.xpose.msra.mxu0 0.0
  %4686 = vmatpush.xpose.msra.mxu0 0.0
  %4687 = vmatpush.xpose.msra.mxu0 0.0
  %4688 = vmatpush.xpose.msra.mxu0 0.0
  %4689 = vmatpush.xpose.msra.mxu0 0.0
  %4690 = vmatpush.xpose.msra.mxu0 0.0
  %4691 = vmatpush.xpose.msra.mxu0 0.0
  %4692 = vmatpush.xpose.msra.mxu0 0.0
  %4693 = vmatpush.xpose.msra.mxu0 0.0
  %4694 = vmatpush.xpose.msra.mxu0 %v4680
  %4695 = vmatpush.xpose.msra.mxu0 %v4677
  %4696 = vmatpush.xpose.msra.mxu0 %v4674
  %4697 = vmatpush.xpose.msra.mxu0 %v4671
  %4698 = vmatmul.f32.gmra.mxu0 %v4666
  %v4699 = vpop.f32.mrf.mxu0
  %v4700 = vadd.f32 0.0, %v4699
  %4701 = vmatmul.f32.gmra.mxu0 %v4668
  %v4702 = vpop.f32.mrf.mxu0
  %v4703 = vadd.f32 0.0, %v4702
  %4704 = vdwg.mxu0
  %v4705 = vadd.f32 %v3148, %v4700
  %v4706 = vadd.f32 %v3149, %v4703
  %v4707 = vperm.slane %v3168, 0
  %v4708 = vadd.f32 %v4705, %v4707
  %v4709 = vadd.f32 %v4706, %v4707
  %s4710 = scalar_lea.vmem %s2, 432
  %v4711 = vld [vmem:[%s4710] sm:$0xff]
  %v4712 = vld [vmem:[%s4710 + $0x8] sm:$0xff]
  %v4713 = vld [vmem:[%s4710 + $0x10] sm:$0xff]
  %v4714 = vld [vmem:[%s4710 + $0x18] sm:$0xff]
  %v4715 = vld [vmem:[%s4710 + $0x20] sm:$0xff]
  %v4716 = vld [vmem:[%s4710 + $0x28] sm:$0xff]
  %v4717 = vld [vmem:[%s4710 + $0x30] sm:$0xff]
  %v4718 = vld [vmem:[%s4710 + $0x38] sm:$0xff]
  %v4719 = vld [vmem:[%s4710 + $0x40] sm:$0xff]
  %v4720 = vld [vmem:[%s4710 + $0x48] sm:$0xff]
  %v4721 = vld [vmem:[%s4710 + $0x50] sm:$0xff]
  %v4722 = vld [vmem:[%s4710 + $0x58] sm:$0xff]
  %v4723 = vld [vmem:[%s4710 + $0x60] sm:$0xff]
  %v4724 = vld [vmem:[%s4710 + $0x68] sm:$0xff]
  %v4725 = vld [vmem:[%s4710 + $0x70] sm:$0xff]
  %v4726 = vld [vmem:[%s4710 + $0x78] sm:$0xff]
  %v4727 = vld [vmem:[%s4710 + $0x80] sm:$0x1]
  %v4728 = vld [vmem:[%s4710 + $0x88] sm:$0x1]
  %s4729 = scalar_lea.vmem %s1, 408
  %v4730 = vld [vmem:[%s4729] sm:$0xff]
  %v4731 = vld [vmem:[%s4729 + $0x8] sm:$0xff]
  %v4732 = vld [vmem:[%s4729 + $0x10] sm:$0xff]
  %v4733 = vld [vmem:[%s4729 + $0x18] sm:$0xff]
  %v4734 = vld [vmem:[%s4729 + $0x20] sm:$0xff]
  %v4735 = vld [vmem:[%s4729 + $0x28] sm:$0xff]
  %v4736 = vld [vmem:[%s4729 + $0x30] sm:$0xff]
  %v4737 = vld [vmem:[%s4729 + $0x38] sm:$0xff]
  %v4738 = vld [vmem:[%s4729 + $0x40] sm:$0xff]
  %v4739 = vld [vmem:[%s4729 + $0x48] sm:$0xff]
  %v4740 = vld [vmem:[%s4729 + $0x50] sm:$0xff]
  %v4741 = vld [vmem:[%s4729 + $0x58] sm:$0xff]
  %v4742 = vld [vmem:[%s4729 + $0x60] sm:$0xf]
  %v4743 = vld [vmem:[%s4729 + $0x68] sm:$0x1]
  %v4744 = vld [vmem:[%s4729 + $0x70] sm:$0x1]
  %v4745 = vld [vmem:[%s4729 + $0x78] sm:$0x1]
  %v4746 = vld [vmem:[%s4729 + $0x80] sm:$0x1]
  %v4747 = vmul.f32 %v4708, %v4708
  %v4748 = vmul.f32 %v4709, %v4709
  %v4749 = vsel %vm53, %v4747, 0.0
  %4750 = vadd.xlane.f32.xlu0 %v4749
  %v4751 = vpop.xlane.xlu0 %4750
  %v4752 = vsel %vm53, %v4748, 0.0
  %4753 = vadd.xlane.f32.xlu0 %v4752
  %v4754 = vpop.xlane.xlu0 %4753
  %v4755 = vmul.f32 %v4751, %v66
  %v4756 = vmul.f32 %v4754, %v66
  %v4757 = vadd.f32 %v4755, 1e-05
  %v4758 = vadd.f32 %v4756, 1e-05
  %v4759 = vrsqrt.pop %v4757
  %v4760 = vmul.f32 %v4759, %v4757
  %v4761 = vmul.f32 %v4760, %v4759
  %v4762 = vmul.f32 0.5, %v4761
  %v4763 = vsub.f32 1.5, %v4762
  %v4764 = vmul.f32 %v4759, %v4763
  %vm4765 = vweird.f32 %v4757
  %vm4766 = vweird.f32 %v4759
  %vm4767 = vmor %vm4765, %vm4766
  %v4768 = vsel %vm4767, %v4759, %v4764
  %v4769 = vrsqrt.pop %v4758
  %v4770 = vmul.f32 %v4769, %v4758
  %v4771 = vmul.f32 %v4770, %v4769
  %v4772 = vmul.f32 0.5, %v4771
  %v4773 = vsub.f32 1.5, %v4772
  %v4774 = vmul.f32 %v4769, %v4773
  %vm4775 = vweird.f32 %v4758
  %vm4776 = vweird.f32 %v4769
  %vm4777 = vmor %vm4775, %vm4776
  %v4778 = vsel %vm4777, %v4769, %v4774
  %v4779 = vmul.f32 %v4708, %v4768
  %v4780 = vmul.f32 %v4709, %v4778
  %v4781 = vperm.slane %v4727, 0
  %v4782 = vmul.f32 %v4779, %v4781
  %v4783 = vmul.f32 %v4780, %v4781
  %v4785 = vsel %vm53, %v4782, 0
  %v4788 = vsel %vm53, %v4783, 0
  %v4791 = vsel %vm53, %v4711, 0
  %v4794 = vsel %vm53, %v4712, 0
  %v4797 = vsel %vm53, %v4713, 0
  %v4800 = vsel %vm53, %v4714, 0
  %v4803 = vsel %vm53, %v4715, 0
  %v4806 = vsel %vm53, %v4716, 0
  %v4809 = vsel %vm53, %v4717, 0
  %v4812 = vsel %vm53, %v4718, 0
  %v4815 = vsel %vm53, %v4719, 0
  %v4818 = vsel %vm53, %v4720, 0
  %v4821 = vsel %vm53, %v4721, 0
  %v4824 = vsel %vm53, %v4722, 0
  %v4827 = vsel %vm53, %v4723, 0
  %v4830 = vsel %vm53, %v4724, 0
  %v4833 = vsel %vm53, %v4725, 0
  %v4836 = vsel %vm53, %v4726, 0
  %4838 = vmatpush.xpose.msra.mxu0 %v4836
  %4839 = vmatpush.xpose.msra.mxu0 %v4833
  %4840 = vmatpush.xpose.msra.mxu0 %v4830
  %4841 = vmatpush.xpose.msra.mxu0 %v4827
  %4842 = vmatpush.xpose.msra.mxu0 %v4824
  %4843 = vmatpush.xpose.msra.mxu0 %v4821
  %4844 = vmatpush.xpose.msra.mxu0 %v4818
  %4845 = vmatpush.xpose.msra.mxu0 %v4815
  %4846 = vmatpush.xpose.msra.mxu0 %v4812
  %4847 = vmatpush.xpose.msra.mxu0 %v4809
  %4848 = vmatpush.xpose.msra.mxu0 %v4806
  %4849 = vmatpush.xpose.msra.mxu0 %v4803
  %4850 = vmatpush.xpose.msra.mxu0 %v4800
  %4851 = vmatpush.xpose.msra.mxu0 %v4797
  %4852 = vmatpush.xpose.msra.mxu0 %v4794
  %4853 = vmatpush.xpose.msra.mxu0 %v4791
  %4854 = vmatmul.f32.gmra.mxu0 %v4785
  %v4855 = vpop.f32.mrf.mxu0
  %v4856 = vadd.f32 0.0, %v4855
  %4857 = vmatmul.f32.gmra.mxu0 %v4788
  %v4858 = vpop.f32.mrf.mxu0
  %v4859 = vadd.f32 0.0, %v4858
  %4860 = vdwg.mxu0
  %v4861 = vperm.slane %v4743, 0
  %v4862 = vadd.f32 %v4856, %v4861
  %v4863 = vadd.f32 %v4859, %v4861
  %v4864 = vperm.slane %v4744, 0
  %4866 = vrot.lane.b32.xlu0 %v4864, 64
  %v4867 = vpop.permute.xlu0 %4866
  %v4869 = vadd.f32 %v4856, %v4867
  %v4870 = vadd.f32 %v4859, %v4867
  %v4871 = vperm.slane %v4742, 3
  %v4872 = vmul.f32 %v4862, %v4871
  %v4873 = vmul.f32 %v4863, %v4871
  %v4876 = vrot.slane %v4862, 5
  %v4877 = vrot.slane %v4863, 5
  %v4880 = vsel %vm192, 0.0, %v4876
  %v4881 = vsel %vm192, 0.0, %v4877
  %v4882 = vperm.slane %v4742, 0
  %v4883 = vmul.f32 %v4880, %v4882
  %v4884 = vmul.f32 %v4881, %v4882
  %v4885 = vadd.f32 %v4872, %v4883
  %v4886 = vadd.f32 %v4873, %v4884
  %v4887 = vrot.slane %v4862, 6
  %v4888 = vrot.slane %v4863, 6
  %v4891 = vsel %vm204, 0.0, %v4887
  %v4892 = vsel %vm204, 0.0, %v4888
  %v4893 = vperm.slane %v4742, 1
  %v4894 = vmul.f32 %v4891, %v4893
  %v4895 = vmul.f32 %v4892, %v4893
  %v4896 = vadd.f32 %v4885, %v4894
  %v4897 = vadd.f32 %v4886, %v4895
  %v4898 = vrot.slane %v4862, 7
  %v4899 = vrot.slane %v4863, 7
  %v4902 = vsel %vm216, 0.0, %v4898
  %v4903 = vsel %vm216, 0.0, %v4899
  %v4904 = vperm.slane %v4742, 2
  %v4905 = vmul.f32 %v4902, %v4904
  %v4906 = vmul.f32 %v4903, %v4904
  %v4907 = vadd.f32 %v4896, %v4905
  %v4908 = vadd.f32 %v4897, %v4906
  %v4909 = vand.u32 2147483647, %v4907
  %v4910 = vand.u32 2147483647, %v4908
  %v4911 = vsub.f32 0.0, %v4909
  %v4912 = vsub.f32 0.0, %v4910
  %v4913 = vmul.f32 %v4911, 1.442695
  %v4914 = vpow.pop %v4913
  %v4915 = vmul.f32 %v4912, 1.442695
  %v4916 = vpow.pop %v4915
  %vm4917 = vcmp.ge.f32.partialorder %v4907, 0.0
  %vm4918 = vcmp.ge.f32.partialorder %v4908, 0.0
  %v4919 = vadd.f32 %v4914, 1.0
  %v4920 = vadd.f32 %v4916, 1.0
  %v4921 = vrcp.pop %v4919
  %v4922 = vmul.f32 %v4919, %v4921
  %v4923 = vsub.f32 1.0, %v4922
  %v4924 = vmul.f32 %v4921, %v4923
  %v4925 = vadd.f32 %v4921, %v4924
  %vm4926 = vweird.f32 %v4919
  %vm4927 = vweird.f32 %v4921
  %vm4928 = vmor %vm4926, %vm4927
  %v4929 = vsel %vm4928, %v4921, %v4925
  %v4930 = vand.u32 2147483647, %v4919
  %vm4931 = vcmp.eq.f32.partialorder %v4930, 8.507059e+37
  %v4932 = vand.u32 %v4919, 2147483648
  %v4933 = vor.u32 1.1754944e-38, %v4932
  %v4934 = vsel %vm4931, %v4933, %v4929
  %v4935 = vmul.f32 1.0, %v4934
  %v4936 = vrcp.pop %v4920
  %v4937 = vmul.f32 %v4920, %v4936
  %v4938 = vsub.f32 1.0, %v4937
  %v4939 = vmul.f32 %v4936, %v4938
  %v4940 = vadd.f32 %v4936, %v4939
  %vm4941 = vweird.f32 %v4920
  %vm4942 = vweird.f32 %v4936
  %vm4943 = vmor %vm4941, %vm4942
  %v4944 = vsel %vm4943, %v4936, %v4940
  %v4945 = vand.u32 2147483647, %v4920
  %vm4946 = vcmp.eq.f32.partialorder %v4945, 8.507059e+37
  %v4947 = vand.u32 %v4920, 2147483648
  %v4948 = vor.u32 1.1754944e-38, %v4947
  %v4949 = vsel %vm4946, %v4948, %v4944
  %v4950 = vmul.f32 1.0, %v4949
  %v4951 = vmul.f32 %v4914, %v4934
  %v4952 = vmul.f32 %v4916, %v4949
  %v4953 = vsel %vm4917, %v4935, %v4951
  %v4954 = vsel %vm4918, %v4950, %v4952
  %v4955 = vmul.f32 %v4907, %v4953
  %v4956 = vmul.f32 %v4908, %v4954
  %v4958 = vsel %vm272, %v4955, 0
  %v4961 = vsel %vm272, %v4956, 0
  %v4964 = vsel %vm272, %v4730, 0
  %4966 = vmatpush.xpose.msra.mxu0 0.0
  %4967 = vmatpush.xpose.msra.mxu0 0.0
  %4968 = vmatpush.xpose.msra.mxu0 0.0
  %4969 = vmatpush.xpose.msra.mxu0 0.0
  %4970 = vmatpush.xpose.msra.mxu0 0.0
  %4971 = vmatpush.xpose.msra.mxu0 0.0
  %4972 = vmatpush.xpose.msra.mxu0 0.0
  %4973 = vmatpush.xpose.msra.mxu0 0.0
  %4974 = vmatpush.xpose.msra.mxu0 0.0
  %4975 = vmatpush.xpose.msra.mxu0 0.0
  %4976 = vmatpush.xpose.msra.mxu0 0.0
  %4977 = vmatpush.xpose.msra.mxu0 0.0
  %4978 = vmatpush.xpose.msra.mxu0 0.0
  %4979 = vmatpush.xpose.msra.mxu0 0.0
  %4980 = vmatpush.xpose.msra.mxu0 0.0
  %4981 = vmatpush.xpose.msra.mxu0 %v4964
  %4982 = vmatmul.f32.gmra.mxu0 %v4958
  %v4983 = vpop.f32.mrf.mxu0
  %v4984 = vadd.f32 0.0, %v4983
  %4985 = vmatmul.f32.gmra.mxu0 %v4961
  %v4986 = vpop.f32.mrf.mxu0
  %v4987 = vadd.f32 0.0, %v4986
  %4988 = vdwg.mxu0
  %v4990 = vsel %vm272, %v4731, 0
  %v4993 = vsel %vm272, %v4732, 0
  %4995 = vmatpush.xpose.msra.mxu0 0.0
  %4996 = vmatpush.xpose.msra.mxu0 0.0
  %4997 = vmatpush.xpose.msra.mxu0 0.0
  %4998 = vmatpush.xpose.msra.mxu0 0.0
  %4999 = vmatpush.xpose.msra.mxu0 0.0
  %5000 = vmatpush.xpose.msra.mxu0 0.0
  %5001 = vmatpush.xpose.msra.mxu0 0.0
  %5002 = vmatpush.xpose.msra.mxu0 0.0
  %5003 = vmatpush.xpose.msra.mxu0 0.0
  %5004 = vmatpush.xpose.msra.mxu0 0.0
  %5005 = vmatpush.xpose.msra.mxu0 0.0
  %5006 = vmatpush.xpose.msra.mxu0 0.0
  %5007 = vmatpush.xpose.msra.mxu0 0.0
  %5008 = vmatpush.xpose.msra.mxu0 0.0
  %5009 = vmatpush.xpose.msra.mxu0 %v4993
  %5010 = vmatpush.xpose.msra.mxu0 %v4990
  %5011 = vmatmul.f32.gmra.mxu0 %v4958
  %v5012 = vpop.f32.mrf.mxu0
  %v5013 = vadd.f32 0.0, %v5012
  %5014 = vmatmul.f32.gmra.mxu0 %v4961
  %v5015 = vpop.f32.mrf.mxu0
  %v5016 = vadd.f32 0.0, %v5015
  %5017 = vdwg.mxu0
  %v5019 = vsel %vm272, %v4733, 0
  %v5022 = vsel %vm272, %v4734, 0
  %5024 = vmatpush.xpose.msra.mxu0 0.0
  %5025 = vmatpush.xpose.msra.mxu0 0.0
  %5026 = vmatpush.xpose.msra.mxu0 0.0
  %5027 = vmatpush.xpose.msra.mxu0 0.0
  %5028 = vmatpush.xpose.msra.mxu0 0.0
  %5029 = vmatpush.xpose.msra.mxu0 0.0
  %5030 = vmatpush.xpose.msra.mxu0 0.0
  %5031 = vmatpush.xpose.msra.mxu0 0.0
  %5032 = vmatpush.xpose.msra.mxu0 0.0
  %5033 = vmatpush.xpose.msra.mxu0 0.0
  %5034 = vmatpush.xpose.msra.mxu0 0.0
  %5035 = vmatpush.xpose.msra.mxu0 0.0
  %5036 = vmatpush.xpose.msra.mxu0 0.0
  %5037 = vmatpush.xpose.msra.mxu0 0.0
  %5038 = vmatpush.xpose.msra.mxu0 %v5022
  %5039 = vmatpush.xpose.msra.mxu0 %v5019
  %5040 = vmatmul.f32.gmra.mxu0 %v4958
  %v5041 = vpop.f32.mrf.mxu0
  %v5042 = vadd.f32 0.0, %v5041
  %5043 = vmatmul.f32.gmra.mxu0 %v4961
  %v5044 = vpop.f32.mrf.mxu0
  %v5045 = vadd.f32 0.0, %v5044
  %5046 = vdwg.mxu0
  %v5047 = vperm.slane %v4745, 0
  %v5049 = vsel %vm364, %v4984, 0
  %v5052 = vsel %vm364, %v4987, 0
  %5054 = vmatpush.msra.mxu0 0.0
  %5055 = vmatpush.msra.mxu0 0.0
  %5056 = vmatpush.msra.mxu0 0.0
  %5057 = vmatpush.msra.mxu0 0.0
  %5058 = vmatpush.msra.mxu0 0.0
  %5059 = vmatpush.msra.mxu0 0.0
  %5060 = vmatpush.msra.mxu0 0.0
  %5061 = vmatpush.msra.mxu0 0.0
  %5062 = vmatpush.msra.mxu0 0.0
  %5063 = vmatpush.msra.mxu0 0.0
  %5064 = vmatpush.msra.mxu0 0.0
  %5065 = vmatpush.msra.mxu0 0.0
  %5066 = vmatpush.msra.mxu0 0.0
  %5067 = vmatpush.msra.mxu0 0.0
  %5068 = vmatpush.msra.mxu0 0.0
  %5069 = vmatpush.msra.mxu0 %v4735
  %5070 = vmatmul.f32.gmra.mxu0 %v5049
  %v5071 = vpop.f32.mrf.mxu0
  %v5072 = vadd.f32 %v5047, %v5071
  %5073 = vmatmul.f32.gmra.mxu0 %v5052
  %v5074 = vpop.f32.mrf.mxu0
  %v5075 = vadd.f32 %v5047, %v5074
  %5076 = vdwg.mxu0
  %v5077 = vmax.f32 %v5072, 0.0
  %v5078 = vmax.f32 %v5075, 0.0
  %v5079 = vand.u32 2147483647, %v5072
  %v5080 = vand.u32 2147483647, %v5075
  %v5081 = vsub.f32 0.0, %v5079
  %v5082 = vsub.f32 0.0, %v5080
  %v5083 = vmul.f32 %v5081, 1.442695
  %v5084 = vpow.pop %v5083
  %v5085 = vmul.f32 %v5082, 1.442695
  %v5086 = vpow.pop %v5085
  %v5087 = vadd.f32 %v5084, 1.0
  %v5088 = vlog2.pop %v5087
  %v5089 = vmul.f32 %v5088, 0.6931472
  %v5090 = vmul.f32 -0.5, %v5084
  %v5091 = vadd.f32 %v5090, 1.0
  %v5092 = vmul.f32 %v5091, %v5084
  %v5093 = vand.u32 2147483647, %v5084
  %vm5094 = vcmp.lt.f32.partialorder %v5093, 0.0004427343
  %v5095 = vsel %vm5094, %v5092, %v5089
  %v5096 = vadd.f32 %v5086, 1.0
  %v5097 = vlog2.pop %v5096
  %v5098 = vmul.f32 %v5097, 0.6931472
  %v5099 = vmul.f32 -0.5, %v5086
  %v5100 = vadd.f32 %v5099, 1.0
  %v5101 = vmul.f32 %v5100, %v5086
  %v5102 = vand.u32 2147483647, %v5086
  %vm5103 = vcmp.lt.f32.partialorder %v5102, 0.0004427343
  %v5104 = vsel %vm5103, %v5101, %v5098
  %v5105 = vadd.f32 %v5077, %v5095
  %v5106 = vadd.f32 %v5078, %v5104
  %v5107 = vmul.f32 %v4740, 1.442695
  %v5108 = vpow.pop %v5107
  %v5109 = vmul.f32 %v4741, 1.442695
  %v5110 = vpow.pop %v5109
  %v5111 = vsub.f32 0.0, %v5108
  %v5112 = vsub.f32 0.0, %v5110
  %v5113 = vmul.f32 %v5105, %v4955
  %v5114 = vmul.f32 %v5106, %v4956
  %v5115 = vperm.slane %v5105, 0
  %v5116 = vperm.slane %v5106, 0
  %v5117 = vmul.f32 %v5115, %v5111
  %v5118 = vmul.f32 %v5115, %v5112
  %v5119 = vmul.f32 %v5116, %v5111
  %v5120 = vmul.f32 %v5116, %v5112
  %v5121 = vmul.f32 %v5117, 1.442695
  %v5122 = vpow.pop %v5121
  %v5123 = vmul.f32 %v5118, 1.442695
  %v5124 = vpow.pop %v5123
  %v5125 = vmul.f32 %v5119, 1.442695
  %v5126 = vpow.pop %v5125
  %v5127 = vmul.f32 %v5120, 1.442695
  %v5128 = vpow.pop %v5127
  %v5129 = vperm.slane %v5013, 0
  %v5130 = vlaneseq
  %v5131 = vshrl.u32 %v5130, 7
  %5133 = vset.pattern.permute.xlu0 %v5131
  %5134 = vperm.xlu0 %5133, %v5129
  %v5135 = vpop.permute.xlu0 %5134
  %v5136 = vlaneseq
  %v5137 = vshrl.u32 %v5136, 7
  %v5138 = vadd.s32 %v5137, 8
  %5139 = vset.pattern.permute.xlu0 %v5138
  %5140 = vperm.xlu0 %5139, %v5129
  %v5141 = vpop.permute.xlu0 %5140
  %v5142 = vperm.slane %v5016, 0
  %v5143 = vlaneseq
  %v5144 = vshrl.u32 %v5143, 7
  %5146 = vset.pattern.permute.xlu0 %v5144
  %5147 = vperm.xlu0 %5146, %v5142
  %v5148 = vpop.permute.xlu0 %5147
  %v5149 = vlaneseq
  %v5150 = vshrl.u32 %v5149, 7
  %v5151 = vadd.s32 %v5150, 8
  %5152 = vset.pattern.permute.xlu0 %v5151
  %5153 = vperm.xlu0 %5152, %v5142
  %v5154 = vpop.permute.xlu0 %5153
  %v5155 = vperm.slane %v5113, 0
  %v5156 = vperm.slane %v5114, 0
  %v5157 = vmul.f32 %v5155, %v5135
  %v5158 = vmul.f32 %v5155, %v5141
  %v5159 = vmul.f32 %v5156, %v5148
  %v5160 = vmul.f32 %v5156, %v5154
  %v5161 = vmul.f32 %v5122, 0.0
  %v5162 = vmul.f32 %v5124, 0.0
  %v5163 = vmul.f32 %v5126, 0.0
  %v5164 = vmul.f32 %v5128, 0.0
  %v5165 = vadd.f32 %v5161, %v5157
  %v5166 = vadd.f32 %v5162, %v5158
  %v5167 = vadd.f32 %v5163, %v5159
  %v5168 = vadd.f32 %v5164, %v5160
  %5169 = vst.msk [vmem:[%s3609] sm:$0xff] %vm272, %v5165
  %5170 = vst.msk [vmem:[%s3609 + $0x8] sm:$0xff] %vm272, %v5166
  %5171 = vst.msk [vmem:[%s3609 + $0x80] sm:$0xff] %vm272, %v5167
  %5172 = vst.msk [vmem:[%s3609 + $0x88] sm:$0xff] %vm272, %v5168
  %v5173 = vperm.slane %v5105, 1
  %v5174 = vperm.slane %v5106, 1
  %v5175 = vmul.f32 %v5173, %v5111
  %v5176 = vmul.f32 %v5173, %v5112
  %v5177 = vmul.f32 %v5174, %v5111
  %v5178 = vmul.f32 %v5174, %v5112
  %v5179 = vmul.f32 %v5175, 1.442695
  %v5180 = vpow.pop %v5179
  %v5181 = vmul.f32 %v5176, 1.442695
  %v5182 = vpow.pop %v5181
  %v5183 = vmul.f32 %v5177, 1.442695
  %v5184 = vpow.pop %v5183
  %v5185 = vmul.f32 %v5178, 1.442695
  %v5186 = vpow.pop %v5185
  %v5187 = vperm.slane %v5013, 1
  %v5188 = vlaneseq
  %v5189 = vshrl.u32 %v5188, 7
  %5191 = vset.pattern.permute.xlu0 %v5189
  %5192 = vperm.xlu0 %5191, %v5187
  %v5193 = vpop.permute.xlu0 %5192
  %v5194 = vlaneseq
  %v5195 = vshrl.u32 %v5194, 7
  %v5196 = vadd.s32 %v5195, 8
  %5197 = vset.pattern.permute.xlu0 %v5196
  %5198 = vperm.xlu0 %5197, %v5187
  %v5199 = vpop.permute.xlu0 %5198
  %v5200 = vperm.slane %v5016, 1
  %v5201 = vlaneseq
  %v5202 = vshrl.u32 %v5201, 7
  %5204 = vset.pattern.permute.xlu0 %v5202
  %5205 = vperm.xlu0 %5204, %v5200
  %v5206 = vpop.permute.xlu0 %5205
  %v5207 = vlaneseq
  %v5208 = vshrl.u32 %v5207, 7
  %v5209 = vadd.s32 %v5208, 8
  %5210 = vset.pattern.permute.xlu0 %v5209
  %5211 = vperm.xlu0 %5210, %v5200
  %v5212 = vpop.permute.xlu0 %5211
  %v5213 = vperm.slane %v5113, 1
  %v5214 = vperm.slane %v5114, 1
  %v5215 = vmul.f32 %v5213, %v5193
  %v5216 = vmul.f32 %v5213, %v5199
  %v5217 = vmul.f32 %v5214, %v5206
  %v5218 = vmul.f32 %v5214, %v5212
  %v5219 = vmul.f32 %v5165, %v5180
  %v5220 = vmul.f32 %v5166, %v5182
  %v5221 = vmul.f32 %v5167, %v5184
  %v5222 = vmul.f32 %v5168, %v5186
  %v5223 = vadd.f32 %v5219, %v5215
  %v5224 = vadd.f32 %v5220, %v5216
  %v5225 = vadd.f32 %v5221, %v5217
  %v5226 = vadd.f32 %v5222, %v5218
  %5227 = vst.msk [vmem:[%s3668] sm:$0xff] %vm272, %v5223
  %5228 = vst.msk [vmem:[%s3668 + $0x8] sm:$0xff] %vm272, %v5224
  %5229 = vst.msk [vmem:[%s3668 + $0x80] sm:$0xff] %vm272, %v5225
  %5230 = vst.msk [vmem:[%s3668 + $0x88] sm:$0xff] %vm272, %v5226
  %v5231 = vperm.slane %v5105, 2
  %v5232 = vperm.slane %v5106, 2
  %v5233 = vmul.f32 %v5231, %v5111
  %v5234 = vmul.f32 %v5231, %v5112
  %v5235 = vmul.f32 %v5232, %v5111
  %v5236 = vmul.f32 %v5232, %v5112
  %v5237 = vmul.f32 %v5233, 1.442695
  %v5238 = vpow.pop %v5237
  %v5239 = vmul.f32 %v5234, 1.442695
  %v5240 = vpow.pop %v5239
  %v5241 = vmul.f32 %v5235, 1.442695
  %v5242 = vpow.pop %v5241
  %v5243 = vmul.f32 %v5236, 1.442695
  %v5244 = vpow.pop %v5243
  %v5245 = vperm.slane %v5013, 2
  %v5246 = vlaneseq
  %v5247 = vshrl.u32 %v5246, 7
  %5249 = vset.pattern.permute.xlu0 %v5247
  %5250 = vperm.xlu0 %5249, %v5245
  %v5251 = vpop.permute.xlu0 %5250
  %v5252 = vlaneseq
  %v5253 = vshrl.u32 %v5252, 7
  %v5254 = vadd.s32 %v5253, 8
  %5255 = vset.pattern.permute.xlu0 %v5254
  %5256 = vperm.xlu0 %5255, %v5245
  %v5257 = vpop.permute.xlu0 %5256
  %v5258 = vperm.slane %v5016, 2
  %v5259 = vlaneseq
  %v5260 = vshrl.u32 %v5259, 7
  %5262 = vset.pattern.permute.xlu0 %v5260
  %5263 = vperm.xlu0 %5262, %v5258
  %v5264 = vpop.permute.xlu0 %5263
  %v5265 = vlaneseq
  %v5266 = vshrl.u32 %v5265, 7
  %v5267 = vadd.s32 %v5266, 8
  %5268 = vset.pattern.permute.xlu0 %v5267
  %5269 = vperm.xlu0 %5268, %v5258
  %v5270 = vpop.permute.xlu0 %5269
  %v5271 = vperm.slane %v5113, 2
  %v5272 = vperm.slane %v5114, 2
  %v5273 = vmul.f32 %v5271, %v5251
  %v5274 = vmul.f32 %v5271, %v5257
  %v5275 = vmul.f32 %v5272, %v5264
  %v5276 = vmul.f32 %v5272, %v5270
  %v5277 = vmul.f32 %v5223, %v5238
  %v5278 = vmul.f32 %v5224, %v5240
  %v5279 = vmul.f32 %v5225, %v5242
  %v5280 = vmul.f32 %v5226, %v5244
  %v5281 = vadd.f32 %v5277, %v5273
  %v5282 = vadd.f32 %v5278, %v5274
  %v5283 = vadd.f32 %v5279, %v5275
  %v5284 = vadd.f32 %v5280, %v5276
  %5285 = vst.msk [vmem:[%s3727] sm:$0xff] %vm272, %v5281
  %5286 = vst.msk [vmem:[%s3727 + $0x8] sm:$0xff] %vm272, %v5282
  %5287 = vst.msk [vmem:[%s3727 + $0x80] sm:$0xff] %vm272, %v5283
  %5288 = vst.msk [vmem:[%s3727 + $0x88] sm:$0xff] %vm272, %v5284
  %v5289 = vperm.slane %v5105, 3
  %v5290 = vperm.slane %v5106, 3
  %v5291 = vmul.f32 %v5289, %v5111
  %v5292 = vmul.f32 %v5289, %v5112
  %v5293 = vmul.f32 %v5290, %v5111
  %v5294 = vmul.f32 %v5290, %v5112
  %v5295 = vmul.f32 %v5291, 1.442695
  %v5296 = vpow.pop %v5295
  %v5297 = vmul.f32 %v5292, 1.442695
  %v5298 = vpow.pop %v5297
  %v5299 = vmul.f32 %v5293, 1.442695
  %v5300 = vpow.pop %v5299
  %v5301 = vmul.f32 %v5294, 1.442695
  %v5302 = vpow.pop %v5301
  %v5303 = vperm.slane %v5013, 3
  %v5304 = vlaneseq
  %v5305 = vshrl.u32 %v5304, 7
  %5307 = vset.pattern.permute.xlu0 %v5305
  %5308 = vperm.xlu0 %5307, %v5303
  %v5309 = vpop.permute.xlu0 %5308
  %v5310 = vlaneseq
  %v5311 = vshrl.u32 %v5310, 7
  %v5312 = vadd.s32 %v5311, 8
  %5313 = vset.pattern.permute.xlu0 %v5312
  %5314 = vperm.xlu0 %5313, %v5303
  %v5315 = vpop.permute.xlu0 %5314
  %v5316 = vperm.slane %v5016, 3
  %v5317 = vlaneseq
  %v5318 = vshrl.u32 %v5317, 7
  %5320 = vset.pattern.permute.xlu0 %v5318
  %5321 = vperm.xlu0 %5320, %v5316
  %v5322 = vpop.permute.xlu0 %5321
  %v5323 = vlaneseq
  %v5324 = vshrl.u32 %v5323, 7
  %v5325 = vadd.s32 %v5324, 8
  %5326 = vset.pattern.permute.xlu0 %v5325
  %5327 = vperm.xlu0 %5326, %v5316
  %v5328 = vpop.permute.xlu0 %5327
  %v5329 = vperm.slane %v5113, 3
  %v5330 = vperm.slane %v5114, 3
  %v5331 = vmul.f32 %v5329, %v5309
  %v5332 = vmul.f32 %v5329, %v5315
  %v5333 = vmul.f32 %v5330, %v5322
  %v5334 = vmul.f32 %v5330, %v5328
  %v5335 = vmul.f32 %v5281, %v5296
  %v5336 = vmul.f32 %v5282, %v5298
  %v5337 = vmul.f32 %v5283, %v5300
  %v5338 = vmul.f32 %v5284, %v5302
  %v5339 = vadd.f32 %v5335, %v5331
  %v5340 = vadd.f32 %v5336, %v5332
  %v5341 = vadd.f32 %v5337, %v5333
  %v5342 = vadd.f32 %v5338, %v5334
  %5343 = vst.msk [vmem:[%s3786] sm:$0xff] %vm272, %v5339
  %5344 = vst.msk [vmem:[%s3786 + $0x8] sm:$0xff] %vm272, %v5340
  %5345 = vst.msk [vmem:[%s3786 + $0x80] sm:$0xff] %vm272, %v5341
  %5346 = vst.msk [vmem:[%s3786 + $0x88] sm:$0xff] %vm272, %v5342
  %v5347 = vperm.slane %v5105, 4
  %v5348 = vperm.slane %v5106, 4
  %v5349 = vmul.f32 %v5347, %v5111
  %v5350 = vmul.f32 %v5347, %v5112
  %v5351 = vmul.f32 %v5348, %v5111
  %v5352 = vmul.f32 %v5348, %v5112
  %v5353 = vmul.f32 %v5349, 1.442695
  %v5354 = vpow.pop %v5353
  %v5355 = vmul.f32 %v5350, 1.442695
  %v5356 = vpow.pop %v5355
  %v5357 = vmul.f32 %v5351, 1.442695
  %v5358 = vpow.pop %v5357
  %v5359 = vmul.f32 %v5352, 1.442695
  %v5360 = vpow.pop %v5359
  %v5361 = vperm.slane %v5013, 4
  %v5362 = vlaneseq
  %v5363 = vshrl.u32 %v5362, 7
  %5365 = vset.pattern.permute.xlu0 %v5363
  %5366 = vperm.xlu0 %5365, %v5361
  %v5367 = vpop.permute.xlu0 %5366
  %v5368 = vlaneseq
  %v5369 = vshrl.u32 %v5368, 7
  %v5370 = vadd.s32 %v5369, 8
  %5371 = vset.pattern.permute.xlu0 %v5370
  %5372 = vperm.xlu0 %5371, %v5361
  %v5373 = vpop.permute.xlu0 %5372
  %v5374 = vperm.slane %v5016, 4
  %v5375 = vlaneseq
  %v5376 = vshrl.u32 %v5375, 7
  %5378 = vset.pattern.permute.xlu0 %v5376
  %5379 = vperm.xlu0 %5378, %v5374
  %v5380 = vpop.permute.xlu0 %5379
  %v5381 = vlaneseq
  %v5382 = vshrl.u32 %v5381, 7
  %v5383 = vadd.s32 %v5382, 8
  %5384 = vset.pattern.permute.xlu0 %v5383
  %5385 = vperm.xlu0 %5384, %v5374
  %v5386 = vpop.permute.xlu0 %5385
  %v5387 = vperm.slane %v5113, 4
  %v5388 = vperm.slane %v5114, 4
  %v5389 = vmul.f32 %v5387, %v5367
  %v5390 = vmul.f32 %v5387, %v5373
  %v5391 = vmul.f32 %v5388, %v5380
  %v5392 = vmul.f32 %v5388, %v5386
  %v5393 = vmul.f32 %v5339, %v5354
  %v5394 = vmul.f32 %v5340, %v5356
  %v5395 = vmul.f32 %v5341, %v5358
  %v5396 = vmul.f32 %v5342, %v5360
  %v5397 = vadd.f32 %v5393, %v5389
  %v5398 = vadd.f32 %v5394, %v5390
  %v5399 = vadd.f32 %v5395, %v5391
  %v5400 = vadd.f32 %v5396, %v5392
  %5401 = vst.msk [vmem:[%s3845] sm:$0xff] %vm272, %v5397
  %5402 = vst.msk [vmem:[%s3845 + $0x8] sm:$0xff] %vm272, %v5398
  %5403 = vst.msk [vmem:[%s3845 + $0x80] sm:$0xff] %vm272, %v5399
  %5404 = vst.msk [vmem:[%s3845 + $0x88] sm:$0xff] %vm272, %v5400
  %v5405 = vperm.slane %v5105, 5
  %v5406 = vperm.slane %v5106, 5
  %v5407 = vmul.f32 %v5405, %v5111
  %v5408 = vmul.f32 %v5405, %v5112
  %v5409 = vmul.f32 %v5406, %v5111
  %v5410 = vmul.f32 %v5406, %v5112
  %v5411 = vmul.f32 %v5407, 1.442695
  %v5412 = vpow.pop %v5411
  %v5413 = vmul.f32 %v5408, 1.442695
  %v5414 = vpow.pop %v5413
  %v5415 = vmul.f32 %v5409, 1.442695
  %v5416 = vpow.pop %v5415
  %v5417 = vmul.f32 %v5410, 1.442695
  %v5418 = vpow.pop %v5417
  %v5419 = vperm.slane %v5013, 5
  %v5420 = vlaneseq
  %v5421 = vshrl.u32 %v5420, 7
  %5423 = vset.pattern.permute.xlu0 %v5421
  %5424 = vperm.xlu0 %5423, %v5419
  %v5425 = vpop.permute.xlu0 %5424
  %v5426 = vlaneseq
  %v5427 = vshrl.u32 %v5426, 7
  %v5428 = vadd.s32 %v5427, 8
  %5429 = vset.pattern.permute.xlu0 %v5428
  %5430 = vperm.xlu0 %5429, %v5419
  %v5431 = vpop.permute.xlu0 %5430
  %v5432 = vperm.slane %v5016, 5
  %v5433 = vlaneseq
  %v5434 = vshrl.u32 %v5433, 7
  %5436 = vset.pattern.permute.xlu0 %v5434
  %5437 = vperm.xlu0 %5436, %v5432
  %v5438 = vpop.permute.xlu0 %5437
  %v5439 = vlaneseq
  %v5440 = vshrl.u32 %v5439, 7
  %v5441 = vadd.s32 %v5440, 8
  %5442 = vset.pattern.permute.xlu0 %v5441
  %5443 = vperm.xlu0 %5442, %v5432
  %v5444 = vpop.permute.xlu0 %5443
  %v5445 = vperm.slane %v5113, 5
  %v5446 = vperm.slane %v5114, 5
  %v5447 = vmul.f32 %v5445, %v5425
  %v5448 = vmul.f32 %v5445, %v5431
  %v5449 = vmul.f32 %v5446, %v5438
  %v5450 = vmul.f32 %v5446, %v5444
  %v5451 = vmul.f32 %v5397, %v5412
  %v5452 = vmul.f32 %v5398, %v5414
  %v5453 = vmul.f32 %v5399, %v5416
  %v5454 = vmul.f32 %v5400, %v5418
  %v5455 = vadd.f32 %v5451, %v5447
  %v5456 = vadd.f32 %v5452, %v5448
  %v5457 = vadd.f32 %v5453, %v5449
  %v5458 = vadd.f32 %v5454, %v5450
  %5459 = vst.msk [vmem:[%s3904] sm:$0xff] %vm272, %v5455
  %5460 = vst.msk [vmem:[%s3904 + $0x8] sm:$0xff] %vm272, %v5456
  %5461 = vst.msk [vmem:[%s3904 + $0x80] sm:$0xff] %vm272, %v5457
  %5462 = vst.msk [vmem:[%s3904 + $0x88] sm:$0xff] %vm272, %v5458
  %v5463 = vperm.slane %v5105, 6
  %v5464 = vperm.slane %v5106, 6
  %v5465 = vmul.f32 %v5463, %v5111
  %v5466 = vmul.f32 %v5463, %v5112
  %v5467 = vmul.f32 %v5464, %v5111
  %v5468 = vmul.f32 %v5464, %v5112
  %v5469 = vmul.f32 %v5465, 1.442695
  %v5470 = vpow.pop %v5469
  %v5471 = vmul.f32 %v5466, 1.442695
  %v5472 = vpow.pop %v5471
  %v5473 = vmul.f32 %v5467, 1.442695
  %v5474 = vpow.pop %v5473
  %v5475 = vmul.f32 %v5468, 1.442695
  %v5476 = vpow.pop %v5475
  %v5477 = vperm.slane %v5013, 6
  %v5478 = vlaneseq
  %v5479 = vshrl.u32 %v5478, 7
  %5481 = vset.pattern.permute.xlu0 %v5479
  %5482 = vperm.xlu0 %5481, %v5477
  %v5483 = vpop.permute.xlu0 %5482
  %v5484 = vlaneseq
  %v5485 = vshrl.u32 %v5484, 7
  %v5486 = vadd.s32 %v5485, 8
  %5487 = vset.pattern.permute.xlu0 %v5486
  %5488 = vperm.xlu0 %5487, %v5477
  %v5489 = vpop.permute.xlu0 %5488
  %v5490 = vperm.slane %v5016, 6
  %v5491 = vlaneseq
  %v5492 = vshrl.u32 %v5491, 7
  %5494 = vset.pattern.permute.xlu0 %v5492
  %5495 = vperm.xlu0 %5494, %v5490
  %v5496 = vpop.permute.xlu0 %5495
  %v5497 = vlaneseq
  %v5498 = vshrl.u32 %v5497, 7
  %v5499 = vadd.s32 %v5498, 8
  %5500 = vset.pattern.permute.xlu0 %v5499
  %5501 = vperm.xlu0 %5500, %v5490
  %v5502 = vpop.permute.xlu0 %5501
  %v5503 = vperm.slane %v5113, 6
  %v5504 = vperm.slane %v5114, 6
  %v5505 = vmul.f32 %v5503, %v5483
  %v5506 = vmul.f32 %v5503, %v5489
  %v5507 = vmul.f32 %v5504, %v5496
  %v5508 = vmul.f32 %v5504, %v5502
  %v5509 = vmul.f32 %v5455, %v5470
  %v5510 = vmul.f32 %v5456, %v5472
  %v5511 = vmul.f32 %v5457, %v5474
  %v5512 = vmul.f32 %v5458, %v5476
  %v5513 = vadd.f32 %v5509, %v5505
  %v5514 = vadd.f32 %v5510, %v5506
  %v5515 = vadd.f32 %v5511, %v5507
  %v5516 = vadd.f32 %v5512, %v5508
  %5517 = vst.msk [vmem:[%s3963] sm:$0xff] %vm272, %v5513
  %5518 = vst.msk [vmem:[%s3963 + $0x8] sm:$0xff] %vm272, %v5514
  %5519 = vst.msk [vmem:[%s3963 + $0x80] sm:$0xff] %vm272, %v5515
  %5520 = vst.msk [vmem:[%s3963 + $0x88] sm:$0xff] %vm272, %v5516
  %v5521 = vperm.slane %v5105, 7
  %v5522 = vperm.slane %v5106, 7
  %v5523 = vmul.f32 %v5521, %v5111
  %v5524 = vmul.f32 %v5521, %v5112
  %v5525 = vmul.f32 %v5522, %v5111
  %v5526 = vmul.f32 %v5522, %v5112
  %v5527 = vmul.f32 %v5523, 1.442695
  %v5528 = vpow.pop %v5527
  %v5529 = vmul.f32 %v5524, 1.442695
  %v5530 = vpow.pop %v5529
  %v5531 = vmul.f32 %v5525, 1.442695
  %v5532 = vpow.pop %v5531
  %v5533 = vmul.f32 %v5526, 1.442695
  %v5534 = vpow.pop %v5533
  %v5535 = vperm.slane %v5013, 7
  %v5536 = vlaneseq
  %v5537 = vshrl.u32 %v5536, 7
  %5539 = vset.pattern.permute.xlu0 %v5537
  %5540 = vperm.xlu0 %5539, %v5535
  %v5541 = vpop.permute.xlu0 %5540
  %v5542 = vlaneseq
  %v5543 = vshrl.u32 %v5542, 7
  %v5544 = vadd.s32 %v5543, 8
  %5545 = vset.pattern.permute.xlu0 %v5544
  %5546 = vperm.xlu0 %5545, %v5535
  %v5547 = vpop.permute.xlu0 %5546
  %v5548 = vperm.slane %v5016, 7
  %v5549 = vlaneseq
  %v5550 = vshrl.u32 %v5549, 7
  %5552 = vset.pattern.permute.xlu0 %v5550
  %5553 = vperm.xlu0 %5552, %v5548
  %v5554 = vpop.permute.xlu0 %5553
  %v5555 = vlaneseq
  %v5556 = vshrl.u32 %v5555, 7
  %v5557 = vadd.s32 %v5556, 8
  %5558 = vset.pattern.permute.xlu0 %v5557
  %5559 = vperm.xlu0 %5558, %v5548
  %v5560 = vpop.permute.xlu0 %5559
  %v5561 = vperm.slane %v5113, 7
  %v5562 = vperm.slane %v5114, 7
  %v5563 = vmul.f32 %v5561, %v5541
  %v5564 = vmul.f32 %v5561, %v5547
  %v5565 = vmul.f32 %v5562, %v5554
  %v5566 = vmul.f32 %v5562, %v5560
  %v5567 = vmul.f32 %v5513, %v5528
  %v5568 = vmul.f32 %v5514, %v5530
  %v5569 = vmul.f32 %v5515, %v5532
  %v5570 = vmul.f32 %v5516, %v5534
  %v5571 = vadd.f32 %v5567, %v5563
  %v5572 = vadd.f32 %v5568, %v5564
  %v5573 = vadd.f32 %v5569, %v5565
  %v5574 = vadd.f32 %v5570, %v5566
  %5575 = vst.msk [vmem:[%s4022] sm:$0xff] %vm272, %v5571
  %5576 = vst.msk [vmem:[%s4022 + $0x8] sm:$0xff] %vm272, %v5572
  %5577 = vst.msk [vmem:[%s4022 + $0x80] sm:$0xff] %vm272, %v5573
  %5578 = vst.msk [vmem:[%s4022 + $0x88] sm:$0xff] %vm272, %v5574
  %v5579 = vld [vmem:[%s3609] sm:$0xff]
  %v5580 = vld [vmem:[%s3609 + $0x8] sm:$0xff]
  %v5581 = vld [vmem:[%s3609 + $0x10] sm:$0xff]
  %v5582 = vld [vmem:[%s3609 + $0x18] sm:$0xff]
  %v5583 = vld [vmem:[%s3609 + $0x20] sm:$0xff]
  %v5584 = vld [vmem:[%s3609 + $0x28] sm:$0xff]
  %v5585 = vld [vmem:[%s3609 + $0x30] sm:$0xff]
  %v5586 = vld [vmem:[%s3609 + $0x38] sm:$0xff]
  %v5587 = vld [vmem:[%s3609 + $0x40] sm:$0xff]
  %v5588 = vld [vmem:[%s3609 + $0x48] sm:$0xff]
  %v5589 = vld [vmem:[%s3609 + $0x50] sm:$0xff]
  %v5590 = vld [vmem:[%s3609 + $0x58] sm:$0xff]
  %v5591 = vld [vmem:[%s3609 + $0x60] sm:$0xff]
  %v5592 = vld [vmem:[%s3609 + $0x68] sm:$0xff]
  %v5593 = vld [vmem:[%s3609 + $0x70] sm:$0xff]
  %v5594 = vld [vmem:[%s3609 + $0x78] sm:$0xff]
  %v5595 = vld [vmem:[%s3609 + $0x80] sm:$0xff]
  %v5596 = vld [vmem:[%s3609 + $0x88] sm:$0xff]
  %v5597 = vld [vmem:[%s3609 + $0x90] sm:$0xff]
  %v5598 = vld [vmem:[%s3609 + $0x98] sm:$0xff]
  %v5599 = vld [vmem:[%s3609 + $0xa0] sm:$0xff]
  %v5600 = vld [vmem:[%s3609 + $0xa8] sm:$0xff]
  %v5601 = vld [vmem:[%s3609 + $0xb0] sm:$0xff]
  %v5602 = vld [vmem:[%s3609 + $0xb8] sm:$0xff]
  %v5603 = vld [vmem:[%s3609 + $0xc0] sm:$0xff]
  %v5604 = vld [vmem:[%s3609 + $0xc8] sm:$0xff]
  %v5605 = vld [vmem:[%s3609 + $0xd0] sm:$0xff]
  %v5606 = vld [vmem:[%s3609 + $0xd8] sm:$0xff]
  %v5607 = vld [vmem:[%s3609 + $0xe0] sm:$0xff]
  %v5608 = vld [vmem:[%s3609 + $0xe8] sm:$0xff]
  %v5609 = vld [vmem:[%s3609 + $0xf0] sm:$0xff]
  %v5610 = vld [vmem:[%s3609 + $0xf8] sm:$0xff]
  %v5611 = vperm.slane %v5042, 0
  %v5612 = vlaneseq
  %v5613 = vshrl.u32 %v5612, 7
  %5615 = vset.pattern.permute.xlu0 %v5613
  %5616 = vperm.xlu0 %5615, %v5611
  %v5617 = vpop.permute.xlu0 %5616
  %v5618 = vlaneseq
  %v5619 = vshrl.u32 %v5618, 7
  %v5620 = vadd.s32 %v5619, 8
  %5621 = vset.pattern.permute.xlu0 %v5620
  %5622 = vperm.xlu0 %5621, %v5611
  %v5623 = vpop.permute.xlu0 %5622
  %v5624 = vperm.slane %v5042, 1
  %v5625 = vlaneseq
  %v5626 = vshrl.u32 %v5625, 7
  %5628 = vset.pattern.permute.xlu0 %v5626
  %5629 = vperm.xlu0 %5628, %v5624
  %v5630 = vpop.permute.xlu0 %5629
  %v5631 = vlaneseq
  %v5632 = vshrl.u32 %v5631, 7
  %v5633 = vadd.s32 %v5632, 8
  %5634 = vset.pattern.permute.xlu0 %v5633
  %5635 = vperm.xlu0 %5634, %v5624
  %v5636 = vpop.permute.xlu0 %5635
  %v5637 = vperm.slane %v5042, 2
  %v5638 = vlaneseq
  %v5639 = vshrl.u32 %v5638, 7
  %5641 = vset.pattern.permute.xlu0 %v5639
  %5642 = vperm.xlu0 %5641, %v5637
  %v5643 = vpop.permute.xlu0 %5642
  %v5644 = vlaneseq
  %v5645 = vshrl.u32 %v5644, 7
  %v5646 = vadd.s32 %v5645, 8
  %5647 = vset.pattern.permute.xlu0 %v5646
  %5648 = vperm.xlu0 %5647, %v5637
  %v5649 = vpop.permute.xlu0 %5648
  %v5650 = vperm.slane %v5042, 3
  %v5651 = vlaneseq
  %v5652 = vshrl.u32 %v5651, 7
  %5654 = vset.pattern.permute.xlu0 %v5652
  %5655 = vperm.xlu0 %5654, %v5650
  %v5656 = vpop.permute.xlu0 %5655
  %v5657 = vlaneseq
  %v5658 = vshrl.u32 %v5657, 7
  %v5659 = vadd.s32 %v5658, 8
  %5660 = vset.pattern.permute.xlu0 %v5659
  %5661 = vperm.xlu0 %5660, %v5650
  %v5662 = vpop.permute.xlu0 %5661
  %v5663 = vperm.slane %v5042, 4
  %v5664 = vlaneseq
  %v5665 = vshrl.u32 %v5664, 7
  %5667 = vset.pattern.permute.xlu0 %v5665
  %5668 = vperm.xlu0 %5667, %v5663
  %v5669 = vpop.permute.xlu0 %5668
  %v5670 = vlaneseq
  %v5671 = vshrl.u32 %v5670, 7
  %v5672 = vadd.s32 %v5671, 8
  %5673 = vset.pattern.permute.xlu0 %v5672
  %5674 = vperm.xlu0 %5673, %v5663
  %v5675 = vpop.permute.xlu0 %5674
  %v5676 = vperm.slane %v5042, 5
  %v5677 = vlaneseq
  %v5678 = vshrl.u32 %v5677, 7
  %5680 = vset.pattern.permute.xlu0 %v5678
  %5681 = vperm.xlu0 %5680, %v5676
  %v5682 = vpop.permute.xlu0 %5681
  %v5683 = vlaneseq
  %v5684 = vshrl.u32 %v5683, 7
  %v5685 = vadd.s32 %v5684, 8
  %5686 = vset.pattern.permute.xlu0 %v5685
  %5687 = vperm.xlu0 %5686, %v5676
  %v5688 = vpop.permute.xlu0 %5687
  %v5689 = vperm.slane %v5042, 6
  %v5690 = vlaneseq
  %v5691 = vshrl.u32 %v5690, 7
  %5693 = vset.pattern.permute.xlu0 %v5691
  %5694 = vperm.xlu0 %5693, %v5689
  %v5695 = vpop.permute.xlu0 %5694
  %v5696 = vlaneseq
  %v5697 = vshrl.u32 %v5696, 7
  %v5698 = vadd.s32 %v5697, 8
  %5699 = vset.pattern.permute.xlu0 %v5698
  %5700 = vperm.xlu0 %5699, %v5689
  %v5701 = vpop.permute.xlu0 %5700
  %v5702 = vperm.slane %v5042, 7
  %v5703 = vlaneseq
  %v5704 = vshrl.u32 %v5703, 7
  %5706 = vset.pattern.permute.xlu0 %v5704
  %5707 = vperm.xlu0 %5706, %v5702
  %v5708 = vpop.permute.xlu0 %5707
  %v5709 = vlaneseq
  %v5710 = vshrl.u32 %v5709, 7
  %v5711 = vadd.s32 %v5710, 8
  %5712 = vset.pattern.permute.xlu0 %v5711
  %5713 = vperm.xlu0 %5712, %v5702
  %v5714 = vpop.permute.xlu0 %5713
  %v5715 = vperm.slane %v5045, 0
  %v5716 = vlaneseq
  %v5717 = vshrl.u32 %v5716, 7
  %5719 = vset.pattern.permute.xlu0 %v5717
  %5720 = vperm.xlu0 %5719, %v5715
  %v5721 = vpop.permute.xlu0 %5720
  %v5722 = vlaneseq
  %v5723 = vshrl.u32 %v5722, 7
  %v5724 = vadd.s32 %v5723, 8
  %5725 = vset.pattern.permute.xlu0 %v5724
  %5726 = vperm.xlu0 %5725, %v5715
  %v5727 = vpop.permute.xlu0 %5726
  %v5728 = vperm.slane %v5045, 1
  %v5729 = vlaneseq
  %v5730 = vshrl.u32 %v5729, 7
  %5732 = vset.pattern.permute.xlu0 %v5730
  %5733 = vperm.xlu0 %5732, %v5728
  %v5734 = vpop.permute.xlu0 %5733
  %v5735 = vlaneseq
  %v5736 = vshrl.u32 %v5735, 7
  %v5737 = vadd.s32 %v5736, 8
  %5738 = vset.pattern.permute.xlu0 %v5737
  %5739 = vperm.xlu0 %5738, %v5728
  %v5740 = vpop.permute.xlu0 %5739
  %v5741 = vperm.slane %v5045, 2
  %v5742 = vlaneseq
  %v5743 = vshrl.u32 %v5742, 7
  %5745 = vset.pattern.permute.xlu0 %v5743
  %5746 = vperm.xlu0 %5745, %v5741
  %v5747 = vpop.permute.xlu0 %5746
  %v5748 = vlaneseq
  %v5749 = vshrl.u32 %v5748, 7
  %v5750 = vadd.s32 %v5749, 8
  %5751 = vset.pattern.permute.xlu0 %v5750
  %5752 = vperm.xlu0 %5751, %v5741
  %v5753 = vpop.permute.xlu0 %5752
  %v5754 = vperm.slane %v5045, 3
  %v5755 = vlaneseq
  %v5756 = vshrl.u32 %v5755, 7
  %5758 = vset.pattern.permute.xlu0 %v5756
  %5759 = vperm.xlu0 %5758, %v5754
  %v5760 = vpop.permute.xlu0 %5759
  %v5761 = vlaneseq
  %v5762 = vshrl.u32 %v5761, 7
  %v5763 = vadd.s32 %v5762, 8
  %5764 = vset.pattern.permute.xlu0 %v5763
  %5765 = vperm.xlu0 %5764, %v5754
  %v5766 = vpop.permute.xlu0 %5765
  %v5767 = vperm.slane %v5045, 4
  %v5768 = vlaneseq
  %v5769 = vshrl.u32 %v5768, 7
  %5771 = vset.pattern.permute.xlu0 %v5769
  %5772 = vperm.xlu0 %5771, %v5767
  %v5773 = vpop.permute.xlu0 %5772
  %v5774 = vlaneseq
  %v5775 = vshrl.u32 %v5774, 7
  %v5776 = vadd.s32 %v5775, 8
  %5777 = vset.pattern.permute.xlu0 %v5776
  %5778 = vperm.xlu0 %5777, %v5767
  %v5779 = vpop.permute.xlu0 %5778
  %v5780 = vperm.slane %v5045, 5
  %v5781 = vlaneseq
  %v5782 = vshrl.u32 %v5781, 7
  %5784 = vset.pattern.permute.xlu0 %v5782
  %5785 = vperm.xlu0 %5784, %v5780
  %v5786 = vpop.permute.xlu0 %5785
  %v5787 = vlaneseq
  %v5788 = vshrl.u32 %v5787, 7
  %v5789 = vadd.s32 %v5788, 8
  %5790 = vset.pattern.permute.xlu0 %v5789
  %5791 = vperm.xlu0 %5790, %v5780
  %v5792 = vpop.permute.xlu0 %5791
  %v5793 = vperm.slane %v5045, 6
  %v5794 = vlaneseq
  %v5795 = vshrl.u32 %v5794, 7
  %5797 = vset.pattern.permute.xlu0 %v5795
  %5798 = vperm.xlu0 %5797, %v5793
  %v5799 = vpop.permute.xlu0 %5798
  %v5800 = vlaneseq
  %v5801 = vshrl.u32 %v5800, 7
  %v5802 = vadd.s32 %v5801, 8
  %5803 = vset.pattern.permute.xlu0 %v5802
  %5804 = vperm.xlu0 %5803, %v5793
  %v5805 = vpop.permute.xlu0 %5804
  %v5806 = vperm.slane %v5045, 7
  %v5807 = vlaneseq
  %v5808 = vshrl.u32 %v5807, 7
  %5810 = vset.pattern.permute.xlu0 %v5808
  %5811 = vperm.xlu0 %5810, %v5806
  %v5812 = vpop.permute.xlu0 %5811
  %v5813 = vlaneseq
  %v5814 = vshrl.u32 %v5813, 7
  %v5815 = vadd.s32 %v5814, 8
  %5816 = vset.pattern.permute.xlu0 %v5815
  %5817 = vperm.xlu0 %5816, %v5806
  %v5818 = vpop.permute.xlu0 %5817
  %v5819 = vmul.f32 %v5579, %v5617
  %v5820 = vmul.f32 %v5580, %v5623
  %v5821 = vmul.f32 %v5581, %v5630
  %v5822 = vmul.f32 %v5582, %v5636
  %v5823 = vmul.f32 %v5583, %v5643
  %v5824 = vmul.f32 %v5584, %v5649
  %v5825 = vmul.f32 %v5585, %v5656
  %v5826 = vmul.f32 %v5586, %v5662
  %v5827 = vmul.f32 %v5587, %v5669
  %v5828 = vmul.f32 %v5588, %v5675
  %v5829 = vmul.f32 %v5589, %v5682
  %v5830 = vmul.f32 %v5590, %v5688
  %v5831 = vmul.f32 %v5591, %v5695
  %v5832 = vmul.f32 %v5592, %v5701
  %v5833 = vmul.f32 %v5593, %v5708
  %v5834 = vmul.f32 %v5594, %v5714
  %v5835 = vmul.f32 %v5595, %v5721
  %v5836 = vmul.f32 %v5596, %v5727
  %v5837 = vmul.f32 %v5597, %v5734
  %v5838 = vmul.f32 %v5598, %v5740
  %v5839 = vmul.f32 %v5599, %v5747
  %v5840 = vmul.f32 %v5600, %v5753
  %v5841 = vmul.f32 %v5601, %v5760
  %v5842 = vmul.f32 %v5602, %v5766
  %v5843 = vmul.f32 %v5603, %v5773
  %v5844 = vmul.f32 %v5604, %v5779
  %v5845 = vmul.f32 %v5605, %v5786
  %v5846 = vmul.f32 %v5606, %v5792
  %v5847 = vmul.f32 %v5607, %v5799
  %v5848 = vmul.f32 %v5608, %v5805
  %v5849 = vmul.f32 %v5609, %v5812
  %v5850 = vmul.f32 %v5610, %v5818
  %v5851 = vsel %vm272, %v5819, 0.0
  %v5852 = vsel %vm272, %v5820, 0.0
  %v5853 = vadd.f32 %v5851, %v5852
  %v5854 = vrot.slane %v5853, 4
  %v5855 = vadd.f32 %v5853, %v5854
  %v5856 = vrot.slane %v5855, 2
  %v5857 = vadd.f32 %v5855, %v5856
  %v5858 = vrot.slane %v5857, 1
  %v5859 = vadd.f32 %v5857, %v5858
  %v5860 = vsel %vm272, %v5821, 0.0
  %v5861 = vsel %vm272, %v5822, 0.0
  %v5862 = vadd.f32 %v5860, %v5861
  %v5863 = vrot.slane %v5862, 4
  %v5864 = vadd.f32 %v5862, %v5863
  %v5865 = vrot.slane %v5864, 2
  %v5866 = vadd.f32 %v5864, %v5865
  %v5867 = vrot.slane %v5866, 1
  %v5868 = vadd.f32 %v5866, %v5867
  %v5869 = vsel %vm272, %v5823, 0.0
  %v5870 = vsel %vm272, %v5824, 0.0
  %v5871 = vadd.f32 %v5869, %v5870
  %v5872 = vrot.slane %v5871, 4
  %v5873 = vadd.f32 %v5871, %v5872
  %v5874 = vrot.slane %v5873, 2
  %v5875 = vadd.f32 %v5873, %v5874
  %v5876 = vrot.slane %v5875, 1
  %v5877 = vadd.f32 %v5875, %v5876
  %v5878 = vsel %vm272, %v5825, 0.0
  %v5879 = vsel %vm272, %v5826, 0.0
  %v5880 = vadd.f32 %v5878, %v5879
  %v5881 = vrot.slane %v5880, 4
  %v5882 = vadd.f32 %v5880, %v5881
  %v5883 = vrot.slane %v5882, 2
  %v5884 = vadd.f32 %v5882, %v5883
  %v5885 = vrot.slane %v5884, 1
  %v5886 = vadd.f32 %v5884, %v5885
  %v5887 = vsel %vm272, %v5827, 0.0
  %v5888 = vsel %vm272, %v5828, 0.0
  %v5889 = vadd.f32 %v5887, %v5888
  %v5890 = vrot.slane %v5889, 4
  %v5891 = vadd.f32 %v5889, %v5890
  %v5892 = vrot.slane %v5891, 2
  %v5893 = vadd.f32 %v5891, %v5892
  %v5894 = vrot.slane %v5893, 1
  %v5895 = vadd.f32 %v5893, %v5894
  %v5896 = vsel %vm272, %v5829, 0.0
  %v5897 = vsel %vm272, %v5830, 0.0
  %v5898 = vadd.f32 %v5896, %v5897
  %v5899 = vrot.slane %v5898, 4
  %v5900 = vadd.f32 %v5898, %v5899
  %v5901 = vrot.slane %v5900, 2
  %v5902 = vadd.f32 %v5900, %v5901
  %v5903 = vrot.slane %v5902, 1
  %v5904 = vadd.f32 %v5902, %v5903
  %v5905 = vsel %vm272, %v5831, 0.0
  %v5906 = vsel %vm272, %v5832, 0.0
  %v5907 = vadd.f32 %v5905, %v5906
  %v5908 = vrot.slane %v5907, 4
  %v5909 = vadd.f32 %v5907, %v5908
  %v5910 = vrot.slane %v5909, 2
  %v5911 = vadd.f32 %v5909, %v5910
  %v5912 = vrot.slane %v5911, 1
  %v5913 = vadd.f32 %v5911, %v5912
  %v5914 = vsel %vm272, %v5833, 0.0
  %v5915 = vsel %vm272, %v5834, 0.0
  %v5916 = vadd.f32 %v5914, %v5915
  %v5917 = vrot.slane %v5916, 4
  %v5918 = vadd.f32 %v5916, %v5917
  %v5919 = vrot.slane %v5918, 2
  %v5920 = vadd.f32 %v5918, %v5919
  %v5921 = vrot.slane %v5920, 1
  %v5922 = vadd.f32 %v5920, %v5921
  %v5923 = vsel %vm272, %v5835, 0.0
  %v5924 = vsel %vm272, %v5836, 0.0
  %v5925 = vadd.f32 %v5923, %v5924
  %v5926 = vrot.slane %v5925, 4
  %v5927 = vadd.f32 %v5925, %v5926
  %v5928 = vrot.slane %v5927, 2
  %v5929 = vadd.f32 %v5927, %v5928
  %v5930 = vrot.slane %v5929, 1
  %v5931 = vadd.f32 %v5929, %v5930
  %v5932 = vsel %vm272, %v5837, 0.0
  %v5933 = vsel %vm272, %v5838, 0.0
  %v5934 = vadd.f32 %v5932, %v5933
  %v5935 = vrot.slane %v5934, 4
  %v5936 = vadd.f32 %v5934, %v5935
  %v5937 = vrot.slane %v5936, 2
  %v5938 = vadd.f32 %v5936, %v5937
  %v5939 = vrot.slane %v5938, 1
  %v5940 = vadd.f32 %v5938, %v5939
  %v5941 = vsel %vm272, %v5839, 0.0
  %v5942 = vsel %vm272, %v5840, 0.0
  %v5943 = vadd.f32 %v5941, %v5942
  %v5944 = vrot.slane %v5943, 4
  %v5945 = vadd.f32 %v5943, %v5944
  %v5946 = vrot.slane %v5945, 2
  %v5947 = vadd.f32 %v5945, %v5946
  %v5948 = vrot.slane %v5947, 1
  %v5949 = vadd.f32 %v5947, %v5948
  %v5950 = vsel %vm272, %v5841, 0.0
  %v5951 = vsel %vm272, %v5842, 0.0
  %v5952 = vadd.f32 %v5950, %v5951
  %v5953 = vrot.slane %v5952, 4
  %v5954 = vadd.f32 %v5952, %v5953
  %v5955 = vrot.slane %v5954, 2
  %v5956 = vadd.f32 %v5954, %v5955
  %v5957 = vrot.slane %v5956, 1
  %v5958 = vadd.f32 %v5956, %v5957
  %v5959 = vsel %vm272, %v5843, 0.0
  %v5960 = vsel %vm272, %v5844, 0.0
  %v5961 = vadd.f32 %v5959, %v5960
  %v5962 = vrot.slane %v5961, 4
  %v5963 = vadd.f32 %v5961, %v5962
  %v5964 = vrot.slane %v5963, 2
  %v5965 = vadd.f32 %v5963, %v5964
  %v5966 = vrot.slane %v5965, 1
  %v5967 = vadd.f32 %v5965, %v5966
  %v5968 = vsel %vm272, %v5845, 0.0
  %v5969 = vsel %vm272, %v5846, 0.0
  %v5970 = vadd.f32 %v5968, %v5969
  %v5971 = vrot.slane %v5970, 4
  %v5972 = vadd.f32 %v5970, %v5971
  %v5973 = vrot.slane %v5972, 2
  %v5974 = vadd.f32 %v5972, %v5973
  %v5975 = vrot.slane %v5974, 1
  %v5976 = vadd.f32 %v5974, %v5975
  %v5977 = vsel %vm272, %v5847, 0.0
  %v5978 = vsel %vm272, %v5848, 0.0
  %v5979 = vadd.f32 %v5977, %v5978
  %v5980 = vrot.slane %v5979, 4
  %v5981 = vadd.f32 %v5979, %v5980
  %v5982 = vrot.slane %v5981, 2
  %v5983 = vadd.f32 %v5981, %v5982
  %v5984 = vrot.slane %v5983, 1
  %v5985 = vadd.f32 %v5983, %v5984
  %v5986 = vsel %vm272, %v5849, 0.0
  %v5987 = vsel %vm272, %v5850, 0.0
  %v5988 = vadd.f32 %v5986, %v5987
  %v5989 = vrot.slane %v5988, 4
  %v5990 = vadd.f32 %v5988, %v5989
  %v5991 = vrot.slane %v5990, 2
  %v5992 = vadd.f32 %v5990, %v5991
  %v5993 = vrot.slane %v5992, 1
  %v5994 = vadd.f32 %v5992, %v5993
  %v5995 = vperm.slane %v4746, 0
  %v5996 = vmul.f32 %v4955, %v5995
  %v5997 = vmul.f32 %v4956, %v5995
  %v6000 = vrot.slane %v5996, 1
  %v6001 = vrot.slane %v5996, 2
  %v6002 = vrot.slane %v5996, 3
  %v6003 = vrot.slane %v5996, 4
  %v6004 = vrot.slane %v5996, 5
  %v6005 = vrot.slane %v5996, 6
  %v6006 = vrot.slane %v5996, 7
  %v6007 = vrot.slane %v5997, 1
  %v6008 = vrot.slane %v5997, 2
  %v6009 = vrot.slane %v5997, 3
  %v6010 = vrot.slane %v5997, 4
  %v6011 = vrot.slane %v5997, 5
  %v6012 = vrot.slane %v5997, 6
  %v6013 = vrot.slane %v5997, 7
  %v6030 = vadd.f32 %v5859, %v5996
  %v6031 = vadd.f32 %v5868, %v6000
  %v6032 = vadd.f32 %v5877, %v6001
  %v6033 = vadd.f32 %v5886, %v6002
  %v6034 = vadd.f32 %v5895, %v6003
  %v6035 = vadd.f32 %v5904, %v6004
  %v6036 = vadd.f32 %v5913, %v6005
  %v6037 = vadd.f32 %v5922, %v6006
  %v6038 = vadd.f32 %v5931, %v5997
  %v6039 = vadd.f32 %v5940, %v6007
  %v6040 = vadd.f32 %v5949, %v6008
  %v6041 = vadd.f32 %v5958, %v6009
  %v6042 = vadd.f32 %v5967, %v6010
  %v6043 = vadd.f32 %v5976, %v6011
  %v6044 = vadd.f32 %v5985, %v6012
  %v6045 = vadd.f32 %v5994, %v6013
  %v6046 = vand.u32 2147483647, %v4869
  %v6047 = vand.u32 2147483647, %v4870
  %v6048 = vsub.f32 0.0, %v6046
  %v6049 = vsub.f32 0.0, %v6047
  %v6050 = vmul.f32 %v6048, 1.442695
  %v6051 = vpow.pop %v6050
  %v6052 = vmul.f32 %v6049, 1.442695
  %v6053 = vpow.pop %v6052
  %vm6054 = vcmp.ge.f32.partialorder %v4869, 0.0
  %vm6055 = vcmp.ge.f32.partialorder %v4870, 0.0
  %v6056 = vadd.f32 %v6051, 1.0
  %v6057 = vadd.f32 %v6053, 1.0
  %v6058 = vrcp.pop %v6056
  %v6059 = vmul.f32 %v6056, %v6058
  %v6060 = vsub.f32 1.0, %v6059
  %v6061 = vmul.f32 %v6058, %v6060
  %v6062 = vadd.f32 %v6058, %v6061
  %vm6063 = vweird.f32 %v6056
  %vm6064 = vweird.f32 %v6058
  %vm6065 = vmor %vm6063, %vm6064
  %v6066 = vsel %vm6065, %v6058, %v6062
  %v6067 = vand.u32 2147483647, %v6056
  %vm6068 = vcmp.eq.f32.partialorder %v6067, 8.507059e+37
  %v6069 = vand.u32 %v6056, 2147483648
  %v6070 = vor.u32 1.1754944e-38, %v6069
  %v6071 = vsel %vm6068, %v6070, %v6066
  %v6072 = vmul.f32 1.0, %v6071
  %v6073 = vrcp.pop %v6057
  %v6074 = vmul.f32 %v6057, %v6073
  %v6075 = vsub.f32 1.0, %v6074
  %v6076 = vmul.f32 %v6073, %v6075
  %v6077 = vadd.f32 %v6073, %v6076
  %vm6078 = vweird.f32 %v6057
  %vm6079 = vweird.f32 %v6073
  %vm6080 = vmor %vm6078, %vm6079
  %v6081 = vsel %vm6080, %v6073, %v6077
  %v6082 = vand.u32 2147483647, %v6057
  %vm6083 = vcmp.eq.f32.partialorder %v6082, 8.507059e+37
  %v6084 = vand.u32 %v6057, 2147483648
  %v6085 = vor.u32 1.1754944e-38, %v6084
  %v6086 = vsel %vm6083, %v6085, %v6081
  %v6087 = vmul.f32 1.0, %v6086
  %v6088 = vmul.f32 %v6051, %v6071
  %v6089 = vmul.f32 %v6053, %v6086
  %v6090 = vsel %vm6054, %v6072, %v6088
  %v6091 = vsel %vm6055, %v6087, %v6089
  %v6092 = vmul.f32 %v4869, %v6090
  %v6093 = vmul.f32 %v4870, %v6091
  %v6096 = vrot.slane %v6092, 1
  %v6097 = vrot.slane %v6092, 2
  %v6098 = vrot.slane %v6092, 3
  %v6099 = vrot.slane %v6092, 4
  %v6100 = vrot.slane %v6092, 5
  %v6101 = vrot.slane %v6092, 6
  %v6102 = vrot.slane %v6092, 7
  %v6103 = vrot.slane %v6093, 1
  %v6104 = vrot.slane %v6093, 2
  %v6105 = vrot.slane %v6093, 3
  %v6106 = vrot.slane %v6093, 4
  %v6107 = vrot.slane %v6093, 5
  %v6108 = vrot.slane %v6093, 6
  %v6109 = vrot.slane %v6093, 7
  %6110 = vrot.lane.b32.xlu0 %v6092, 64
  %v6111 = vpop.permute.xlu0 %6110
  %6112 = vrot.lane.b32.xlu0 %v6096, 64
  %v6113 = vpop.permute.xlu0 %6112
  %6114 = vrot.lane.b32.xlu0 %v6097, 64
  %v6115 = vpop.permute.xlu0 %6114
  %6116 = vrot.lane.b32.xlu0 %v6098, 64
  %v6117 = vpop.permute.xlu0 %6116
  %6118 = vrot.lane.b32.xlu0 %v6099, 64
  %v6119 = vpop.permute.xlu0 %6118
  %6120 = vrot.lane.b32.xlu0 %v6100, 64
  %v6121 = vpop.permute.xlu0 %6120
  %6122 = vrot.lane.b32.xlu0 %v6101, 64
  %v6123 = vpop.permute.xlu0 %6122
  %6124 = vrot.lane.b32.xlu0 %v6102, 64
  %v6125 = vpop.permute.xlu0 %6124
  %6126 = vrot.lane.b32.xlu0 %v6093, 64
  %v6127 = vpop.permute.xlu0 %6126
  %6128 = vrot.lane.b32.xlu0 %v6103, 64
  %v6129 = vpop.permute.xlu0 %6128
  %6130 = vrot.lane.b32.xlu0 %v6104, 64
  %v6131 = vpop.permute.xlu0 %6130
  %6132 = vrot.lane.b32.xlu0 %v6105, 64
  %v6133 = vpop.permute.xlu0 %6132
  %6134 = vrot.lane.b32.xlu0 %v6106, 64
  %v6135 = vpop.permute.xlu0 %6134
  %6136 = vrot.lane.b32.xlu0 %v6107, 64
  %v6137 = vpop.permute.xlu0 %6136
  %6138 = vrot.lane.b32.xlu0 %v6108, 64
  %v6139 = vpop.permute.xlu0 %6138
  %6140 = vrot.lane.b32.xlu0 %v6109, 64
  %v6141 = vpop.permute.xlu0 %6140
  %v6158 = vmul.f32 %v6030, %v6111
  %v6159 = vmul.f32 %v6031, %v6113
  %v6160 = vmul.f32 %v6032, %v6115
  %v6161 = vmul.f32 %v6033, %v6117
  %v6162 = vmul.f32 %v6034, %v6119
  %v6163 = vmul.f32 %v6035, %v6121
  %v6164 = vmul.f32 %v6036, %v6123
  %v6165 = vmul.f32 %v6037, %v6125
  %v6166 = vmul.f32 %v6038, %v6127
  %v6167 = vmul.f32 %v6039, %v6129
  %v6168 = vmul.f32 %v6040, %v6131
  %v6169 = vmul.f32 %v6041, %v6133
  %v6170 = vmul.f32 %v6042, %v6135
  %v6171 = vmul.f32 %v6043, %v6137
  %v6172 = vmul.f32 %v6044, %v6139
  %v6173 = vmul.f32 %v6045, %v6141
  %v6190 = vrot.slane %v6159, 7
  %v6191 = vsel %vm1515, %v6190, %v6158
  %v6192 = vrot.slane %v6160, 6
  %v6193 = vsel %vm1518, %v6192, %v6191
  %v6194 = vrot.slane %v6161, 5
  %v6195 = vsel %vm1521, %v6194, %v6193
  %v6196 = vrot.slane %v6162, 4
  %v6197 = vsel %vm1524, %v6196, %v6195
  %v6198 = vrot.slane %v6163, 3
  %v6199 = vsel %vm1527, %v6198, %v6197
  %v6200 = vrot.slane %v6164, 2
  %v6201 = vsel %vm1530, %v6200, %v6199
  %v6202 = vrot.slane %v6165, 1
  %v6203 = vsel %vm1533, %v6202, %v6201
  %v6204 = vrot.slane %v6167, 7
  %v6205 = vsel %vm1515, %v6204, %v6166
  %v6206 = vrot.slane %v6168, 6
  %v6207 = vsel %vm1518, %v6206, %v6205
  %v6208 = vrot.slane %v6169, 5
  %v6209 = vsel %vm1521, %v6208, %v6207
  %v6210 = vrot.slane %v6170, 4
  %v6211 = vsel %vm1524, %v6210, %v6209
  %v6212 = vrot.slane %v6171, 3
  %v6213 = vsel %vm1527, %v6212, %v6211
  %v6214 = vrot.slane %v6172, 2
  %v6215 = vsel %vm1530, %v6214, %v6213
  %v6216 = vrot.slane %v6173, 1
  %v6217 = vsel %vm1533, %v6216, %v6215
  %v6218 = vsel %vm272, %v6203, 0
  %v6220 = vsel %vm272, %v6217, 0
  %v6223 = vsel %vm272, %v4736, 0
  %v6226 = vsel %vm272, %v4737, 0
  %v6229 = vsel %vm272, %v4738, 0
  %v6232 = vsel %vm272, %v4739, 0
  %6234 = vmatpush.xpose.msra.mxu0 0.0
  %6235 = vmatpush.xpose.msra.mxu0 0.0
  %6236 = vmatpush.xpose.msra.mxu0 0.0
  %6237 = vmatpush.xpose.msra.mxu0 0.0
  %6238 = vmatpush.xpose.msra.mxu0 0.0
  %6239 = vmatpush.xpose.msra.mxu0 0.0
  %6240 = vmatpush.xpose.msra.mxu0 0.0
  %6241 = vmatpush.xpose.msra.mxu0 0.0
  %6242 = vmatpush.xpose.msra.mxu0 0.0
  %6243 = vmatpush.xpose.msra.mxu0 0.0
  %6244 = vmatpush.xpose.msra.mxu0 0.0
  %6245 = vmatpush.xpose.msra.mxu0 0.0
  %6246 = vmatpush.xpose.msra.mxu0 %v6232
  %6247 = vmatpush.xpose.msra.mxu0 %v6229
  %6248 = vmatpush.xpose.msra.mxu0 %v6226
  %6249 = vmatpush.xpose.msra.mxu0 %v6223
  %6250 = vmatmul.f32.gmra.mxu0 %v6218
  %v6251 = vpop.f32.mrf.mxu0
  %v6252 = vadd.f32 0.0, %v6251
  %6253 = vmatmul.f32.gmra.mxu0 %v6220
  %v6254 = vpop.f32.mrf.mxu0
  %v6255 = vadd.f32 0.0, %v6254
  %6256 = vdwg.mxu0
  %v6257 = vadd.f32 %v4708, %v6252
  %v6258 = vadd.f32 %v4709, %v6255
  %v6259 = vperm.slane %v4728, 0
  %v6260 = vadd.f32 %v6257, %v6259
  %v6261 = vadd.f32 %v6258, %v6259
  %s6262 = scalar_lea.vmem %s3, 16
  %6263 = vst.msk [vmem:[%s6262] sm:$0xff] %vm53, %v6260
  %6264 = vst.msk [vmem:[%s6262 + $0x8] sm:$0xff] %vm53, %v6261
  // Predicated region
  $region14: #{mamba_original_forward.1} parent=0 // pred_check
    _
  $region15: #{mamba_original_forward.1} parent=0 // pred_check_branch
    %6266 = sbr.rel (0) target = $region17
  $region16: #{mamba_original_forward.1} parent=0 // pred_region
    _
  $region17: #{mamba_original_forward.1} parent=0 // pred_fallthru
    _
  // Predicated region
  $region18: #{mamba_original_forward.1} parent=0 // pred_check
    _
  $region19: #{mamba_original_forward.1} parent=0 // pred_check_branch
    %6268 = sbr.rel (0) target = $region21
  $region20: #{mamba_original_forward.1} parent=0 // pred_region
    _
  $region21: #{mamba_original_forward.1} parent=0 // pred_fallthru
    _

</llo_original>
